<compile_context>
chip_gen: v7x
topology: tpu7x:2x2x1
jax: 0.10.0
libtpu: 0.0.40
codegen_flags: <defaults>
</compile_context>

<pallas_src>
import jax
import jax.numpy as jnp
from jax.experimental import pallas as pl
from jax.experimental.pallas import tpu as pltpu

_SQRT2_INV = 0.7071067811865476


def _erf_poly(x):
    # Abramowitz & Stegun 7.1.26 erf approximation, |abs error| <= 1.5e-7.
    # Uses only ops guaranteed to lower in Mosaic (abs, div, exp, mul, where).
    a1, a2, a3, a4, a5 = (0.254829592, -0.284496736, 1.421413741,
                          -1.453152027, 1.061405429)
    p = 0.3275911
    ax = jnp.abs(x)
    t = 1.0 / (1.0 + p * ax)
    poly = ((((a5 * t + a4) * t + a3) * t + a2) * t + a1) * t
    y = 1.0 - poly * jnp.exp(-ax * ax)
    return jnp.where(x < 0.0, -y, y)


def _gelu_exact(x):
    # PyTorch nn.GELU() default (approximate='none'): 0.5*x*(1+erf(x/sqrt(2)))
    return 0.5 * x * (1.0 + _erf_poly(x * _SQRT2_INV))


# ---------------------------------------------------------------------------
# Kernel 1: 1x1 conv (two half-channel matmuls) + bias + exact GELU.
# Grid over batch; output emitted lane-dense as (S, C_out), dtype bf16.
# ---------------------------------------------------------------------------
def conv1x1_gelu_kernel(x1_ref, x2_ref, wa_ref, wb_ref, b_ref, o_ref):
    # x1_ref/x2_ref: (C_half, S) f32; wa_ref/wb_ref: (C_out, C_half) f32
    # b_ref: (1, C_out); o_ref: (S, C_out) bf16 -- last dim = 128 dense lanes.
    y = jnp.dot(wa_ref[...], x1_ref[...], preferred_element_type=jnp.float32)
    y = y + jnp.dot(wb_ref[...], x2_ref[...], preferred_element_type=jnp.float32)
    # Small (128, S) result transpose; cheaper than transposing the (1024, S)
    # operand (see header note).
    yt = y.T + b_ref[...]                      # (S, C_out)
    o_ref[...] = _gelu_exact(yt).astype(o_ref.dtype)


def conv1x1_gelu(x1, x2, wa, wb, b, *, out_dtype=jnp.bfloat16):
    # x1, x2: (B, C_half, S); wa, wb: (C_out, C_half); b: (1, C_out)
    B, C_half, S = x1.shape
    C_out = wa.shape[0]
    return pl.pallas_call(
        conv1x1_gelu_kernel,
        out_shape=jax.ShapeDtypeStruct((B, S, C_out), out_dtype),
        grid_spec=pltpu.PrefetchScalarGridSpec(
            num_scalar_prefetch=0,
            grid=(B,),
            in_specs=[
                pl.BlockSpec((None, C_half, S), lambda i: (i, 0, 0)),
                pl.BlockSpec((None, C_half, S), lambda i: (i, 0, 0)),
                pl.BlockSpec((C_out, C_half), lambda i: (0, 0)),
                pl.BlockSpec((C_out, C_half), lambda i: (0, 0)),
                pl.BlockSpec((1, C_out), lambda i: (0, 0)),
            ],
            out_specs=pl.BlockSpec((None, S, C_out), lambda i: (i, 0, 0)),
        ),
        compiler_params=pltpu.CompilerParams(
            dimension_semantics=("parallel",),
            vmem_limit_bytes=32 * 1024 * 1024),
    )(x1, x2, wa, wb, b)


# ---------------------------------------------------------------------------
# Kernel 2: Linear(25088->128) + GELU + Linear(128->2) + softmax.
# K tiled over the grid with a f32 VMEM accumulator (init/finalize via
# pl.when).  w1 arrives pre-permuted/pre-transposed as (K, H) bf16; x is the
# bf16 conv intermediate viewed as (B, K); accumulation stays f32.
# ---------------------------------------------------------------------------
def mlp_softmax_kernel(x_ref, w1_ref, b1_ref, w2_ref, b2_ref, o_ref, acc_ref):
    k = pl.program_id(0)

    @pl.when(k == 0)
    def _():
        acc_ref[...] = jnp.zeros_like(acc_ref)

    acc_ref[...] += jnp.dot(x_ref[...], w1_ref[...],
                            preferred_element_type=jnp.float32)

    @pl.when(k == pl.num_programs(0) - 1)
    def _():
        h = _gelu_exact(acc_ref[...] + b1_ref[...])                    # (B, H)
        logits = jnp.dot(h, w2_ref[...],
                         preferred_element_type=jnp.float32) + b2_ref[...]
        m = jnp.max(logits, axis=-1, keepdims=True)
        e = jnp.exp(logits - m)
        o_ref[...] = (e / jnp.sum(e, axis=-1, keepdims=True)).astype(o_ref.dtype)


def mlp_softmax(x, w1, b1_2d, w2, b2_2d, *, tk=12544):
    # x: (B, K) bf16, w1: (K, H) bf16, b1_2d: (1, H), w2: (H, C), b2_2d: (1, C)
    B, K = x.shape
    H = w1.shape[1]
    C = w2.shape[1]
    assert K % tk == 0 and tk % 128 == 0
    return pl.pallas_call(
        mlp_softmax_kernel,
        out_shape=jax.ShapeDtypeStruct((B, C), jnp.float32),
        grid_spec=pltpu.PrefetchScalarGridSpec(
            num_scalar_prefetch=0,
            grid=(K // tk,),
            in_specs=[
                pl.BlockSpec((B, tk), lambda k: (0, k)),
                pl.BlockSpec((tk, H), lambda k: (k, 0)),
                pl.BlockSpec((1, H), lambda k: (0, 0)),
                pl.BlockSpec((H, C), lambda k: (0, 0)),
                pl.BlockSpec((1, C), lambda k: (0, 0)),
            ],
            out_specs=pl.BlockSpec((B, C), lambda k: (0, 0)),
            scratch_shapes=[pltpu.VMEM((B, H), jnp.float32)],
        ),
        compiler_params=pltpu.CompilerParams(
            dimension_semantics=("arbitrary",),
            vmem_limit_bytes=32 * 1024 * 1024),
    )(x, w1, b1_2d, w2, b2_2d)


# ---------------------------------------------------------------------------
# One-time parameter preparation (outside the jitted forward): split conv_w,
# permute+transpose fc1_w for the lane-dense (S, C_out) flatten order and cast
# it to bf16, transpose fc2_w.  No per-forward HBM transpose traffic remains.
# ---------------------------------------------------------------------------
def prepare_params(conv_w, conv_b, fc1_w, fc1_b, fc2_w, fc2_b, *, C_half, S):
    C_out = conv_w.shape[0]
    H = fc1_w.shape[0]
    n_cls = fc2_w.shape[0]
    wa = conv_w[:, :C_half]                    # (C_out, C_half) -> multiplies x1
    wb = conv_w[:, C_half:]                    # (C_out, C_half) -> multiplies x2
    b_conv = conv_b.reshape(1, C_out)
    # torch flatten index: k = c*S + s ; ours: k' = s*C_out + c.
    # w1_kh[s*C_out + c, h] = fc1_w[h, c*S + s], stored as (K, H) bf16.
    w1_kh = jnp.transpose(fc1_w.reshape(H, C_out, S), (2, 1, 0)).reshape(S * C_out, H)
    w1_kh = w1_kh.astype(jnp.bfloat16)
    b1_2d = fc1_b.reshape(1, H)
    w2_hc = fc2_w.T                            # (H, n_cls)
    b2_2d = fc2_b.reshape(1, n_cls)
    return wa, wb, b_conv, w1_kh, b1_2d, w2_hc, b2_2d


# ---------------------------------------------------------------------------
# Full MoEBlock forward (jitted; takes pre-prepared parameters).
# ---------------------------------------------------------------------------
@jax.jit
def moe_block(x1, x2, wa, wb, b_conv, w1_kh, b1_2d, w2_hc, b2_2d):
    B, C_half = x1.shape[0], x1.shape[1]
    S = x1.shape[2] * x1.shape[3]
    x1f = x1.reshape(B, C_half, S)              # contiguous view, no HBM copy
    x2f = x2.reshape(B, C_half, S)
    y = conv1x1_gelu(x1f, x2f, wa, wb, b_conv)  # (B, S, C_out) lane-dense bf16
    y_flat = y.reshape(B, -1)                   # contiguous view, k' = s*C_out + c
    return mlp_softmax(y_flat, w1_kh, b1_2d, w2_hc, b2_2d)   # (B, 2) f32


def _reference(x1, x2, conv_w, conv_b, fc1_w, fc1_b, fc2_w, fc2_b):
    # Pure-JAX f32 reference mirroring the PyTorch forward (original weights).
    B = x1.shape[0]
    S = x1.shape[2] * x1.shape[3]
    x = jnp.concatenate([x1, x2], axis=1).reshape(B, -1, S)
    y = jax.nn.gelu(jnp.einsum("oc,bcs->bos", conv_w, x) + conv_b[None, :, None],
                    approximate=False)
    y = y.reshape(B, -1)                       # torch Flatten (NCHW order)
    h = jax.nn.gelu(y @ fc1_w.T + fc1_b, approximate=False)
    logits = h @ fc2_w.T + fc2_b
    return jax.nn.softmax(logits, axis=-1)


if __name__ == "__main__":
    key = jax.random.PRNGKey(0)
    kx1, kx2, kcw, kcb, k1w, k1b, k2w, k2b = jax.random.split(key, 8)

    # Shapes fixed by the module: Conv2d(2048,128,1) and Linear(25088,128)
    # => H*W = 25088/128 = 196 = 14*14; x1/x2 each carry 1024 channels.
    B, C_half, Hs, Ws = 2, 1024, 14, 14
    C_in, C_mid, Hdim, n_cls = 2 * C_half, 128, 128, 2
    S = Hs * Ws
    K = C_mid * S                              # 25088

    x1 = jax.random.normal(kx1, (B, C_half, Hs, Ws), jnp.float32)
    x2 = jax.random.normal(kx2, (B, C_half, Hs, Ws), jnp.float32)

    # PyTorch-shaped parameters (~1/sqrt(fan_in) scale).
    conv_w = jax.random.normal(kcw, (C_mid, C_in), jnp.float32) / jnp.sqrt(C_in)
    conv_b = jax.random.normal(kcb, (C_mid,), jnp.float32) / jnp.sqrt(C_in)
    fc1_w = jax.random.normal(k1w, (Hdim, K), jnp.float32) / jnp.sqrt(K)      # (out, in)
    fc1_b = jax.random.normal(k1b, (Hdim,), jnp.float32) / jnp.sqrt(K)
    fc2_w = jax.random.normal(k2w, (n_cls, Hdim), jnp.float32) / jnp.sqrt(Hdim)
    fc2_b = jax.random.normal(k2b, (n_cls,), jnp.float32) / jnp.sqrt(Hdim)

    params = prepare_params(conv_w, conv_b, fc1_w, fc1_b, fc2_w, fc2_b,
                            C_half=C_half, S=S)
    out = moe_block(x1, x2, *params)
    jax.block_until_ready(out)

    ref = _reference(x1, x2, conv_w, conv_b, fc1_w, fc1_b, fc2_w, fc2_b)
    assert out.shape == (B, n_cls)
    # Tolerance relaxed for bf16 weight/intermediate streaming (estimated prob
    # error < 1e-3; see review correctness note).
    assert jnp.allclose(out, ref, rtol=2e-2, atol=1e-2), (out, ref)

    print("KERNEL_OK")
</pallas_src>

<mosaic_0001>
module attributes {stable_mosaic.version = 11 : i64} {
  func.func @conv1x1_gelu_kernel(%arg0: i32, %arg1: memref<1x1024x196xf32, #tpu.memory_space<vmem>>, %arg2: memref<1x1024x196xf32, #tpu.memory_space<vmem>>, %arg3: memref<128x1024xf32, #tpu.memory_space<vmem>>, %arg4: memref<128x1024xf32, #tpu.memory_space<vmem>>, %arg5: memref<1x128xf32, #tpu.memory_space<vmem>>, %arg6: memref<1x196x128xbf16, #tpu.memory_space<vmem>>) attributes {dimension_semantics = [#tpu.dimension_semantics<parallel>], iteration_bounds = array<i64: 2>, scalar_prefetch = 0 : i64, scratch_operands = 0 : i64, tpu.core_type = #tpu.core_type<tc>, window_params = [{transform_indices = @transform_0, window_bounds = array<i64: 1, 1024, 196>}, {transform_indices = @transform_1, window_bounds = array<i64: 1, 1024, 196>}, {pipeline_mode = #tpu.pipeline_mode<synchronous>, transform_indices = @transform_2, window_bounds = array<i64: 128, 1024>}, {pipeline_mode = #tpu.pipeline_mode<synchronous>, transform_indices = @transform_3, window_bounds = array<i64: 128, 1024>}, {pipeline_mode = #tpu.pipeline_mode<synchronous>, transform_indices = @transform_4, window_bounds = array<i64: 1, 128>}, {transform_indices = @transform_5, window_bounds = array<i64: 1, 196, 128>}]} {
    %c0 = arith.constant 0 : index
    %c0_0 = arith.constant 0 : index
    %0 = vector.load %arg3[%c0, %c0_0] : memref<128x1024xf32, #tpu.memory_space<vmem>>, vector<128x1024xf32>
    %c0_1 = arith.constant 0 : index
    %c0_2 = arith.constant 0 : index
    %c0_3 = arith.constant 0 : index
    %1 = vector.load %arg1[%c0_1, %c0_2, %c0_3] : memref<1x1024x196xf32, #tpu.memory_space<vmem>>, vector<1x1024x196xf32>
    %2 = vector.shape_cast %1 : vector<1x1024x196xf32> to vector<1024x196xf32>
    %cst = arith.constant dense<0.000000e+00> : vector<128x196xf32>
    %3 = tpu.matmul %0, %2, %cst {dimension_numbers = #tpu.dot_dimension_numbers<[1], [0], [0], [1], [0, 0, 1, 1], [], []>} : vector<128x1024xf32>, vector<1024x196xf32>, vector<128x196xf32> -> vector<128x196xf32>
    %c0_4 = arith.constant 0 : index
    %c0_5 = arith.constant 0 : index
    %4 = vector.load %arg4[%c0_4, %c0_5] : memref<128x1024xf32, #tpu.memory_space<vmem>>, vector<128x1024xf32>
    %c0_6 = arith.constant 0 : index
    %c0_7 = arith.constant 0 : index
    %c0_8 = arith.constant 0 : index
    %5 = vector.load %arg2[%c0_6, %c0_7, %c0_8] : memref<1x1024x196xf32, #tpu.memory_space<vmem>>, vector<1x1024x196xf32>
    %6 = vector.shape_cast %5 : vector<1x1024x196xf32> to vector<1024x196xf32>
    %cst_9 = arith.constant dense<0.000000e+00> : vector<128x196xf32>
    %7 = tpu.matmul %4, %6, %cst_9 {dimension_numbers = #tpu.dot_dimension_numbers<[1], [0], [0], [1], [0, 0, 1, 1], [], []>} : vector<128x1024xf32>, vector<1024x196xf32>, vector<128x196xf32> -> vector<128x196xf32>
    %8 = arith.addf %3, %7 : vector<128x196xf32>
    %9 = tpu.transpose %8, [1, 0] : vector<128x196xf32> -> vector<196x128xf32>
    %c0_10 = arith.constant 0 : index
    %c0_11 = arith.constant 0 : index
    %10 = vector.load %arg5[%c0_10, %c0_11] : memref<1x128xf32, #tpu.memory_space<vmem>>, vector<1x128xf32>
    %11 = vector.broadcast %10 : vector<1x128xf32> to vector<196x128xf32>
    %12 = arith.addf %9, %11 : vector<196x128xf32>
    %cst_12 = arith.constant 5.000000e-01 : f32
    %13 = vector.broadcast %cst_12 : f32 to vector<196x128xf32>
    %14 = arith.mulf %13, %12 : vector<196x128xf32>
    %cst_13 = arith.constant 0.707106769 : f32
    %15 = vector.broadcast %cst_13 : f32 to vector<196x128xf32>
    %16 = arith.mulf %12, %15 : vector<196x128xf32>
    %17 = math.absf %16 : vector<196x128xf32>
    %cst_14 = arith.constant 0.327591091 : f32
    %18 = vector.broadcast %cst_14 : f32 to vector<196x128xf32>
    %19 = arith.mulf %18, %17 : vector<196x128xf32>
    %cst_15 = arith.constant 1.000000e+00 : f32
    %20 = vector.broadcast %cst_15 : f32 to vector<196x128xf32>
    %21 = arith.addf %20, %19 : vector<196x128xf32>
    %cst_16 = arith.constant 1.000000e+00 : f32
    %22 = vector.broadcast %cst_16 : f32 to vector<196x128xf32>
    %23 = arith.divf %22, %21 : vector<196x128xf32>
    %cst_17 = arith.constant 1.06140542 : f32
    %24 = vector.broadcast %cst_17 : f32 to vector<196x128xf32>
    %25 = arith.mulf %24, %23 : vector<196x128xf32>
    %cst_18 = arith.constant -1.45315206 : f32
    %26 = vector.broadcast %cst_18 : f32 to vector<196x128xf32>
    %27 = arith.addf %25, %26 : vector<196x128xf32>
    %28 = arith.mulf %27, %23 : vector<196x128xf32>
    %cst_19 = arith.constant 1.42141378 : f32
    %29 = vector.broadcast %cst_19 : f32 to vector<196x128xf32>
    %30 = arith.addf %28, %29 : vector<196x128xf32>
    %31 = arith.mulf %30, %23 : vector<196x128xf32>
    %cst_20 = arith.constant -0.284496725 : f32
    %32 = vector.broadcast %cst_20 : f32 to vector<196x128xf32>
    %33 = arith.addf %31, %32 : vector<196x128xf32>
    %34 = arith.mulf %33, %23 : vector<196x128xf32>
    %cst_21 = arith.constant 0.254829586 : f32
    %35 = vector.broadcast %cst_21 : f32 to vector<196x128xf32>
    %36 = arith.addf %34, %35 : vector<196x128xf32>
    %37 = arith.mulf %36, %23 : vector<196x128xf32>
    %cst_22 = arith.constant 0.000000e+00 : f32
    %38 = vector.broadcast %cst_22 : f32 to vector<196x128xf32>
    %39 = arith.subf %38, %17 : vector<196x128xf32>
    %40 = arith.mulf %39, %17 : vector<196x128xf32>
    %41 = math.exp %40 : vector<196x128xf32>
    %42 = arith.mulf %37, %41 : vector<196x128xf32>
    %cst_23 = arith.constant 1.000000e+00 : f32
    %43 = vector.broadcast %cst_23 : f32 to vector<196x128xf32>
    %44 = arith.subf %43, %42 : vector<196x128xf32>
    %cst_24 = arith.constant 0.000000e+00 : f32
    %45 = vector.broadcast %cst_24 : f32 to vector<196x128xf32>
    %46 = arith.cmpf olt, %16, %45 : vector<196x128xf32>
    %cst_25 = arith.constant 0.000000e+00 : f32
    %47 = vector.broadcast %cst_25 : f32 to vector<196x128xf32>
    %48 = arith.subf %47, %44 : vector<196x128xf32>
    %49 = arith.select %46, %48, %44 : vector<196x128xi1>, vector<196x128xf32>
    %cst_26 = arith.constant 1.000000e+00 : f32
    %50 = vector.broadcast %cst_26 : f32 to vector<196x128xf32>
    %51 = arith.addf %50, %49 : vector<196x128xf32>
    %52 = arith.mulf %14, %51 : vector<196x128xf32>
    %53 = arith.truncf %52 : vector<196x128xf32> to vector<196x128xbf16>
    %c0_27 = arith.constant 0 : index
    %c0_28 = arith.constant 0 : index
    %c0_29 = arith.constant 0 : index
    %54 = vector.load %arg6[%c0_27, %c0_28, %c0_29] : memref<1x196x128xbf16, #tpu.memory_space<vmem>>, vector<1x196x128xbf16>
    %55 = vector.shape_cast %54 : vector<1x196x128xbf16> to vector<196x128xbf16>
    %56 = vector.shape_cast %53 : vector<196x128xbf16> to vector<1x196x128xbf16>
    tpu.vector_store %arg6[%c0_27, %c0_28, %c0_29], %56 {strides = array<i32>} : memref<1x196x128xbf16, #tpu.memory_space<vmem>>, vector<1x196x128xbf16>,
    return
  }
  func.func @transform_0(%arg0: i32) -> (i32, i32, i32) {
    %c0_i32 = arith.constant 0 : i32
    %c0_i32_0 = arith.constant 0 : i32
    %c0_i32_1 = arith.constant 0 : i32
    return %arg0, %c0_i32, %c0_i32_0 : i32, i32, i32
  }
  func.func @transform_1(%arg0: i32) -> (i32, i32, i32) {
    %c0_i32 = arith.constant 0 : i32
    %c0_i32_0 = arith.constant 0 : i32
    %c0_i32_1 = arith.constant 0 : i32
    return %arg0, %c0_i32, %c0_i32_0 : i32, i32, i32
  }
  func.func @transform_2(%arg0: i32) -> (i32, i32) {
    %c0_i32 = arith.constant 0 : i32
    %c0_i32_0 = arith.constant 0 : i32
    %c0_i32_1 = arith.constant 0 : i32
    return %c0_i32, %c0_i32_0 : i32, i32
  }
  func.func @transform_3(%arg0: i32) -> (i32, i32) {
    %c0_i32 = arith.constant 0 : i32
    %c0_i32_0 = arith.constant 0 : i32
    %c0_i32_1 = arith.constant 0 : i32
    return %c0_i32, %c0_i32_0 : i32, i32
  }
  func.func @transform_4(%arg0: i32) -> (i32, i32) {
    %c0_i32 = arith.constant 0 : i32
    %c0_i32_0 = arith.constant 0 : i32
    %c0_i32_1 = arith.constant 0 : i32
    return %c0_i32, %c0_i32_0 : i32, i32
  }
  func.func @transform_5(%arg0: i32) -> (i32, i32, i32) {
    %c0_i32 = arith.constant 0 : i32
    %c0_i32_0 = arith.constant 0 : i32
    %c0_i32_1 = arith.constant 0 : i32
    return %arg0, %c0_i32, %c0_i32_0 : i32, i32, i32
  }
}

module attributes {stable_mosaic.version = 11 : i64} {
  func.func @mlp_softmax_kernel(%arg0: i32, %arg1: memref<2x12544xbf16, #tpu.memory_space<vmem>>, %arg2: memref<12544x128xbf16, #tpu.memory_space<vmem>>, %arg3: memref<1x128xf32, #tpu.memory_space<vmem>>, %arg4: memref<128x2xf32, #tpu.memory_space<vmem>>, %arg5: memref<1x2xf32, #tpu.memory_space<vmem>>, %arg6: memref<2x2xf32, #tpu.memory_space<vmem>>, %arg7: memref<2x128xf32, #tpu.memory_space<vmem>>) attributes {dimension_semantics = [#tpu.dimension_semantics<arbitrary>], iteration_bounds = array<i64: 2>, scalar_prefetch = 0 : i64, scratch_operands = 1 : i64, tpu.core_type = #tpu.core_type<tc>, window_params = [{transform_indices = @transform_0, window_bounds = array<i64: 2, 12544>}, {transform_indices = @transform_1, window_bounds = array<i64: 12544, 128>}, {pipeline_mode = #tpu.pipeline_mode<synchronous>, transform_indices = @transform_2, window_bounds = array<i64: 1, 128>}, {pipeline_mode = #tpu.pipeline_mode<synchronous>, transform_indices = @transform_3, window_bounds = array<i64: 128, 2>}, {pipeline_mode = #tpu.pipeline_mode<synchronous>, transform_indices = @transform_4, window_bounds = array<i64: 1, 2>}, {pipeline_mode = #tpu.pipeline_mode<synchronous>, transform_indices = @transform_5, window_bounds = array<i64: 2, 2>}]} {
    %c0_i32 = arith.constant 0 : i32
    %0 = arith.cmpi eq, %arg0, %c0_i32 : i32
    %1 = arith.extui %0 : i1 to i32
    %c0_i32_0 = arith.constant 0 : i32
    %2 = arith.cmpi ne, %1, %c0_i32_0 : i32
    scf.if %2 {
      %cst_9 = arith.constant 0.000000e+00 : f32
      %12 = vector.broadcast %cst_9 : f32 to vector<2x128xf32>
      %c0_10 = arith.constant 0 : index
      %c0_11 = arith.constant 0 : index
      %13 = vector.load %arg7[%c0_10, %c0_11] : memref<2x128xf32, #tpu.memory_space<vmem>>, vector<2x128xf32>
      tpu.vector_store %arg7[%c0_10, %c0_11], %12 {strides = array<i32>} : memref<2x128xf32, #tpu.memory_space<vmem>>, vector<2x128xf32>,
    } else {
    }
    %c0 = arith.constant 0 : index
    %c0_1 = arith.constant 0 : index
    %3 = vector.load %arg7[%c0, %c0_1] : memref<2x128xf32, #tpu.memory_space<vmem>>, vector<2x128xf32>
    %c0_2 = arith.constant 0 : index
    %c0_3 = arith.constant 0 : index
    %4 = vector.load %arg1[%c0_2, %c0_3] : memref<2x12544xbf16, #tpu.memory_space<vmem>>, vector<2x12544xbf16>
    %c0_4 = arith.constant 0 : index
    %c0_5 = arith.constant 0 : index
    %5 = vector.load %arg2[%c0_4, %c0_5] : memref<12544x128xbf16, #tpu.memory_space<vmem>>, vector<12544x128xbf16>
    %cst = arith.constant dense<0.000000e+00> : vector<2x128xf32>
    %6 = tpu.matmul %4, %5, %cst {dimension_numbers = #tpu.dot_dimension_numbers<[1], [0], [0], [1], [0, 0, 1, 1], [], []>} : vector<2x12544xbf16>, vector<12544x128xbf16>, vector<2x128xf32> -> vector<2x128xf32>
    %7 = arith.addf %3, %6 : vector<2x128xf32>
    %c0_6 = arith.constant 0 : index
    %c0_7 = arith.constant 0 : index
    %8 = vector.load %arg7[%c0_6, %c0_7] : memref<2x128xf32, #tpu.memory_space<vmem>>, vector<2x128xf32>
    tpu.vector_store %arg7[%c0_6, %c0_7], %7 {strides = array<i32>} : memref<2x128xf32, #tpu.memory_space<vmem>>, vector<2x128xf32>,
    %c1_i32 = arith.constant 1 : i32
    %9 = arith.cmpi eq, %arg0, %c1_i32 : i32
    %10 = arith.extui %9 : i1 to i32
    %c0_i32_8 = arith.constant 0 : i32
    %11 = arith.cmpi ne, %10, %c0_i32_8 : i32
    scf.if %11 {
      %c0_9 = arith.constant 0 : index
      %c0_10 = arith.constant 0 : index
      %12 = vector.load %arg7[%c0_9, %c0_10] : memref<2x128xf32, #tpu.memory_space<vmem>>, vector<2x128xf32>
      %c0_11 = arith.constant 0 : index
      %c0_12 = arith.constant 0 : index
      %13 = vector.load %arg3[%c0_11, %c0_12] : memref<1x128xf32, #tpu.memory_space<vmem>>, vector<1x128xf32>
      %14 = vector.broadcast %13 : vector<1x128xf32> to vector<2x128xf32>
      %15 = arith.addf %12, %14 : vector<2x128xf32>
      %cst_13 = arith.constant 5.000000e-01 : f32
      %16 = vector.broadcast %cst_13 : f32 to vector<2x128xf32>
      %17 = arith.mulf %16, %15 : vector<2x128xf32>
      %cst_14 = arith.constant 0.707106769 : f32
      %18 = vector.broadcast %cst_14 : f32 to vector<2x128xf32>
      %19 = arith.mulf %15, %18 : vector<2x128xf32>
      %20 = math.absf %19 : vector<2x128xf32>
      %cst_15 = arith.constant 0.327591091 : f32
      %21 = vector.broadcast %cst_15 : f32 to vector<2x128xf32>
      %22 = arith.mulf %21, %20 : vector<2x128xf32>
      %cst_16 = arith.constant 1.000000e+00 : f32
      %23 = vector.broadcast %cst_16 : f32 to vector<2x128xf32>
      %24 = arith.addf %23, %22 : vector<2x128xf32>
      %cst_17 = arith.constant 1.000000e+00 : f32
      %25 = vector.broadcast %cst_17 : f32 to vector<2x128xf32>
      %26 = arith.divf %25, %24 : vector<2x128xf32>
      %cst_18 = arith.constant 1.06140542 : f32
      %27 = vector.broadcast %cst_18 : f32 to vector<2x128xf32>
      %28 = arith.mulf %27, %26 : vector<2x128xf32>
      %cst_19 = arith.constant -1.45315206 : f32
      %29 = vector.broadcast %cst_19 : f32 to vector<2x128xf32>
      %30 = arith.addf %28, %29 : vector<2x128xf32>
      %31 = arith.mulf %30, %26 : vector<2x128xf32>
      %cst_20 = arith.constant 1.42141378 : f32
      %32 = vector.broadcast %cst_20 : f32 to vector<2x128xf32>
      %33 = arith.addf %31, %32 : vector<2x128xf32>
      %34 = arith.mulf %33, %26 : vector<2x128xf32>
      %cst_21 = arith.constant -0.284496725 : f32
      %35 = vector.broadcast %cst_21 : f32 to vector<2x128xf32>
      %36 = arith.addf %34, %35 : vector<2x128xf32>
      %37 = arith.mulf %36, %26 : vector<2x128xf32>
      %cst_22 = arith.constant 0.254829586 : f32
      %38 = vector.broadcast %cst_22 : f32 to vector<2x128xf32>
      %39 = arith.addf %37, %38 : vector<2x128xf32>
      %40 = arith.mulf %39, %26 : vector<2x128xf32>
      %cst_23 = arith.constant 0.000000e+00 : f32
      %41 = vector.broadcast %cst_23 : f32 to vector<2x128xf32>
      %42 = arith.subf %41, %20 : vector<2x128xf32>
      %43 = arith.mulf %42, %20 : vector<2x128xf32>
      %44 = math.exp %43 : vector<2x128xf32>
      %45 = arith.mulf %40, %44 : vector<2x128xf32>
      %cst_24 = arith.constant 1.000000e+00 : f32
      %46 = vector.broadcast %cst_24 : f32 to vector<2x128xf32>
      %47 = arith.subf %46, %45 : vector<2x128xf32>
      %cst_25 = arith.constant 0.000000e+00 : f32
      %48 = vector.broadcast %cst_25 : f32 to vector<2x128xf32>
      %49 = arith.cmpf olt, %19, %48 : vector<2x128xf32>
      %cst_26 = arith.constant 0.000000e+00 : f32
      %50 = vector.broadcast %cst_26 : f32 to vector<2x128xf32>
      %51 = arith.subf %50, %47 : vector<2x128xf32>
      %52 = arith.select %49, %51, %47 : vector<2x128xi1>, vector<2x128xf32>
      %cst_27 = arith.constant 1.000000e+00 : f32
      %53 = vector.broadcast %cst_27 : f32 to vector<2x128xf32>
      %54 = arith.addf %53, %52 : vector<2x128xf32>
      %55 = arith.mulf %17, %54 : vector<2x128xf32>
      %c0_28 = arith.constant 0 : index
      %c0_29 = arith.constant 0 : index
      %56 = vector.load %arg4[%c0_28, %c0_29] : memref<128x2xf32, #tpu.memory_space<vmem>>, vector<128x2xf32>
      %cst_30 = arith.constant dense<0.000000e+00> : vector<2x2xf32>
      %57 = tpu.matmul %55, %56, %cst_30 {dimension_numbers = #tpu.dot_dimension_numbers<[1], [0], [0], [1], [0, 0, 1, 1], [], []>} : vector<2x128xf32>, vector<128x2xf32>, vector<2x2xf32> -> vector<2x2xf32>
      %c0_31 = arith.constant 0 : index
      %c0_32 = arith.constant 0 : index
      %58 = vector.load %arg5[%c0_31, %c0_32] : memref<1x2xf32, #tpu.memory_space<vmem>>, vector<1x2xf32>
      %59 = vector.broadcast %58 : vector<1x2xf32> to vector<2x2xf32>
      %60 = arith.addf %57, %59 : vector<2x2xf32>
      %cst_33 = arith.constant dense<0xFF800000> : vector<2xf32>
      %61 = vector.multi_reduction <maximumf>, %60, %cst_33 [1] : vector<2x2xf32> to vector<2xf32>
      %62 = vector.shape_cast %61 : vector<2xf32> to vector<2x1xf32>
      %63 = vector.broadcast %62 : vector<2x1xf32> to vector<2x2xf32>
      %64 = arith.subf %60, %63 : vector<2x2xf32>
      %65 = math.exp %64 : vector<2x2xf32>
      %cst_34 = arith.constant dense<0.000000e+00> : vector<2xf32>
      %66 = vector.multi_reduction <add>, %65, %cst_34 [1] : vector<2x2xf32> to vector<2xf32>
      %67 = vector.shape_cast %66 : vector<2xf32> to vector<2x1xf32>
      %68 = vector.broadcast %67 : vector<2x1xf32> to vector<2x2xf32>
      %69 = arith.divf %65, %68 : vector<2x2xf32>
      %c0_35 = arith.constant 0 : index
      %c0_36 = arith.constant 0 : index
      %70 = vector.load %arg6[%c0_35, %c0_36] : memref<2x2xf32, #tpu.memory_space<vmem>>, vector<2x2xf32>
      tpu.vector_store %arg6[%c0_35, %c0_36], %69 {strides = array<i32>} : memref<2x2xf32, #tpu.memory_space<vmem>>, vector<2x2xf32>,
    } else {
    }
    return
  }
  func.func @transform_0(%arg0: i32) -> (i32, i32) {
    %c0_i32 = arith.constant 0 : i32
    %c0_i32_0 = arith.constant 0 : i32
    return %c0_i32, %arg0 : i32, i32
  }
  func.func @transform_1(%arg0: i32) -> (i32, i32) {
    %c0_i32 = arith.constant 0 : i32
    %c0_i32_0 = arith.constant 0 : i32
    return %arg0, %c0_i32 : i32, i32
  }
  func.func @transform_2(%arg0: i32) -> (i32, i32) {
    %c0_i32 = arith.constant 0 : i32
    %c0_i32_0 = arith.constant 0 : i32
    %c0_i32_1 = arith.constant 0 : i32
    return %c0_i32, %c0_i32_0 : i32, i32
  }
  func.func @transform_3(%arg0: i32) -> (i32, i32) {
    %c0_i32 = arith.constant 0 : i32
    %c0_i32_0 = arith.constant 0 : i32
    %c0_i32_1 = arith.constant 0 : i32
    return %c0_i32, %c0_i32_0 : i32, i32
  }
  func.func @transform_4(%arg0: i32) -> (i32, i32) {
    %c0_i32 = arith.constant 0 : i32
    %c0_i32_0 = arith.constant 0 : i32
    %c0_i32_1 = arith.constant 0 : i32
    return %c0_i32, %c0_i32_0 : i32, i32
  }
  func.func @transform_5(%arg0: i32) -> (i32, i32) {
    %c0_i32 = arith.constant 0 : i32
    %c0_i32_0 = arith.constant 0 : i32
    %c0_i32_1 = arith.constant 0 : i32
    return %c0_i32, %c0_i32_0 : i32, i32
  }
}

</mosaic_0001>

<llo_original>
// kernel: moe_block.2
$region0: #{moe_block.2}
  #allocation0 [shape = 'u32[]', space=smem, size = 0x4, offset = 0x4, fixed_abs, tag = 'smem constant byte address 0x4 - core index']
  #allocation1 [shape = 'u32[144,128]{1,0:T(1,128)}', space=vmem, size = 0x12000, scoped, tag = 'internal scratch']
  %s0 = inlined_call_operand.vmem [shape: f32[2,1024,196], index: 0, kind: input, shape index: {}]
  %s1 = inlined_call_operand.vmem [shape: f32[2,1024,196], index: 1, kind: input, shape index: {}]
  %s2 = inlined_call_operand.vmem [shape: f32[128,1024], index: 2, kind: input, shape index: {}]
  %s3 = inlined_call_operand.vmem [shape: f32[128,1024], index: 3, kind: input, shape index: {}]
  %s4 = inlined_call_operand.vmem [shape: f32[1,128], index: 4, kind: input, shape index: {}]
  %s5 = inlined_call_operand.vmem [shape: bf16[2,196,128], index: 5, kind: output, shape index: {}]
  %s6 = sld [smem:[#allocation0]]
  $region53: #{moe_block.2} parent=0
    _
  %s8 = ssub.s32 1, %s6
  %s9 = scalar_select 0, %s8, %s6
  loop: start=0, step=1, limit=4
  $region2: #{moe_block.2} parent=0 // loop_pre_header
    _
  $region3: #{moe_block.2} parent=0 // loop_header
    %s11 = sphi 0, %s15
    %p12 = scmp.ge.s32.totalorder %s11, 4
    %s21 = sphi 0, %s23
    %s24 = sphi 0, %s21
    %s25 = sphi 0, %s24
    %s41 = sphi 0, %s25
    %s47 = sphi 0, %s49
    %s50 = sphi 0, %s47
    %s51 = sphi 0, %s50
    %s67 = sphi 0, %s51
    %s71 = sphi 0, %s71
    %s73 = sphi 0, %s71
    %s74 = sphi 0, %s73
    %s88 = sphi 0, %s74
    %s92 = sphi 0, %s92
    %s94 = sphi 0, %s92
    %s95 = sphi 0, %s94
    %s109 = sphi 0, %s95
    %s113 = sphi 0, %s113
    %s115 = sphi 0, %s113
    %s116 = sphi 0, %s115
    %s130 = sphi 0, %s116
    %s136 = sphi 0, %s138
    %s139 = sphi 0, %s136
    %s140 = sphi 0, %s139
    %s156 = sphi 0, %s140
  $region4: #{moe_block.2} parent=0 // loop_header_branch
    %14 = sbr.rel (%p12) target = $region8
  $region5: #{moe_block.2} parent=0 // loop_body
    %s16 = ssub.s32 %s11, 1
    %s17 = ssub.s32 %s11, 2
    %s18 = sadd.s32 %s11, 1
    %s19 = ssub.s32 %s11, %s18
    %p20 = scmp.eq.s32.totalorder %s19, 0
    %s22 = sadd.s32 %s21, 1
    %s23 = scalar_select %p20, %s21, %s22
    %p26 = pneg %p20
    %p27 = scmp.eq.s32.totalorder %s11, 1
    %p28 = por %p26, %p27
    %p29 = scmp.ne.s32.totalorder %s21, %s24
    %p30 = scmp.eq.s32.totalorder %s11, 0
    %p31 = por %p29, %p30
    %p32 = scmp.ne.s32.totalorder %s21, %s24
    %p33 = scmp.eq.s32.totalorder %s16, 1
    %p34 = por %p32, %p33
    %p35 = scmp.ne.s32.totalorder %s24, %s25
    %p36 = scmp.eq.s32.totalorder %s16, 0
    %p37 = por %p35, %p36
    %p38 = scmp.ne.s32.totalorder %s24, %s25
    %p39 = scmp.eq.s32.totalorder %s17, 1
    %p40 = por %p38, %p39
    %p42 = scmp.ne.s32.totalorder %s25, %s41
    %p43 = scmp.eq.s32.totalorder %s17, 0
    %p44 = por %p42, %p43
    %s45 = ssub.s32 %s11, %s18
    %p46 = scmp.eq.s32.totalorder %s45, 0
    %s48 = sadd.s32 %s47, 1
    %s49 = scalar_select %p46, %s47, %s48
    %p52 = pneg %p46
    %p53 = scmp.eq.s32.totalorder %s11, 1
    %p54 = por %p52, %p53
    %p55 = scmp.ne.s32.totalorder %s47, %s50
    %p56 = scmp.eq.s32.totalorder %s11, 0
    %p57 = por %p55, %p56
    %p58 = scmp.ne.s32.totalorder %s47, %s50
    %p59 = scmp.eq.s32.totalorder %s16, 1
    %p60 = por %p58, %p59
    %p61 = scmp.ne.s32.totalorder %s50, %s51
    %p62 = scmp.eq.s32.totalorder %s16, 0
    %p63 = por %p61, %p62
    %p64 = scmp.ne.s32.totalorder %s50, %s51
    %p65 = scmp.eq.s32.totalorder %s17, 1
    %p66 = por %p64, %p65
    %p68 = scmp.ne.s32.totalorder %s51, %s67
    %p69 = scmp.eq.s32.totalorder %s17, 0
    %p70 = por %p68, %p69
    %s72 = sadd.s32 %s71, 1
    %p75 = scmp.eq.s32.totalorder %s11, 1
    %p76 = scmp.ne.s32.totalorder %s71, %s73
    %p77 = scmp.eq.s32.totalorder %s11, 0
    %p78 = por %p76, %p77
    %p79 = scmp.ne.s32.totalorder %s71, %s73
    %p80 = scmp.eq.s32.totalorder %s16, 1
    %p81 = por %p79, %p80
    %p82 = scmp.ne.s32.totalorder %s73, %s74
    %p83 = scmp.eq.s32.totalorder %s16, 0
    %p84 = por %p82, %p83
    %p85 = scmp.ne.s32.totalorder %s73, %s74
    %p86 = scmp.eq.s32.totalorder %s17, 1
    %p87 = por %p85, %p86
    %p89 = scmp.ne.s32.totalorder %s74, %s88
    %p90 = scmp.eq.s32.totalorder %s17, 0
    %p91 = por %p89, %p90
    %s93 = sadd.s32 %s92, 1
    %p96 = scmp.eq.s32.totalorder %s11, 1
    %p97 = scmp.ne.s32.totalorder %s92, %s94
    %p98 = scmp.eq.s32.totalorder %s11, 0
    %p99 = por %p97, %p98
    %p100 = scmp.ne.s32.totalorder %s92, %s94
    %p101 = scmp.eq.s32.totalorder %s16, 1
    %p102 = por %p100, %p101
    %p103 = scmp.ne.s32.totalorder %s94, %s95
    %p104 = scmp.eq.s32.totalorder %s16, 0
    %p105 = por %p103, %p104
    %p106 = scmp.ne.s32.totalorder %s94, %s95
    %p107 = scmp.eq.s32.totalorder %s17, 1
    %p108 = por %p106, %p107
    %p110 = scmp.ne.s32.totalorder %s95, %s109
    %p111 = scmp.eq.s32.totalorder %s17, 0
    %p112 = por %p110, %p111
    %s114 = sadd.s32 %s113, 1
    %p117 = scmp.eq.s32.totalorder %s11, 1
    %p118 = scmp.ne.s32.totalorder %s113, %s115
    %p119 = scmp.eq.s32.totalorder %s11, 0
    %p120 = por %p118, %p119
    %p121 = scmp.ne.s32.totalorder %s113, %s115
    %p122 = scmp.eq.s32.totalorder %s16, 1
    %p123 = por %p121, %p122
    %p124 = scmp.ne.s32.totalorder %s115, %s116
    %p125 = scmp.eq.s32.totalorder %s16, 0
    %p126 = por %p124, %p125
    %p127 = scmp.ne.s32.totalorder %s115, %s116
    %p128 = scmp.eq.s32.totalorder %s17, 1
    %p129 = por %p127, %p128
    %p131 = scmp.ne.s32.totalorder %s116, %s130
    %p132 = scmp.eq.s32.totalorder %s17, 0
    %p133 = por %p131, %p132
    %s134 = ssub.s32 %s11, %s18
    %p135 = scmp.eq.s32.totalorder %s134, 0
    %s137 = sadd.s32 %s136, 1
    %s138 = scalar_select %p135, %s136, %s137
    %p141 = pneg %p135
    %p142 = scmp.eq.s32.totalorder %s11, 1
    %p143 = por %p141, %p142
    %p144 = scmp.ne.s32.totalorder %s136, %s139
    %p145 = scmp.eq.s32.totalorder %s11, 0
    %p146 = por %p144, %p145
    %p147 = scmp.ne.s32.totalorder %s136, %s139
    %p148 = scmp.eq.s32.totalorder %s16, 1
    %p149 = por %p147, %p148
    %p150 = scmp.ne.s32.totalorder %s139, %s140
    %p151 = scmp.eq.s32.totalorder %s16, 0
    %p152 = por %p150, %p151
    %p153 = scmp.ne.s32.totalorder %s139, %s140
    %p154 = scmp.eq.s32.totalorder %s17, 1
    %p155 = por %p153, %p154
    %p157 = scmp.ne.s32.totalorder %s140, %s156
    %p158 = scmp.eq.s32.totalorder %s17, 0
    %p159 = por %p157, %p158
    %p160 = scmp.le.s32.totalorder 1, %s11
    %p161 = scmp.lt.s32.totalorder %s11, 3
    %p162 = pnand %p160, %p161
    %p163 = pneg %p162
    // Predicated region
    $region9: #{moe_block.2} parent=5 // pred_check
      _
    $region10: #{moe_block.2} parent=5 // pred_check_branch
      %165 = sbr.rel (%p162) target = $region12
    $region11: #{moe_block.2} parent=5 // pred_region
      %s166 = ssub.s32 %s11, 1
      // Predicated region
      $region13: #{moe_block.2} parent=11 // pred_check
        %p167 = pneg %p84
      $region14: #{moe_block.2} parent=11 // pred_check_branch
        %169 = sbr.rel (%p167) target = $region16
      $region15: #{moe_block.2} parent=11 // pred_region
        _
      $region16: #{moe_block.2} parent=11 // pred_fallthru
        _
      // Predicated region
      $region17: #{moe_block.2} parent=11 // pred_check
        %p170 = pneg %p105
      $region18: #{moe_block.2} parent=11 // pred_check_branch
        %172 = sbr.rel (%p170) target = $region20
      $region19: #{moe_block.2} parent=11 // pred_region
        _
      $region20: #{moe_block.2} parent=11 // pred_fallthru
        _
      // Predicated region
      $region21: #{moe_block.2} parent=11 // pred_check
        %p173 = pneg %p126
      $region22: #{moe_block.2} parent=11 // pred_check_branch
        %175 = sbr.rel (%p173) target = $region24
      $region23: #{moe_block.2} parent=11 // pred_region
        _
      $region24: #{moe_block.2} parent=11 // pred_fallthru
        _
    $region12: #{moe_block.2} parent=5 // pred_fallthru
      _
    %p176 = scmp.lt.s32.totalorder %s11, 2
    // Predicated region
    $region25: #{moe_block.2} parent=5 // pred_check
      %p177 = pneg %p176
    $region26: #{moe_block.2} parent=5 // pred_check_branch
      %179 = sbr.rel (%p177) target = $region28
    $region27: #{moe_block.2} parent=5 // pred_region
      // Predicated region
      $region29: #{moe_block.2} parent=27 // pred_check
        %p180 = pneg %p31
      $region30: #{moe_block.2} parent=27 // pred_check_branch
        %182 = sbr.rel (%p180) target = $region32
      $region31: #{moe_block.2} parent=27 // pred_region
        %p183 = scmp.lt.s32.totalorder %s11, 1
        %s184 = scalar_select %p183, %s11, 1
        %s185 = smul.addr %s184, 256
        %s186 = smul.addr %s185, 8
        %s187 = scalar_lea.vmem %s0, %s186
      $region32: #{moe_block.2} parent=27 // pred_fallthru
        _
      // Predicated region
      $region33: #{moe_block.2} parent=27 // pred_check
        %p188 = pneg %p57
      $region34: #{moe_block.2} parent=27 // pred_check_branch
        %190 = sbr.rel (%p188) target = $region36
      $region35: #{moe_block.2} parent=27 // pred_region
        %p191 = scmp.lt.s32.totalorder %s11, 1
        %s192 = scalar_select %p191, %s11, 1
        %s193 = smul.addr %s192, 256
        %s194 = smul.addr %s193, 8
        %s195 = scalar_lea.vmem %s1, %s194
      $region36: #{moe_block.2} parent=27 // pred_fallthru
        _
    $region28: #{moe_block.2} parent=5 // pred_fallthru
      _
    %p196 = scmp.le.s32.totalorder 1, %s11
    %p197 = scmp.lt.s32.totalorder %s11, 3
    %p198 = pnand %p196, %p197
    %p199 = pneg %p198
    // Predicated region
    $region37: #{moe_block.2} parent=5 // pred_check
      _
    $region38: #{moe_block.2} parent=5 // pred_check_branch
      %201 = sbr.rel (%p198) target = $region40
    $region39: #{moe_block.2} parent=5 // pred_region
      %s202 = ssub.s32 %s11, 1
      %p203 = scmp.lt.s32.totalorder %s16, 1
      %s204 = scalar_select %p203, %s16, 1
      %s205 = smul.addr %s204, 256
      %s206 = smul.addr %s205, 8
      %s207 = scalar_lea.vmem %s0, %s206
      %p208 = pneg %p37
      %p209 = pneg %p34
      %p210 = scmp.lt.s32.totalorder %s16, 1
      %s211 = scalar_select %p210, %s16, 1
      %s212 = smul.addr %s211, 256
      %s213 = smul.addr %s212, 8
      %s214 = scalar_lea.vmem %s1, %s213
      %p215 = pneg %p63
      %p216 = pneg %p60
      %p217 = pneg %p84
      %p218 = pneg %p81
      %p219 = pneg %p105
      %p220 = pneg %p102
      %p221 = pneg %p126
      %p222 = pneg %p123
      %p223 = pneg %p152
      %p224 = pneg %p149
      %p225 = scmp.lt.s32.totalorder %s16, 1
      %s226 = scalar_select %p225, %s16, 1
      %s227 = smul.addr %s226, 25
      %s228 = smul.addr %s227, 4
      %s229 = scalar_lea.vmem %s5, %s228
      %p230 = scmp.lt.s32.totalorder %s16, 1
      %s231 = scalar_select %p230, %s16, 1
      %s232 = smul.addr %s231, 256
      %s233 = smul.addr %s232, 8
      %s234 = scalar_lea.vmem %s0, %s233
      %p235 = scmp.lt.s32.totalorder %s16, 1
      %s236 = scalar_select %p235, %s16, 1
      %s237 = smul.addr %s236, 256
      %s238 = smul.addr %s237, 8
      %s239 = scalar_lea.vmem %s1, %s238
      %p240 = scmp.lt.s32.totalorder %s16, 1
      %s241 = scalar_select %p240, %s16, 1
      %s242 = smul.addr %s241, 25
      %s243 = smul.addr %s242, 4
      %s244 = scalar_lea.vmem %s5, %s243
      %v245 = vld [vmem:[%s2] sm:$0xff]
      %v246 = vld [vmem:[%s2 + $0x8] sm:$0xff]
      %v247 = vld [vmem:[%s2 + $0x10] sm:$0xff]
      %v248 = vld [vmem:[%s2 + $0x18] sm:$0xff]
      %v249 = vld [vmem:[%s2 + $0x20] sm:$0xff]
      %v250 = vld [vmem:[%s2 + $0x28] sm:$0xff]
      %v251 = vld [vmem:[%s2 + $0x30] sm:$0xff]
      %v252 = vld [vmem:[%s2 + $0x38] sm:$0xff]
      %v253 = vld [vmem:[%s2 + $0x40] sm:$0xff]
      %v254 = vld [vmem:[%s2 + $0x48] sm:$0xff]
      %v255 = vld [vmem:[%s2 + $0x50] sm:$0xff]
      %v256 = vld [vmem:[%s2 + $0x58] sm:$0xff]
      %v257 = vld [vmem:[%s2 + $0x60] sm:$0xff]
      %v258 = vld [vmem:[%s2 + $0x68] sm:$0xff]
      %v259 = vld [vmem:[%s2 + $0x70] sm:$0xff]
      %v260 = vld [vmem:[%s2 + $0x78] sm:$0xff]
      %v261 = vld [vmem:[%s2 + $0x80] sm:$0xff]
      %v262 = vld [vmem:[%s2 + $0x88] sm:$0xff]
      %v263 = vld [vmem:[%s2 + $0x90] sm:$0xff]
      %v264 = vld [vmem:[%s2 + $0x98] sm:$0xff]
      %v265 = vld [vmem:[%s2 + $0xa0] sm:$0xff]
      %v266 = vld [vmem:[%s2 + $0xa8] sm:$0xff]
      %v267 = vld [vmem:[%s2 + $0xb0] sm:$0xff]
      %v268 = vld [vmem:[%s2 + $0xb8] sm:$0xff]
      %v269 = vld [vmem:[%s2 + $0xc0] sm:$0xff]
      %v270 = vld [vmem:[%s2 + $0xc8] sm:$0xff]
      %v271 = vld [vmem:[%s2 + $0xd0] sm:$0xff]
      %v272 = vld [vmem:[%s2 + $0xd8] sm:$0xff]
      %v273 = vld [vmem:[%s2 + $0xe0] sm:$0xff]
      %v274 = vld [vmem:[%s2 + $0xe8] sm:$0xff]
      %v275 = vld [vmem:[%s2 + $0xf0] sm:$0xff]
      %v276 = vld [vmem:[%s2 + $0xf8] sm:$0xff]
      %v277 = vld [vmem:[%s2 + $0x100] sm:$0xff]
      %v278 = vld [vmem:[%s2 + $0x108] sm:$0xff]
      %v279 = vld [vmem:[%s2 + $0x110] sm:$0xff]
      %v280 = vld [vmem:[%s2 + $0x118] sm:$0xff]
      %v281 = vld [vmem:[%s2 + $0x120] sm:$0xff]
      %v282 = vld [vmem:[%s2 + $0x128] sm:$0xff]
      %v283 = vld [vmem:[%s2 + $0x130] sm:$0xff]
      %v284 = vld [vmem:[%s2 + $0x138] sm:$0xff]
      %v285 = vld [vmem:[%s2 + $0x140] sm:$0xff]
      %v286 = vld [vmem:[%s2 + $0x148] sm:$0xff]
      %v287 = vld [vmem:[%s2 + $0x150] sm:$0xff]
      %v288 = vld [vmem:[%s2 + $0x158] sm:$0xff]
      %v289 = vld [vmem:[%s2 + $0x160] sm:$0xff]
      %v290 = vld [vmem:[%s2 + $0x168] sm:$0xff]
      %v291 = vld [vmem:[%s2 + $0x170] sm:$0xff]
      %v292 = vld [vmem:[%s2 + $0x178] sm:$0xff]
      %v293 = vld [vmem:[%s2 + $0x180] sm:$0xff]
      %v294 = vld [vmem:[%s2 + $0x188] sm:$0xff]
      %v295 = vld [vmem:[%s2 + $0x190] sm:$0xff]
      %v296 = vld [vmem:[%s2 + $0x198] sm:$0xff]
      %v297 = vld [vmem:[%s2 + $0x1a0] sm:$0xff]
      %v298 = vld [vmem:[%s2 + $0x1a8] sm:$0xff]
      %v299 = vld [vmem:[%s2 + $0x1b0] sm:$0xff]
      %v300 = vld [vmem:[%s2 + $0x1b8] sm:$0xff]
      %v301 = vld [vmem:[%s2 + $0x1c0] sm:$0xff]
      %v302 = vld [vmem:[%s2 + $0x1c8] sm:$0xff]
      %v303 = vld [vmem:[%s2 + $0x1d0] sm:$0xff]
      %v304 = vld [vmem:[%s2 + $0x1d8] sm:$0xff]
      %v305 = vld [vmem:[%s2 + $0x1e0] sm:$0xff]
      %v306 = vld [vmem:[%s2 + $0x1e8] sm:$0xff]
      %v307 = vld [vmem:[%s2 + $0x1f0] sm:$0xff]
      %v308 = vld [vmem:[%s2 + $0x1f8] sm:$0xff]
      %v309 = vld [vmem:[%s2 + $0x200] sm:$0xff]
      %v310 = vld [vmem:[%s2 + $0x208] sm:$0xff]
      %v311 = vld [vmem:[%s2 + $0x210] sm:$0xff]
      %v312 = vld [vmem:[%s2 + $0x218] sm:$0xff]
      %v313 = vld [vmem:[%s2 + $0x220] sm:$0xff]
      %v314 = vld [vmem:[%s2 + $0x228] sm:$0xff]
      %v315 = vld [vmem:[%s2 + $0x230] sm:$0xff]
      %v316 = vld [vmem:[%s2 + $0x238] sm:$0xff]
      %v317 = vld [vmem:[%s2 + $0x240] sm:$0xff]
      %v318 = vld [vmem:[%s2 + $0x248] sm:$0xff]
      %v319 = vld [vmem:[%s2 + $0x250] sm:$0xff]
      %v320 = vld [vmem:[%s2 + $0x258] sm:$0xff]
      %v321 = vld [vmem:[%s2 + $0x260] sm:$0xff]
      %v322 = vld [vmem:[%s2 + $0x268] sm:$0xff]
      %v323 = vld [vmem:[%s2 + $0x270] sm:$0xff]
      %v324 = vld [vmem:[%s2 + $0x278] sm:$0xff]
      %v325 = vld [vmem:[%s2 + $0x280] sm:$0xff]
      %v326 = vld [vmem:[%s2 + $0x288] sm:$0xff]
      %v327 = vld [vmem:[%s2 + $0x290] sm:$0xff]
      %v328 = vld [vmem:[%s2 + $0x298] sm:$0xff]
      %v329 = vld [vmem:[%s2 + $0x2a0] sm:$0xff]
      %v330 = vld [vmem:[%s2 + $0x2a8] sm:$0xff]
      %v331 = vld [vmem:[%s2 + $0x2b0] sm:$0xff]
      %v332 = vld [vmem:[%s2 + $0x2b8] sm:$0xff]
      %v333 = vld [vmem:[%s2 + $0x2c0] sm:$0xff]
      %v334 = vld [vmem:[%s2 + $0x2c8] sm:$0xff]
      %v335 = vld [vmem:[%s2 + $0x2d0] sm:$0xff]
      %v336 = vld [vmem:[%s2 + $0x2d8] sm:$0xff]
      %v337 = vld [vmem:[%s2 + $0x2e0] sm:$0xff]
      %v338 = vld [vmem:[%s2 + $0x2e8] sm:$0xff]
      %v339 = vld [vmem:[%s2 + $0x2f0] sm:$0xff]
      %v340 = vld [vmem:[%s2 + $0x2f8] sm:$0xff]
      %v341 = vld [vmem:[%s2 + $0x300] sm:$0xff]
      %v342 = vld [vmem:[%s2 + $0x308] sm:$0xff]
      %v343 = vld [vmem:[%s2 + $0x310] sm:$0xff]
      %v344 = vld [vmem:[%s2 + $0x318] sm:$0xff]
      %v345 = vld [vmem:[%s2 + $0x320] sm:$0xff]
      %v346 = vld [vmem:[%s2 + $0x328] sm:$0xff]
      %v347 = vld [vmem:[%s2 + $0x330] sm:$0xff]
      %v348 = vld [vmem:[%s2 + $0x338] sm:$0xff]
      %v349 = vld [vmem:[%s2 + $0x340] sm:$0xff]
      %v350 = vld [vmem:[%s2 + $0x348] sm:$0xff]
      %v351 = vld [vmem:[%s2 + $0x350] sm:$0xff]
      %v352 = vld [vmem:[%s2 + $0x358] sm:$0xff]
      %v353 = vld [vmem:[%s2 + $0x360] sm:$0xff]
      %v354 = vld [vmem:[%s2 + $0x368] sm:$0xff]
      %v355 = vld [vmem:[%s2 + $0x370] sm:$0xff]
      %v356 = vld [vmem:[%s2 + $0x378] sm:$0xff]
      %v357 = vld [vmem:[%s2 + $0x380] sm:$0xff]
      %v358 = vld [vmem:[%s2 + $0x388] sm:$0xff]
      %v359 = vld [vmem:[%s2 + $0x390] sm:$0xff]
      %v360 = vld [vmem:[%s2 + $0x398] sm:$0xff]
      %v361 = vld [vmem:[%s2 + $0x3a0] sm:$0xff]
      %v362 = vld [vmem:[%s2 + $0x3a8] sm:$0xff]
      %v363 = vld [vmem:[%s2 + $0x3b0] sm:$0xff]
      %v364 = vld [vmem:[%s2 + $0x3b8] sm:$0xff]
      %v365 = vld [vmem:[%s2 + $0x3c0] sm:$0xff]
      %v366 = vld [vmem:[%s2 + $0x3c8] sm:$0xff]
      %v367 = vld [vmem:[%s2 + $0x3d0] sm:$0xff]
      %v368 = vld [vmem:[%s2 + $0x3d8] sm:$0xff]
      %v369 = vld [vmem:[%s2 + $0x3e0] sm:$0xff]
      %v370 = vld [vmem:[%s2 + $0x3e8] sm:$0xff]
      %v371 = vld [vmem:[%s2 + $0x3f0] sm:$0xff]
      %v372 = vld [vmem:[%s2 + $0x3f8] sm:$0xff]
      %v373 = vld [vmem:[%s234] sm:$0xff]
      %v374 = vld [vmem:[%s234 + $0x8] sm:$0xff]
      %v375 = vld [vmem:[%s234 + $0x10] sm:$0xff]
      %v376 = vld [vmem:[%s234 + $0x18] sm:$0xff]
      %v377 = vld [vmem:[%s234 + $0x20] sm:$0xff]
      %v378 = vld [vmem:[%s234 + $0x28] sm:$0xff]
      %v379 = vld [vmem:[%s234 + $0x30] sm:$0xff]
      %v380 = vld [vmem:[%s234 + $0x38] sm:$0xff]
      %v381 = vld [vmem:[%s234 + $0x40] sm:$0xff]
      %v382 = vld [vmem:[%s234 + $0x48] sm:$0xff]
      %v383 = vld [vmem:[%s234 + $0x50] sm:$0xff]
      %v384 = vld [vmem:[%s234 + $0x58] sm:$0xff]
      %v385 = vld [vmem:[%s234 + $0x60] sm:$0xff]
      %v386 = vld [vmem:[%s234 + $0x68] sm:$0xff]
      %v387 = vld [vmem:[%s234 + $0x70] sm:$0xff]
      %v388 = vld [vmem:[%s234 + $0x78] sm:$0xff]
      %v389 = vld [vmem:[%s234 + $0x80] sm:$0xff]
      %v390 = vld [vmem:[%s234 + $0x88] sm:$0xff]
      %v391 = vld [vmem:[%s234 + $0x90] sm:$0xff]
      %v392 = vld [vmem:[%s234 + $0x98] sm:$0xff]
      %v393 = vld [vmem:[%s234 + $0xa0] sm:$0xff]
      %v394 = vld [vmem:[%s234 + $0xa8] sm:$0xff]
      %v395 = vld [vmem:[%s234 + $0xb0] sm:$0xff]
      %v396 = vld [vmem:[%s234 + $0xb8] sm:$0xff]
      %v397 = vld [vmem:[%s234 + $0xc0] sm:$0xff]
      %v398 = vld [vmem:[%s234 + $0xc8] sm:$0xff]
      %v399 = vld [vmem:[%s234 + $0xd0] sm:$0xff]
      %v400 = vld [vmem:[%s234 + $0xd8] sm:$0xff]
      %v401 = vld [vmem:[%s234 + $0xe0] sm:$0xff]
      %v402 = vld [vmem:[%s234 + $0xe8] sm:$0xff]
      %v403 = vld [vmem:[%s234 + $0xf0] sm:$0xff]
      %v404 = vld [vmem:[%s234 + $0xf8] sm:$0xff]
      %v405 = vld [vmem:[%s234 + $0x100] sm:$0xff]
      %v406 = vld [vmem:[%s234 + $0x108] sm:$0xff]
      %v407 = vld [vmem:[%s234 + $0x110] sm:$0xff]
      %v408 = vld [vmem:[%s234 + $0x118] sm:$0xff]
      %v409 = vld [vmem:[%s234 + $0x120] sm:$0xff]
      %v410 = vld [vmem:[%s234 + $0x128] sm:$0xff]
      %v411 = vld [vmem:[%s234 + $0x130] sm:$0xff]
      %v412 = vld [vmem:[%s234 + $0x138] sm:$0xff]
      %v413 = vld [vmem:[%s234 + $0x140] sm:$0xff]
      %v414 = vld [vmem:[%s234 + $0x148] sm:$0xff]
      %v415 = vld [vmem:[%s234 + $0x150] sm:$0xff]
      %v416 = vld [vmem:[%s234 + $0x158] sm:$0xff]
      %v417 = vld [vmem:[%s234 + $0x160] sm:$0xff]
      %v418 = vld [vmem:[%s234 + $0x168] sm:$0xff]
      %v419 = vld [vmem:[%s234 + $0x170] sm:$0xff]
      %v420 = vld [vmem:[%s234 + $0x178] sm:$0xff]
      %v421 = vld [vmem:[%s234 + $0x180] sm:$0xff]
      %v422 = vld [vmem:[%s234 + $0x188] sm:$0xff]
      %v423 = vld [vmem:[%s234 + $0x190] sm:$0xff]
      %v424 = vld [vmem:[%s234 + $0x198] sm:$0xff]
      %v425 = vld [vmem:[%s234 + $0x1a0] sm:$0xff]
      %v426 = vld [vmem:[%s234 + $0x1a8] sm:$0xff]
      %v427 = vld [vmem:[%s234 + $0x1b0] sm:$0xff]
      %v428 = vld [vmem:[%s234 + $0x1b8] sm:$0xff]
      %v429 = vld [vmem:[%s234 + $0x1c0] sm:$0xff]
      %v430 = vld [vmem:[%s234 + $0x1c8] sm:$0xff]
      %v431 = vld [vmem:[%s234 + $0x1d0] sm:$0xff]
      %v432 = vld [vmem:[%s234 + $0x1d8] sm:$0xff]
      %v433 = vld [vmem:[%s234 + $0x1e0] sm:$0xff]
      %v434 = vld [vmem:[%s234 + $0x1e8] sm:$0xff]
      %v435 = vld [vmem:[%s234 + $0x1f0] sm:$0xff]
      %v436 = vld [vmem:[%s234 + $0x1f8] sm:$0xff]
      %v437 = vld [vmem:[%s234 + $0x200] sm:$0xff]
      %v438 = vld [vmem:[%s234 + $0x208] sm:$0xff]
      %v439 = vld [vmem:[%s234 + $0x210] sm:$0xff]
      %v440 = vld [vmem:[%s234 + $0x218] sm:$0xff]
      %v441 = vld [vmem:[%s234 + $0x220] sm:$0xff]
      %v442 = vld [vmem:[%s234 + $0x228] sm:$0xff]
      %v443 = vld [vmem:[%s234 + $0x230] sm:$0xff]
      %v444 = vld [vmem:[%s234 + $0x238] sm:$0xff]
      %v445 = vld [vmem:[%s234 + $0x240] sm:$0xff]
      %v446 = vld [vmem:[%s234 + $0x248] sm:$0xff]
      %v447 = vld [vmem:[%s234 + $0x250] sm:$0xff]
      %v448 = vld [vmem:[%s234 + $0x258] sm:$0xff]
      %v449 = vld [vmem:[%s234 + $0x260] sm:$0xff]
      %v450 = vld [vmem:[%s234 + $0x268] sm:$0xff]
      %v451 = vld [vmem:[%s234 + $0x270] sm:$0xff]
      %v452 = vld [vmem:[%s234 + $0x278] sm:$0xff]
      %v453 = vld [vmem:[%s234 + $0x280] sm:$0xff]
      %v454 = vld [vmem:[%s234 + $0x288] sm:$0xff]
      %v455 = vld [vmem:[%s234 + $0x290] sm:$0xff]
      %v456 = vld [vmem:[%s234 + $0x298] sm:$0xff]
      %v457 = vld [vmem:[%s234 + $0x2a0] sm:$0xff]
      %v458 = vld [vmem:[%s234 + $0x2a8] sm:$0xff]
      %v459 = vld [vmem:[%s234 + $0x2b0] sm:$0xff]
      %v460 = vld [vmem:[%s234 + $0x2b8] sm:$0xff]
      %v461 = vld [vmem:[%s234 + $0x2c0] sm:$0xff]
      %v462 = vld [vmem:[%s234 + $0x2c8] sm:$0xff]
      %v463 = vld [vmem:[%s234 + $0x2d0] sm:$0xff]
      %v464 = vld [vmem:[%s234 + $0x2d8] sm:$0xff]
      %v465 = vld [vmem:[%s234 + $0x2e0] sm:$0xff]
      %v466 = vld [vmem:[%s234 + $0x2e8] sm:$0xff]
      %v467 = vld [vmem:[%s234 + $0x2f0] sm:$0xff]
      %v468 = vld [vmem:[%s234 + $0x2f8] sm:$0xff]
      %v469 = vld [vmem:[%s234 + $0x300] sm:$0xff]
      %v470 = vld [vmem:[%s234 + $0x308] sm:$0xff]
      %v471 = vld [vmem:[%s234 + $0x310] sm:$0xff]
      %v472 = vld [vmem:[%s234 + $0x318] sm:$0xff]
      %v473 = vld [vmem:[%s234 + $0x320] sm:$0xff]
      %v474 = vld [vmem:[%s234 + $0x328] sm:$0xff]
      %v475 = vld [vmem:[%s234 + $0x330] sm:$0xff]
      %v476 = vld [vmem:[%s234 + $0x338] sm:$0xff]
      %v477 = vld [vmem:[%s234 + $0x340] sm:$0xff]
      %v478 = vld [vmem:[%s234 + $0x348] sm:$0xff]
      %v479 = vld [vmem:[%s234 + $0x350] sm:$0xff]
      %v480 = vld [vmem:[%s234 + $0x358] sm:$0xff]
      %v481 = vld [vmem:[%s234 + $0x360] sm:$0xff]
      %v482 = vld [vmem:[%s234 + $0x368] sm:$0xff]
      %v483 = vld [vmem:[%s234 + $0x370] sm:$0xff]
      %v484 = vld [vmem:[%s234 + $0x378] sm:$0xff]
      %v485 = vld [vmem:[%s234 + $0x380] sm:$0xff]
      %v486 = vld [vmem:[%s234 + $0x388] sm:$0xff]
      %v487 = vld [vmem:[%s234 + $0x390] sm:$0xff]
      %v488 = vld [vmem:[%s234 + $0x398] sm:$0xff]
      %v489 = vld [vmem:[%s234 + $0x3a0] sm:$0xff]
      %v490 = vld [vmem:[%s234 + $0x3a8] sm:$0xff]
      %v491 = vld [vmem:[%s234 + $0x3b0] sm:$0xff]
      %v492 = vld [vmem:[%s234 + $0x3b8] sm:$0xff]
      %v493 = vld [vmem:[%s234 + $0x3c0] sm:$0xff]
      %v494 = vld [vmem:[%s234 + $0x3c8] sm:$0xff]
      %v495 = vld [vmem:[%s234 + $0x3d0] sm:$0xff]
      %v496 = vld [vmem:[%s234 + $0x3d8] sm:$0xff]
      %v497 = vld [vmem:[%s234 + $0x3e0] sm:$0xff]
      %v498 = vld [vmem:[%s234 + $0x3e8] sm:$0xff]
      %v499 = vld [vmem:[%s234 + $0x3f0] sm:$0xff]
      %v500 = vld [vmem:[%s234 + $0x3f8] sm:$0xff]
      %v501 = vld [vmem:[%s234 + $0x400] sm:$0xff]
      %v502 = vld [vmem:[%s234 + $0x408] sm:$0xff]
      %v503 = vld [vmem:[%s234 + $0x410] sm:$0xff]
      %v504 = vld [vmem:[%s234 + $0x418] sm:$0xff]
      %v505 = vld [vmem:[%s234 + $0x420] sm:$0xff]
      %v506 = vld [vmem:[%s234 + $0x428] sm:$0xff]
      %v507 = vld [vmem:[%s234 + $0x430] sm:$0xff]
      %v508 = vld [vmem:[%s234 + $0x438] sm:$0xff]
      %v509 = vld [vmem:[%s234 + $0x440] sm:$0xff]
      %v510 = vld [vmem:[%s234 + $0x448] sm:$0xff]
      %v511 = vld [vmem:[%s234 + $0x450] sm:$0xff]
      %v512 = vld [vmem:[%s234 + $0x458] sm:$0xff]
      %v513 = vld [vmem:[%s234 + $0x460] sm:$0xff]
      %v514 = vld [vmem:[%s234 + $0x468] sm:$0xff]
      %v515 = vld [vmem:[%s234 + $0x470] sm:$0xff]
      %v516 = vld [vmem:[%s234 + $0x478] sm:$0xff]
      %v517 = vld [vmem:[%s234 + $0x480] sm:$0xff]
      %v518 = vld [vmem:[%s234 + $0x488] sm:$0xff]
      %v519 = vld [vmem:[%s234 + $0x490] sm:$0xff]
      %v520 = vld [vmem:[%s234 + $0x498] sm:$0xff]
      %v521 = vld [vmem:[%s234 + $0x4a0] sm:$0xff]
      %v522 = vld [vmem:[%s234 + $0x4a8] sm:$0xff]
      %v523 = vld [vmem:[%s234 + $0x4b0] sm:$0xff]
      %v524 = vld [vmem:[%s234 + $0x4b8] sm:$0xff]
      %v525 = vld [vmem:[%s234 + $0x4c0] sm:$0xff]
      %v526 = vld [vmem:[%s234 + $0x4c8] sm:$0xff]
      %v527 = vld [vmem:[%s234 + $0x4d0] sm:$0xff]
      %v528 = vld [vmem:[%s234 + $0x4d8] sm:$0xff]
      %v529 = vld [vmem:[%s234 + $0x4e0] sm:$0xff]
      %v530 = vld [vmem:[%s234 + $0x4e8] sm:$0xff]
      %v531 = vld [vmem:[%s234 + $0x4f0] sm:$0xff]
      %v532 = vld [vmem:[%s234 + $0x4f8] sm:$0xff]
      %v533 = vld [vmem:[%s234 + $0x500] sm:$0xff]
      %v534 = vld [vmem:[%s234 + $0x508] sm:$0xff]
      %v535 = vld [vmem:[%s234 + $0x510] sm:$0xff]
      %v536 = vld [vmem:[%s234 + $0x518] sm:$0xff]
      %v537 = vld [vmem:[%s234 + $0x520] sm:$0xff]
      %v538 = vld [vmem:[%s234 + $0x528] sm:$0xff]
      %v539 = vld [vmem:[%s234 + $0x530] sm:$0xff]
      %v540 = vld [vmem:[%s234 + $0x538] sm:$0xff]
      %v541 = vld [vmem:[%s234 + $0x540] sm:$0xff]
      %v542 = vld [vmem:[%s234 + $0x548] sm:$0xff]
      %v543 = vld [vmem:[%s234 + $0x550] sm:$0xff]
      %v544 = vld [vmem:[%s234 + $0x558] sm:$0xff]
      %v545 = vld [vmem:[%s234 + $0x560] sm:$0xff]
      %v546 = vld [vmem:[%s234 + $0x568] sm:$0xff]
      %v547 = vld [vmem:[%s234 + $0x570] sm:$0xff]
      %v548 = vld [vmem:[%s234 + $0x578] sm:$0xff]
      %v549 = vld [vmem:[%s234 + $0x580] sm:$0xff]
      %v550 = vld [vmem:[%s234 + $0x588] sm:$0xff]
      %v551 = vld [vmem:[%s234 + $0x590] sm:$0xff]
      %v552 = vld [vmem:[%s234 + $0x598] sm:$0xff]
      %v553 = vld [vmem:[%s234 + $0x5a0] sm:$0xff]
      %v554 = vld [vmem:[%s234 + $0x5a8] sm:$0xff]
      %v555 = vld [vmem:[%s234 + $0x5b0] sm:$0xff]
      %v556 = vld [vmem:[%s234 + $0x5b8] sm:$0xff]
      %v557 = vld [vmem:[%s234 + $0x5c0] sm:$0xff]
      %v558 = vld [vmem:[%s234 + $0x5c8] sm:$0xff]
      %v559 = vld [vmem:[%s234 + $0x5d0] sm:$0xff]
      %v560 = vld [vmem:[%s234 + $0x5d8] sm:$0xff]
      %v561 = vld [vmem:[%s234 + $0x5e0] sm:$0xff]
      %v562 = vld [vmem:[%s234 + $0x5e8] sm:$0xff]
      %v563 = vld [vmem:[%s234 + $0x5f0] sm:$0xff]
      %v564 = vld [vmem:[%s234 + $0x5f8] sm:$0xff]
      %v565 = vld [vmem:[%s234 + $0x600] sm:$0xff]
      %v566 = vld [vmem:[%s234 + $0x608] sm:$0xff]
      %v567 = vld [vmem:[%s234 + $0x610] sm:$0xff]
      %v568 = vld [vmem:[%s234 + $0x618] sm:$0xff]
      %v569 = vld [vmem:[%s234 + $0x620] sm:$0xff]
      %v570 = vld [vmem:[%s234 + $0x628] sm:$0xff]
      %v571 = vld [vmem:[%s234 + $0x630] sm:$0xff]
      %v572 = vld [vmem:[%s234 + $0x638] sm:$0xff]
      %v573 = vld [vmem:[%s234 + $0x640] sm:$0xff]
      %v574 = vld [vmem:[%s234 + $0x648] sm:$0xff]
      %v575 = vld [vmem:[%s234 + $0x650] sm:$0xff]
      %v576 = vld [vmem:[%s234 + $0x658] sm:$0xff]
      %v577 = vld [vmem:[%s234 + $0x660] sm:$0xff]
      %v578 = vld [vmem:[%s234 + $0x668] sm:$0xff]
      %v579 = vld [vmem:[%s234 + $0x670] sm:$0xff]
      %v580 = vld [vmem:[%s234 + $0x678] sm:$0xff]
      %v581 = vld [vmem:[%s234 + $0x680] sm:$0xff]
      %v582 = vld [vmem:[%s234 + $0x688] sm:$0xff]
      %v583 = vld [vmem:[%s234 + $0x690] sm:$0xff]
      %v584 = vld [vmem:[%s234 + $0x698] sm:$0xff]
      %v585 = vld [vmem:[%s234 + $0x6a0] sm:$0xff]
      %v586 = vld [vmem:[%s234 + $0x6a8] sm:$0xff]
      %v587 = vld [vmem:[%s234 + $0x6b0] sm:$0xff]
      %v588 = vld [vmem:[%s234 + $0x6b8] sm:$0xff]
      %v589 = vld [vmem:[%s234 + $0x6c0] sm:$0xff]
      %v590 = vld [vmem:[%s234 + $0x6c8] sm:$0xff]
      %v591 = vld [vmem:[%s234 + $0x6d0] sm:$0xff]
      %v592 = vld [vmem:[%s234 + $0x6d8] sm:$0xff]
      %v593 = vld [vmem:[%s234 + $0x6e0] sm:$0xff]
      %v594 = vld [vmem:[%s234 + $0x6e8] sm:$0xff]
      %v595 = vld [vmem:[%s234 + $0x6f0] sm:$0xff]
      %v596 = vld [vmem:[%s234 + $0x6f8] sm:$0xff]
      %v597 = vld [vmem:[%s234 + $0x700] sm:$0xff]
      %v598 = vld [vmem:[%s234 + $0x708] sm:$0xff]
      %v599 = vld [vmem:[%s234 + $0x710] sm:$0xff]
      %v600 = vld [vmem:[%s234 + $0x718] sm:$0xff]
      %v601 = vld [vmem:[%s234 + $0x720] sm:$0xff]
      %v602 = vld [vmem:[%s234 + $0x728] sm:$0xff]
      %v603 = vld [vmem:[%s234 + $0x730] sm:$0xff]
      %v604 = vld [vmem:[%s234 + $0x738] sm:$0xff]
      %v605 = vld [vmem:[%s234 + $0x740] sm:$0xff]
      %v606 = vld [vmem:[%s234 + $0x748] sm:$0xff]
      %v607 = vld [vmem:[%s234 + $0x750] sm:$0xff]
      %v608 = vld [vmem:[%s234 + $0x758] sm:$0xff]
      %v609 = vld [vmem:[%s234 + $0x760] sm:$0xff]
      %v610 = vld [vmem:[%s234 + $0x768] sm:$0xff]
      %v611 = vld [vmem:[%s234 + $0x770] sm:$0xff]
      %v612 = vld [vmem:[%s234 + $0x778] sm:$0xff]
      %v613 = vld [vmem:[%s234 + $0x780] sm:$0xff]
      %v614 = vld [vmem:[%s234 + $0x788] sm:$0xff]
      %v615 = vld [vmem:[%s234 + $0x790] sm:$0xff]
      %v616 = vld [vmem:[%s234 + $0x798] sm:$0xff]
      %v617 = vld [vmem:[%s234 + $0x7a0] sm:$0xff]
      %v618 = vld [vmem:[%s234 + $0x7a8] sm:$0xff]
      %v619 = vld [vmem:[%s234 + $0x7b0] sm:$0xff]
      %v620 = vld [vmem:[%s234 + $0x7b8] sm:$0xff]
      %v621 = vld [vmem:[%s234 + $0x7c0] sm:$0xff]
      %v622 = vld [vmem:[%s234 + $0x7c8] sm:$0xff]
      %v623 = vld [vmem:[%s234 + $0x7d0] sm:$0xff]
      %v624 = vld [vmem:[%s234 + $0x7d8] sm:$0xff]
      %v625 = vld [vmem:[%s234 + $0x7e0] sm:$0xff]
      %v626 = vld [vmem:[%s234 + $0x7e8] sm:$0xff]
      %v627 = vld [vmem:[%s234 + $0x7f0] sm:$0xff]
      %v628 = vld [vmem:[%s234 + $0x7f8] sm:$0xff]
      %v629 = vld [vmem:[%s3] sm:$0xff]
      %v630 = vld [vmem:[%s3 + $0x8] sm:$0xff]
      %v631 = vld [vmem:[%s3 + $0x10] sm:$0xff]
      %v632 = vld [vmem:[%s3 + $0x18] sm:$0xff]
      %v633 = vld [vmem:[%s3 + $0x20] sm:$0xff]
      %v634 = vld [vmem:[%s3 + $0x28] sm:$0xff]
      %v635 = vld [vmem:[%s3 + $0x30] sm:$0xff]
      %v636 = vld [vmem:[%s3 + $0x38] sm:$0xff]
      %v637 = vld [vmem:[%s3 + $0x40] sm:$0xff]
      %v638 = vld [vmem:[%s3 + $0x48] sm:$0xff]
      %v639 = vld [vmem:[%s3 + $0x50] sm:$0xff]
      %v640 = vld [vmem:[%s3 + $0x58] sm:$0xff]
      %v641 = vld [vmem:[%s3 + $0x60] sm:$0xff]
      %v642 = vld [vmem:[%s3 + $0x68] sm:$0xff]
      %v643 = vld [vmem:[%s3 + $0x70] sm:$0xff]
      %v644 = vld [vmem:[%s3 + $0x78] sm:$0xff]
      %v645 = vld [vmem:[%s3 + $0x80] sm:$0xff]
      %v646 = vld [vmem:[%s3 + $0x88] sm:$0xff]
      %v647 = vld [vmem:[%s3 + $0x90] sm:$0xff]
      %v648 = vld [vmem:[%s3 + $0x98] sm:$0xff]
      %v649 = vld [vmem:[%s3 + $0xa0] sm:$0xff]
      %v650 = vld [vmem:[%s3 + $0xa8] sm:$0xff]
      %v651 = vld [vmem:[%s3 + $0xb0] sm:$0xff]
      %v652 = vld [vmem:[%s3 + $0xb8] sm:$0xff]
      %v653 = vld [vmem:[%s3 + $0xc0] sm:$0xff]
      %v654 = vld [vmem:[%s3 + $0xc8] sm:$0xff]
      %v655 = vld [vmem:[%s3 + $0xd0] sm:$0xff]
      %v656 = vld [vmem:[%s3 + $0xd8] sm:$0xff]
      %v657 = vld [vmem:[%s3 + $0xe0] sm:$0xff]
      %v658 = vld [vmem:[%s3 + $0xe8] sm:$0xff]
      %v659 = vld [vmem:[%s3 + $0xf0] sm:$0xff]
      %v660 = vld [vmem:[%s3 + $0xf8] sm:$0xff]
      %v661 = vld [vmem:[%s3 + $0x100] sm:$0xff]
      %v662 = vld [vmem:[%s3 + $0x108] sm:$0xff]
      %v663 = vld [vmem:[%s3 + $0x110] sm:$0xff]
      %v664 = vld [vmem:[%s3 + $0x118] sm:$0xff]
      %v665 = vld [vmem:[%s3 + $0x120] sm:$0xff]
      %v666 = vld [vmem:[%s3 + $0x128] sm:$0xff]
      %v667 = vld [vmem:[%s3 + $0x130] sm:$0xff]
      %v668 = vld [vmem:[%s3 + $0x138] sm:$0xff]
      %v669 = vld [vmem:[%s3 + $0x140] sm:$0xff]
      %v670 = vld [vmem:[%s3 + $0x148] sm:$0xff]
      %v671 = vld [vmem:[%s3 + $0x150] sm:$0xff]
      %v672 = vld [vmem:[%s3 + $0x158] sm:$0xff]
      %v673 = vld [vmem:[%s3 + $0x160] sm:$0xff]
      %v674 = vld [vmem:[%s3 + $0x168] sm:$0xff]
      %v675 = vld [vmem:[%s3 + $0x170] sm:$0xff]
      %v676 = vld [vmem:[%s3 + $0x178] sm:$0xff]
      %v677 = vld [vmem:[%s3 + $0x180] sm:$0xff]
      %v678 = vld [vmem:[%s3 + $0x188] sm:$0xff]
      %v679 = vld [vmem:[%s3 + $0x190] sm:$0xff]
      %v680 = vld [vmem:[%s3 + $0x198] sm:$0xff]
      %v681 = vld [vmem:[%s3 + $0x1a0] sm:$0xff]
      %v682 = vld [vmem:[%s3 + $0x1a8] sm:$0xff]
      %v683 = vld [vmem:[%s3 + $0x1b0] sm:$0xff]
      %v684 = vld [vmem:[%s3 + $0x1b8] sm:$0xff]
      %v685 = vld [vmem:[%s3 + $0x1c0] sm:$0xff]
      %v686 = vld [vmem:[%s3 + $0x1c8] sm:$0xff]
      %v687 = vld [vmem:[%s3 + $0x1d0] sm:$0xff]
      %v688 = vld [vmem:[%s3 + $0x1d8] sm:$0xff]
      %v689 = vld [vmem:[%s3 + $0x1e0] sm:$0xff]
      %v690 = vld [vmem:[%s3 + $0x1e8] sm:$0xff]
      %v691 = vld [vmem:[%s3 + $0x1f0] sm:$0xff]
      %v692 = vld [vmem:[%s3 + $0x1f8] sm:$0xff]
      %v693 = vld [vmem:[%s3 + $0x200] sm:$0xff]
      %v694 = vld [vmem:[%s3 + $0x208] sm:$0xff]
      %v695 = vld [vmem:[%s3 + $0x210] sm:$0xff]
      %v696 = vld [vmem:[%s3 + $0x218] sm:$0xff]
      %v697 = vld [vmem:[%s3 + $0x220] sm:$0xff]
      %v698 = vld [vmem:[%s3 + $0x228] sm:$0xff]
      %v699 = vld [vmem:[%s3 + $0x230] sm:$0xff]
      %v700 = vld [vmem:[%s3 + $0x238] sm:$0xff]
      %v701 = vld [vmem:[%s3 + $0x240] sm:$0xff]
      %v702 = vld [vmem:[%s3 + $0x248] sm:$0xff]
      %v703 = vld [vmem:[%s3 + $0x250] sm:$0xff]
      %v704 = vld [vmem:[%s3 + $0x258] sm:$0xff]
      %v705 = vld [vmem:[%s3 + $0x260] sm:$0xff]
      %v706 = vld [vmem:[%s3 + $0x268] sm:$0xff]
      %v707 = vld [vmem:[%s3 + $0x270] sm:$0xff]
      %v708 = vld [vmem:[%s3 + $0x278] sm:$0xff]
      %v709 = vld [vmem:[%s3 + $0x280] sm:$0xff]
      %v710 = vld [vmem:[%s3 + $0x288] sm:$0xff]
      %v711 = vld [vmem:[%s3 + $0x290] sm:$0xff]
      %v712 = vld [vmem:[%s3 + $0x298] sm:$0xff]
      %v713 = vld [vmem:[%s3 + $0x2a0] sm:$0xff]
      %v714 = vld [vmem:[%s3 + $0x2a8] sm:$0xff]
      %v715 = vld [vmem:[%s3 + $0x2b0] sm:$0xff]
      %v716 = vld [vmem:[%s3 + $0x2b8] sm:$0xff]
      %v717 = vld [vmem:[%s3 + $0x2c0] sm:$0xff]
      %v718 = vld [vmem:[%s3 + $0x2c8] sm:$0xff]
      %v719 = vld [vmem:[%s3 + $0x2d0] sm:$0xff]
      %v720 = vld [vmem:[%s3 + $0x2d8] sm:$0xff]
      %v721 = vld [vmem:[%s3 + $0x2e0] sm:$0xff]
      %v722 = vld [vmem:[%s3 + $0x2e8] sm:$0xff]
      %v723 = vld [vmem:[%s3 + $0x2f0] sm:$0xff]
      %v724 = vld [vmem:[%s3 + $0x2f8] sm:$0xff]
      %v725 = vld [vmem:[%s3 + $0x300] sm:$0xff]
      %v726 = vld [vmem:[%s3 + $0x308] sm:$0xff]
      %v727 = vld [vmem:[%s3 + $0x310] sm:$0xff]
      %v728 = vld [vmem:[%s3 + $0x318] sm:$0xff]
      %v729 = vld [vmem:[%s3 + $0x320] sm:$0xff]
      %v730 = vld [vmem:[%s3 + $0x328] sm:$0xff]
      %v731 = vld [vmem:[%s3 + $0x330] sm:$0xff]
      %v732 = vld [vmem:[%s3 + $0x338] sm:$0xff]
      %v733 = vld [vmem:[%s3 + $0x340] sm:$0xff]
      %v734 = vld [vmem:[%s3 + $0x348] sm:$0xff]
      %v735 = vld [vmem:[%s3 + $0x350] sm:$0xff]
      %v736 = vld [vmem:[%s3 + $0x358] sm:$0xff]
      %v737 = vld [vmem:[%s3 + $0x360] sm:$0xff]
      %v738 = vld [vmem:[%s3 + $0x368] sm:$0xff]
      %v739 = vld [vmem:[%s3 + $0x370] sm:$0xff]
      %v740 = vld [vmem:[%s3 + $0x378] sm:$0xff]
      %v741 = vld [vmem:[%s3 + $0x380] sm:$0xff]
      %v742 = vld [vmem:[%s3 + $0x388] sm:$0xff]
      %v743 = vld [vmem:[%s3 + $0x390] sm:$0xff]
      %v744 = vld [vmem:[%s3 + $0x398] sm:$0xff]
      %v745 = vld [vmem:[%s3 + $0x3a0] sm:$0xff]
      %v746 = vld [vmem:[%s3 + $0x3a8] sm:$0xff]
      %v747 = vld [vmem:[%s3 + $0x3b0] sm:$0xff]
      %v748 = vld [vmem:[%s3 + $0x3b8] sm:$0xff]
      %v749 = vld [vmem:[%s3 + $0x3c0] sm:$0xff]
      %v750 = vld [vmem:[%s3 + $0x3c8] sm:$0xff]
      %v751 = vld [vmem:[%s3 + $0x3d0] sm:$0xff]
      %v752 = vld [vmem:[%s3 + $0x3d8] sm:$0xff]
      %v753 = vld [vmem:[%s3 + $0x3e0] sm:$0xff]
      %v754 = vld [vmem:[%s3 + $0x3e8] sm:$0xff]
      %v755 = vld [vmem:[%s3 + $0x3f0] sm:$0xff]
      %v756 = vld [vmem:[%s3 + $0x3f8] sm:$0xff]
      %v757 = vld [vmem:[%s239] sm:$0xff]
      %v758 = vld [vmem:[%s239 + $0x8] sm:$0xff]
      %v759 = vld [vmem:[%s239 + $0x10] sm:$0xff]
      %v760 = vld [vmem:[%s239 + $0x18] sm:$0xff]
      %v761 = vld [vmem:[%s239 + $0x20] sm:$0xff]
      %v762 = vld [vmem:[%s239 + $0x28] sm:$0xff]
      %v763 = vld [vmem:[%s239 + $0x30] sm:$0xff]
      %v764 = vld [vmem:[%s239 + $0x38] sm:$0xff]
      %v765 = vld [vmem:[%s239 + $0x40] sm:$0xff]
      %v766 = vld [vmem:[%s239 + $0x48] sm:$0xff]
      %v767 = vld [vmem:[%s239 + $0x50] sm:$0xff]
      %v768 = vld [vmem:[%s239 + $0x58] sm:$0xff]
      %v769 = vld [vmem:[%s239 + $0x60] sm:$0xff]
      %v770 = vld [vmem:[%s239 + $0x68] sm:$0xff]
      %v771 = vld [vmem:[%s239 + $0x70] sm:$0xff]
      %v772 = vld [vmem:[%s239 + $0x78] sm:$0xff]
      %v773 = vld [vmem:[%s239 + $0x80] sm:$0xff]
      %v774 = vld [vmem:[%s239 + $0x88] sm:$0xff]
      %v775 = vld [vmem:[%s239 + $0x90] sm:$0xff]
      %v776 = vld [vmem:[%s239 + $0x98] sm:$0xff]
      %v777 = vld [vmem:[%s239 + $0xa0] sm:$0xff]
      %v778 = vld [vmem:[%s239 + $0xa8] sm:$0xff]
      %v779 = vld [vmem:[%s239 + $0xb0] sm:$0xff]
      %v780 = vld [vmem:[%s239 + $0xb8] sm:$0xff]
      %v781 = vld [vmem:[%s239 + $0xc0] sm:$0xff]
      %v782 = vld [vmem:[%s239 + $0xc8] sm:$0xff]
      %v783 = vld [vmem:[%s239 + $0xd0] sm:$0xff]
      %v784 = vld [vmem:[%s239 + $0xd8] sm:$0xff]
      %v785 = vld [vmem:[%s239 + $0xe0] sm:$0xff]
      %v786 = vld [vmem:[%s239 + $0xe8] sm:$0xff]
      %v787 = vld [vmem:[%s239 + $0xf0] sm:$0xff]
      %v788 = vld [vmem:[%s239 + $0xf8] sm:$0xff]
      %v789 = vld [vmem:[%s239 + $0x100] sm:$0xff]
      %v790 = vld [vmem:[%s239 + $0x108] sm:$0xff]
      %v791 = vld [vmem:[%s239 + $0x110] sm:$0xff]
      %v792 = vld [vmem:[%s239 + $0x118] sm:$0xff]
      %v793 = vld [vmem:[%s239 + $0x120] sm:$0xff]
      %v794 = vld [vmem:[%s239 + $0x128] sm:$0xff]
      %v795 = vld [vmem:[%s239 + $0x130] sm:$0xff]
      %v796 = vld [vmem:[%s239 + $0x138] sm:$0xff]
      %v797 = vld [vmem:[%s239 + $0x140] sm:$0xff]
      %v798 = vld [vmem:[%s239 + $0x148] sm:$0xff]
      %v799 = vld [vmem:[%s239 + $0x150] sm:$0xff]
      %v800 = vld [vmem:[%s239 + $0x158] sm:$0xff]
      %v801 = vld [vmem:[%s239 + $0x160] sm:$0xff]
      %v802 = vld [vmem:[%s239 + $0x168] sm:$0xff]
      %v803 = vld [vmem:[%s239 + $0x170] sm:$0xff]
      %v804 = vld [vmem:[%s239 + $0x178] sm:$0xff]
      %v805 = vld [vmem:[%s239 + $0x180] sm:$0xff]
      %v806 = vld [vmem:[%s239 + $0x188] sm:$0xff]
      %v807 = vld [vmem:[%s239 + $0x190] sm:$0xff]
      %v808 = vld [vmem:[%s239 + $0x198] sm:$0xff]
      %v809 = vld [vmem:[%s239 + $0x1a0] sm:$0xff]
      %v810 = vld [vmem:[%s239 + $0x1a8] sm:$0xff]
      %v811 = vld [vmem:[%s239 + $0x1b0] sm:$0xff]
      %v812 = vld [vmem:[%s239 + $0x1b8] sm:$0xff]
      %v813 = vld [vmem:[%s239 + $0x1c0] sm:$0xff]
      %v814 = vld [vmem:[%s239 + $0x1c8] sm:$0xff]
      %v815 = vld [vmem:[%s239 + $0x1d0] sm:$0xff]
      %v816 = vld [vmem:[%s239 + $0x1d8] sm:$0xff]
      %v817 = vld [vmem:[%s239 + $0x1e0] sm:$0xff]
      %v818 = vld [vmem:[%s239 + $0x1e8] sm:$0xff]
      %v819 = vld [vmem:[%s239 + $0x1f0] sm:$0xff]
      %v820 = vld [vmem:[%s239 + $0x1f8] sm:$0xff]
      %v821 = vld [vmem:[%s239 + $0x200] sm:$0xff]
      %v822 = vld [vmem:[%s239 + $0x208] sm:$0xff]
      %v823 = vld [vmem:[%s239 + $0x210] sm:$0xff]
      %v824 = vld [vmem:[%s239 + $0x218] sm:$0xff]
      %v825 = vld [vmem:[%s239 + $0x220] sm:$0xff]
      %v826 = vld [vmem:[%s239 + $0x228] sm:$0xff]
      %v827 = vld [vmem:[%s239 + $0x230] sm:$0xff]
      %v828 = vld [vmem:[%s239 + $0x238] sm:$0xff]
      %v829 = vld [vmem:[%s239 + $0x240] sm:$0xff]
      %v830 = vld [vmem:[%s239 + $0x248] sm:$0xff]
      %v831 = vld [vmem:[%s239 + $0x250] sm:$0xff]
      %v832 = vld [vmem:[%s239 + $0x258] sm:$0xff]
      %v833 = vld [vmem:[%s239 + $0x260] sm:$0xff]
      %v834 = vld [vmem:[%s239 + $0x268] sm:$0xff]
      %v835 = vld [vmem:[%s239 + $0x270] sm:$0xff]
      %v836 = vld [vmem:[%s239 + $0x278] sm:$0xff]
      %v837 = vld [vmem:[%s239 + $0x280] sm:$0xff]
      %v838 = vld [vmem:[%s239 + $0x288] sm:$0xff]
      %v839 = vld [vmem:[%s239 + $0x290] sm:$0xff]
      %v840 = vld [vmem:[%s239 + $0x298] sm:$0xff]
      %v841 = vld [vmem:[%s239 + $0x2a0] sm:$0xff]
      %v842 = vld [vmem:[%s239 + $0x2a8] sm:$0xff]
      %v843 = vld [vmem:[%s239 + $0x2b0] sm:$0xff]
      %v844 = vld [vmem:[%s239 + $0x2b8] sm:$0xff]
      %v845 = vld [vmem:[%s239 + $0x2c0] sm:$0xff]
      %v846 = vld [vmem:[%s239 + $0x2c8] sm:$0xff]
      %v847 = vld [vmem:[%s239 + $0x2d0] sm:$0xff]
      %v848 = vld [vmem:[%s239 + $0x2d8] sm:$0xff]
      %v849 = vld [vmem:[%s239 + $0x2e0] sm:$0xff]
      %v850 = vld [vmem:[%s239 + $0x2e8] sm:$0xff]
      %v851 = vld [vmem:[%s239 + $0x2f0] sm:$0xff]
      %v852 = vld [vmem:[%s239 + $0x2f8] sm:$0xff]
      %v853 = vld [vmem:[%s239 + $0x300] sm:$0xff]
      %v854 = vld [vmem:[%s239 + $0x308] sm:$0xff]
      %v855 = vld [vmem:[%s239 + $0x310] sm:$0xff]
      %v856 = vld [vmem:[%s239 + $0x318] sm:$0xff]
      %v857 = vld [vmem:[%s239 + $0x320] sm:$0xff]
      %v858 = vld [vmem:[%s239 + $0x328] sm:$0xff]
      %v859 = vld [vmem:[%s239 + $0x330] sm:$0xff]
      %v860 = vld [vmem:[%s239 + $0x338] sm:$0xff]
      %v861 = vld [vmem:[%s239 + $0x340] sm:$0xff]
      %v862 = vld [vmem:[%s239 + $0x348] sm:$0xff]
      %v863 = vld [vmem:[%s239 + $0x350] sm:$0xff]
      %v864 = vld [vmem:[%s239 + $0x358] sm:$0xff]
      %v865 = vld [vmem:[%s239 + $0x360] sm:$0xff]
      %v866 = vld [vmem:[%s239 + $0x368] sm:$0xff]
      %v867 = vld [vmem:[%s239 + $0x370] sm:$0xff]
      %v868 = vld [vmem:[%s239 + $0x378] sm:$0xff]
      %v869 = vld [vmem:[%s239 + $0x380] sm:$0xff]
      %v870 = vld [vmem:[%s239 + $0x388] sm:$0xff]
      %v871 = vld [vmem:[%s239 + $0x390] sm:$0xff]
      %v872 = vld [vmem:[%s239 + $0x398] sm:$0xff]
      %v873 = vld [vmem:[%s239 + $0x3a0] sm:$0xff]
      %v874 = vld [vmem:[%s239 + $0x3a8] sm:$0xff]
      %v875 = vld [vmem:[%s239 + $0x3b0] sm:$0xff]
      %v876 = vld [vmem:[%s239 + $0x3b8] sm:$0xff]
      %v877 = vld [vmem:[%s239 + $0x3c0] sm:$0xff]
      %v878 = vld [vmem:[%s239 + $0x3c8] sm:$0xff]
      %v879 = vld [vmem:[%s239 + $0x3d0] sm:$0xff]
      %v880 = vld [vmem:[%s239 + $0x3d8] sm:$0xff]
      %v881 = vld [vmem:[%s239 + $0x3e0] sm:$0xff]
      %v882 = vld [vmem:[%s239 + $0x3e8] sm:$0xff]
      %v883 = vld [vmem:[%s239 + $0x3f0] sm:$0xff]
      %v884 = vld [vmem:[%s239 + $0x3f8] sm:$0xff]
      %v885 = vld [vmem:[%s239 + $0x400] sm:$0xff]
      %v886 = vld [vmem:[%s239 + $0x408] sm:$0xff]
      %v887 = vld [vmem:[%s239 + $0x410] sm:$0xff]
      %v888 = vld [vmem:[%s239 + $0x418] sm:$0xff]
      %v889 = vld [vmem:[%s239 + $0x420] sm:$0xff]
      %v890 = vld [vmem:[%s239 + $0x428] sm:$0xff]
      %v891 = vld [vmem:[%s239 + $0x430] sm:$0xff]
      %v892 = vld [vmem:[%s239 + $0x438] sm:$0xff]
      %v893 = vld [vmem:[%s239 + $0x440] sm:$0xff]
      %v894 = vld [vmem:[%s239 + $0x448] sm:$0xff]
      %v895 = vld [vmem:[%s239 + $0x450] sm:$0xff]
      %v896 = vld [vmem:[%s239 + $0x458] sm:$0xff]
      %v897 = vld [vmem:[%s239 + $0x460] sm:$0xff]
      %v898 = vld [vmem:[%s239 + $0x468] sm:$0xff]
      %v899 = vld [vmem:[%s239 + $0x470] sm:$0xff]
      %v900 = vld [vmem:[%s239 + $0x478] sm:$0xff]
      %v901 = vld [vmem:[%s239 + $0x480] sm:$0xff]
      %v902 = vld [vmem:[%s239 + $0x488] sm:$0xff]
      %v903 = vld [vmem:[%s239 + $0x490] sm:$0xff]
      %v904 = vld [vmem:[%s239 + $0x498] sm:$0xff]
      %v905 = vld [vmem:[%s239 + $0x4a0] sm:$0xff]
      %v906 = vld [vmem:[%s239 + $0x4a8] sm:$0xff]
      %v907 = vld [vmem:[%s239 + $0x4b0] sm:$0xff]
      %v908 = vld [vmem:[%s239 + $0x4b8] sm:$0xff]
      %v909 = vld [vmem:[%s239 + $0x4c0] sm:$0xff]
      %v910 = vld [vmem:[%s239 + $0x4c8] sm:$0xff]
      %v911 = vld [vmem:[%s239 + $0x4d0] sm:$0xff]
      %v912 = vld [vmem:[%s239 + $0x4d8] sm:$0xff]
      %v913 = vld [vmem:[%s239 + $0x4e0] sm:$0xff]
      %v914 = vld [vmem:[%s239 + $0x4e8] sm:$0xff]
      %v915 = vld [vmem:[%s239 + $0x4f0] sm:$0xff]
      %v916 = vld [vmem:[%s239 + $0x4f8] sm:$0xff]
      %v917 = vld [vmem:[%s239 + $0x500] sm:$0xff]
      %v918 = vld [vmem:[%s239 + $0x508] sm:$0xff]
      %v919 = vld [vmem:[%s239 + $0x510] sm:$0xff]
      %v920 = vld [vmem:[%s239 + $0x518] sm:$0xff]
      %v921 = vld [vmem:[%s239 + $0x520] sm:$0xff]
      %v922 = vld [vmem:[%s239 + $0x528] sm:$0xff]
      %v923 = vld [vmem:[%s239 + $0x530] sm:$0xff]
      %v924 = vld [vmem:[%s239 + $0x538] sm:$0xff]
      %v925 = vld [vmem:[%s239 + $0x540] sm:$0xff]
      %v926 = vld [vmem:[%s239 + $0x548] sm:$0xff]
      %v927 = vld [vmem:[%s239 + $0x550] sm:$0xff]
      %v928 = vld [vmem:[%s239 + $0x558] sm:$0xff]
      %v929 = vld [vmem:[%s239 + $0x560] sm:$0xff]
      %v930 = vld [vmem:[%s239 + $0x568] sm:$0xff]
      %v931 = vld [vmem:[%s239 + $0x570] sm:$0xff]
      %v932 = vld [vmem:[%s239 + $0x578] sm:$0xff]
      %v933 = vld [vmem:[%s239 + $0x580] sm:$0xff]
      %v934 = vld [vmem:[%s239 + $0x588] sm:$0xff]
      %v935 = vld [vmem:[%s239 + $0x590] sm:$0xff]
      %v936 = vld [vmem:[%s239 + $0x598] sm:$0xff]
      %v937 = vld [vmem:[%s239 + $0x5a0] sm:$0xff]
      %v938 = vld [vmem:[%s239 + $0x5a8] sm:$0xff]
      %v939 = vld [vmem:[%s239 + $0x5b0] sm:$0xff]
      %v940 = vld [vmem:[%s239 + $0x5b8] sm:$0xff]
      %v941 = vld [vmem:[%s239 + $0x5c0] sm:$0xff]
      %v942 = vld [vmem:[%s239 + $0x5c8] sm:$0xff]
      %v943 = vld [vmem:[%s239 + $0x5d0] sm:$0xff]
      %v944 = vld [vmem:[%s239 + $0x5d8] sm:$0xff]
      %v945 = vld [vmem:[%s239 + $0x5e0] sm:$0xff]
      %v946 = vld [vmem:[%s239 + $0x5e8] sm:$0xff]
      %v947 = vld [vmem:[%s239 + $0x5f0] sm:$0xff]
      %v948 = vld [vmem:[%s239 + $0x5f8] sm:$0xff]
      %v949 = vld [vmem:[%s239 + $0x600] sm:$0xff]
      %v950 = vld [vmem:[%s239 + $0x608] sm:$0xff]
      %v951 = vld [vmem:[%s239 + $0x610] sm:$0xff]
      %v952 = vld [vmem:[%s239 + $0x618] sm:$0xff]
      %v953 = vld [vmem:[%s239 + $0x620] sm:$0xff]
      %v954 = vld [vmem:[%s239 + $0x628] sm:$0xff]
      %v955 = vld [vmem:[%s239 + $0x630] sm:$0xff]
      %v956 = vld [vmem:[%s239 + $0x638] sm:$0xff]
      %v957 = vld [vmem:[%s239 + $0x640] sm:$0xff]
      %v958 = vld [vmem:[%s239 + $0x648] sm:$0xff]
      %v959 = vld [vmem:[%s239 + $0x650] sm:$0xff]
      %v960 = vld [vmem:[%s239 + $0x658] sm:$0xff]
      %v961 = vld [vmem:[%s239 + $0x660] sm:$0xff]
      %v962 = vld [vmem:[%s239 + $0x668] sm:$0xff]
      %v963 = vld [vmem:[%s239 + $0x670] sm:$0xff]
      %v964 = vld [vmem:[%s239 + $0x678] sm:$0xff]
      %v965 = vld [vmem:[%s239 + $0x680] sm:$0xff]
      %v966 = vld [vmem:[%s239 + $0x688] sm:$0xff]
      %v967 = vld [vmem:[%s239 + $0x690] sm:$0xff]
      %v968 = vld [vmem:[%s239 + $0x698] sm:$0xff]
      %v969 = vld [vmem:[%s239 + $0x6a0] sm:$0xff]
      %v970 = vld [vmem:[%s239 + $0x6a8] sm:$0xff]
      %v971 = vld [vmem:[%s239 + $0x6b0] sm:$0xff]
      %v972 = vld [vmem:[%s239 + $0x6b8] sm:$0xff]
      %v973 = vld [vmem:[%s239 + $0x6c0] sm:$0xff]
      %v974 = vld [vmem:[%s239 + $0x6c8] sm:$0xff]
      %v975 = vld [vmem:[%s239 + $0x6d0] sm:$0xff]
      %v976 = vld [vmem:[%s239 + $0x6d8] sm:$0xff]
      %v977 = vld [vmem:[%s239 + $0x6e0] sm:$0xff]
      %v978 = vld [vmem:[%s239 + $0x6e8] sm:$0xff]
      %v979 = vld [vmem:[%s239 + $0x6f0] sm:$0xff]
      %v980 = vld [vmem:[%s239 + $0x6f8] sm:$0xff]
      %v981 = vld [vmem:[%s239 + $0x700] sm:$0xff]
      %v982 = vld [vmem:[%s239 + $0x708] sm:$0xff]
      %v983 = vld [vmem:[%s239 + $0x710] sm:$0xff]
      %v984 = vld [vmem:[%s239 + $0x718] sm:$0xff]
      %v985 = vld [vmem:[%s239 + $0x720] sm:$0xff]
      %v986 = vld [vmem:[%s239 + $0x728] sm:$0xff]
      %v987 = vld [vmem:[%s239 + $0x730] sm:$0xff]
      %v988 = vld [vmem:[%s239 + $0x738] sm:$0xff]
      %v989 = vld [vmem:[%s239 + $0x740] sm:$0xff]
      %v990 = vld [vmem:[%s239 + $0x748] sm:$0xff]
      %v991 = vld [vmem:[%s239 + $0x750] sm:$0xff]
      %v992 = vld [vmem:[%s239 + $0x758] sm:$0xff]
      %v993 = vld [vmem:[%s239 + $0x760] sm:$0xff]
      %v994 = vld [vmem:[%s239 + $0x768] sm:$0xff]
      %v995 = vld [vmem:[%s239 + $0x770] sm:$0xff]
      %v996 = vld [vmem:[%s239 + $0x778] sm:$0xff]
      %v997 = vld [vmem:[%s239 + $0x780] sm:$0xff]
      %v998 = vld [vmem:[%s239 + $0x788] sm:$0xff]
      %v999 = vld [vmem:[%s239 + $0x790] sm:$0xff]
      %v1000 = vld [vmem:[%s239 + $0x798] sm:$0xff]
      %v1001 = vld [vmem:[%s239 + $0x7a0] sm:$0xff]
      %v1002 = vld [vmem:[%s239 + $0x7a8] sm:$0xff]
      %v1003 = vld [vmem:[%s239 + $0x7b0] sm:$0xff]
      %v1004 = vld [vmem:[%s239 + $0x7b8] sm:$0xff]
      %v1005 = vld [vmem:[%s239 + $0x7c0] sm:$0xff]
      %v1006 = vld [vmem:[%s239 + $0x7c8] sm:$0xff]
      %v1007 = vld [vmem:[%s239 + $0x7d0] sm:$0xff]
      %v1008 = vld [vmem:[%s239 + $0x7d8] sm:$0xff]
      %v1009 = vld [vmem:[%s239 + $0x7e0] sm:$0xff]
      %v1010 = vld [vmem:[%s239 + $0x7e8] sm:$0xff]
      %v1011 = vld [vmem:[%s239 + $0x7f0] sm:$0xff]
      %v1012 = vld [vmem:[%s239 + $0x7f8] sm:$0xff]
      %1013 = vmatprep.subr.mxu0 %v758
      %1014 = vmatpush1.msra.mxu0 %v757
      %1015 = vmatprep.subr.mxu0 %v760
      %1016 = vmatpush1.msra.mxu0 %v759
      %1017 = vmatprep.subr.mxu0 %v762
      %1018 = vmatpush1.msra.mxu0 %v761
      %1019 = vmatprep.subr.mxu0 %v764
      %1020 = vmatpush1.msra.mxu0 %v763
      %1021 = vmatprep.subr.mxu0 %v766
      %1022 = vmatpush1.msra.mxu0 %v765
      %1023 = vmatprep.subr.mxu0 %v768
      %1024 = vmatpush1.msra.mxu0 %v767
      %1025 = vmatprep.subr.mxu0 %v770
      %1026 = vmatpush1.msra.mxu0 %v769
      %1027 = vmatprep.subr.mxu0 %v772
      %1028 = vmatpush1.msra.mxu0 %v771
      %1029 = vmatprep.subr.mxu0 %v774
      %1030 = vmatpush1.msra.mxu0 %v773
      %1031 = vmatprep.subr.mxu0 %v776
      %1032 = vmatpush1.msra.mxu0 %v775
      %1033 = vmatprep.subr.mxu0 %v778
      %1034 = vmatpush1.msra.mxu0 %v777
      %1035 = vmatprep.subr.mxu0 %v780
      %1036 = vmatpush1.msra.mxu0 %v779
      %1037 = vmatprep.subr.mxu0 %v782
      %1038 = vmatpush1.msra.mxu0 %v781
      %1039 = vmatprep.subr.mxu0 %v784
      %1040 = vmatpush1.msra.mxu0 %v783
      %1041 = vmatprep.subr.mxu0 %v786
      %1042 = vmatpush1.msra.mxu0 %v785
      %1043 = vmatprep.subr.mxu0 %v788
      %1044 = vmatpush1.msra.mxu0 %v787
      %1045 = vmatprep.subr.mxu0 %v790
      %1046 = vmatpush1.msra.mxu0 %v789
      %1047 = vmatprep.subr.mxu0 %v792
      %1048 = vmatpush1.msra.mxu0 %v791
      %1049 = vmatprep.subr.mxu0 %v794
      %1050 = vmatpush1.msra.mxu0 %v793
      %1051 = vmatprep.subr.mxu0 %v796
      %1052 = vmatpush1.msra.mxu0 %v795
      %1053 = vmatprep.subr.mxu0 %v798
      %1054 = vmatpush1.msra.mxu0 %v797
      %1055 = vmatprep.subr.mxu0 %v800
      %1056 = vmatpush1.msra.mxu0 %v799
      %1057 = vmatprep.subr.mxu0 %v802
      %1058 = vmatpush1.msra.mxu0 %v801
      %1059 = vmatprep.subr.mxu0 %v804
      %1060 = vmatpush1.msra.mxu0 %v803
      %1061 = vmatprep.subr.mxu0 %v806
      %1062 = vmatpush1.msra.mxu0 %v805
      %1063 = vmatprep.subr.mxu0 %v808
      %1064 = vmatpush1.msra.mxu0 %v807
      %1065 = vmatprep.subr.mxu0 %v810
      %1066 = vmatpush1.msra.mxu0 %v809
      %1067 = vmatprep.subr.mxu0 %v812
      %1068 = vmatpush1.msra.mxu0 %v811
      %1069 = vmatprep.subr.mxu0 %v814
      %1070 = vmatpush1.msra.mxu0 %v813
      %1071 = vmatprep.subr.mxu0 %v816
      %1072 = vmatpush1.msra.mxu0 %v815
      %1073 = vmatprep.subr.mxu0 %v818
      %1074 = vmatpush1.msra.mxu0 %v817
      %1075 = vmatprep.subr.mxu0 %v820
      %1076 = vmatpush1.msra.mxu0 %v819
      %1077 = vmatprep.mubr.f32.mxu0 %v630
      %1078 = vmatmul.mubr.f32.gmra.mrb[0].mxu0 %v629
      %v1079 = vpop.f32.mrb[0].mxu0
      %v1080 = vadd.f32 0.0, %v1079
      %v1081 = vpop.f32.mrb[0].mxu0
      %v1082 = vadd.f32 0.0, %v1081
      %1083 = vmatprep.mubr.f32.mxu0 %v638
      %1084 = vmatmul.mubr.f32.gmra.mrb[0].mxu0 %v637
      %v1085 = vpop.f32.mrb[0].mxu0
      %v1086 = vadd.f32 0.0, %v1085
      %v1087 = vpop.f32.mrb[0].mxu0
      %v1088 = vadd.f32 0.0, %v1087
      %1089 = vmatprep.mubr.f32.mxu0 %v646
      %1090 = vmatmul.mubr.f32.gmra.mrb[0].mxu0 %v645
      %v1091 = vpop.f32.mrb[0].mxu0
      %v1092 = vadd.f32 0.0, %v1091
      %v1093 = vpop.f32.mrb[0].mxu0
      %v1094 = vadd.f32 0.0, %v1093
      %1095 = vmatprep.mubr.f32.mxu0 %v654
      %1096 = vmatmul.mubr.f32.gmra.mrb[0].mxu0 %v653
      %v1097 = vpop.f32.mrb[0].mxu0
      %v1098 = vadd.f32 0.0, %v1097
      %v1099 = vpop.f32.mrb[0].mxu0
      %v1100 = vadd.f32 0.0, %v1099
      %1101 = vmatprep.mubr.f32.mxu0 %v662
      %1102 = vmatmul.mubr.f32.gmra.mrb[0].mxu0 %v661
      %v1103 = vpop.f32.mrb[0].mxu0
      %v1104 = vadd.f32 0.0, %v1103
      %v1105 = vpop.f32.mrb[0].mxu0
      %v1106 = vadd.f32 0.0, %v1105
      %1107 = vmatprep.mubr.f32.mxu0 %v670
      %1108 = vmatmul.mubr.f32.gmra.mrb[0].mxu0 %v669
      %v1109 = vpop.f32.mrb[0].mxu0
      %v1110 = vadd.f32 0.0, %v1109
      %v1111 = vpop.f32.mrb[0].mxu0
      %v1112 = vadd.f32 0.0, %v1111
      %1113 = vmatprep.mubr.f32.mxu0 %v678
      %1114 = vmatmul.mubr.f32.gmra.mrb[0].mxu0 %v677
      %v1115 = vpop.f32.mrb[0].mxu0
      %v1116 = vadd.f32 0.0, %v1115
      %v1117 = vpop.f32.mrb[0].mxu0
      %v1118 = vadd.f32 0.0, %v1117
      %1119 = vmatprep.mubr.f32.mxu0 %v686
      %1120 = vmatmul.mubr.f32.gmra.mrb[0].mxu0 %v685
      %v1121 = vpop.f32.mrb[0].mxu0
      %v1122 = vadd.f32 0.0, %v1121
      %v1123 = vpop.f32.mrb[0].mxu0
      %v1124 = vadd.f32 0.0, %v1123
      %1125 = vmatprep.mubr.f32.mxu0 %v694
      %1126 = vmatmul.mubr.f32.gmra.mrb[0].mxu0 %v693
      %v1127 = vpop.f32.mrb[0].mxu0
      %v1128 = vadd.f32 0.0, %v1127
      %v1129 = vpop.f32.mrb[0].mxu0
      %v1130 = vadd.f32 0.0, %v1129
      %1131 = vmatprep.mubr.f32.mxu0 %v702
      %1132 = vmatmul.mubr.f32.gmra.mrb[0].mxu0 %v701
      %v1133 = vpop.f32.mrb[0].mxu0
      %v1134 = vadd.f32 0.0, %v1133
      %v1135 = vpop.f32.mrb[0].mxu0
      %v1136 = vadd.f32 0.0, %v1135
      %1137 = vmatprep.mubr.f32.mxu0 %v710
      %1138 = vmatmul.mubr.f32.gmra.mrb[0].mxu0 %v709
      %v1139 = vpop.f32.mrb[0].mxu0
      %v1140 = vadd.f32 0.0, %v1139
      %v1141 = vpop.f32.mrb[0].mxu0
      %v1142 = vadd.f32 0.0, %v1141
      %1143 = vmatprep.mubr.f32.mxu0 %v718
      %1144 = vmatmul.mubr.f32.gmra.mrb[0].mxu0 %v717
      %v1145 = vpop.f32.mrb[0].mxu0
      %v1146 = vadd.f32 0.0, %v1145
      %v1147 = vpop.f32.mrb[0].mxu0
      %v1148 = vadd.f32 0.0, %v1147
      %1149 = vmatprep.mubr.f32.mxu0 %v726
      %1150 = vmatmul.mubr.f32.gmra.mrb[0].mxu0 %v725
      %v1151 = vpop.f32.mrb[0].mxu0
      %v1152 = vadd.f32 0.0, %v1151
      %v1153 = vpop.f32.mrb[0].mxu0
      %v1154 = vadd.f32 0.0, %v1153
      %1155 = vmatprep.mubr.f32.mxu0 %v734
      %1156 = vmatmul.mubr.f32.gmra.mrb[0].mxu0 %v733
      %v1157 = vpop.f32.mrb[0].mxu0
      %v1158 = vadd.f32 0.0, %v1157
      %v1159 = vpop.f32.mrb[0].mxu0
      %v1160 = vadd.f32 0.0, %v1159
      %1161 = vmatprep.mubr.f32.mxu0 %v742
      %1162 = vmatmul.mubr.f32.gmra.mrb[0].mxu0 %v741
      %v1163 = vpop.f32.mrb[0].mxu0
      %v1164 = vadd.f32 0.0, %v1163
      %v1165 = vpop.f32.mrb[0].mxu0
      %v1166 = vadd.f32 0.0, %v1165
      %1167 = vmatprep.mubr.f32.mxu0 %v750
      %1168 = vmatmul.mubr.f32.gmra.mrb[0].mxu0 %v749
      %v1169 = vpop.f32.mrb[0].mxu0
      %v1170 = vadd.f32 0.0, %v1169
      %v1171 = vpop.f32.mrb[0].mxu0
      %v1172 = vadd.f32 0.0, %v1171
      %1173 = vdwg.mxu0
      %1174 = vmatprep.subr.mxu0 %v822
      %1175 = vmatpush1.msra.mxu0 %v821
      %1176 = vmatprep.subr.mxu0 %v824
      %1177 = vmatpush1.msra.mxu0 %v823
      %1178 = vmatprep.subr.mxu0 %v826
      %1179 = vmatpush1.msra.mxu0 %v825
      %1180 = vmatprep.subr.mxu0 %v828
      %1181 = vmatpush1.msra.mxu0 %v827
      %1182 = vmatprep.subr.mxu0 %v830
      %1183 = vmatpush1.msra.mxu0 %v829
      %1184 = vmatprep.subr.mxu0 %v832
      %1185 = vmatpush1.msra.mxu0 %v831
      %1186 = vmatprep.subr.mxu0 %v834
      %1187 = vmatpush1.msra.mxu0 %v833
      %1188 = vmatprep.subr.mxu0 %v836
      %1189 = vmatpush1.msra.mxu0 %v835
      %1190 = vmatprep.subr.mxu0 %v838
      %1191 = vmatpush1.msra.mxu0 %v837
      %1192 = vmatprep.subr.mxu0 %v840
      %1193 = vmatpush1.msra.mxu0 %v839
      %1194 = vmatprep.subr.mxu0 %v842
      %1195 = vmatpush1.msra.mxu0 %v841
      %1196 = vmatprep.subr.mxu0 %v844
      %1197 = vmatpush1.msra.mxu0 %v843
      %1198 = vmatprep.subr.mxu0 %v846
      %1199 = vmatpush1.msra.mxu0 %v845
      %1200 = vmatprep.subr.mxu0 %v848
      %1201 = vmatpush1.msra.mxu0 %v847
      %1202 = vmatprep.subr.mxu0 %v850
      %1203 = vmatpush1.msra.mxu0 %v849
      %1204 = vmatprep.subr.mxu0 %v852
      %1205 = vmatpush1.msra.mxu0 %v851
      %1206 = vmatprep.subr.mxu0 %v854
      %1207 = vmatpush1.msra.mxu0 %v853
      %1208 = vmatprep.subr.mxu0 %v856
      %1209 = vmatpush1.msra.mxu0 %v855
      %1210 = vmatprep.subr.mxu0 %v858
      %1211 = vmatpush1.msra.mxu0 %v857
      %1212 = vmatprep.subr.mxu0 %v860
      %1213 = vmatpush1.msra.mxu0 %v859
      %1214 = vmatprep.subr.mxu0 %v862
      %1215 = vmatpush1.msra.mxu0 %v861
      %1216 = vmatprep.subr.mxu0 %v864
      %1217 = vmatpush1.msra.mxu0 %v863
      %1218 = vmatprep.subr.mxu0 %v866
      %1219 = vmatpush1.msra.mxu0 %v865
      %1220 = vmatprep.subr.mxu0 %v868
      %1221 = vmatpush1.msra.mxu0 %v867
      %1222 = vmatprep.subr.mxu0 %v870
      %1223 = vmatpush1.msra.mxu0 %v869
      %1224 = vmatprep.subr.mxu0 %v872
      %1225 = vmatpush1.msra.mxu0 %v871
      %1226 = vmatprep.subr.mxu0 %v874
      %1227 = vmatpush1.msra.mxu0 %v873
      %1228 = vmatprep.subr.mxu0 %v876
      %1229 = vmatpush1.msra.mxu0 %v875
      %1230 = vmatprep.subr.mxu0 %v878
      %1231 = vmatpush1.msra.mxu0 %v877
      %1232 = vmatprep.subr.mxu0 %v880
      %1233 = vmatpush1.msra.mxu0 %v879
      %1234 = vmatprep.subr.mxu0 %v882
      %1235 = vmatpush1.msra.mxu0 %v881
      %1236 = vmatprep.subr.mxu0 %v884
      %1237 = vmatpush1.msra.mxu0 %v883
      %1238 = vmatprep.mubr.f32.mxu0 %v632
      %1239 = vmatmul.mubr.f32.gmra.mrb[0].mxu0 %v631
      %v1240 = vpop.f32.mrb[0].mxu0
      %v1241 = vadd.f32 %v1080, %v1240
      %v1242 = vpop.f32.mrb[0].mxu0
      %v1243 = vadd.f32 %v1082, %v1242
      %1244 = vmatprep.mubr.f32.mxu0 %v640
      %1245 = vmatmul.mubr.f32.gmra.mrb[0].mxu0 %v639
      %v1246 = vpop.f32.mrb[0].mxu0
      %v1247 = vadd.f32 %v1086, %v1246
      %v1248 = vpop.f32.mrb[0].mxu0
      %v1249 = vadd.f32 %v1088, %v1248
      %1250 = vmatprep.mubr.f32.mxu0 %v648
      %1251 = vmatmul.mubr.f32.gmra.mrb[0].mxu0 %v647
      %v1252 = vpop.f32.mrb[0].mxu0
      %v1253 = vadd.f32 %v1092, %v1252
      %v1254 = vpop.f32.mrb[0].mxu0
      %v1255 = vadd.f32 %v1094, %v1254
      %1256 = vmatprep.mubr.f32.mxu0 %v656
      %1257 = vmatmul.mubr.f32.gmra.mrb[0].mxu0 %v655
      %v1258 = vpop.f32.mrb[0].mxu0
      %v1259 = vadd.f32 %v1098, %v1258
      %v1260 = vpop.f32.mrb[0].mxu0
      %v1261 = vadd.f32 %v1100, %v1260
      %1262 = vmatprep.mubr.f32.mxu0 %v664
      %1263 = vmatmul.mubr.f32.gmra.mrb[0].mxu0 %v663
      %v1264 = vpop.f32.mrb[0].mxu0
      %v1265 = vadd.f32 %v1104, %v1264
      %v1266 = vpop.f32.mrb[0].mxu0
      %v1267 = vadd.f32 %v1106, %v1266
      %1268 = vmatprep.mubr.f32.mxu0 %v672
      %1269 = vmatmul.mubr.f32.gmra.mrb[0].mxu0 %v671
      %v1270 = vpop.f32.mrb[0].mxu0
      %v1271 = vadd.f32 %v1110, %v1270
      %v1272 = vpop.f32.mrb[0].mxu0
      %v1273 = vadd.f32 %v1112, %v1272
      %1274 = vmatprep.mubr.f32.mxu0 %v680
      %1275 = vmatmul.mubr.f32.gmra.mrb[0].mxu0 %v679
      %v1276 = vpop.f32.mrb[0].mxu0
      %v1277 = vadd.f32 %v1116, %v1276
      %v1278 = vpop.f32.mrb[0].mxu0
      %v1279 = vadd.f32 %v1118, %v1278
      %1280 = vmatprep.mubr.f32.mxu0 %v688
      %1281 = vmatmul.mubr.f32.gmra.mrb[0].mxu0 %v687
      %v1282 = vpop.f32.mrb[0].mxu0
      %v1283 = vadd.f32 %v1122, %v1282
      %v1284 = vpop.f32.mrb[0].mxu0
      %v1285 = vadd.f32 %v1124, %v1284
      %1286 = vmatprep.mubr.f32.mxu0 %v696
      %1287 = vmatmul.mubr.f32.gmra.mrb[0].mxu0 %v695
      %v1288 = vpop.f32.mrb[0].mxu0
      %v1289 = vadd.f32 %v1128, %v1288
      %v1290 = vpop.f32.mrb[0].mxu0
      %v1291 = vadd.f32 %v1130, %v1290
      %1292 = vmatprep.mubr.f32.mxu0 %v704
      %1293 = vmatmul.mubr.f32.gmra.mrb[0].mxu0 %v703
      %v1294 = vpop.f32.mrb[0].mxu0
      %v1295 = vadd.f32 %v1134, %v1294
      %v1296 = vpop.f32.mrb[0].mxu0
      %v1297 = vadd.f32 %v1136, %v1296
      %1298 = vmatprep.mubr.f32.mxu0 %v712
      %1299 = vmatmul.mubr.f32.gmra.mrb[0].mxu0 %v711
      %v1300 = vpop.f32.mrb[0].mxu0
      %v1301 = vadd.f32 %v1140, %v1300
      %v1302 = vpop.f32.mrb[0].mxu0
      %v1303 = vadd.f32 %v1142, %v1302
      %1304 = vmatprep.mubr.f32.mxu0 %v720
      %1305 = vmatmul.mubr.f32.gmra.mrb[0].mxu0 %v719
      %v1306 = vpop.f32.mrb[0].mxu0
      %v1307 = vadd.f32 %v1146, %v1306
      %v1308 = vpop.f32.mrb[0].mxu0
      %v1309 = vadd.f32 %v1148, %v1308
      %1310 = vmatprep.mubr.f32.mxu0 %v728
      %1311 = vmatmul.mubr.f32.gmra.mrb[0].mxu0 %v727
      %v1312 = vpop.f32.mrb[0].mxu0
      %v1313 = vadd.f32 %v1152, %v1312
      %v1314 = vpop.f32.mrb[0].mxu0
      %v1315 = vadd.f32 %v1154, %v1314
      %1316 = vmatprep.mubr.f32.mxu0 %v736
      %1317 = vmatmul.mubr.f32.gmra.mrb[0].mxu0 %v735
      %v1318 = vpop.f32.mrb[0].mxu0
      %v1319 = vadd.f32 %v1158, %v1318
      %v1320 = vpop.f32.mrb[0].mxu0
      %v1321 = vadd.f32 %v1160, %v1320
      %1322 = vmatprep.mubr.f32.mxu0 %v744
      %1323 = vmatmul.mubr.f32.gmra.mrb[0].mxu0 %v743
      %v1324 = vpop.f32.mrb[0].mxu0
      %v1325 = vadd.f32 %v1164, %v1324
      %v1326 = vpop.f32.mrb[0].mxu0
      %v1327 = vadd.f32 %v1166, %v1326
      %1328 = vmatprep.mubr.f32.mxu0 %v752
      %1329 = vmatmul.mubr.f32.gmra.mrb[0].mxu0 %v751
      %v1330 = vpop.f32.mrb[0].mxu0
      %v1331 = vadd.f32 %v1170, %v1330
      %v1332 = vpop.f32.mrb[0].mxu0
      %v1333 = vadd.f32 %v1172, %v1332
      %1334 = vdwg.mxu0
      %1335 = vmatprep.subr.mxu0 %v886
      %1336 = vmatpush1.msra.mxu0 %v885
      %1337 = vmatprep.subr.mxu0 %v888
      %1338 = vmatpush1.msra.mxu0 %v887
      %1339 = vmatprep.subr.mxu0 %v890
      %1340 = vmatpush1.msra.mxu0 %v889
      %1341 = vmatprep.subr.mxu0 %v892
      %1342 = vmatpush1.msra.mxu0 %v891
      %1343 = vmatprep.subr.mxu0 %v894
      %1344 = vmatpush1.msra.mxu0 %v893
      %1345 = vmatprep.subr.mxu0 %v896
      %1346 = vmatpush1.msra.mxu0 %v895
      %1347 = vmatprep.subr.mxu0 %v898
      %1348 = vmatpush1.msra.mxu0 %v897
      %1349 = vmatprep.subr.mxu0 %v900
      %1350 = vmatpush1.msra.mxu0 %v899
      %1351 = vmatprep.subr.mxu0 %v902
      %1352 = vmatpush1.msra.mxu0 %v901
      %1353 = vmatprep.subr.mxu0 %v904
      %1354 = vmatpush1.msra.mxu0 %v903
      %1355 = vmatprep.subr.mxu0 %v906
      %1356 = vmatpush1.msra.mxu0 %v905
      %1357 = vmatprep.subr.mxu0 %v908
      %1358 = vmatpush1.msra.mxu0 %v907
      %1359 = vmatprep.subr.mxu0 %v910
      %1360 = vmatpush1.msra.mxu0 %v909
      %1361 = vmatprep.subr.mxu0 %v912
      %1362 = vmatpush1.msra.mxu0 %v911
      %1363 = vmatprep.subr.mxu0 %v914
      %1364 = vmatpush1.msra.mxu0 %v913
      %1365 = vmatprep.subr.mxu0 %v916
      %1366 = vmatpush1.msra.mxu0 %v915
      %1367 = vmatprep.subr.mxu0 %v918
      %1368 = vmatpush1.msra.mxu0 %v917
      %1369 = vmatprep.subr.mxu0 %v920
      %1370 = vmatpush1.msra.mxu0 %v919
      %1371 = vmatprep.subr.mxu0 %v922
      %1372 = vmatpush1.msra.mxu0 %v921
      %1373 = vmatprep.subr.mxu0 %v924
      %1374 = vmatpush1.msra.mxu0 %v923
      %1375 = vmatprep.subr.mxu0 %v926
      %1376 = vmatpush1.msra.mxu0 %v925
      %1377 = vmatprep.subr.mxu0 %v928
      %1378 = vmatpush1.msra.mxu0 %v927
      %1379 = vmatprep.subr.mxu0 %v930
      %1380 = vmatpush1.msra.mxu0 %v929
      %1381 = vmatprep.subr.mxu0 %v932
      %1382 = vmatpush1.msra.mxu0 %v931
      %1383 = vmatprep.subr.mxu0 %v934
      %1384 = vmatpush1.msra.mxu0 %v933
      %1385 = vmatprep.subr.mxu0 %v936
      %1386 = vmatpush1.msra.mxu0 %v935
      %1387 = vmatprep.subr.mxu0 %v938
      %1388 = vmatpush1.msra.mxu0 %v937
      %1389 = vmatprep.subr.mxu0 %v940
      %1390 = vmatpush1.msra.mxu0 %v939
      %1391 = vmatprep.subr.mxu0 %v942
      %1392 = vmatpush1.msra.mxu0 %v941
      %1393 = vmatprep.subr.mxu0 %v944
      %1394 = vmatpush1.msra.mxu0 %v943
      %1395 = vmatprep.subr.mxu0 %v946
      %1396 = vmatpush1.msra.mxu0 %v945
      %1397 = vmatprep.subr.mxu0 %v948
      %1398 = vmatpush1.msra.mxu0 %v947
      %1399 = vmatprep.mubr.f32.mxu0 %v634
      %1400 = vmatmul.mubr.f32.gmra.mrb[0].mxu0 %v633
      %v1401 = vpop.f32.mrb[0].mxu0
      %v1402 = vadd.f32 %v1241, %v1401
      %v1403 = vpop.f32.mrb[0].mxu0
      %v1404 = vadd.f32 %v1243, %v1403
      %1405 = vmatprep.mubr.f32.mxu0 %v642
      %1406 = vmatmul.mubr.f32.gmra.mrb[0].mxu0 %v641
      %v1407 = vpop.f32.mrb[0].mxu0
      %v1408 = vadd.f32 %v1247, %v1407
      %v1409 = vpop.f32.mrb[0].mxu0
      %v1410 = vadd.f32 %v1249, %v1409
      %1411 = vmatprep.mubr.f32.mxu0 %v650
      %1412 = vmatmul.mubr.f32.gmra.mrb[0].mxu0 %v649
      %v1413 = vpop.f32.mrb[0].mxu0
      %v1414 = vadd.f32 %v1253, %v1413
      %v1415 = vpop.f32.mrb[0].mxu0
      %v1416 = vadd.f32 %v1255, %v1415
      %1417 = vmatprep.mubr.f32.mxu0 %v658
      %1418 = vmatmul.mubr.f32.gmra.mrb[0].mxu0 %v657
      %v1419 = vpop.f32.mrb[0].mxu0
      %v1420 = vadd.f32 %v1259, %v1419
      %v1421 = vpop.f32.mrb[0].mxu0
      %v1422 = vadd.f32 %v1261, %v1421
      %1423 = vmatprep.mubr.f32.mxu0 %v666
      %1424 = vmatmul.mubr.f32.gmra.mrb[0].mxu0 %v665
      %v1425 = vpop.f32.mrb[0].mxu0
      %v1426 = vadd.f32 %v1265, %v1425
      %v1427 = vpop.f32.mrb[0].mxu0
      %v1428 = vadd.f32 %v1267, %v1427
      %1429 = vmatprep.mubr.f32.mxu0 %v674
      %1430 = vmatmul.mubr.f32.gmra.mrb[0].mxu0 %v673
      %v1431 = vpop.f32.mrb[0].mxu0
      %v1432 = vadd.f32 %v1271, %v1431
      %v1433 = vpop.f32.mrb[0].mxu0
      %v1434 = vadd.f32 %v1273, %v1433
      %1435 = vmatprep.mubr.f32.mxu0 %v682
      %1436 = vmatmul.mubr.f32.gmra.mrb[0].mxu0 %v681
      %v1437 = vpop.f32.mrb[0].mxu0
      %v1438 = vadd.f32 %v1277, %v1437
      %v1439 = vpop.f32.mrb[0].mxu0
      %v1440 = vadd.f32 %v1279, %v1439
      %1441 = vmatprep.mubr.f32.mxu0 %v690
      %1442 = vmatmul.mubr.f32.gmra.mrb[0].mxu0 %v689
      %v1443 = vpop.f32.mrb[0].mxu0
      %v1444 = vadd.f32 %v1283, %v1443
      %v1445 = vpop.f32.mrb[0].mxu0
      %v1446 = vadd.f32 %v1285, %v1445
      %1447 = vmatprep.mubr.f32.mxu0 %v698
      %1448 = vmatmul.mubr.f32.gmra.mrb[0].mxu0 %v697
      %v1449 = vpop.f32.mrb[0].mxu0
      %v1450 = vadd.f32 %v1289, %v1449
      %v1451 = vpop.f32.mrb[0].mxu0
      %v1452 = vadd.f32 %v1291, %v1451
      %1453 = vmatprep.mubr.f32.mxu0 %v706
      %1454 = vmatmul.mubr.f32.gmra.mrb[0].mxu0 %v705
      %v1455 = vpop.f32.mrb[0].mxu0
      %v1456 = vadd.f32 %v1295, %v1455
      %v1457 = vpop.f32.mrb[0].mxu0
      %v1458 = vadd.f32 %v1297, %v1457
      %1459 = vmatprep.mubr.f32.mxu0 %v714
      %1460 = vmatmul.mubr.f32.gmra.mrb[0].mxu0 %v713
      %v1461 = vpop.f32.mrb[0].mxu0
      %v1462 = vadd.f32 %v1301, %v1461
      %v1463 = vpop.f32.mrb[0].mxu0
      %v1464 = vadd.f32 %v1303, %v1463
      %1465 = vmatprep.mubr.f32.mxu0 %v722
      %1466 = vmatmul.mubr.f32.gmra.mrb[0].mxu0 %v721
      %v1467 = vpop.f32.mrb[0].mxu0
      %v1468 = vadd.f32 %v1307, %v1467
      %v1469 = vpop.f32.mrb[0].mxu0
      %v1470 = vadd.f32 %v1309, %v1469
      %1471 = vmatprep.mubr.f32.mxu0 %v730
      %1472 = vmatmul.mubr.f32.gmra.mrb[0].mxu0 %v729
      %v1473 = vpop.f32.mrb[0].mxu0
      %v1474 = vadd.f32 %v1313, %v1473
      %v1475 = vpop.f32.mrb[0].mxu0
      %v1476 = vadd.f32 %v1315, %v1475
      %1477 = vmatprep.mubr.f32.mxu0 %v738
      %1478 = vmatmul.mubr.f32.gmra.mrb[0].mxu0 %v737
      %v1479 = vpop.f32.mrb[0].mxu0
      %v1480 = vadd.f32 %v1319, %v1479
      %v1481 = vpop.f32.mrb[0].mxu0
      %v1482 = vadd.f32 %v1321, %v1481
      %1483 = vmatprep.mubr.f32.mxu0 %v746
      %1484 = vmatmul.mubr.f32.gmra.mrb[0].mxu0 %v745
      %v1485 = vpop.f32.mrb[0].mxu0
      %v1486 = vadd.f32 %v1325, %v1485
      %v1487 = vpop.f32.mrb[0].mxu0
      %v1488 = vadd.f32 %v1327, %v1487
      %1489 = vmatprep.mubr.f32.mxu0 %v754
      %1490 = vmatmul.mubr.f32.gmra.mrb[0].mxu0 %v753
      %v1491 = vpop.f32.mrb[0].mxu0
      %v1492 = vadd.f32 %v1331, %v1491
      %v1493 = vpop.f32.mrb[0].mxu0
      %v1494 = vadd.f32 %v1333, %v1493
      %1495 = vdwg.mxu0
      %1496 = vmatprep.subr.mxu0 %v950
      %1497 = vmatpush1.msra.mxu0 %v949
      %1498 = vmatprep.subr.mxu0 %v952
      %1499 = vmatpush1.msra.mxu0 %v951
      %1500 = vmatprep.subr.mxu0 %v954
      %1501 = vmatpush1.msra.mxu0 %v953
      %1502 = vmatprep.subr.mxu0 %v956
      %1503 = vmatpush1.msra.mxu0 %v955
      %1504 = vmatprep.subr.mxu0 %v958
      %1505 = vmatpush1.msra.mxu0 %v957
      %1506 = vmatprep.subr.mxu0 %v960
      %1507 = vmatpush1.msra.mxu0 %v959
      %1508 = vmatprep.subr.mxu0 %v962
      %1509 = vmatpush1.msra.mxu0 %v961
      %1510 = vmatprep.subr.mxu0 %v964
      %1511 = vmatpush1.msra.mxu0 %v963
      %1512 = vmatprep.subr.mxu0 %v966
      %1513 = vmatpush1.msra.mxu0 %v965
      %1514 = vmatprep.subr.mxu0 %v968
      %1515 = vmatpush1.msra.mxu0 %v967
      %1516 = vmatprep.subr.mxu0 %v970
      %1517 = vmatpush1.msra.mxu0 %v969
      %1518 = vmatprep.subr.mxu0 %v972
      %1519 = vmatpush1.msra.mxu0 %v971
      %1520 = vmatprep.subr.mxu0 %v974
      %1521 = vmatpush1.msra.mxu0 %v973
      %1522 = vmatprep.subr.mxu0 %v976
      %1523 = vmatpush1.msra.mxu0 %v975
      %1524 = vmatprep.subr.mxu0 %v978
      %1525 = vmatpush1.msra.mxu0 %v977
      %1526 = vmatprep.subr.mxu0 %v980
      %1527 = vmatpush1.msra.mxu0 %v979
      %1528 = vmatprep.subr.mxu0 %v982
      %1529 = vmatpush1.msra.mxu0 %v981
      %1530 = vmatprep.subr.mxu0 %v984
      %1531 = vmatpush1.msra.mxu0 %v983
      %1532 = vmatprep.subr.mxu0 %v986
      %1533 = vmatpush1.msra.mxu0 %v985
      %1534 = vmatprep.subr.mxu0 %v988
      %1535 = vmatpush1.msra.mxu0 %v987
      %1536 = vmatprep.subr.mxu0 %v990
      %1537 = vmatpush1.msra.mxu0 %v989
      %1538 = vmatprep.subr.mxu0 %v992
      %1539 = vmatpush1.msra.mxu0 %v991
      %1540 = vmatprep.subr.mxu0 %v994
      %1541 = vmatpush1.msra.mxu0 %v993
      %1542 = vmatprep.subr.mxu0 %v996
      %1543 = vmatpush1.msra.mxu0 %v995
      %1544 = vmatprep.subr.mxu0 %v998
      %1545 = vmatpush1.msra.mxu0 %v997
      %1546 = vmatprep.subr.mxu0 %v1000
      %1547 = vmatpush1.msra.mxu0 %v999
      %1548 = vmatprep.subr.mxu0 %v1002
      %1549 = vmatpush1.msra.mxu0 %v1001
      %1550 = vmatprep.subr.mxu0 %v1004
      %1551 = vmatpush1.msra.mxu0 %v1003
      %1552 = vmatprep.subr.mxu0 %v1006
      %1553 = vmatpush1.msra.mxu0 %v1005
      %1554 = vmatprep.subr.mxu0 %v1008
      %1555 = vmatpush1.msra.mxu0 %v1007
      %1556 = vmatprep.subr.mxu0 %v1010
      %1557 = vmatpush1.msra.mxu0 %v1009
      %1558 = vmatprep.subr.mxu0 %v1012
      %1559 = vmatpush1.msra.mxu0 %v1011
      %1560 = vmatprep.mubr.f32.mxu0 %v636
      %1561 = vmatmul.mubr.f32.gmra.mrb[0].mxu0 %v635
      %v1562 = vpop.f32.mrb[0].mxu0
      %v1563 = vadd.f32 %v1402, %v1562
      %v1564 = vpop.f32.mrb[0].mxu0
      %v1565 = vadd.f32 %v1404, %v1564
      %1566 = vmatprep.mubr.f32.mxu0 %v644
      %1567 = vmatmul.mubr.f32.gmra.mrb[0].mxu0 %v643
      %v1568 = vpop.f32.mrb[0].mxu0
      %v1569 = vadd.f32 %v1408, %v1568
      %v1570 = vpop.f32.mrb[0].mxu0
      %v1571 = vadd.f32 %v1410, %v1570
      %1572 = vmatprep.mubr.f32.mxu0 %v652
      %1573 = vmatmul.mubr.f32.gmra.mrb[0].mxu0 %v651
      %v1574 = vpop.f32.mrb[0].mxu0
      %v1575 = vadd.f32 %v1414, %v1574
      %v1576 = vpop.f32.mrb[0].mxu0
      %v1577 = vadd.f32 %v1416, %v1576
      %1578 = vmatprep.mubr.f32.mxu0 %v660
      %1579 = vmatmul.mubr.f32.gmra.mrb[0].mxu0 %v659
      %v1580 = vpop.f32.mrb[0].mxu0
      %v1581 = vadd.f32 %v1420, %v1580
      %v1582 = vpop.f32.mrb[0].mxu0
      %v1583 = vadd.f32 %v1422, %v1582
      %1584 = vmatprep.mubr.f32.mxu0 %v668
      %1585 = vmatmul.mubr.f32.gmra.mrb[0].mxu0 %v667
      %v1586 = vpop.f32.mrb[0].mxu0
      %v1587 = vadd.f32 %v1426, %v1586
      %v1588 = vpop.f32.mrb[0].mxu0
      %v1589 = vadd.f32 %v1428, %v1588
      %1590 = vmatprep.mubr.f32.mxu0 %v676
      %1591 = vmatmul.mubr.f32.gmra.mrb[0].mxu0 %v675
      %v1592 = vpop.f32.mrb[0].mxu0
      %v1593 = vadd.f32 %v1432, %v1592
      %v1594 = vpop.f32.mrb[0].mxu0
      %v1595 = vadd.f32 %v1434, %v1594
      %1596 = vmatprep.mubr.f32.mxu0 %v684
      %1597 = vmatmul.mubr.f32.gmra.mrb[0].mxu0 %v683
      %v1598 = vpop.f32.mrb[0].mxu0
      %v1599 = vadd.f32 %v1438, %v1598
      %v1600 = vpop.f32.mrb[0].mxu0
      %v1601 = vadd.f32 %v1440, %v1600
      %1602 = vmatprep.mubr.f32.mxu0 %v692
      %1603 = vmatmul.mubr.f32.gmra.mrb[0].mxu0 %v691
      %v1604 = vpop.f32.mrb[0].mxu0
      %v1605 = vadd.f32 %v1444, %v1604
      %v1606 = vpop.f32.mrb[0].mxu0
      %v1607 = vadd.f32 %v1446, %v1606
      %1608 = vmatprep.mubr.f32.mxu0 %v700
      %1609 = vmatmul.mubr.f32.gmra.mrb[0].mxu0 %v699
      %v1610 = vpop.f32.mrb[0].mxu0
      %v1611 = vadd.f32 %v1450, %v1610
      %v1612 = vpop.f32.mrb[0].mxu0
      %v1613 = vadd.f32 %v1452, %v1612
      %1614 = vmatprep.mubr.f32.mxu0 %v708
      %1615 = vmatmul.mubr.f32.gmra.mrb[0].mxu0 %v707
      %v1616 = vpop.f32.mrb[0].mxu0
      %v1617 = vadd.f32 %v1456, %v1616
      %v1618 = vpop.f32.mrb[0].mxu0
      %v1619 = vadd.f32 %v1458, %v1618
      %1620 = vmatprep.mubr.f32.mxu0 %v716
      %1621 = vmatmul.mubr.f32.gmra.mrb[0].mxu0 %v715
      %v1622 = vpop.f32.mrb[0].mxu0
      %v1623 = vadd.f32 %v1462, %v1622
      %v1624 = vpop.f32.mrb[0].mxu0
      %v1625 = vadd.f32 %v1464, %v1624
      %1626 = vmatprep.mubr.f32.mxu0 %v724
      %1627 = vmatmul.mubr.f32.gmra.mrb[0].mxu0 %v723
      %v1628 = vpop.f32.mrb[0].mxu0
      %v1629 = vadd.f32 %v1468, %v1628
      %v1630 = vpop.f32.mrb[0].mxu0
      %v1631 = vadd.f32 %v1470, %v1630
      %1632 = vmatprep.mubr.f32.mxu0 %v732
      %1633 = vmatmul.mubr.f32.gmra.mrb[0].mxu0 %v731
      %v1634 = vpop.f32.mrb[0].mxu0
      %v1635 = vadd.f32 %v1474, %v1634
      %v1636 = vpop.f32.mrb[0].mxu0
      %v1637 = vadd.f32 %v1476, %v1636
      %1638 = vmatprep.mubr.f32.mxu0 %v740
      %1639 = vmatmul.mubr.f32.gmra.mrb[0].mxu0 %v739
      %v1640 = vpop.f32.mrb[0].mxu0
      %v1641 = vadd.f32 %v1480, %v1640
      %v1642 = vpop.f32.mrb[0].mxu0
      %v1643 = vadd.f32 %v1482, %v1642
      %1644 = vmatprep.mubr.f32.mxu0 %v748
      %1645 = vmatmul.mubr.f32.gmra.mrb[0].mxu0 %v747
      %v1646 = vpop.f32.mrb[0].mxu0
      %v1647 = vadd.f32 %v1486, %v1646
      %v1648 = vpop.f32.mrb[0].mxu0
      %v1649 = vadd.f32 %v1488, %v1648
      %1650 = vmatprep.mubr.f32.mxu0 %v756
      %1651 = vmatmul.mubr.f32.gmra.mrb[0].mxu0 %v755
      %v1652 = vpop.f32.mrb[0].mxu0
      %v1653 = vadd.f32 %v1492, %v1652
      %v1654 = vpop.f32.mrb[0].mxu0
      %v1655 = vadd.f32 %v1494, %v1654
      %1656 = vdwg.mxu0
      %1657 = vmatprep.subr.mxu0 %v374
      %1658 = vmatpush1.msra.mxu0 %v373
      %1659 = vmatprep.subr.mxu0 %v376
      %1660 = vmatpush1.msra.mxu0 %v375
      %1661 = vmatprep.subr.mxu0 %v378
      %1662 = vmatpush1.msra.mxu0 %v377
      %1663 = vmatprep.subr.mxu0 %v380
      %1664 = vmatpush1.msra.mxu0 %v379
      %1665 = vmatprep.subr.mxu0 %v382
      %1666 = vmatpush1.msra.mxu0 %v381
      %1667 = vmatprep.subr.mxu0 %v384
      %1668 = vmatpush1.msra.mxu0 %v383
      %1669 = vmatprep.subr.mxu0 %v386
      %1670 = vmatpush1.msra.mxu0 %v385
      %1671 = vmatprep.subr.mxu0 %v388
      %1672 = vmatpush1.msra.mxu0 %v387
      %1673 = vmatprep.subr.mxu0 %v390
      %1674 = vmatpush1.msra.mxu0 %v389
      %1675 = vmatprep.subr.mxu0 %v392
      %1676 = vmatpush1.msra.mxu0 %v391
      %1677 = vmatprep.subr.mxu0 %v394
      %1678 = vmatpush1.msra.mxu0 %v393
      %1679 = vmatprep.subr.mxu0 %v396
      %1680 = vmatpush1.msra.mxu0 %v395
      %1681 = vmatprep.subr.mxu0 %v398
      %1682 = vmatpush1.msra.mxu0 %v397
      %1683 = vmatprep.subr.mxu0 %v400
      %1684 = vmatpush1.msra.mxu0 %v399
      %1685 = vmatprep.subr.mxu0 %v402
      %1686 = vmatpush1.msra.mxu0 %v401
      %1687 = vmatprep.subr.mxu0 %v404
      %1688 = vmatpush1.msra.mxu0 %v403
      %1689 = vmatprep.subr.mxu0 %v406
      %1690 = vmatpush1.msra.mxu0 %v405
      %1691 = vmatprep.subr.mxu0 %v408
      %1692 = vmatpush1.msra.mxu0 %v407
      %1693 = vmatprep.subr.mxu0 %v410
      %1694 = vmatpush1.msra.mxu0 %v409
      %1695 = vmatprep.subr.mxu0 %v412
      %1696 = vmatpush1.msra.mxu0 %v411
      %1697 = vmatprep.subr.mxu0 %v414
      %1698 = vmatpush1.msra.mxu0 %v413
      %1699 = vmatprep.subr.mxu0 %v416
      %1700 = vmatpush1.msra.mxu0 %v415
      %1701 = vmatprep.subr.mxu0 %v418
      %1702 = vmatpush1.msra.mxu0 %v417
      %1703 = vmatprep.subr.mxu0 %v420
      %1704 = vmatpush1.msra.mxu0 %v419
      %1705 = vmatprep.subr.mxu0 %v422
      %1706 = vmatpush1.msra.mxu0 %v421
      %1707 = vmatprep.subr.mxu0 %v424
      %1708 = vmatpush1.msra.mxu0 %v423
      %1709 = vmatprep.subr.mxu0 %v426
      %1710 = vmatpush1.msra.mxu0 %v425
      %1711 = vmatprep.subr.mxu0 %v428
      %1712 = vmatpush1.msra.mxu0 %v427
      %1713 = vmatprep.subr.mxu0 %v430
      %1714 = vmatpush1.msra.mxu0 %v429
      %1715 = vmatprep.subr.mxu0 %v432
      %1716 = vmatpush1.msra.mxu0 %v431
      %1717 = vmatprep.subr.mxu0 %v434
      %1718 = vmatpush1.msra.mxu0 %v433
      %1719 = vmatprep.subr.mxu0 %v436
      %1720 = vmatpush1.msra.mxu0 %v435
      %1721 = vmatprep.mubr.f32.mxu0 %v246
      %1722 = vmatmul.mubr.f32.gmra.mrb[0].mxu0 %v245
      %v1723 = vpop.f32.mrb[0].mxu0
      %v1724 = vadd.f32 %v1563, %v1723
      %v1725 = vpop.f32.mrb[0].mxu0
      %v1726 = vadd.f32 %v1565, %v1725
      %1727 = vmatprep.mubr.f32.mxu0 %v254
      %1728 = vmatmul.mubr.f32.gmra.mrb[0].mxu0 %v253
      %v1729 = vpop.f32.mrb[0].mxu0
      %v1730 = vadd.f32 %v1569, %v1729
      %v1731 = vpop.f32.mrb[0].mxu0
      %v1732 = vadd.f32 %v1571, %v1731
      %1733 = vmatprep.mubr.f32.mxu0 %v262
      %1734 = vmatmul.mubr.f32.gmra.mrb[0].mxu0 %v261
      %v1735 = vpop.f32.mrb[0].mxu0
      %v1736 = vadd.f32 %v1575, %v1735
      %v1737 = vpop.f32.mrb[0].mxu0
      %v1738 = vadd.f32 %v1577, %v1737
      %1739 = vmatprep.mubr.f32.mxu0 %v270
      %1740 = vmatmul.mubr.f32.gmra.mrb[0].mxu0 %v269
      %v1741 = vpop.f32.mrb[0].mxu0
      %v1742 = vadd.f32 %v1581, %v1741
      %v1743 = vpop.f32.mrb[0].mxu0
      %v1744 = vadd.f32 %v1583, %v1743
      %1745 = vmatprep.mubr.f32.mxu0 %v278
      %1746 = vmatmul.mubr.f32.gmra.mrb[0].mxu0 %v277
      %v1747 = vpop.f32.mrb[0].mxu0
      %v1748 = vadd.f32 %v1587, %v1747
      %v1749 = vpop.f32.mrb[0].mxu0
      %v1750 = vadd.f32 %v1589, %v1749
      %1751 = vmatprep.mubr.f32.mxu0 %v286
      %1752 = vmatmul.mubr.f32.gmra.mrb[0].mxu0 %v285
      %v1753 = vpop.f32.mrb[0].mxu0
      %v1754 = vadd.f32 %v1593, %v1753
      %v1755 = vpop.f32.mrb[0].mxu0
      %v1756 = vadd.f32 %v1595, %v1755
      %1757 = vmatprep.mubr.f32.mxu0 %v294
      %1758 = vmatmul.mubr.f32.gmra.mrb[0].mxu0 %v293
      %v1759 = vpop.f32.mrb[0].mxu0
      %v1760 = vadd.f32 %v1599, %v1759
      %v1761 = vpop.f32.mrb[0].mxu0
      %v1762 = vadd.f32 %v1601, %v1761
      %1763 = vmatprep.mubr.f32.mxu0 %v302
      %1764 = vmatmul.mubr.f32.gmra.mrb[0].mxu0 %v301
      %v1765 = vpop.f32.mrb[0].mxu0
      %v1766 = vadd.f32 %v1605, %v1765
      %v1767 = vpop.f32.mrb[0].mxu0
      %v1768 = vadd.f32 %v1607, %v1767
      %1769 = vmatprep.mubr.f32.mxu0 %v310
      %1770 = vmatmul.mubr.f32.gmra.mrb[0].mxu0 %v309
      %v1771 = vpop.f32.mrb[0].mxu0
      %v1772 = vadd.f32 %v1611, %v1771
      %v1773 = vpop.f32.mrb[0].mxu0
      %v1774 = vadd.f32 %v1613, %v1773
      %1775 = vmatprep.mubr.f32.mxu0 %v318
      %1776 = vmatmul.mubr.f32.gmra.mrb[0].mxu0 %v317
      %v1777 = vpop.f32.mrb[0].mxu0
      %v1778 = vadd.f32 %v1617, %v1777
      %v1779 = vpop.f32.mrb[0].mxu0
      %v1780 = vadd.f32 %v1619, %v1779
      %1781 = vmatprep.mubr.f32.mxu0 %v326
      %1782 = vmatmul.mubr.f32.gmra.mrb[0].mxu0 %v325
      %v1783 = vpop.f32.mrb[0].mxu0
      %v1784 = vadd.f32 %v1623, %v1783
      %v1785 = vpop.f32.mrb[0].mxu0
      %v1786 = vadd.f32 %v1625, %v1785
      %1787 = vmatprep.mubr.f32.mxu0 %v334
      %1788 = vmatmul.mubr.f32.gmra.mrb[0].mxu0 %v333
      %v1789 = vpop.f32.mrb[0].mxu0
      %v1790 = vadd.f32 %v1629, %v1789
      %v1791 = vpop.f32.mrb[0].mxu0
      %v1792 = vadd.f32 %v1631, %v1791
      %1793 = vmatprep.mubr.f32.mxu0 %v342
      %1794 = vmatmul.mubr.f32.gmra.mrb[0].mxu0 %v341
      %v1795 = vpop.f32.mrb[0].mxu0
      %v1796 = vadd.f32 %v1635, %v1795
      %v1797 = vpop.f32.mrb[0].mxu0
      %v1798 = vadd.f32 %v1637, %v1797
      %1799 = vmatprep.mubr.f32.mxu0 %v350
      %1800 = vmatmul.mubr.f32.gmra.mrb[0].mxu0 %v349
      %v1801 = vpop.f32.mrb[0].mxu0
      %v1802 = vadd.f32 %v1641, %v1801
      %v1803 = vpop.f32.mrb[0].mxu0
      %v1804 = vadd.f32 %v1643, %v1803
      %1805 = vmatprep.mubr.f32.mxu0 %v358
      %1806 = vmatmul.mubr.f32.gmra.mrb[0].mxu0 %v357
      %v1807 = vpop.f32.mrb[0].mxu0
      %v1808 = vadd.f32 %v1647, %v1807
      %v1809 = vpop.f32.mrb[0].mxu0
      %v1810 = vadd.f32 %v1649, %v1809
      %1811 = vmatprep.mubr.f32.mxu0 %v366
      %1812 = vmatmul.mubr.f32.gmra.mrb[0].mxu0 %v365
      %v1813 = vpop.f32.mrb[0].mxu0
      %v1814 = vadd.f32 %v1653, %v1813
      %v1815 = vpop.f32.mrb[0].mxu0
      %v1816 = vadd.f32 %v1655, %v1815
      %1817 = vdwg.mxu0
      %1818 = vmatprep.subr.mxu0 %v438
      %1819 = vmatpush1.msra.mxu0 %v437
      %1820 = vmatprep.subr.mxu0 %v440
      %1821 = vmatpush1.msra.mxu0 %v439
      %1822 = vmatprep.subr.mxu0 %v442
      %1823 = vmatpush1.msra.mxu0 %v441
      %1824 = vmatprep.subr.mxu0 %v444
      %1825 = vmatpush1.msra.mxu0 %v443
      %1826 = vmatprep.subr.mxu0 %v446
      %1827 = vmatpush1.msra.mxu0 %v445
      %1828 = vmatprep.subr.mxu0 %v448
      %1829 = vmatpush1.msra.mxu0 %v447
      %1830 = vmatprep.subr.mxu0 %v450
      %1831 = vmatpush1.msra.mxu0 %v449
      %1832 = vmatprep.subr.mxu0 %v452
      %1833 = vmatpush1.msra.mxu0 %v451
      %1834 = vmatprep.subr.mxu0 %v454
      %1835 = vmatpush1.msra.mxu0 %v453
      %1836 = vmatprep.subr.mxu0 %v456
      %1837 = vmatpush1.msra.mxu0 %v455
      %1838 = vmatprep.subr.mxu0 %v458
      %1839 = vmatpush1.msra.mxu0 %v457
      %1840 = vmatprep.subr.mxu0 %v460
      %1841 = vmatpush1.msra.mxu0 %v459
      %1842 = vmatprep.subr.mxu0 %v462
      %1843 = vmatpush1.msra.mxu0 %v461
      %1844 = vmatprep.subr.mxu0 %v464
      %1845 = vmatpush1.msra.mxu0 %v463
      %1846 = vmatprep.subr.mxu0 %v466
      %1847 = vmatpush1.msra.mxu0 %v465
      %1848 = vmatprep.subr.mxu0 %v468
      %1849 = vmatpush1.msra.mxu0 %v467
      %1850 = vmatprep.subr.mxu0 %v470
      %1851 = vmatpush1.msra.mxu0 %v469
      %1852 = vmatprep.subr.mxu0 %v472
      %1853 = vmatpush1.msra.mxu0 %v471
      %1854 = vmatprep.subr.mxu0 %v474
      %1855 = vmatpush1.msra.mxu0 %v473
      %1856 = vmatprep.subr.mxu0 %v476
      %1857 = vmatpush1.msra.mxu0 %v475
      %1858 = vmatprep.subr.mxu0 %v478
      %1859 = vmatpush1.msra.mxu0 %v477
      %1860 = vmatprep.subr.mxu0 %v480
      %1861 = vmatpush1.msra.mxu0 %v479
      %1862 = vmatprep.subr.mxu0 %v482
      %1863 = vmatpush1.msra.mxu0 %v481
      %1864 = vmatprep.subr.mxu0 %v484
      %1865 = vmatpush1.msra.mxu0 %v483
      %1866 = vmatprep.subr.mxu0 %v486
      %1867 = vmatpush1.msra.mxu0 %v485
      %1868 = vmatprep.subr.mxu0 %v488
      %1869 = vmatpush1.msra.mxu0 %v487
      %1870 = vmatprep.subr.mxu0 %v490
      %1871 = vmatpush1.msra.mxu0 %v489
      %1872 = vmatprep.subr.mxu0 %v492
      %1873 = vmatpush1.msra.mxu0 %v491
      %1874 = vmatprep.subr.mxu0 %v494
      %1875 = vmatpush1.msra.mxu0 %v493
      %1876 = vmatprep.subr.mxu0 %v496
      %1877 = vmatpush1.msra.mxu0 %v495
      %1878 = vmatprep.subr.mxu0 %v498
      %1879 = vmatpush1.msra.mxu0 %v497
      %1880 = vmatprep.subr.mxu0 %v500
      %1881 = vmatpush1.msra.mxu0 %v499
      %1882 = vmatprep.mubr.f32.mxu0 %v248
      %1883 = vmatmul.mubr.f32.gmra.mrb[0].mxu0 %v247
      %v1884 = vpop.f32.mrb[0].mxu0
      %v1885 = vadd.f32 %v1724, %v1884
      %v1886 = vpop.f32.mrb[0].mxu0
      %v1887 = vadd.f32 %v1726, %v1886
      %1888 = vmatprep.mubr.f32.mxu0 %v256
      %1889 = vmatmul.mubr.f32.gmra.mrb[0].mxu0 %v255
      %v1890 = vpop.f32.mrb[0].mxu0
      %v1891 = vadd.f32 %v1730, %v1890
      %v1892 = vpop.f32.mrb[0].mxu0
      %v1893 = vadd.f32 %v1732, %v1892
      %1894 = vmatprep.mubr.f32.mxu0 %v264
      %1895 = vmatmul.mubr.f32.gmra.mrb[0].mxu0 %v263
      %v1896 = vpop.f32.mrb[0].mxu0
      %v1897 = vadd.f32 %v1736, %v1896
      %v1898 = vpop.f32.mrb[0].mxu0
      %v1899 = vadd.f32 %v1738, %v1898
      %1900 = vmatprep.mubr.f32.mxu0 %v272
      %1901 = vmatmul.mubr.f32.gmra.mrb[0].mxu0 %v271
      %v1902 = vpop.f32.mrb[0].mxu0
      %v1903 = vadd.f32 %v1742, %v1902
      %v1904 = vpop.f32.mrb[0].mxu0
      %v1905 = vadd.f32 %v1744, %v1904
      %1906 = vmatprep.mubr.f32.mxu0 %v280
      %1907 = vmatmul.mubr.f32.gmra.mrb[0].mxu0 %v279
      %v1908 = vpop.f32.mrb[0].mxu0
      %v1909 = vadd.f32 %v1748, %v1908
      %v1910 = vpop.f32.mrb[0].mxu0
      %v1911 = vadd.f32 %v1750, %v1910
      %1912 = vmatprep.mubr.f32.mxu0 %v288
      %1913 = vmatmul.mubr.f32.gmra.mrb[0].mxu0 %v287
      %v1914 = vpop.f32.mrb[0].mxu0
      %v1915 = vadd.f32 %v1754, %v1914
      %v1916 = vpop.f32.mrb[0].mxu0
      %v1917 = vadd.f32 %v1756, %v1916
      %1918 = vmatprep.mubr.f32.mxu0 %v296
      %1919 = vmatmul.mubr.f32.gmra.mrb[0].mxu0 %v295
      %v1920 = vpop.f32.mrb[0].mxu0
      %v1921 = vadd.f32 %v1760, %v1920
      %v1922 = vpop.f32.mrb[0].mxu0
      %v1923 = vadd.f32 %v1762, %v1922
      %1924 = vmatprep.mubr.f32.mxu0 %v304
      %1925 = vmatmul.mubr.f32.gmra.mrb[0].mxu0 %v303
      %v1926 = vpop.f32.mrb[0].mxu0
      %v1927 = vadd.f32 %v1766, %v1926
      %v1928 = vpop.f32.mrb[0].mxu0
      %v1929 = vadd.f32 %v1768, %v1928
      %1930 = vmatprep.mubr.f32.mxu0 %v312
      %1931 = vmatmul.mubr.f32.gmra.mrb[0].mxu0 %v311
      %v1932 = vpop.f32.mrb[0].mxu0
      %v1933 = vadd.f32 %v1772, %v1932
      %v1934 = vpop.f32.mrb[0].mxu0
      %v1935 = vadd.f32 %v1774, %v1934
      %1936 = vmatprep.mubr.f32.mxu0 %v320
      %1937 = vmatmul.mubr.f32.gmra.mrb[0].mxu0 %v319
      %v1938 = vpop.f32.mrb[0].mxu0
      %v1939 = vadd.f32 %v1778, %v1938
      %v1940 = vpop.f32.mrb[0].mxu0
      %v1941 = vadd.f32 %v1780, %v1940
      %1942 = vmatprep.mubr.f32.mxu0 %v328
      %1943 = vmatmul.mubr.f32.gmra.mrb[0].mxu0 %v327
      %v1944 = vpop.f32.mrb[0].mxu0
      %v1945 = vadd.f32 %v1784, %v1944
      %v1946 = vpop.f32.mrb[0].mxu0
      %v1947 = vadd.f32 %v1786, %v1946
      %1948 = vmatprep.mubr.f32.mxu0 %v336
      %1949 = vmatmul.mubr.f32.gmra.mrb[0].mxu0 %v335
      %v1950 = vpop.f32.mrb[0].mxu0
      %v1951 = vadd.f32 %v1790, %v1950
      %v1952 = vpop.f32.mrb[0].mxu0
      %v1953 = vadd.f32 %v1792, %v1952
      %1954 = vmatprep.mubr.f32.mxu0 %v344
      %1955 = vmatmul.mubr.f32.gmra.mrb[0].mxu0 %v343
      %v1956 = vpop.f32.mrb[0].mxu0
      %v1957 = vadd.f32 %v1796, %v1956
      %v1958 = vpop.f32.mrb[0].mxu0
      %v1959 = vadd.f32 %v1798, %v1958
      %1960 = vmatprep.mubr.f32.mxu0 %v352
      %1961 = vmatmul.mubr.f32.gmra.mrb[0].mxu0 %v351
      %v1962 = vpop.f32.mrb[0].mxu0
      %v1963 = vadd.f32 %v1802, %v1962
      %v1964 = vpop.f32.mrb[0].mxu0
      %v1965 = vadd.f32 %v1804, %v1964
      %1966 = vmatprep.mubr.f32.mxu0 %v360
      %1967 = vmatmul.mubr.f32.gmra.mrb[0].mxu0 %v359
      %v1968 = vpop.f32.mrb[0].mxu0
      %v1969 = vadd.f32 %v1808, %v1968
      %v1970 = vpop.f32.mrb[0].mxu0
      %v1971 = vadd.f32 %v1810, %v1970
      %1972 = vmatprep.mubr.f32.mxu0 %v368
      %1973 = vmatmul.mubr.f32.gmra.mrb[0].mxu0 %v367
      %v1974 = vpop.f32.mrb[0].mxu0
      %v1975 = vadd.f32 %v1814, %v1974
      %v1976 = vpop.f32.mrb[0].mxu0
      %v1977 = vadd.f32 %v1816, %v1976
      %1978 = vdwg.mxu0
      %1979 = vmatprep.subr.mxu0 %v502
      %1980 = vmatpush1.msra.mxu0 %v501
      %1981 = vmatprep.subr.mxu0 %v504
      %1982 = vmatpush1.msra.mxu0 %v503
      %1983 = vmatprep.subr.mxu0 %v506
      %1984 = vmatpush1.msra.mxu0 %v505
      %1985 = vmatprep.subr.mxu0 %v508
      %1986 = vmatpush1.msra.mxu0 %v507
      %1987 = vmatprep.subr.mxu0 %v510
      %1988 = vmatpush1.msra.mxu0 %v509
      %1989 = vmatprep.subr.mxu0 %v512
      %1990 = vmatpush1.msra.mxu0 %v511
      %1991 = vmatprep.subr.mxu0 %v514
      %1992 = vmatpush1.msra.mxu0 %v513
      %1993 = vmatprep.subr.mxu0 %v516
      %1994 = vmatpush1.msra.mxu0 %v515
      %1995 = vmatprep.subr.mxu0 %v518
      %1996 = vmatpush1.msra.mxu0 %v517
      %1997 = vmatprep.subr.mxu0 %v520
      %1998 = vmatpush1.msra.mxu0 %v519
      %1999 = vmatprep.subr.mxu0 %v522
      %2000 = vmatpush1.msra.mxu0 %v521
      %2001 = vmatprep.subr.mxu0 %v524
      %2002 = vmatpush1.msra.mxu0 %v523
      %2003 = vmatprep.subr.mxu0 %v526
      %2004 = vmatpush1.msra.mxu0 %v525
      %2005 = vmatprep.subr.mxu0 %v528
      %2006 = vmatpush1.msra.mxu0 %v527
      %2007 = vmatprep.subr.mxu0 %v530
      %2008 = vmatpush1.msra.mxu0 %v529
      %2009 = vmatprep.subr.mxu0 %v532
      %2010 = vmatpush1.msra.mxu0 %v531
      %2011 = vmatprep.subr.mxu0 %v534
      %2012 = vmatpush1.msra.mxu0 %v533
      %2013 = vmatprep.subr.mxu0 %v536
      %2014 = vmatpush1.msra.mxu0 %v535
      %2015 = vmatprep.subr.mxu0 %v538
      %2016 = vmatpush1.msra.mxu0 %v537
      %2017 = vmatprep.subr.mxu0 %v540
      %2018 = vmatpush1.msra.mxu0 %v539
      %2019 = vmatprep.subr.mxu0 %v542
      %2020 = vmatpush1.msra.mxu0 %v541
      %2021 = vmatprep.subr.mxu0 %v544
      %2022 = vmatpush1.msra.mxu0 %v543
      %2023 = vmatprep.subr.mxu0 %v546
      %2024 = vmatpush1.msra.mxu0 %v545
      %2025 = vmatprep.subr.mxu0 %v548
      %2026 = vmatpush1.msra.mxu0 %v547
      %2027 = vmatprep.subr.mxu0 %v550
      %2028 = vmatpush1.msra.mxu0 %v549
      %2029 = vmatprep.subr.mxu0 %v552
      %2030 = vmatpush1.msra.mxu0 %v551
      %2031 = vmatprep.subr.mxu0 %v554
      %2032 = vmatpush1.msra.mxu0 %v553
      %2033 = vmatprep.subr.mxu0 %v556
      %2034 = vmatpush1.msra.mxu0 %v555
      %2035 = vmatprep.subr.mxu0 %v558
      %2036 = vmatpush1.msra.mxu0 %v557
      %2037 = vmatprep.subr.mxu0 %v560
      %2038 = vmatpush1.msra.mxu0 %v559
      %2039 = vmatprep.subr.mxu0 %v562
      %2040 = vmatpush1.msra.mxu0 %v561
      %2041 = vmatprep.subr.mxu0 %v564
      %2042 = vmatpush1.msra.mxu0 %v563
      %2043 = vmatprep.mubr.f32.mxu0 %v250
      %2044 = vmatmul.mubr.f32.gmra.mrb[0].mxu0 %v249
      %v2045 = vpop.f32.mrb[0].mxu0
      %v2046 = vadd.f32 %v1885, %v2045
      %v2047 = vpop.f32.mrb[0].mxu0
      %v2048 = vadd.f32 %v1887, %v2047
      %2049 = vmatprep.mubr.f32.mxu0 %v258
      %2050 = vmatmul.mubr.f32.gmra.mrb[0].mxu0 %v257
      %v2051 = vpop.f32.mrb[0].mxu0
      %v2052 = vadd.f32 %v1891, %v2051
      %v2053 = vpop.f32.mrb[0].mxu0
      %v2054 = vadd.f32 %v1893, %v2053
      %2055 = vmatprep.mubr.f32.mxu0 %v266
      %2056 = vmatmul.mubr.f32.gmra.mrb[0].mxu0 %v265
      %v2057 = vpop.f32.mrb[0].mxu0
      %v2058 = vadd.f32 %v1897, %v2057
      %v2059 = vpop.f32.mrb[0].mxu0
      %v2060 = vadd.f32 %v1899, %v2059
      %2061 = vmatprep.mubr.f32.mxu0 %v274
      %2062 = vmatmul.mubr.f32.gmra.mrb[0].mxu0 %v273
      %v2063 = vpop.f32.mrb[0].mxu0
      %v2064 = vadd.f32 %v1903, %v2063
      %v2065 = vpop.f32.mrb[0].mxu0
      %v2066 = vadd.f32 %v1905, %v2065
      %2067 = vmatprep.mubr.f32.mxu0 %v282
      %2068 = vmatmul.mubr.f32.gmra.mrb[0].mxu0 %v281
      %v2069 = vpop.f32.mrb[0].mxu0
      %v2070 = vadd.f32 %v1909, %v2069
      %v2071 = vpop.f32.mrb[0].mxu0
      %v2072 = vadd.f32 %v1911, %v2071
      %2073 = vmatprep.mubr.f32.mxu0 %v290
      %2074 = vmatmul.mubr.f32.gmra.mrb[0].mxu0 %v289
      %v2075 = vpop.f32.mrb[0].mxu0
      %v2076 = vadd.f32 %v1915, %v2075
      %v2077 = vpop.f32.mrb[0].mxu0
      %v2078 = vadd.f32 %v1917, %v2077
      %2079 = vmatprep.mubr.f32.mxu0 %v298
      %2080 = vmatmul.mubr.f32.gmra.mrb[0].mxu0 %v297
      %v2081 = vpop.f32.mrb[0].mxu0
      %v2082 = vadd.f32 %v1921, %v2081
      %v2083 = vpop.f32.mrb[0].mxu0
      %v2084 = vadd.f32 %v1923, %v2083
      %2085 = vmatprep.mubr.f32.mxu0 %v306
      %2086 = vmatmul.mubr.f32.gmra.mrb[0].mxu0 %v305
      %v2087 = vpop.f32.mrb[0].mxu0
      %v2088 = vadd.f32 %v1927, %v2087
      %v2089 = vpop.f32.mrb[0].mxu0
      %v2090 = vadd.f32 %v1929, %v2089
      %2091 = vmatprep.mubr.f32.mxu0 %v314
      %2092 = vmatmul.mubr.f32.gmra.mrb[0].mxu0 %v313
      %v2093 = vpop.f32.mrb[0].mxu0
      %v2094 = vadd.f32 %v1933, %v2093
      %v2095 = vpop.f32.mrb[0].mxu0
      %v2096 = vadd.f32 %v1935, %v2095
      %2097 = vmatprep.mubr.f32.mxu0 %v322
      %2098 = vmatmul.mubr.f32.gmra.mrb[0].mxu0 %v321
      %v2099 = vpop.f32.mrb[0].mxu0
      %v2100 = vadd.f32 %v1939, %v2099
      %v2101 = vpop.f32.mrb[0].mxu0
      %v2102 = vadd.f32 %v1941, %v2101
      %2103 = vmatprep.mubr.f32.mxu0 %v330
      %2104 = vmatmul.mubr.f32.gmra.mrb[0].mxu0 %v329
      %v2105 = vpop.f32.mrb[0].mxu0
      %v2106 = vadd.f32 %v1945, %v2105
      %v2107 = vpop.f32.mrb[0].mxu0
      %v2108 = vadd.f32 %v1947, %v2107
      %2109 = vmatprep.mubr.f32.mxu0 %v338
      %2110 = vmatmul.mubr.f32.gmra.mrb[0].mxu0 %v337
      %v2111 = vpop.f32.mrb[0].mxu0
      %v2112 = vadd.f32 %v1951, %v2111
      %v2113 = vpop.f32.mrb[0].mxu0
      %v2114 = vadd.f32 %v1953, %v2113
      %2115 = vmatprep.mubr.f32.mxu0 %v346
      %2116 = vmatmul.mubr.f32.gmra.mrb[0].mxu0 %v345
      %v2117 = vpop.f32.mrb[0].mxu0
      %v2118 = vadd.f32 %v1957, %v2117
      %v2119 = vpop.f32.mrb[0].mxu0
      %v2120 = vadd.f32 %v1959, %v2119
      %2121 = vmatprep.mubr.f32.mxu0 %v354
      %2122 = vmatmul.mubr.f32.gmra.mrb[0].mxu0 %v353
      %v2123 = vpop.f32.mrb[0].mxu0
      %v2124 = vadd.f32 %v1963, %v2123
      %v2125 = vpop.f32.mrb[0].mxu0
      %v2126 = vadd.f32 %v1965, %v2125
      %2127 = vmatprep.mubr.f32.mxu0 %v362
      %2128 = vmatmul.mubr.f32.gmra.mrb[0].mxu0 %v361
      %v2129 = vpop.f32.mrb[0].mxu0
      %v2130 = vadd.f32 %v1969, %v2129
      %v2131 = vpop.f32.mrb[0].mxu0
      %v2132 = vadd.f32 %v1971, %v2131
      %2133 = vmatprep.mubr.f32.mxu0 %v370
      %2134 = vmatmul.mubr.f32.gmra.mrb[0].mxu0 %v369
      %v2135 = vpop.f32.mrb[0].mxu0
      %v2136 = vadd.f32 %v1975, %v2135
      %v2137 = vpop.f32.mrb[0].mxu0
      %v2138 = vadd.f32 %v1977, %v2137
      %2139 = vdwg.mxu0
      %2140 = vmatprep.subr.mxu0 %v566
      %2141 = vmatpush1.msra.mxu0 %v565
      %2142 = vmatprep.subr.mxu0 %v568
      %2143 = vmatpush1.msra.mxu0 %v567
      %2144 = vmatprep.subr.mxu0 %v570
      %2145 = vmatpush1.msra.mxu0 %v569
      %2146 = vmatprep.subr.mxu0 %v572
      %2147 = vmatpush1.msra.mxu0 %v571
      %2148 = vmatprep.subr.mxu0 %v574
      %2149 = vmatpush1.msra.mxu0 %v573
      %2150 = vmatprep.subr.mxu0 %v576
      %2151 = vmatpush1.msra.mxu0 %v575
      %2152 = vmatprep.subr.mxu0 %v578
      %2153 = vmatpush1.msra.mxu0 %v577
      %2154 = vmatprep.subr.mxu0 %v580
      %2155 = vmatpush1.msra.mxu0 %v579
      %2156 = vmatprep.subr.mxu0 %v582
      %2157 = vmatpush1.msra.mxu0 %v581
      %2158 = vmatprep.subr.mxu0 %v584
      %2159 = vmatpush1.msra.mxu0 %v583
      %2160 = vmatprep.subr.mxu0 %v586
      %2161 = vmatpush1.msra.mxu0 %v585
      %2162 = vmatprep.subr.mxu0 %v588
      %2163 = vmatpush1.msra.mxu0 %v587
      %2164 = vmatprep.subr.mxu0 %v590
      %2165 = vmatpush1.msra.mxu0 %v589
      %2166 = vmatprep.subr.mxu0 %v592
      %2167 = vmatpush1.msra.mxu0 %v591
      %2168 = vmatprep.subr.mxu0 %v594
      %2169 = vmatpush1.msra.mxu0 %v593
      %2170 = vmatprep.subr.mxu0 %v596
      %2171 = vmatpush1.msra.mxu0 %v595
      %2172 = vmatprep.subr.mxu0 %v598
      %2173 = vmatpush1.msra.mxu0 %v597
      %2174 = vmatprep.subr.mxu0 %v600
      %2175 = vmatpush1.msra.mxu0 %v599
      %2176 = vmatprep.subr.mxu0 %v602
      %2177 = vmatpush1.msra.mxu0 %v601
      %2178 = vmatprep.subr.mxu0 %v604
      %2179 = vmatpush1.msra.mxu0 %v603
      %2180 = vmatprep.subr.mxu0 %v606
      %2181 = vmatpush1.msra.mxu0 %v605
      %2182 = vmatprep.subr.mxu0 %v608
      %2183 = vmatpush1.msra.mxu0 %v607
      %2184 = vmatprep.subr.mxu0 %v610
      %2185 = vmatpush1.msra.mxu0 %v609
      %2186 = vmatprep.subr.mxu0 %v612
      %2187 = vmatpush1.msra.mxu0 %v611
      %2188 = vmatprep.subr.mxu0 %v614
      %2189 = vmatpush1.msra.mxu0 %v613
      %2190 = vmatprep.subr.mxu0 %v616
      %2191 = vmatpush1.msra.mxu0 %v615
      %2192 = vmatprep.subr.mxu0 %v618
      %2193 = vmatpush1.msra.mxu0 %v617
      %2194 = vmatprep.subr.mxu0 %v620
      %2195 = vmatpush1.msra.mxu0 %v619
      %2196 = vmatprep.subr.mxu0 %v622
      %2197 = vmatpush1.msra.mxu0 %v621
      %2198 = vmatprep.subr.mxu0 %v624
      %2199 = vmatpush1.msra.mxu0 %v623
      %2200 = vmatprep.subr.mxu0 %v626
      %2201 = vmatpush1.msra.mxu0 %v625
      %2202 = vmatprep.subr.mxu0 %v628
      %2203 = vmatpush1.msra.mxu0 %v627
      %2204 = vmatprep.mubr.f32.mxu0 %v252
      %2205 = vmatmul.mubr.f32.gmra.mrb[0].mxu0 %v251
      %v2206 = vpop.f32.mrb[0].mxu0
      %v2207 = vadd.f32 %v2046, %v2206
      %v2208 = vpop.f32.mrb[0].mxu0
      %v2209 = vadd.f32 %v2048, %v2208
      %2210 = vmatprep.mubr.f32.mxu0 %v260
      %2211 = vmatmul.mubr.f32.gmra.mrb[0].mxu0 %v259
      %v2212 = vpop.f32.mrb[0].mxu0
      %v2213 = vadd.f32 %v2052, %v2212
      %v2214 = vpop.f32.mrb[0].mxu0
      %v2215 = vadd.f32 %v2054, %v2214
      %2216 = vmatprep.mubr.f32.mxu0 %v268
      %2217 = vmatmul.mubr.f32.gmra.mrb[0].mxu0 %v267
      %v2218 = vpop.f32.mrb[0].mxu0
      %v2219 = vadd.f32 %v2058, %v2218
      %v2220 = vpop.f32.mrb[0].mxu0
      %v2221 = vadd.f32 %v2060, %v2220
      %2222 = vmatprep.mubr.f32.mxu0 %v276
      %2223 = vmatmul.mubr.f32.gmra.mrb[0].mxu0 %v275
      %v2224 = vpop.f32.mrb[0].mxu0
      %v2225 = vadd.f32 %v2064, %v2224
      %v2226 = vpop.f32.mrb[0].mxu0
      %v2227 = vadd.f32 %v2066, %v2226
      %2228 = vmatprep.mubr.f32.mxu0 %v284
      %2229 = vmatmul.mubr.f32.gmra.mrb[0].mxu0 %v283
      %v2230 = vpop.f32.mrb[0].mxu0
      %v2231 = vadd.f32 %v2070, %v2230
      %v2232 = vpop.f32.mrb[0].mxu0
      %v2233 = vadd.f32 %v2072, %v2232
      %2234 = vmatprep.mubr.f32.mxu0 %v292
      %2235 = vmatmul.mubr.f32.gmra.mrb[0].mxu0 %v291
      %v2236 = vpop.f32.mrb[0].mxu0
      %v2237 = vadd.f32 %v2076, %v2236
      %v2238 = vpop.f32.mrb[0].mxu0
      %v2239 = vadd.f32 %v2078, %v2238
      %2240 = vmatprep.mubr.f32.mxu0 %v300
      %2241 = vmatmul.mubr.f32.gmra.mrb[0].mxu0 %v299
      %v2242 = vpop.f32.mrb[0].mxu0
      %v2243 = vadd.f32 %v2082, %v2242
      %v2244 = vpop.f32.mrb[0].mxu0
      %v2245 = vadd.f32 %v2084, %v2244
      %2246 = vmatprep.mubr.f32.mxu0 %v308
      %2247 = vmatmul.mubr.f32.gmra.mrb[0].mxu0 %v307
      %v2248 = vpop.f32.mrb[0].mxu0
      %v2249 = vadd.f32 %v2088, %v2248
      %v2250 = vpop.f32.mrb[0].mxu0
      %v2251 = vadd.f32 %v2090, %v2250
      %2252 = vmatprep.mubr.f32.mxu0 %v316
      %2253 = vmatmul.mubr.f32.gmra.mrb[0].mxu0 %v315
      %v2254 = vpop.f32.mrb[0].mxu0
      %v2255 = vadd.f32 %v2094, %v2254
      %v2256 = vpop.f32.mrb[0].mxu0
      %v2257 = vadd.f32 %v2096, %v2256
      %2258 = vmatprep.mubr.f32.mxu0 %v324
      %2259 = vmatmul.mubr.f32.gmra.mrb[0].mxu0 %v323
      %v2260 = vpop.f32.mrb[0].mxu0
      %v2261 = vadd.f32 %v2100, %v2260
      %v2262 = vpop.f32.mrb[0].mxu0
      %v2263 = vadd.f32 %v2102, %v2262
      %2264 = vmatprep.mubr.f32.mxu0 %v332
      %2265 = vmatmul.mubr.f32.gmra.mrb[0].mxu0 %v331
      %v2266 = vpop.f32.mrb[0].mxu0
      %v2267 = vadd.f32 %v2106, %v2266
      %v2268 = vpop.f32.mrb[0].mxu0
      %v2269 = vadd.f32 %v2108, %v2268
      %2270 = vmatprep.mubr.f32.mxu0 %v340
      %2271 = vmatmul.mubr.f32.gmra.mrb[0].mxu0 %v339
      %v2272 = vpop.f32.mrb[0].mxu0
      %v2273 = vadd.f32 %v2112, %v2272
      %v2274 = vpop.f32.mrb[0].mxu0
      %v2275 = vadd.f32 %v2114, %v2274
      %2276 = vmatprep.mubr.f32.mxu0 %v348
      %2277 = vmatmul.mubr.f32.gmra.mrb[0].mxu0 %v347
      %v2278 = vpop.f32.mrb[0].mxu0
      %v2279 = vadd.f32 %v2118, %v2278
      %v2280 = vpop.f32.mrb[0].mxu0
      %v2281 = vadd.f32 %v2120, %v2280
      %2282 = vmatprep.mubr.f32.mxu0 %v356
      %2283 = vmatmul.mubr.f32.gmra.mrb[0].mxu0 %v355
      %v2284 = vpop.f32.mrb[0].mxu0
      %v2285 = vadd.f32 %v2124, %v2284
      %v2286 = vpop.f32.mrb[0].mxu0
      %v2287 = vadd.f32 %v2126, %v2286
      %2288 = vmatprep.mubr.f32.mxu0 %v364
      %2289 = vmatmul.mubr.f32.gmra.mrb[0].mxu0 %v363
      %v2290 = vpop.f32.mrb[0].mxu0
      %v2291 = vadd.f32 %v2130, %v2290
      %v2292 = vpop.f32.mrb[0].mxu0
      %v2293 = vadd.f32 %v2132, %v2292
      %2294 = vmatprep.mubr.f32.mxu0 %v372
      %2295 = vmatmul.mubr.f32.gmra.mrb[0].mxu0 %v371
      %v2296 = vpop.f32.mrb[0].mxu0
      %v2297 = vadd.f32 %v2136, %v2296
      %v2298 = vpop.f32.mrb[0].mxu0
      %v2299 = vadd.f32 %v2138, %v2298
      %2300 = vdwg.mxu0
      %2301 = vxpose.xlu0.b32.start [1/16] %v2207, 128
      %2302 = vxpose.xlu0.b32.cont [2/16] %v2213, 128
      %2303 = vxpose.xlu0.b32.cont [3/16] %v2219, 128
      %2304 = vxpose.xlu0.b32.cont [4/16] %v2225, 128
      %2305 = vxpose.xlu0.b32.cont [5/16] %v2231, 128
      %2306 = vxpose.xlu0.b32.cont [6/16] %v2237, 128
      %2307 = vxpose.xlu0.b32.cont [7/16] %v2243, 128
      %2308 = vxpose.xlu0.b32.cont [8/16] %v2249, 128
      %2309 = vxpose.xlu0.b32.cont [9/16] %v2255, 128
      %2310 = vxpose.xlu0.b32.cont [10/16] %v2261, 128
      %2311 = vxpose.xlu0.b32.cont [11/16] %v2267, 128
      %2312 = vxpose.xlu0.b32.cont [12/16] %v2273, 128
      %2313 = vxpose.xlu0.b32.cont [13/16] %v2279, 128
      %2314 = vxpose.xlu0.b32.cont [14/16] %v2285, 128
      %2315 = vxpose.xlu0.b32.cont [15/16] %v2291, 128
      %2316 = vxpose.xlu0.b32.end [16/16] %v2297, 128
      %v2317 = vpop.trf.xlu0
      %v2318 = vpop.trf.xlu0
      %v2319 = vpop.trf.xlu0
      %v2320 = vpop.trf.xlu0
      %v2321 = vpop.trf.xlu0
      %v2322 = vpop.trf.xlu0
      %v2323 = vpop.trf.xlu0
      %v2324 = vpop.trf.xlu0
      %v2325 = vpop.trf.xlu0
      %v2326 = vpop.trf.xlu0
      %v2327 = vpop.trf.xlu0
      %v2328 = vpop.trf.xlu0
      %v2329 = vpop.trf.xlu0
      %v2330 = vpop.trf.xlu0
      %v2331 = vpop.trf.xlu0
      %v2332 = vpop.trf.xlu0
      %2333 = vxpose.xlu0.b32.start [1/16] %v2209, 128
      %2334 = vxpose.xlu0.b32.cont [2/16] %v2215, 128
      %2335 = vxpose.xlu0.b32.cont [3/16] %v2221, 128
      %2336 = vxpose.xlu0.b32.cont [4/16] %v2227, 128
      %2337 = vxpose.xlu0.b32.cont [5/16] %v2233, 128
      %2338 = vxpose.xlu0.b32.cont [6/16] %v2239, 128
      %2339 = vxpose.xlu0.b32.cont [7/16] %v2245, 128
      %2340 = vxpose.xlu0.b32.cont [8/16] %v2251, 128
      %2341 = vxpose.xlu0.b32.cont [9/16] %v2257, 128
      %2342 = vxpose.xlu0.b32.cont [10/16] %v2263, 128
      %2343 = vxpose.xlu0.b32.cont [11/16] %v2269, 128
      %2344 = vxpose.xlu0.b32.cont [12/16] %v2275, 128
      %2345 = vxpose.xlu0.b32.cont [13/16] %v2281, 128
      %2346 = vxpose.xlu0.b32.cont [14/16] %v2287, 128
      %2347 = vxpose.xlu0.b32.cont [15/16] %v2293, 128
      %2348 = vxpose.xlu0.b32.end [16/16] %v2299, 128
      %v2349 = vpop.trf.xlu0
      %v2350 = vpop.trf.xlu0
      %v2351 = vpop.trf.xlu0
      %v2352 = vpop.trf.xlu0
      %v2353 = vpop.trf.xlu0
      %v2354 = vpop.trf.xlu0
      %v2355 = vpop.trf.xlu0
      %v2356 = vpop.trf.xlu0
      %v2357 = vpop.trf.xlu0
      %v2358 = vpop.trf.xlu0
      %v2359 = vpop.trf.xlu0
      %v2360 = vpop.trf.xlu0
      %v2361 = vpop.trf.xlu0
      %v2362 = vpop.trf.xlu0
      %v2363 = vpop.trf.xlu0
      %v2364 = vpop.trf.xlu0
      %v2365 = vld [vmem:[%s4] sm:$0x1]
      %v2367 = vlaneseq
      %v2368 = vshrl.u32 %v2367, 7
      %v2369 = vsub.s32 0, %v2368
      %v2370 = vrot.slane %v2365, %v2369
      %v2372 = vadd.f32 %v2317, %v2370
      %v2373 = vadd.f32 %v2318, %v2370
      %v2374 = vadd.f32 %v2319, %v2370
      %v2375 = vadd.f32 %v2320, %v2370
      %v2376 = vadd.f32 %v2321, %v2370
      %v2377 = vadd.f32 %v2322, %v2370
      %v2378 = vadd.f32 %v2323, %v2370
      %v2379 = vadd.f32 %v2324, %v2370
      %v2380 = vadd.f32 %v2325, %v2370
      %v2381 = vadd.f32 %v2326, %v2370
      %v2382 = vadd.f32 %v2327, %v2370
      %v2383 = vadd.f32 %v2328, %v2370
      %v2384 = vadd.f32 %v2329, %v2370
      %v2385 = vadd.f32 %v2330, %v2370
      %v2386 = vadd.f32 %v2331, %v2370
      %v2387 = vadd.f32 %v2332, %v2370
      %v2388 = vadd.f32 %v2349, %v2370
      %v2389 = vadd.f32 %v2350, %v2370
      %v2390 = vadd.f32 %v2351, %v2370
      %v2391 = vadd.f32 %v2352, %v2370
      %v2392 = vadd.f32 %v2353, %v2370
      %v2393 = vadd.f32 %v2354, %v2370
      %v2394 = vadd.f32 %v2355, %v2370
      %v2395 = vadd.f32 %v2356, %v2370
      %v2396 = vadd.f32 %v2357, %v2370
      %v2397 = vmul.f32 %v2372, 0.5
      %v2398 = vmul.f32 %v2373, 0.5
      %v2399 = vmul.f32 %v2374, 0.5
      %v2400 = vmul.f32 %v2375, 0.5
      %v2401 = vmul.f32 %v2376, 0.5
      %v2402 = vmul.f32 %v2377, 0.5
      %v2403 = vmul.f32 %v2378, 0.5
      %v2404 = vmul.f32 %v2379, 0.5
      %v2405 = vmul.f32 %v2380, 0.5
      %v2406 = vmul.f32 %v2381, 0.5
      %v2407 = vmul.f32 %v2382, 0.5
      %v2408 = vmul.f32 %v2383, 0.5
      %v2409 = vmul.f32 %v2384, 0.5
      %v2410 = vmul.f32 %v2385, 0.5
      %v2411 = vmul.f32 %v2386, 0.5
      %v2412 = vmul.f32 %v2387, 0.5
      %v2413 = vmul.f32 %v2388, 0.5
      %v2414 = vmul.f32 %v2389, 0.5
      %v2415 = vmul.f32 %v2390, 0.5
      %v2416 = vmul.f32 %v2391, 0.5
      %v2417 = vmul.f32 %v2392, 0.5
      %v2418 = vmul.f32 %v2393, 0.5
      %v2419 = vmul.f32 %v2394, 0.5
      %v2420 = vmul.f32 %v2395, 0.5
      %v2421 = vmul.f32 %v2396, 0.5
      %v2422 = vmul.f32 %v2372, 0.70710677
      %v2423 = vmul.f32 %v2373, 0.70710677
      %v2424 = vmul.f32 %v2374, 0.70710677
      %v2425 = vmul.f32 %v2375, 0.70710677
      %v2426 = vmul.f32 %v2376, 0.70710677
      %v2427 = vmul.f32 %v2377, 0.70710677
      %v2428 = vmul.f32 %v2378, 0.70710677
      %v2429 = vmul.f32 %v2379, 0.70710677
      %v2430 = vmul.f32 %v2380, 0.70710677
      %v2431 = vmul.f32 %v2381, 0.70710677
      %v2432 = vmul.f32 %v2382, 0.70710677
      %v2433 = vmul.f32 %v2383, 0.70710677
      %v2434 = vmul.f32 %v2384, 0.70710677
      %v2435 = vmul.f32 %v2385, 0.70710677
      %v2436 = vmul.f32 %v2386, 0.70710677
      %v2437 = vmul.f32 %v2387, 0.70710677
      %v2438 = vmul.f32 %v2388, 0.70710677
      %v2439 = vmul.f32 %v2389, 0.70710677
      %v2440 = vmul.f32 %v2390, 0.70710677
      %v2441 = vmul.f32 %v2391, 0.70710677
      %v2442 = vmul.f32 %v2392, 0.70710677
      %v2443 = vmul.f32 %v2393, 0.70710677
      %v2444 = vmul.f32 %v2394, 0.70710677
      %v2445 = vmul.f32 %v2395, 0.70710677
      %v2446 = vmul.f32 %v2396, 0.70710677
      %v2447 = vand.u32 2147483647, %v2422
      %v2448 = vand.u32 2147483647, %v2423
      %v2449 = vand.u32 2147483647, %v2424
      %v2450 = vand.u32 2147483647, %v2425
      %v2451 = vand.u32 2147483647, %v2426
      %v2452 = vand.u32 2147483647, %v2427
      %v2453 = vand.u32 2147483647, %v2428
      %v2454 = vand.u32 2147483647, %v2429
      %v2455 = vand.u32 2147483647, %v2430
      %v2456 = vand.u32 2147483647, %v2431
      %v2457 = vand.u32 2147483647, %v2432
      %v2458 = vand.u32 2147483647, %v2433
      %v2459 = vand.u32 2147483647, %v2434
      %v2460 = vand.u32 2147483647, %v2435
      %v2461 = vand.u32 2147483647, %v2436
      %v2462 = vand.u32 2147483647, %v2437
      %v2463 = vand.u32 2147483647, %v2438
      %v2464 = vand.u32 2147483647, %v2439
      %v2465 = vand.u32 2147483647, %v2440
      %v2466 = vand.u32 2147483647, %v2441
      %v2467 = vand.u32 2147483647, %v2442
      %v2468 = vand.u32 2147483647, %v2443
      %v2469 = vand.u32 2147483647, %v2444
      %v2470 = vand.u32 2147483647, %v2445
      %v2471 = vand.u32 2147483647, %v2446
      %v2472 = vmul.f32 %v2447, 0.3275911
      %v2473 = vmul.f32 %v2448, 0.3275911
      %v2474 = vmul.f32 %v2449, 0.3275911
      %v2475 = vmul.f32 %v2450, 0.3275911
      %v2476 = vmul.f32 %v2451, 0.3275911
      %v2477 = vmul.f32 %v2452, 0.3275911
      %v2478 = vmul.f32 %v2453, 0.3275911
      %v2479 = vmul.f32 %v2454, 0.3275911
      %v2480 = vmul.f32 %v2455, 0.3275911
      %v2481 = vmul.f32 %v2456, 0.3275911
      %v2482 = vmul.f32 %v2457, 0.3275911
      %v2483 = vmul.f32 %v2458, 0.3275911
      %v2484 = vmul.f32 %v2459, 0.3275911
      %v2485 = vmul.f32 %v2460, 0.3275911
      %v2486 = vmul.f32 %v2461, 0.3275911
      %v2487 = vmul.f32 %v2462, 0.3275911
      %v2488 = vmul.f32 %v2463, 0.3275911
      %v2489 = vmul.f32 %v2464, 0.3275911
      %v2490 = vmul.f32 %v2465, 0.3275911
      %v2491 = vmul.f32 %v2466, 0.3275911
      %v2492 = vmul.f32 %v2467, 0.3275911
      %v2493 = vmul.f32 %v2468, 0.3275911
      %v2494 = vmul.f32 %v2469, 0.3275911
      %v2495 = vmul.f32 %v2470, 0.3275911
      %v2496 = vmul.f32 %v2471, 0.3275911
      %v2497 = vadd.f32 %v2472, 1.0
      %v2498 = vadd.f32 %v2473, 1.0
      %v2499 = vadd.f32 %v2474, 1.0
      %v2500 = vadd.f32 %v2475, 1.0
      %v2501 = vadd.f32 %v2476, 1.0
      %v2502 = vadd.f32 %v2477, 1.0
      %v2503 = vadd.f32 %v2478, 1.0
      %v2504 = vadd.f32 %v2479, 1.0
      %v2505 = vadd.f32 %v2480, 1.0
      %v2506 = vadd.f32 %v2481, 1.0
      %v2507 = vadd.f32 %v2482, 1.0
      %v2508 = vadd.f32 %v2483, 1.0
      %v2509 = vadd.f32 %v2484, 1.0
      %v2510 = vadd.f32 %v2485, 1.0
      %v2511 = vadd.f32 %v2486, 1.0
      %v2512 = vadd.f32 %v2487, 1.0
      %v2513 = vadd.f32 %v2488, 1.0
      %v2514 = vadd.f32 %v2489, 1.0
      %v2515 = vadd.f32 %v2490, 1.0
      %v2516 = vadd.f32 %v2491, 1.0
      %v2517 = vadd.f32 %v2492, 1.0
      %v2518 = vadd.f32 %v2493, 1.0
      %v2519 = vadd.f32 %v2494, 1.0
      %v2520 = vadd.f32 %v2495, 1.0
      %v2521 = vadd.f32 %v2496, 1.0
      %v2522 = vrcp.pop %v2497
      %v2523 = vmul.f32 1.0, %v2522
      %v2524 = vrcp.pop %v2498
      %v2525 = vmul.f32 1.0, %v2524
      %v2526 = vrcp.pop %v2499
      %v2527 = vmul.f32 1.0, %v2526
      %v2528 = vrcp.pop %v2500
      %v2529 = vmul.f32 1.0, %v2528
      %v2530 = vrcp.pop %v2501
      %v2531 = vmul.f32 1.0, %v2530
      %v2532 = vrcp.pop %v2502
      %v2533 = vmul.f32 1.0, %v2532
      %v2534 = vrcp.pop %v2503
      %v2535 = vmul.f32 1.0, %v2534
      %v2536 = vrcp.pop %v2504
      %v2537 = vmul.f32 1.0, %v2536
      %v2538 = vrcp.pop %v2505
      %v2539 = vmul.f32 1.0, %v2538
      %v2540 = vrcp.pop %v2506
      %v2541 = vmul.f32 1.0, %v2540
      %v2542 = vrcp.pop %v2507
      %v2543 = vmul.f32 1.0, %v2542
      %v2544 = vrcp.pop %v2508
      %v2545 = vmul.f32 1.0, %v2544
      %v2546 = vrcp.pop %v2509
      %v2547 = vmul.f32 1.0, %v2546
      %v2548 = vrcp.pop %v2510
      %v2549 = vmul.f32 1.0, %v2548
      %v2550 = vrcp.pop %v2511
      %v2551 = vmul.f32 1.0, %v2550
      %v2552 = vrcp.pop %v2512
      %v2553 = vmul.f32 1.0, %v2552
      %v2554 = vrcp.pop %v2513
      %v2555 = vmul.f32 1.0, %v2554
      %v2556 = vrcp.pop %v2514
      %v2557 = vmul.f32 1.0, %v2556
      %v2558 = vrcp.pop %v2515
      %v2559 = vmul.f32 1.0, %v2558
      %v2560 = vrcp.pop %v2516
      %v2561 = vmul.f32 1.0, %v2560
      %v2562 = vrcp.pop %v2517
      %v2563 = vmul.f32 1.0, %v2562
      %v2564 = vrcp.pop %v2518
      %v2565 = vmul.f32 1.0, %v2564
      %v2566 = vrcp.pop %v2519
      %v2567 = vmul.f32 1.0, %v2566
      %v2568 = vrcp.pop %v2520
      %v2569 = vmul.f32 1.0, %v2568
      %v2570 = vrcp.pop %v2521
      %v2571 = vmul.f32 1.0, %v2570
      %v2572 = vmul.f32 %v2523, 1.0614054
      %v2573 = vmul.f32 %v2525, 1.0614054
      %v2574 = vmul.f32 %v2527, 1.0614054
      %v2575 = vmul.f32 %v2529, 1.0614054
      %v2576 = vmul.f32 %v2531, 1.0614054
      %v2577 = vmul.f32 %v2533, 1.0614054
      %v2578 = vmul.f32 %v2535, 1.0614054
      %v2579 = vmul.f32 %v2537, 1.0614054
      %v2580 = vmul.f32 %v2539, 1.0614054
      %v2581 = vmul.f32 %v2541, 1.0614054
      %v2582 = vmul.f32 %v2543, 1.0614054
      %v2583 = vmul.f32 %v2545, 1.0614054
      %v2584 = vmul.f32 %v2547, 1.0614054
      %v2585 = vmul.f32 %v2549, 1.0614054
      %v2586 = vmul.f32 %v2551, 1.0614054
      %v2587 = vmul.f32 %v2553, 1.0614054
      %v2588 = vmul.f32 %v2555, 1.0614054
      %v2589 = vmul.f32 %v2557, 1.0614054
      %v2590 = vmul.f32 %v2559, 1.0614054
      %v2591 = vmul.f32 %v2561, 1.0614054
      %v2592 = vmul.f32 %v2563, 1.0614054
      %v2593 = vmul.f32 %v2565, 1.0614054
      %v2594 = vmul.f32 %v2567, 1.0614054
      %v2595 = vmul.f32 %v2569, 1.0614054
      %v2596 = vmul.f32 %v2571, 1.0614054
      %v2597 = vadd.f32 %v2572, -1.4531521
      %v2598 = vadd.f32 %v2573, -1.4531521
      %v2599 = vadd.f32 %v2574, -1.4531521
      %v2600 = vadd.f32 %v2575, -1.4531521
      %v2601 = vadd.f32 %v2576, -1.4531521
      %v2602 = vadd.f32 %v2577, -1.4531521
      %v2603 = vadd.f32 %v2578, -1.4531521
      %v2604 = vadd.f32 %v2579, -1.4531521
      %v2605 = vadd.f32 %v2580, -1.4531521
      %v2606 = vadd.f32 %v2581, -1.4531521
      %v2607 = vadd.f32 %v2582, -1.4531521
      %v2608 = vadd.f32 %v2583, -1.4531521
      %v2609 = vadd.f32 %v2584, -1.4531521
      %v2610 = vadd.f32 %v2585, -1.4531521
      %v2611 = vadd.f32 %v2586, -1.4531521
      %v2612 = vadd.f32 %v2587, -1.4531521
      %v2613 = vadd.f32 %v2588, -1.4531521
      %v2614 = vadd.f32 %v2589, -1.4531521
      %v2615 = vadd.f32 %v2590, -1.4531521
      %v2616 = vadd.f32 %v2591, -1.4531521
      %v2617 = vadd.f32 %v2592, -1.4531521
      %v2618 = vadd.f32 %v2593, -1.4531521
      %v2619 = vadd.f32 %v2594, -1.4531521
      %v2620 = vadd.f32 %v2595, -1.4531521
      %v2621 = vadd.f32 %v2596, -1.4531521
      %v2622 = vmul.f32 %v2597, %v2523
      %v2623 = vmul.f32 %v2598, %v2525
      %v2624 = vmul.f32 %v2599, %v2527
      %v2625 = vmul.f32 %v2600, %v2529
      %v2626 = vmul.f32 %v2601, %v2531
      %v2627 = vmul.f32 %v2602, %v2533
      %v2628 = vmul.f32 %v2603, %v2535
      %v2629 = vmul.f32 %v2604, %v2537
      %v2630 = vmul.f32 %v2605, %v2539
      %v2631 = vmul.f32 %v2606, %v2541
      %v2632 = vmul.f32 %v2607, %v2543
      %v2633 = vmul.f32 %v2608, %v2545
      %v2634 = vmul.f32 %v2609, %v2547
      %v2635 = vmul.f32 %v2610, %v2549
      %v2636 = vmul.f32 %v2611, %v2551
      %v2637 = vmul.f32 %v2612, %v2553
      %v2638 = vmul.f32 %v2613, %v2555
      %v2639 = vmul.f32 %v2614, %v2557
      %v2640 = vmul.f32 %v2615, %v2559
      %v2641 = vmul.f32 %v2616, %v2561
      %v2642 = vmul.f32 %v2617, %v2563
      %v2643 = vmul.f32 %v2618, %v2565
      %v2644 = vmul.f32 %v2619, %v2567
      %v2645 = vmul.f32 %v2620, %v2569
      %v2646 = vmul.f32 %v2621, %v2571
      %v2647 = vadd.f32 %v2622, 1.4214138
      %v2648 = vadd.f32 %v2623, 1.4214138
      %v2649 = vadd.f32 %v2624, 1.4214138
      %v2650 = vadd.f32 %v2625, 1.4214138
      %v2651 = vadd.f32 %v2626, 1.4214138
      %v2652 = vadd.f32 %v2627, 1.4214138
      %v2653 = vadd.f32 %v2628, 1.4214138
      %v2654 = vadd.f32 %v2629, 1.4214138
      %v2655 = vadd.f32 %v2630, 1.4214138
      %v2656 = vadd.f32 %v2631, 1.4214138
      %v2657 = vadd.f32 %v2632, 1.4214138
      %v2658 = vadd.f32 %v2633, 1.4214138
      %v2659 = vadd.f32 %v2634, 1.4214138
      %v2660 = vadd.f32 %v2635, 1.4214138
      %v2661 = vadd.f32 %v2636, 1.4214138
      %v2662 = vadd.f32 %v2637, 1.4214138
      %v2663 = vadd.f32 %v2638, 1.4214138
      %v2664 = vadd.f32 %v2639, 1.4214138
      %v2665 = vadd.f32 %v2640, 1.4214138
      %v2666 = vadd.f32 %v2641, 1.4214138
      %v2667 = vadd.f32 %v2642, 1.4214138
      %v2668 = vadd.f32 %v2643, 1.4214138
      %v2669 = vadd.f32 %v2644, 1.4214138
      %v2670 = vadd.f32 %v2645, 1.4214138
      %v2671 = vadd.f32 %v2646, 1.4214138
      %v2672 = vmul.f32 %v2647, %v2523
      %v2673 = vmul.f32 %v2648, %v2525
      %v2674 = vmul.f32 %v2649, %v2527
      %v2675 = vmul.f32 %v2650, %v2529
      %v2676 = vmul.f32 %v2651, %v2531
      %v2677 = vmul.f32 %v2652, %v2533
      %v2678 = vmul.f32 %v2653, %v2535
      %v2679 = vmul.f32 %v2654, %v2537
      %v2680 = vmul.f32 %v2655, %v2539
      %v2681 = vmul.f32 %v2656, %v2541
      %v2682 = vmul.f32 %v2657, %v2543
      %v2683 = vmul.f32 %v2658, %v2545
      %v2684 = vmul.f32 %v2659, %v2547
      %v2685 = vmul.f32 %v2660, %v2549
      %v2686 = vmul.f32 %v2661, %v2551
      %v2687 = vmul.f32 %v2662, %v2553
      %v2688 = vmul.f32 %v2663, %v2555
      %v2689 = vmul.f32 %v2664, %v2557
      %v2690 = vmul.f32 %v2665, %v2559
      %v2691 = vmul.f32 %v2666, %v2561
      %v2692 = vmul.f32 %v2667, %v2563
      %v2693 = vmul.f32 %v2668, %v2565
      %v2694 = vmul.f32 %v2669, %v2567
      %v2695 = vmul.f32 %v2670, %v2569
      %v2696 = vmul.f32 %v2671, %v2571
      %v2697 = vadd.f32 %v2672, -0.28449672
      %v2698 = vadd.f32 %v2673, -0.28449672
      %v2699 = vadd.f32 %v2674, -0.28449672
      %v2700 = vadd.f32 %v2675, -0.28449672
      %v2701 = vadd.f32 %v2676, -0.28449672
      %v2702 = vadd.f32 %v2677, -0.28449672
      %v2703 = vadd.f32 %v2678, -0.28449672
      %v2704 = vadd.f32 %v2679, -0.28449672
      %v2705 = vadd.f32 %v2680, -0.28449672
      %v2706 = vadd.f32 %v2681, -0.28449672
      %v2707 = vadd.f32 %v2682, -0.28449672
      %v2708 = vadd.f32 %v2683, -0.28449672
      %v2709 = vadd.f32 %v2684, -0.28449672
      %v2710 = vadd.f32 %v2685, -0.28449672
      %v2711 = vadd.f32 %v2686, -0.28449672
      %v2712 = vadd.f32 %v2687, -0.28449672
      %v2713 = vadd.f32 %v2688, -0.28449672
      %v2714 = vadd.f32 %v2689, -0.28449672
      %v2715 = vadd.f32 %v2690, -0.28449672
      %v2716 = vadd.f32 %v2691, -0.28449672
      %v2717 = vadd.f32 %v2692, -0.28449672
      %v2718 = vadd.f32 %v2693, -0.28449672
      %v2719 = vadd.f32 %v2694, -0.28449672
      %v2720 = vadd.f32 %v2695, -0.28449672
      %v2721 = vadd.f32 %v2696, -0.28449672
      %v2722 = vmul.f32 %v2697, %v2523
      %v2723 = vmul.f32 %v2698, %v2525
      %v2724 = vmul.f32 %v2699, %v2527
      %v2725 = vmul.f32 %v2700, %v2529
      %v2726 = vmul.f32 %v2701, %v2531
      %v2727 = vmul.f32 %v2702, %v2533
      %v2728 = vmul.f32 %v2703, %v2535
      %v2729 = vmul.f32 %v2704, %v2537
      %v2730 = vmul.f32 %v2705, %v2539
      %v2731 = vmul.f32 %v2706, %v2541
      %v2732 = vmul.f32 %v2707, %v2543
      %v2733 = vmul.f32 %v2708, %v2545
      %v2734 = vmul.f32 %v2709, %v2547
      %v2735 = vmul.f32 %v2710, %v2549
      %v2736 = vmul.f32 %v2711, %v2551
      %v2737 = vmul.f32 %v2712, %v2553
      %v2738 = vmul.f32 %v2713, %v2555
      %v2739 = vmul.f32 %v2714, %v2557
      %v2740 = vmul.f32 %v2715, %v2559
      %v2741 = vmul.f32 %v2716, %v2561
      %v2742 = vmul.f32 %v2717, %v2563
      %v2743 = vmul.f32 %v2718, %v2565
      %v2744 = vmul.f32 %v2719, %v2567
      %v2745 = vmul.f32 %v2720, %v2569
      %v2746 = vmul.f32 %v2721, %v2571
      %v2747 = vadd.f32 %v2722, 0.2548296
      %v2748 = vadd.f32 %v2723, 0.2548296
      %v2749 = vadd.f32 %v2724, 0.2548296
      %v2750 = vadd.f32 %v2725, 0.2548296
      %v2751 = vadd.f32 %v2726, 0.2548296
      %v2752 = vadd.f32 %v2727, 0.2548296
      %v2753 = vadd.f32 %v2728, 0.2548296
      %v2754 = vadd.f32 %v2729, 0.2548296
      %v2755 = vadd.f32 %v2730, 0.2548296
      %v2756 = vadd.f32 %v2731, 0.2548296
      %v2757 = vadd.f32 %v2732, 0.2548296
      %v2758 = vadd.f32 %v2733, 0.2548296
      %v2759 = vadd.f32 %v2734, 0.2548296
      %v2760 = vadd.f32 %v2735, 0.2548296
      %v2761 = vadd.f32 %v2736, 0.2548296
      %v2762 = vadd.f32 %v2737, 0.2548296
      %v2763 = vadd.f32 %v2738, 0.2548296
      %v2764 = vadd.f32 %v2739, 0.2548296
      %v2765 = vadd.f32 %v2740, 0.2548296
      %v2766 = vadd.f32 %v2741, 0.2548296
      %v2767 = vadd.f32 %v2742, 0.2548296
      %v2768 = vadd.f32 %v2743, 0.2548296
      %v2769 = vadd.f32 %v2744, 0.2548296
      %v2770 = vadd.f32 %v2745, 0.2548296
      %v2771 = vadd.f32 %v2746, 0.2548296
      %v2772 = vmul.f32 %v2747, %v2523
      %v2773 = vmul.f32 %v2748, %v2525
      %v2774 = vmul.f32 %v2749, %v2527
      %v2775 = vmul.f32 %v2750, %v2529
      %v2776 = vmul.f32 %v2751, %v2531
      %v2777 = vmul.f32 %v2752, %v2533
      %v2778 = vmul.f32 %v2753, %v2535
      %v2779 = vmul.f32 %v2754, %v2537
      %v2780 = vmul.f32 %v2755, %v2539
      %v2781 = vmul.f32 %v2756, %v2541
      %v2782 = vmul.f32 %v2757, %v2543
      %v2783 = vmul.f32 %v2758, %v2545
      %v2784 = vmul.f32 %v2759, %v2547
      %v2785 = vmul.f32 %v2760, %v2549
      %v2786 = vmul.f32 %v2761, %v2551
      %v2787 = vmul.f32 %v2762, %v2553
      %v2788 = vmul.f32 %v2763, %v2555
      %v2789 = vmul.f32 %v2764, %v2557
      %v2790 = vmul.f32 %v2765, %v2559
      %v2791 = vmul.f32 %v2766, %v2561
      %v2792 = vmul.f32 %v2767, %v2563
      %v2793 = vmul.f32 %v2768, %v2565
      %v2794 = vmul.f32 %v2769, %v2567
      %v2795 = vmul.f32 %v2770, %v2569
      %v2796 = vmul.f32 %v2771, %v2571
      %v2797 = vsub.f32 0.0, %v2447
      %v2798 = vsub.f32 0.0, %v2448
      %v2799 = vsub.f32 0.0, %v2449
      %v2800 = vsub.f32 0.0, %v2450
      %v2801 = vsub.f32 0.0, %v2451
      %v2802 = vsub.f32 0.0, %v2452
      %v2803 = vsub.f32 0.0, %v2453
      %v2804 = vsub.f32 0.0, %v2454
      %v2805 = vsub.f32 0.0, %v2455
      %v2806 = vsub.f32 0.0, %v2456
      %v2807 = vsub.f32 0.0, %v2457
      %v2808 = vsub.f32 0.0, %v2458
      %v2809 = vsub.f32 0.0, %v2459
      %v2810 = vsub.f32 0.0, %v2460
      %v2811 = vsub.f32 0.0, %v2461
      %v2812 = vsub.f32 0.0, %v2462
      %v2813 = vsub.f32 0.0, %v2463
      %v2814 = vsub.f32 0.0, %v2464
      %v2815 = vsub.f32 0.0, %v2465
      %v2816 = vsub.f32 0.0, %v2466
      %v2817 = vsub.f32 0.0, %v2467
      %v2818 = vsub.f32 0.0, %v2468
      %v2819 = vsub.f32 0.0, %v2469
      %v2820 = vsub.f32 0.0, %v2470
      %v2821 = vsub.f32 0.0, %v2471
      %v2822 = vmul.f32 %v2797, %v2447
      %v2823 = vmul.f32 %v2798, %v2448
      %v2824 = vmul.f32 %v2799, %v2449
      %v2825 = vmul.f32 %v2800, %v2450
      %v2826 = vmul.f32 %v2801, %v2451
      %v2827 = vmul.f32 %v2802, %v2452
      %v2828 = vmul.f32 %v2803, %v2453
      %v2829 = vmul.f32 %v2804, %v2454
      %v2830 = vmul.f32 %v2805, %v2455
      %v2831 = vmul.f32 %v2806, %v2456
      %v2832 = vmul.f32 %v2807, %v2457
      %v2833 = vmul.f32 %v2808, %v2458
      %v2834 = vmul.f32 %v2809, %v2459
      %v2835 = vmul.f32 %v2810, %v2460
      %v2836 = vmul.f32 %v2811, %v2461
      %v2837 = vmul.f32 %v2812, %v2462
      %v2838 = vmul.f32 %v2813, %v2463
      %v2839 = vmul.f32 %v2814, %v2464
      %v2840 = vmul.f32 %v2815, %v2465
      %v2841 = vmul.f32 %v2816, %v2466
      %v2842 = vmul.f32 %v2817, %v2467
      %v2843 = vmul.f32 %v2818, %v2468
      %v2844 = vmul.f32 %v2819, %v2469
      %v2845 = vmul.f32 %v2820, %v2470
      %v2846 = vmul.f32 %v2821, %v2471
      %v2847 = vmul.f32 %v2822, 1.442695
      %v2848 = vpow.pop %v2847
      %v2849 = vmul.f32 %v2823, 1.442695
      %v2850 = vpow.pop %v2849
      %v2851 = vmul.f32 %v2824, 1.442695
      %v2852 = vpow.pop %v2851
      %v2853 = vmul.f32 %v2825, 1.442695
      %v2854 = vpow.pop %v2853
      %v2855 = vmul.f32 %v2826, 1.442695
      %v2856 = vpow.pop %v2855
      %v2857 = vmul.f32 %v2827, 1.442695
      %v2858 = vpow.pop %v2857
      %v2859 = vmul.f32 %v2828, 1.442695
      %v2860 = vpow.pop %v2859
      %v2861 = vmul.f32 %v2829, 1.442695
      %v2862 = vpow.pop %v2861
      %v2863 = vmul.f32 %v2830, 1.442695
      %v2864 = vpow.pop %v2863
      %v2865 = vmul.f32 %v2831, 1.442695
      %v2866 = vpow.pop %v2865
      %v2867 = vmul.f32 %v2832, 1.442695
      %v2868 = vpow.pop %v2867
      %v2869 = vmul.f32 %v2833, 1.442695
      %v2870 = vpow.pop %v2869
      %v2871 = vmul.f32 %v2834, 1.442695
      %v2872 = vpow.pop %v2871
      %v2873 = vmul.f32 %v2835, 1.442695
      %v2874 = vpow.pop %v2873
      %v2875 = vmul.f32 %v2836, 1.442695
      %v2876 = vpow.pop %v2875
      %v2877 = vmul.f32 %v2837, 1.442695
      %v2878 = vpow.pop %v2877
      %v2879 = vmul.f32 %v2838, 1.442695
      %v2880 = vpow.pop %v2879
      %v2881 = vmul.f32 %v2839, 1.442695
      %v2882 = vpow.pop %v2881
      %v2883 = vmul.f32 %v2840, 1.442695
      %v2884 = vpow.pop %v2883
      %v2885 = vmul.f32 %v2841, 1.442695
      %v2886 = vpow.pop %v2885
      %v2887 = vmul.f32 %v2842, 1.442695
      %v2888 = vpow.pop %v2887
      %v2889 = vmul.f32 %v2843, 1.442695
      %v2890 = vpow.pop %v2889
      %v2891 = vmul.f32 %v2844, 1.442695
      %v2892 = vpow.pop %v2891
      %v2893 = vmul.f32 %v2845, 1.442695
      %v2894 = vpow.pop %v2893
      %v2895 = vmul.f32 %v2846, 1.442695
      %v2896 = vpow.pop %v2895
      %v2897 = vmul.f32 %v2772, %v2848
      %v2898 = vmul.f32 %v2773, %v2850
      %v2899 = vmul.f32 %v2774, %v2852
      %v2900 = vmul.f32 %v2775, %v2854
      %v2901 = vmul.f32 %v2776, %v2856
      %v2902 = vmul.f32 %v2777, %v2858
      %v2903 = vmul.f32 %v2778, %v2860
      %v2904 = vmul.f32 %v2779, %v2862
      %v2905 = vmul.f32 %v2780, %v2864
      %v2906 = vmul.f32 %v2781, %v2866
      %v2907 = vmul.f32 %v2782, %v2868
      %v2908 = vmul.f32 %v2783, %v2870
      %v2909 = vmul.f32 %v2784, %v2872
      %v2910 = vmul.f32 %v2785, %v2874
      %v2911 = vmul.f32 %v2786, %v2876
      %v2912 = vmul.f32 %v2787, %v2878
      %v2913 = vmul.f32 %v2788, %v2880
      %v2914 = vmul.f32 %v2789, %v2882
      %v2915 = vmul.f32 %v2790, %v2884
      %v2916 = vmul.f32 %v2791, %v2886
      %v2917 = vmul.f32 %v2792, %v2888
      %v2918 = vmul.f32 %v2793, %v2890
      %v2919 = vmul.f32 %v2794, %v2892
      %v2920 = vmul.f32 %v2795, %v2894
      %v2921 = vmul.f32 %v2796, %v2896
      %v2922 = vsub.f32 1.0, %v2897
      %v2923 = vsub.f32 1.0, %v2898
      %v2924 = vsub.f32 1.0, %v2899
      %v2925 = vsub.f32 1.0, %v2900
      %v2926 = vsub.f32 1.0, %v2901
      %v2927 = vsub.f32 1.0, %v2902
      %v2928 = vsub.f32 1.0, %v2903
      %v2929 = vsub.f32 1.0, %v2904
      %v2930 = vsub.f32 1.0, %v2905
      %v2931 = vsub.f32 1.0, %v2906
      %v2932 = vsub.f32 1.0, %v2907
      %v2933 = vsub.f32 1.0, %v2908
      %v2934 = vsub.f32 1.0, %v2909
      %v2935 = vsub.f32 1.0, %v2910
      %v2936 = vsub.f32 1.0, %v2911
      %v2937 = vsub.f32 1.0, %v2912
      %v2938 = vsub.f32 1.0, %v2913
      %v2939 = vsub.f32 1.0, %v2914
      %v2940 = vsub.f32 1.0, %v2915
      %v2941 = vsub.f32 1.0, %v2916
      %v2942 = vsub.f32 1.0, %v2917
      %v2943 = vsub.f32 1.0, %v2918
      %v2944 = vsub.f32 1.0, %v2919
      %v2945 = vsub.f32 1.0, %v2920
      %v2946 = vsub.f32 1.0, %v2921
      %vm2947 = vcmp.lt.f32.partialorder %v2422, 0.0
      %vm2948 = vcmp.lt.f32.partialorder %v2423, 0.0
      %vm2949 = vcmp.lt.f32.partialorder %v2424, 0.0
      %vm2950 = vcmp.lt.f32.partialorder %v2425, 0.0
      %vm2951 = vcmp.lt.f32.partialorder %v2426, 0.0
      %vm2952 = vcmp.lt.f32.partialorder %v2427, 0.0
      %vm2953 = vcmp.lt.f32.partialorder %v2428, 0.0
      %vm2954 = vcmp.lt.f32.partialorder %v2429, 0.0
      %vm2955 = vcmp.lt.f32.partialorder %v2430, 0.0
      %vm2956 = vcmp.lt.f32.partialorder %v2431, 0.0
      %vm2957 = vcmp.lt.f32.partialorder %v2432, 0.0
      %vm2958 = vcmp.lt.f32.partialorder %v2433, 0.0
      %vm2959 = vcmp.lt.f32.partialorder %v2434, 0.0
      %vm2960 = vcmp.lt.f32.partialorder %v2435, 0.0
      %vm2961 = vcmp.lt.f32.partialorder %v2436, 0.0
      %vm2962 = vcmp.lt.f32.partialorder %v2437, 0.0
      %vm2963 = vcmp.lt.f32.partialorder %v2438, 0.0
      %vm2964 = vcmp.lt.f32.partialorder %v2439, 0.0
      %vm2965 = vcmp.lt.f32.partialorder %v2440, 0.0
      %vm2966 = vcmp.lt.f32.partialorder %v2441, 0.0
      %vm2967 = vcmp.lt.f32.partialorder %v2442, 0.0
      %vm2968 = vcmp.lt.f32.partialorder %v2443, 0.0
      %vm2969 = vcmp.lt.f32.partialorder %v2444, 0.0
      %vm2970 = vcmp.lt.f32.partialorder %v2445, 0.0
      %vm2971 = vcmp.lt.f32.partialorder %v2446, 0.0
      %v2972 = vsub.f32 0.0, %v2922
      %v2973 = vsub.f32 0.0, %v2923
      %v2974 = vsub.f32 0.0, %v2924
      %v2975 = vsub.f32 0.0, %v2925
      %v2976 = vsub.f32 0.0, %v2926
      %v2977 = vsub.f32 0.0, %v2927
      %v2978 = vsub.f32 0.0, %v2928
      %v2979 = vsub.f32 0.0, %v2929
      %v2980 = vsub.f32 0.0, %v2930
      %v2981 = vsub.f32 0.0, %v2931
      %v2982 = vsub.f32 0.0, %v2932
      %v2983 = vsub.f32 0.0, %v2933
      %v2984 = vsub.f32 0.0, %v2934
      %v2985 = vsub.f32 0.0, %v2935
      %v2986 = vsub.f32 0.0, %v2936
      %v2987 = vsub.f32 0.0, %v2937
      %v2988 = vsub.f32 0.0, %v2938
      %v2989 = vsub.f32 0.0, %v2939
      %v2990 = vsub.f32 0.0, %v2940
      %v2991 = vsub.f32 0.0, %v2941
      %v2992 = vsub.f32 0.0, %v2942
      %v2993 = vsub.f32 0.0, %v2943
      %v2994 = vsub.f32 0.0, %v2944
      %v2995 = vsub.f32 0.0, %v2945
      %v2996 = vsub.f32 0.0, %v2946
      %v2997 = vsel %vm2947, %v2972, %v2922
      %v2998 = vsel %vm2948, %v2973, %v2923
      %v2999 = vsel %vm2949, %v2974, %v2924
      %v3000 = vsel %vm2950, %v2975, %v2925
      %v3001 = vsel %vm2951, %v2976, %v2926
      %v3002 = vsel %vm2952, %v2977, %v2927
      %v3003 = vsel %vm2953, %v2978, %v2928
      %v3004 = vsel %vm2954, %v2979, %v2929
      %v3005 = vsel %vm2955, %v2980, %v2930
      %v3006 = vsel %vm2956, %v2981, %v2931
      %v3007 = vsel %vm2957, %v2982, %v2932
      %v3008 = vsel %vm2958, %v2983, %v2933
      %v3009 = vsel %vm2959, %v2984, %v2934
      %v3010 = vsel %vm2960, %v2985, %v2935
      %v3011 = vsel %vm2961, %v2986, %v2936
      %v3012 = vsel %vm2962, %v2987, %v2937
      %v3013 = vsel %vm2963, %v2988, %v2938
      %v3014 = vsel %vm2964, %v2989, %v2939
      %v3015 = vsel %vm2965, %v2990, %v2940
      %v3016 = vsel %vm2966, %v2991, %v2941
      %v3017 = vsel %vm2967, %v2992, %v2942
      %v3018 = vsel %vm2968, %v2993, %v2943
      %v3019 = vsel %vm2969, %v2994, %v2944
      %v3020 = vsel %vm2970, %v2995, %v2945
      %v3021 = vsel %vm2971, %v2996, %v2946
      %v3022 = vadd.f32 %v2997, 1.0
      %v3023 = vadd.f32 %v2998, 1.0
      %v3024 = vadd.f32 %v2999, 1.0
      %v3025 = vadd.f32 %v3000, 1.0
      %v3026 = vadd.f32 %v3001, 1.0
      %v3027 = vadd.f32 %v3002, 1.0
      %v3028 = vadd.f32 %v3003, 1.0
      %v3029 = vadd.f32 %v3004, 1.0
      %v3030 = vadd.f32 %v3005, 1.0
      %v3031 = vadd.f32 %v3006, 1.0
      %v3032 = vadd.f32 %v3007, 1.0
      %v3033 = vadd.f32 %v3008, 1.0
      %v3034 = vadd.f32 %v3009, 1.0
      %v3035 = vadd.f32 %v3010, 1.0
      %v3036 = vadd.f32 %v3011, 1.0
      %v3037 = vadd.f32 %v3012, 1.0
      %v3038 = vadd.f32 %v3013, 1.0
      %v3039 = vadd.f32 %v3014, 1.0
      %v3040 = vadd.f32 %v3015, 1.0
      %v3041 = vadd.f32 %v3016, 1.0
      %v3042 = vadd.f32 %v3017, 1.0
      %v3043 = vadd.f32 %v3018, 1.0
      %v3044 = vadd.f32 %v3019, 1.0
      %v3045 = vadd.f32 %v3020, 1.0
      %v3046 = vadd.f32 %v3021, 1.0
      %v3047 = vmul.f32 %v2397, %v3022
      %v3048 = vmul.f32 %v2398, %v3023
      %v3049 = vmul.f32 %v2399, %v3024
      %v3050 = vmul.f32 %v2400, %v3025
      %v3051 = vmul.f32 %v2401, %v3026
      %v3052 = vmul.f32 %v2402, %v3027
      %v3053 = vmul.f32 %v2403, %v3028
      %v3054 = vmul.f32 %v2404, %v3029
      %v3055 = vmul.f32 %v2405, %v3030
      %v3056 = vmul.f32 %v2406, %v3031
      %v3057 = vmul.f32 %v2407, %v3032
      %v3058 = vmul.f32 %v2408, %v3033
      %v3059 = vmul.f32 %v2409, %v3034
      %v3060 = vmul.f32 %v2410, %v3035
      %v3061 = vmul.f32 %v2411, %v3036
      %v3062 = vmul.f32 %v2412, %v3037
      %v3063 = vmul.f32 %v2413, %v3038
      %v3064 = vmul.f32 %v2414, %v3039
      %v3065 = vmul.f32 %v2415, %v3040
      %v3066 = vmul.f32 %v2416, %v3041
      %v3067 = vmul.f32 %v2417, %v3042
      %v3068 = vmul.f32 %v2418, %v3043
      %v3069 = vmul.f32 %v2419, %v3044
      %v3070 = vmul.f32 %v2420, %v3045
      %v3071 = vmul.f32 %v2421, %v3046
      %v3072 = vpack.c.bf16 %v3048, %v3047
      %v3073 = vpack.c.bf16 %v3050, %v3049
      %v3074 = vpack.c.bf16 %v3052, %v3051
      %v3075 = vpack.c.bf16 %v3054, %v3053
      %v3076 = vpack.c.bf16 %v3056, %v3055
      %v3077 = vpack.c.bf16 %v3058, %v3057
      %v3078 = vpack.c.bf16 %v3060, %v3059
      %v3079 = vpack.c.bf16 %v3062, %v3061
      %v3080 = vpack.c.bf16 %v3064, %v3063
      %v3081 = vpack.c.bf16 %v3066, %v3065
      %v3082 = vpack.c.bf16 %v3068, %v3067
      %v3083 = vpack.c.bf16 %v3070, %v3069
      %v3084 = vpack.c.bf16 %v3071, %v3071
      %v3098 = vunpack.c.l.b16 %v3072
      %v3099 = vunpack.c.h.b16 %v3072
      %v3100 = vunpack.c.l.b16 %v3073
      %v3101 = vunpack.c.h.b16 %v3073
      %v3102 = vunpack.c.l.b16 %v3074
      %v3103 = vunpack.c.h.b16 %v3074
      %v3104 = vunpack.c.l.b16 %v3075
      %v3105 = vunpack.c.h.b16 %v3075
      %v3106 = vunpack.c.l.b16 %v3076
      %v3107 = vunpack.c.h.b16 %v3076
      %v3108 = vunpack.c.l.b16 %v3077
      %v3109 = vunpack.c.h.b16 %v3077
      %v3110 = vunpack.c.l.b16 %v3078
      %v3111 = vunpack.c.h.b16 %v3078
      %v3112 = vunpack.c.l.b16 %v3079
      %v3113 = vunpack.c.h.b16 %v3079
      %v3114 = vunpack.c.l.b16 %v3080
      %v3115 = vunpack.c.h.b16 %v3080
      %v3116 = vunpack.c.l.b16 %v3081
      %v3117 = vunpack.c.h.b16 %v3081
      %v3118 = vunpack.c.l.b16 %v3082
      %v3119 = vunpack.c.h.b16 %v3082
      %v3120 = vunpack.c.l.b16 %v3083
      %v3121 = vunpack.c.h.b16 %v3083
      %v3122 = vunpack.c.l.b16 %v3084
      %v3123 = vpack.c.b16 %v3098, %v3098
      %v3124 = vpack.c.b16 %v3099, %v3099
      %v3125 = vpack.c.b16 %v3100, %v3100
      %v3126 = vpack.c.b16 %v3101, %v3101
      %v3127 = vpack.c.b16 %v3102, %v3102
      %v3128 = vpack.c.b16 %v3103, %v3103
      %v3129 = vpack.c.b16 %v3104, %v3104
      %v3130 = vpack.c.b16 %v3105, %v3105
      %v3131 = vpack.c.b16 %v3106, %v3106
      %v3132 = vpack.c.b16 %v3107, %v3107
      %v3133 = vpack.c.b16 %v3108, %v3108
      %v3134 = vpack.c.b16 %v3109, %v3109
      %v3135 = vpack.c.b16 %v3110, %v3110
      %v3136 = vpack.c.b16 %v3111, %v3111
      %v3137 = vpack.c.b16 %v3112, %v3112
      %v3138 = vpack.c.b16 %v3113, %v3113
      %v3139 = vpack.c.b16 %v3114, %v3114
      %v3140 = vpack.c.b16 %v3115, %v3115
      %v3141 = vpack.c.b16 %v3116, %v3116
      %v3142 = vpack.c.b16 %v3117, %v3117
      %v3143 = vpack.c.b16 %v3118, %v3118
      %v3144 = vpack.c.b16 %v3119, %v3119
      %v3145 = vpack.c.b16 %v3120, %v3120
      %v3146 = vpack.c.b16 %v3121, %v3121
      %v3147 = vpack.c.b16 %v3122, %v3122
      %3173 = vst [vmem:[%s244] sm:$0xf] %v3123
      %3174 = vst [vmem:[%s244 + $0x4] sm:$0xf] %v3124
      %3175 = vst [vmem:[%s244 + $0x8] sm:$0xf] %v3125
      %3176 = vst [vmem:[%s244 + $0xc] sm:$0xf] %v3126
      %3177 = vst [vmem:[%s244 + $0x10] sm:$0xf] %v3127
      %3178 = vst [vmem:[%s244 + $0x14] sm:$0xf] %v3128
      %3179 = vst [vmem:[%s244 + $0x18] sm:$0xf] %v3129
      %3180 = vst [vmem:[%s244 + $0x1c] sm:$0xf] %v3130
      %3181 = vst [vmem:[%s244 + $0x20] sm:$0xf] %v3131
      %3182 = vst [vmem:[%s244 + $0x24] sm:$0xf] %v3132
      %3183 = vst [vmem:[%s244 + $0x28] sm:$0xf] %v3133
      %3184 = vst [vmem:[%s244 + $0x2c] sm:$0xf] %v3134
      %3185 = vst [vmem:[%s244 + $0x30] sm:$0xf] %v3135
      %3186 = vst [vmem:[%s244 + $0x34] sm:$0xf] %v3136
      %3187 = vst [vmem:[%s244 + $0x38] sm:$0xf] %v3137
      %3188 = vst [vmem:[%s244 + $0x3c] sm:$0xf] %v3138
      %3189 = vst [vmem:[%s244 + $0x40] sm:$0xf] %v3139
      %3190 = vst [vmem:[%s244 + $0x44] sm:$0xf] %v3140
      %3191 = vst [vmem:[%s244 + $0x48] sm:$0xf] %v3141
      %3192 = vst [vmem:[%s244 + $0x4c] sm:$0xf] %v3142
      %3193 = vst [vmem:[%s244 + $0x50] sm:$0xf] %v3143
      %3194 = vst [vmem:[%s244 + $0x54] sm:$0xf] %v3144
      %3195 = vst [vmem:[%s244 + $0x58] sm:$0xf] %v3145
      %3196 = vst [vmem:[%s244 + $0x5c] sm:$0xf] %v3146
      %3197 = vst [vmem:[%s244 + $0x60] sm:$0x3] %v3147
      %p3198 = scmp.lt.s32.totalorder %s16, 1
      %s3199 = scalar_select %p3198, %s16, 1
      %s3200 = smul.addr %s3199, 25
      %s3201 = smul.addr %s3200, 4
      %s3202 = scalar_lea.vmem %s5, %s3201
      // Predicated region
      $region41: #{moe_block.2} parent=39 // pred_check
        %p3203 = pneg %p149
      $region42: #{moe_block.2} parent=39 // pred_check_branch
        %3205 = sbr.rel (%p3203) target = $region44
      $region43: #{moe_block.2} parent=39 // pred_region
        _
      $region44: #{moe_block.2} parent=39 // pred_fallthru
        _
    $region40: #{moe_block.2} parent=5 // pred_fallthru
      _
    %p3206 = scmp.le.s32.totalorder 2, %s11
    // Predicated region
    $region45: #{moe_block.2} parent=5 // pred_check
      %p3207 = pneg %p3206
    $region46: #{moe_block.2} parent=5 // pred_check_branch
      %3209 = sbr.rel (%p3207) target = $region48
    $region47: #{moe_block.2} parent=5 // pred_region
      %s3210 = ssub.s32 %s11, 2
      // Predicated region
      $region49: #{moe_block.2} parent=47 // pred_check
        %p3211 = pneg %p155
      $region50: #{moe_block.2} parent=47 // pred_check_branch
        %3213 = sbr.rel (%p3211) target = $region52
      $region51: #{moe_block.2} parent=47 // pred_region
        %p3214 = scmp.lt.s32.totalorder %s17, 1
        %s3215 = scalar_select %p3214, %s17, 1
        %s3216 = smul.addr %s3215, 25
        %s3217 = smul.addr %s3216, 4
        %s3218 = scalar_lea.vmem %s5, %s3217
      $region52: #{moe_block.2} parent=47 // pred_fallthru
        _
    $region48: #{moe_block.2} parent=5 // pred_fallthru
      _
  $region6: #{moe_block.2} parent=0 // loop_footer
    %s15 = sadd.s32 1, %s11
  $region7: #{moe_block.2} parent=0 // loop_footer_branch
    %10 = sbr.rel target = $region3
  $region8: #{moe_block.2} parent=0 // loop_exit
    _

// kernel: moe_block.3
$region0: #{moe_block.3}
  #allocation0 [shape = 'u32[]', space=smem, size = 0x4, offset = 0x4, fixed_abs, tag = 'smem constant byte address 0x4 - core index']
  #allocation1 [shape = 'u32[144,128]{1,0:T(1,128)}', space=vmem, size = 0x12000, scoped, tag = 'internal scratch']
  #allocation2 [shape = 'f32[2,128]{1,0:T(2,128)}', space=vmem, size = 0x400, scoped, tag = 'scratch operand']
  %s0 = inlined_call_operand.vmem [shape: bf16[2,25088], index: 0, kind: input, shape index: {}]
  %s1 = inlined_call_operand.vmem [shape: bf16[25088,128], index: 1, kind: input, shape index: {}]
  %s2 = inlined_call_operand.vmem [shape: f32[1,128], index: 2, kind: input, shape index: {}]
  %s3 = inlined_call_operand.vmem [shape: f32[128,2], index: 3, kind: input, shape index: {}]
  %s4 = inlined_call_operand.vmem [shape: f32[1,2], index: 4, kind: input, shape index: {}]
  %s5 = inlined_call_operand.hbm [shape: f32[2,2], index: 5, kind: output, shape index: {}]
  %s6 = sld [smem:[#allocation0]]
  $region61: #{moe_block.3} parent=0
    _
  %s8 = ssub.s32 1, %s6
  %s9 = scalar_select 0, %s8, %s6
  $region1: #{moe_block.3} parent=0
    #allocation3 [shape = 'u8[1024]{0}', space=vmem, size = 0x400, scoped, tag = 'output window, operand 0, single buffered']
    #allocation4 [shape = 's32[2]{0}', space=sflag, size = 0x8, scoped, tag = 'scoped memory for moe_block.3']
    %10 = vsyncpa [#allocation4], 0
    loop: start=0, step=1, limit=4
    $region2: #{moe_block.3} parent=1 // loop_pre_header
      _
    $region3: #{moe_block.3} parent=1 // loop_header
      %s12 = sphi 0, %s16
      %p13 = scmp.ge.s32.totalorder %s12, 4
      %s22 = sphi 0, %s24
      %s25 = sphi 0, %s22
      %s26 = sphi 0, %s25
      %s42 = sphi 0, %s26
      %s48 = sphi 0, %s50
      %s51 = sphi 0, %s48
      %s52 = sphi 0, %s51
      %s68 = sphi 0, %s52
      %s72 = sphi 0, %s72
      %s74 = sphi 0, %s72
      %s75 = sphi 0, %s74
      %s89 = sphi 0, %s75
      %s93 = sphi 0, %s93
      %s95 = sphi 0, %s93
      %s96 = sphi 0, %s95
      %s110 = sphi 0, %s96
      %s114 = sphi 0, %s114
      %s116 = sphi 0, %s114
      %s117 = sphi 0, %s116
      %s131 = sphi 0, %s117
      %s135 = sphi 0, %s135
      %s137 = sphi 0, %s135
      %s138 = sphi 0, %s137
      %s152 = sphi 0, %s138
    $region4: #{moe_block.3} parent=1 // loop_header_branch
      %15 = sbr.rel (%p13) target = $region8
    $region5: #{moe_block.3} parent=1 // loop_body
      %s17 = ssub.s32 %s12, 1
      %s18 = ssub.s32 %s12, 2
      %s19 = sadd.s32 %s12, 1
      %s20 = ssub.s32 %s12, %s19
      %p21 = scmp.eq.s32.totalorder %s20, 0
      %s23 = sadd.s32 %s22, 1
      %s24 = scalar_select %p21, %s22, %s23
      %p27 = pneg %p21
      %p28 = scmp.eq.s32.totalorder %s12, 1
      %p29 = por %p27, %p28
      %p30 = scmp.ne.s32.totalorder %s22, %s25
      %p31 = scmp.eq.s32.totalorder %s12, 0
      %p32 = por %p30, %p31
      %p33 = scmp.ne.s32.totalorder %s22, %s25
      %p34 = scmp.eq.s32.totalorder %s17, 1
      %p35 = por %p33, %p34
      %p36 = scmp.ne.s32.totalorder %s25, %s26
      %p37 = scmp.eq.s32.totalorder %s17, 0
      %p38 = por %p36, %p37
      %p39 = scmp.ne.s32.totalorder %s25, %s26
      %p40 = scmp.eq.s32.totalorder %s18, 1
      %p41 = por %p39, %p40
      %p43 = scmp.ne.s32.totalorder %s26, %s42
      %p44 = scmp.eq.s32.totalorder %s18, 0
      %p45 = por %p43, %p44
      %s46 = ssub.s32 %s12, %s19
      %p47 = scmp.eq.s32.totalorder %s46, 0
      %s49 = sadd.s32 %s48, 1
      %s50 = scalar_select %p47, %s48, %s49
      %p53 = pneg %p47
      %p54 = scmp.eq.s32.totalorder %s12, 1
      %p55 = por %p53, %p54
      %p56 = scmp.ne.s32.totalorder %s48, %s51
      %p57 = scmp.eq.s32.totalorder %s12, 0
      %p58 = por %p56, %p57
      %p59 = scmp.ne.s32.totalorder %s48, %s51
      %p60 = scmp.eq.s32.totalorder %s17, 1
      %p61 = por %p59, %p60
      %p62 = scmp.ne.s32.totalorder %s51, %s52
      %p63 = scmp.eq.s32.totalorder %s17, 0
      %p64 = por %p62, %p63
      %p65 = scmp.ne.s32.totalorder %s51, %s52
      %p66 = scmp.eq.s32.totalorder %s18, 1
      %p67 = por %p65, %p66
      %p69 = scmp.ne.s32.totalorder %s52, %s68
      %p70 = scmp.eq.s32.totalorder %s18, 0
      %p71 = por %p69, %p70
      %s73 = sadd.s32 %s72, 1
      %p76 = scmp.eq.s32.totalorder %s12, 1
      %p77 = scmp.ne.s32.totalorder %s72, %s74
      %p78 = scmp.eq.s32.totalorder %s12, 0
      %p79 = por %p77, %p78
      %p80 = scmp.ne.s32.totalorder %s72, %s74
      %p81 = scmp.eq.s32.totalorder %s17, 1
      %p82 = por %p80, %p81
      %p83 = scmp.ne.s32.totalorder %s74, %s75
      %p84 = scmp.eq.s32.totalorder %s17, 0
      %p85 = por %p83, %p84
      %p86 = scmp.ne.s32.totalorder %s74, %s75
      %p87 = scmp.eq.s32.totalorder %s18, 1
      %p88 = por %p86, %p87
      %p90 = scmp.ne.s32.totalorder %s75, %s89
      %p91 = scmp.eq.s32.totalorder %s18, 0
      %p92 = por %p90, %p91
      %s94 = sadd.s32 %s93, 1
      %p97 = scmp.eq.s32.totalorder %s12, 1
      %p98 = scmp.ne.s32.totalorder %s93, %s95
      %p99 = scmp.eq.s32.totalorder %s12, 0
      %p100 = por %p98, %p99
      %p101 = scmp.ne.s32.totalorder %s93, %s95
      %p102 = scmp.eq.s32.totalorder %s17, 1
      %p103 = por %p101, %p102
      %p104 = scmp.ne.s32.totalorder %s95, %s96
      %p105 = scmp.eq.s32.totalorder %s17, 0
      %p106 = por %p104, %p105
      %p107 = scmp.ne.s32.totalorder %s95, %s96
      %p108 = scmp.eq.s32.totalorder %s18, 1
      %p109 = por %p107, %p108
      %p111 = scmp.ne.s32.totalorder %s96, %s110
      %p112 = scmp.eq.s32.totalorder %s18, 0
      %p113 = por %p111, %p112
      %s115 = sadd.s32 %s114, 1
      %p118 = scmp.eq.s32.totalorder %s12, 1
      %p119 = scmp.ne.s32.totalorder %s114, %s116
      %p120 = scmp.eq.s32.totalorder %s12, 0
      %p121 = por %p119, %p120
      %p122 = scmp.ne.s32.totalorder %s114, %s116
      %p123 = scmp.eq.s32.totalorder %s17, 1
      %p124 = por %p122, %p123
      %p125 = scmp.ne.s32.totalorder %s116, %s117
      %p126 = scmp.eq.s32.totalorder %s17, 0
      %p127 = por %p125, %p126
      %p128 = scmp.ne.s32.totalorder %s116, %s117
      %p129 = scmp.eq.s32.totalorder %s18, 1
      %p130 = por %p128, %p129
      %p132 = scmp.ne.s32.totalorder %s117, %s131
      %p133 = scmp.eq.s32.totalorder %s18, 0
      %p134 = por %p132, %p133
      %s136 = sadd.s32 %s135, 1
      %p139 = scmp.eq.s32.totalorder %s12, 1
      %p140 = scmp.ne.s32.totalorder %s135, %s137
      %p141 = scmp.eq.s32.totalorder %s12, 0
      %p142 = por %p140, %p141
      %p143 = scmp.ne.s32.totalorder %s135, %s137
      %p144 = scmp.eq.s32.totalorder %s17, 1
      %p145 = por %p143, %p144
      %p146 = scmp.ne.s32.totalorder %s137, %s138
      %p147 = scmp.eq.s32.totalorder %s17, 0
      %p148 = por %p146, %p147
      %p149 = scmp.ne.s32.totalorder %s137, %s138
      %p150 = scmp.eq.s32.totalorder %s18, 1
      %p151 = por %p149, %p150
      %p153 = scmp.ne.s32.totalorder %s138, %s152
      %p154 = scmp.eq.s32.totalorder %s18, 0
      %p155 = por %p153, %p154
      %p156 = scmp.le.s32.totalorder 1, %s12
      %p157 = scmp.lt.s32.totalorder %s12, 3
      %p158 = pnand %p156, %p157
      %p159 = pneg %p158
      // Predicated region
      $region9: #{moe_block.3} parent=5 // pred_check
        _
      $region10: #{moe_block.3} parent=5 // pred_check_branch
        %161 = sbr.rel (%p158) target = $region12
      $region11: #{moe_block.3} parent=5 // pred_region
        %s162 = ssub.s32 %s12, 1
        // Predicated region
        $region13: #{moe_block.3} parent=11 // pred_check
          %p163 = pneg %p85
        $region14: #{moe_block.3} parent=11 // pred_check_branch
          %165 = sbr.rel (%p163) target = $region16
        $region15: #{moe_block.3} parent=11 // pred_region
          _
        $region16: #{moe_block.3} parent=11 // pred_fallthru
          _
        // Predicated region
        $region17: #{moe_block.3} parent=11 // pred_check
          %p166 = pneg %p106
        $region18: #{moe_block.3} parent=11 // pred_check_branch
          %168 = sbr.rel (%p166) target = $region20
        $region19: #{moe_block.3} parent=11 // pred_region
          _
        $region20: #{moe_block.3} parent=11 // pred_fallthru
          _
        // Predicated region
        $region21: #{moe_block.3} parent=11 // pred_check
          %p169 = pneg %p127
        $region22: #{moe_block.3} parent=11 // pred_check_branch
          %171 = sbr.rel (%p169) target = $region24
        $region23: #{moe_block.3} parent=11 // pred_region
          _
        $region24: #{moe_block.3} parent=11 // pred_fallthru
          _
      $region12: #{moe_block.3} parent=5 // pred_fallthru
        _
      %p172 = scmp.lt.s32.totalorder %s12, 2
      // Predicated region
      $region25: #{moe_block.3} parent=5 // pred_check
        %p173 = pneg %p172
      $region26: #{moe_block.3} parent=5 // pred_check_branch
        %175 = sbr.rel (%p173) target = $region28
      $region27: #{moe_block.3} parent=5 // pred_region
        // Predicated region
        $region29: #{moe_block.3} parent=27 // pred_check
          %p176 = pneg %p32
        $region30: #{moe_block.3} parent=27 // pred_check_branch
          %178 = sbr.rel (%p176) target = $region32
        $region31: #{moe_block.3} parent=27 // pred_region
          %s179 = smul.u32 98, %s12
          %p180 = scmp.lt.s32.totalorder %s179, 195
          %s181 = scalar_select %p180, %s179, 195
          %s182 = scalar_lea.vmem %s0, %s181
          %s183 = smul.u32 98, %s12
        $region32: #{moe_block.3} parent=27 // pred_fallthru
          _
        // Predicated region
        $region33: #{moe_block.3} parent=27 // pred_check
          %p184 = pneg %p58
        $region34: #{moe_block.3} parent=27 // pred_check_branch
          %186 = sbr.rel (%p184) target = $region36
        $region35: #{moe_block.3} parent=27 // pred_region
          %s187 = smul.u32 1568, %s12
          %p188 = scmp.lt.s32.totalorder %s187, 3135
          %s189 = scalar_select %p188, %s187, 3135
          %s190 = smul.addr %s189, 4
          %s191 = scalar_lea.vmem %s1, %s190
          %s192 = smul.u32 1568, %s12
        $region36: #{moe_block.3} parent=27 // pred_fallthru
          _
      $region28: #{moe_block.3} parent=5 // pred_fallthru
        _
      %p193 = scmp.le.s32.totalorder 1, %s12
      %p194 = scmp.lt.s32.totalorder %s12, 3
      %p195 = pnand %p193, %p194
      %p196 = pneg %p195
      // Predicated region
      $region37: #{moe_block.3} parent=5 // pred_check
        _
      $region38: #{moe_block.3} parent=5 // pred_check_branch
        %198 = sbr.rel (%p195) target = $region40
      $region39: #{moe_block.3} parent=5 // pred_region
        %s199 = ssub.s32 %s12, 1
        %s200 = smul.u32 98, %s17
        %p201 = scmp.lt.s32.totalorder %s200, 195
        %s202 = scalar_select %p201, %s200, 195
        %s203 = scalar_lea.vmem %s0, %s202
        %p204 = pneg %p38
        %p205 = pneg %p35
        %s206 = smul.u32 1568, %s17
        %p207 = scmp.lt.s32.totalorder %s206, 3135
        %s208 = scalar_select %p207, %s206, 3135
        %s209 = smul.addr %s208, 4
        %s210 = scalar_lea.vmem %s1, %s209
        %p211 = pneg %p64
        %p212 = pneg %p61
        %p213 = pneg %p85
        %p214 = pneg %p82
        %p215 = pneg %p106
        %p216 = pneg %p103
        %p217 = pneg %p127
        %p218 = pneg %p124
        %p219 = pneg %p148
        %p220 = pneg %p145
        %s221 = smul.u32 98, %s17
        %p222 = scmp.lt.s32.totalorder %s221, 195
        %s223 = scalar_select %p222, %s221, 195
        %s224 = scalar_lea.vmem %s0, %s223
        %s225 = smul.u32 98, %s17
        %s226 = smul.u32 1568, %s17
        %p227 = scmp.lt.s32.totalorder %s226, 3135
        %s228 = scalar_select %p227, %s226, 3135
        %s229 = smul.addr %s228, 4
        %s230 = scalar_lea.vmem %s1, %s229
        %s231 = smul.u32 1568, %s17
        %p233 = scmp.eq.s32.totalorder %s17, 0
        // Predicated region
        $region41: #{moe_block.3} parent=39 // pred_check
          %p234 = pneg %p233
        $region42: #{moe_block.3} parent=39 // pred_check_branch
          %236 = sbr.rel (%p234) target = $region44
        $region43: #{moe_block.3} parent=39 // pred_region
          %237 = vst [vmem:[#allocation2] sm:$0x3] 0.0
        $region44: #{moe_block.3} parent=39 // pred_fallthru
          _
        %v238 = vld [vmem:[#allocation2] sm:$0x3]
        %v239 = vld [vmem:[%s224] sm:$0xff]
        %v240 = vld [vmem:[%s224 + $0x8] sm:$0xff]
        %v241 = vld [vmem:[%s224 + $0x10] sm:$0xff]
        %v242 = vld [vmem:[%s224 + $0x18] sm:$0xff]
        %v243 = vld [vmem:[%s224 + $0x20] sm:$0xff]
        %v244 = vld [vmem:[%s224 + $0x28] sm:$0xff]
        %v245 = vld [vmem:[%s224 + $0x30] sm:$0xff]
        %v246 = vld [vmem:[%s224 + $0x38] sm:$0xff]
        %v247 = vld [vmem:[%s224 + $0x40] sm:$0xff]
        %v248 = vld [vmem:[%s224 + $0x48] sm:$0xff]
        %v249 = vld [vmem:[%s224 + $0x50] sm:$0xff]
        %v250 = vld [vmem:[%s224 + $0x58] sm:$0xff]
        %v251 = vld [vmem:[%s224 + $0x60] sm:$0x3]
        %v252 = vld [vmem:[%s230] sm:$0xf]
        %v253 = vld [vmem:[%s230 + $0x4] sm:$0xf]
        %v254 = vld [vmem:[%s230 + $0x8] sm:$0xf]
        %v255 = vld [vmem:[%s230 + $0xc] sm:$0xf]
        %v256 = vld [vmem:[%s230 + $0x10] sm:$0xf]
        %v257 = vld [vmem:[%s230 + $0x14] sm:$0xf]
        %v258 = vld [vmem:[%s230 + $0x18] sm:$0xf]
        %v259 = vld [vmem:[%s230 + $0x1c] sm:$0xf]
        %v260 = vld [vmem:[%s230 + $0x20] sm:$0xf]
        %v261 = vld [vmem:[%s230 + $0x24] sm:$0xf]
        %v262 = vld [vmem:[%s230 + $0x28] sm:$0xf]
        %v263 = vld [vmem:[%s230 + $0x2c] sm:$0xf]
        %v264 = vld [vmem:[%s230 + $0x30] sm:$0xf]
        %v265 = vld [vmem:[%s230 + $0x34] sm:$0xf]
        %v266 = vld [vmem:[%s230 + $0x38] sm:$0xf]
        %v267 = vld [vmem:[%s230 + $0x3c] sm:$0xf]
        %v268 = vld [vmem:[%s230 + $0x40] sm:$0xf]
        %v269 = vld [vmem:[%s230 + $0x44] sm:$0xf]
        %v270 = vld [vmem:[%s230 + $0x48] sm:$0xf]
        %v271 = vld [vmem:[%s230 + $0x4c] sm:$0xf]
        %v272 = vld [vmem:[%s230 + $0x50] sm:$0xf]
        %v273 = vld [vmem:[%s230 + $0x54] sm:$0xf]
        %v274 = vld [vmem:[%s230 + $0x58] sm:$0xf]
        %v275 = vld [vmem:[%s230 + $0x5c] sm:$0xf]
        %v276 = vld [vmem:[%s230 + $0x60] sm:$0xf]
        %v277 = vld [vmem:[%s230 + $0x64] sm:$0xf]
        %v278 = vld [vmem:[%s230 + $0x68] sm:$0xf]
        %v279 = vld [vmem:[%s230 + $0x6c] sm:$0xf]
        %v280 = vld [vmem:[%s230 + $0x70] sm:$0xf]
        %v281 = vld [vmem:[%s230 + $0x74] sm:$0xf]
        %v282 = vld [vmem:[%s230 + $0x78] sm:$0xf]
        %v283 = vld [vmem:[%s230 + $0x7c] sm:$0xf]
        %v284 = vld [vmem:[%s230 + $0x80] sm:$0xf]
        %v285 = vld [vmem:[%s230 + $0x84] sm:$0xf]
        %v286 = vld [vmem:[%s230 + $0x88] sm:$0xf]
        %v287 = vld [vmem:[%s230 + $0x8c] sm:$0xf]
        %v288 = vld [vmem:[%s230 + $0x90] sm:$0xf]
        %v289 = vld [vmem:[%s230 + $0x94] sm:$0xf]
        %v290 = vld [vmem:[%s230 + $0x98] sm:$0xf]
        %v291 = vld [vmem:[%s230 + $0x9c] sm:$0xf]
        %v292 = vld [vmem:[%s230 + $0xa0] sm:$0xf]
        %v293 = vld [vmem:[%s230 + $0xa4] sm:$0xf]
        %v294 = vld [vmem:[%s230 + $0xa8] sm:$0xf]
        %v295 = vld [vmem:[%s230 + $0xac] sm:$0xf]
        %v296 = vld [vmem:[%s230 + $0xb0] sm:$0xf]
        %v297 = vld [vmem:[%s230 + $0xb4] sm:$0xf]
        %v298 = vld [vmem:[%s230 + $0xb8] sm:$0xf]
        %v299 = vld [vmem:[%s230 + $0xbc] sm:$0xf]
        %v300 = vld [vmem:[%s230 + $0xc0] sm:$0xf]
        %v301 = vld [vmem:[%s230 + $0xc4] sm:$0xf]
        %v302 = vld [vmem:[%s230 + $0xc8] sm:$0xf]
        %v303 = vld [vmem:[%s230 + $0xcc] sm:$0xf]
        %v304 = vld [vmem:[%s230 + $0xd0] sm:$0xf]
        %v305 = vld [vmem:[%s230 + $0xd4] sm:$0xf]
        %v306 = vld [vmem:[%s230 + $0xd8] sm:$0xf]
        %v307 = vld [vmem:[%s230 + $0xdc] sm:$0xf]
        %v308 = vld [vmem:[%s230 + $0xe0] sm:$0xf]
        %v309 = vld [vmem:[%s230 + $0xe4] sm:$0xf]
        %v310 = vld [vmem:[%s230 + $0xe8] sm:$0xf]
        %v311 = vld [vmem:[%s230 + $0xec] sm:$0xf]
        %v312 = vld [vmem:[%s230 + $0xf0] sm:$0xf]
        %v313 = vld [vmem:[%s230 + $0xf4] sm:$0xf]
        %v314 = vld [vmem:[%s230 + $0xf8] sm:$0xf]
        %v315 = vld [vmem:[%s230 + $0xfc] sm:$0xf]
        %v316 = vld [vmem:[%s230 + $0x100] sm:$0xf]
        %v317 = vld [vmem:[%s230 + $0x104] sm:$0xf]
        %v318 = vld [vmem:[%s230 + $0x108] sm:$0xf]
        %v319 = vld [vmem:[%s230 + $0x10c] sm:$0xf]
        %v320 = vld [vmem:[%s230 + $0x110] sm:$0xf]
        %v321 = vld [vmem:[%s230 + $0x114] sm:$0xf]
        %v322 = vld [vmem:[%s230 + $0x118] sm:$0xf]
        %v323 = vld [vmem:[%s230 + $0x11c] sm:$0xf]
        %v324 = vld [vmem:[%s230 + $0x120] sm:$0xf]
        %v325 = vld [vmem:[%s230 + $0x124] sm:$0xf]
        %v326 = vld [vmem:[%s230 + $0x128] sm:$0xf]
        %v327 = vld [vmem:[%s230 + $0x12c] sm:$0xf]
        %v328 = vld [vmem:[%s230 + $0x130] sm:$0xf]
        %v329 = vld [vmem:[%s230 + $0x134] sm:$0xf]
        %v330 = vld [vmem:[%s230 + $0x138] sm:$0xf]
        %v331 = vld [vmem:[%s230 + $0x13c] sm:$0xf]
        %v332 = vld [vmem:[%s230 + $0x140] sm:$0xf]
        %v333 = vld [vmem:[%s230 + $0x144] sm:$0xf]
        %v334 = vld [vmem:[%s230 + $0x148] sm:$0xf]
        %v335 = vld [vmem:[%s230 + $0x14c] sm:$0xf]
        %v336 = vld [vmem:[%s230 + $0x150] sm:$0xf]
        %v337 = vld [vmem:[%s230 + $0x154] sm:$0xf]
        %v338 = vld [vmem:[%s230 + $0x158] sm:$0xf]
        %v339 = vld [vmem:[%s230 + $0x15c] sm:$0xf]
        %v340 = vld [vmem:[%s230 + $0x160] sm:$0xf]
        %v341 = vld [vmem:[%s230 + $0x164] sm:$0xf]
        %v342 = vld [vmem:[%s230 + $0x168] sm:$0xf]
        %v343 = vld [vmem:[%s230 + $0x16c] sm:$0xf]
        %v344 = vld [vmem:[%s230 + $0x170] sm:$0xf]
        %v345 = vld [vmem:[%s230 + $0x174] sm:$0xf]
        %v346 = vld [vmem:[%s230 + $0x178] sm:$0xf]
        %v347 = vld [vmem:[%s230 + $0x17c] sm:$0xf]
        %v348 = vld [vmem:[%s230 + $0x180] sm:$0xf]
        %v349 = vld [vmem:[%s230 + $0x184] sm:$0xf]
        %v350 = vld [vmem:[%s230 + $0x188] sm:$0xf]
        %v351 = vld [vmem:[%s230 + $0x18c] sm:$0xf]
        %v352 = vld [vmem:[%s230 + $0x190] sm:$0xf]
        %v353 = vld [vmem:[%s230 + $0x194] sm:$0xf]
        %v354 = vld [vmem:[%s230 + $0x198] sm:$0xf]
        %v355 = vld [vmem:[%s230 + $0x19c] sm:$0xf]
        %v356 = vld [vmem:[%s230 + $0x1a0] sm:$0xf]
        %v357 = vld [vmem:[%s230 + $0x1a4] sm:$0xf]
        %v358 = vld [vmem:[%s230 + $0x1a8] sm:$0xf]
        %v359 = vld [vmem:[%s230 + $0x1ac] sm:$0xf]
        %v360 = vld [vmem:[%s230 + $0x1b0] sm:$0xf]
        %v361 = vld [vmem:[%s230 + $0x1b4] sm:$0xf]
        %v362 = vld [vmem:[%s230 + $0x1b8] sm:$0xf]
        %v363 = vld [vmem:[%s230 + $0x1bc] sm:$0xf]
        %v364 = vld [vmem:[%s230 + $0x1c0] sm:$0xf]
        %v365 = vld [vmem:[%s230 + $0x1c4] sm:$0xf]
        %v366 = vld [vmem:[%s230 + $0x1c8] sm:$0xf]
        %v367 = vld [vmem:[%s230 + $0x1cc] sm:$0xf]
        %v368 = vld [vmem:[%s230 + $0x1d0] sm:$0xf]
        %v369 = vld [vmem:[%s230 + $0x1d4] sm:$0xf]
        %v370 = vld [vmem:[%s230 + $0x1d8] sm:$0xf]
        %v371 = vld [vmem:[%s230 + $0x1dc] sm:$0xf]
        %v372 = vld [vmem:[%s230 + $0x1e0] sm:$0xf]
        %v373 = vld [vmem:[%s230 + $0x1e4] sm:$0xf]
        %v374 = vld [vmem:[%s230 + $0x1e8] sm:$0xf]
        %v375 = vld [vmem:[%s230 + $0x1ec] sm:$0xf]
        %v376 = vld [vmem:[%s230 + $0x1f0] sm:$0xf]
        %v377 = vld [vmem:[%s230 + $0x1f4] sm:$0xf]
        %v378 = vld [vmem:[%s230 + $0x1f8] sm:$0xf]
        %v379 = vld [vmem:[%s230 + $0x1fc] sm:$0xf]
        %v380 = vld [vmem:[%s230 + $0x200] sm:$0xf]
        %v381 = vld [vmem:[%s230 + $0x204] sm:$0xf]
        %v382 = vld [vmem:[%s230 + $0x208] sm:$0xf]
        %v383 = vld [vmem:[%s230 + $0x20c] sm:$0xf]
        %v384 = vld [vmem:[%s230 + $0x210] sm:$0xf]
        %v385 = vld [vmem:[%s230 + $0x214] sm:$0xf]
        %v386 = vld [vmem:[%s230 + $0x218] sm:$0xf]
        %v387 = vld [vmem:[%s230 + $0x21c] sm:$0xf]
        %v388 = vld [vmem:[%s230 + $0x220] sm:$0xf]
        %v389 = vld [vmem:[%s230 + $0x224] sm:$0xf]
        %v390 = vld [vmem:[%s230 + $0x228] sm:$0xf]
        %v391 = vld [vmem:[%s230 + $0x22c] sm:$0xf]
        %v392 = vld [vmem:[%s230 + $0x230] sm:$0xf]
        %v393 = vld [vmem:[%s230 + $0x234] sm:$0xf]
        %v394 = vld [vmem:[%s230 + $0x238] sm:$0xf]
        %v395 = vld [vmem:[%s230 + $0x23c] sm:$0xf]
        %v396 = vld [vmem:[%s230 + $0x240] sm:$0xf]
        %v397 = vld [vmem:[%s230 + $0x244] sm:$0xf]
        %v398 = vld [vmem:[%s230 + $0x248] sm:$0xf]
        %v399 = vld [vmem:[%s230 + $0x24c] sm:$0xf]
        %v400 = vld [vmem:[%s230 + $0x250] sm:$0xf]
        %v401 = vld [vmem:[%s230 + $0x254] sm:$0xf]
        %v402 = vld [vmem:[%s230 + $0x258] sm:$0xf]
        %v403 = vld [vmem:[%s230 + $0x25c] sm:$0xf]
        %v404 = vld [vmem:[%s230 + $0x260] sm:$0xf]
        %v405 = vld [vmem:[%s230 + $0x264] sm:$0xf]
        %v406 = vld [vmem:[%s230 + $0x268] sm:$0xf]
        %v407 = vld [vmem:[%s230 + $0x26c] sm:$0xf]
        %v408 = vld [vmem:[%s230 + $0x270] sm:$0xf]
        %v409 = vld [vmem:[%s230 + $0x274] sm:$0xf]
        %v410 = vld [vmem:[%s230 + $0x278] sm:$0xf]
        %v411 = vld [vmem:[%s230 + $0x27c] sm:$0xf]
        %v412 = vld [vmem:[%s230 + $0x280] sm:$0xf]
        %v413 = vld [vmem:[%s230 + $0x284] sm:$0xf]
        %v414 = vld [vmem:[%s230 + $0x288] sm:$0xf]
        %v415 = vld [vmem:[%s230 + $0x28c] sm:$0xf]
        %v416 = vld [vmem:[%s230 + $0x290] sm:$0xf]
        %v417 = vld [vmem:[%s230 + $0x294] sm:$0xf]
        %v418 = vld [vmem:[%s230 + $0x298] sm:$0xf]
        %v419 = vld [vmem:[%s230 + $0x29c] sm:$0xf]
        %v420 = vld [vmem:[%s230 + $0x2a0] sm:$0xf]
        %v421 = vld [vmem:[%s230 + $0x2a4] sm:$0xf]
        %v422 = vld [vmem:[%s230 + $0x2a8] sm:$0xf]
        %v423 = vld [vmem:[%s230 + $0x2ac] sm:$0xf]
        %v424 = vld [vmem:[%s230 + $0x2b0] sm:$0xf]
        %v425 = vld [vmem:[%s230 + $0x2b4] sm:$0xf]
        %v426 = vld [vmem:[%s230 + $0x2b8] sm:$0xf]
        %v427 = vld [vmem:[%s230 + $0x2bc] sm:$0xf]
        %v428 = vld [vmem:[%s230 + $0x2c0] sm:$0xf]
        %v429 = vld [vmem:[%s230 + $0x2c4] sm:$0xf]
        %v430 = vld [vmem:[%s230 + $0x2c8] sm:$0xf]
        %v431 = vld [vmem:[%s230 + $0x2cc] sm:$0xf]
        %v432 = vld [vmem:[%s230 + $0x2d0] sm:$0xf]
        %v433 = vld [vmem:[%s230 + $0x2d4] sm:$0xf]
        %v434 = vld [vmem:[%s230 + $0x2d8] sm:$0xf]
        %v435 = vld [vmem:[%s230 + $0x2dc] sm:$0xf]
        %v436 = vld [vmem:[%s230 + $0x2e0] sm:$0xf]
        %v437 = vld [vmem:[%s230 + $0x2e4] sm:$0xf]
        %v438 = vld [vmem:[%s230 + $0x2e8] sm:$0xf]
        %v439 = vld [vmem:[%s230 + $0x2ec] sm:$0xf]
        %v440 = vld [vmem:[%s230 + $0x2f0] sm:$0xf]
        %v441 = vld [vmem:[%s230 + $0x2f4] sm:$0xf]
        %v442 = vld [vmem:[%s230 + $0x2f8] sm:$0xf]
        %v443 = vld [vmem:[%s230 + $0x2fc] sm:$0xf]
        %v444 = vld [vmem:[%s230 + $0x300] sm:$0xf]
        %v445 = vld [vmem:[%s230 + $0x304] sm:$0xf]
        %v446 = vld [vmem:[%s230 + $0x308] sm:$0xf]
        %v447 = vld [vmem:[%s230 + $0x30c] sm:$0xf]
        %v448 = vld [vmem:[%s230 + $0x310] sm:$0xf]
        %v449 = vld [vmem:[%s230 + $0x314] sm:$0xf]
        %v450 = vld [vmem:[%s230 + $0x318] sm:$0xf]
        %v451 = vld [vmem:[%s230 + $0x31c] sm:$0xf]
        %v452 = vld [vmem:[%s230 + $0x320] sm:$0xf]
        %v453 = vld [vmem:[%s230 + $0x324] sm:$0xf]
        %v454 = vld [vmem:[%s230 + $0x328] sm:$0xf]
        %v455 = vld [vmem:[%s230 + $0x32c] sm:$0xf]
        %v456 = vld [vmem:[%s230 + $0x330] sm:$0xf]
        %v457 = vld [vmem:[%s230 + $0x334] sm:$0xf]
        %v458 = vld [vmem:[%s230 + $0x338] sm:$0xf]
        %v459 = vld [vmem:[%s230 + $0x33c] sm:$0xf]
        %v460 = vld [vmem:[%s230 + $0x340] sm:$0xf]
        %v461 = vld [vmem:[%s230 + $0x344] sm:$0xf]
        %v462 = vld [vmem:[%s230 + $0x348] sm:$0xf]
        %v463 = vld [vmem:[%s230 + $0x34c] sm:$0xf]
        %v464 = vld [vmem:[%s230 + $0x350] sm:$0xf]
        %v465 = vld [vmem:[%s230 + $0x354] sm:$0xf]
        %v466 = vld [vmem:[%s230 + $0x358] sm:$0xf]
        %v467 = vld [vmem:[%s230 + $0x35c] sm:$0xf]
        %v468 = vld [vmem:[%s230 + $0x360] sm:$0xf]
        %v469 = vld [vmem:[%s230 + $0x364] sm:$0xf]
        %v470 = vld [vmem:[%s230 + $0x368] sm:$0xf]
        %v471 = vld [vmem:[%s230 + $0x36c] sm:$0xf]
        %v472 = vld [vmem:[%s230 + $0x370] sm:$0xf]
        %v473 = vld [vmem:[%s230 + $0x374] sm:$0xf]
        %v474 = vld [vmem:[%s230 + $0x378] sm:$0xf]
        %v475 = vld [vmem:[%s230 + $0x37c] sm:$0xf]
        %v476 = vld [vmem:[%s230 + $0x380] sm:$0xf]
        %v477 = vld [vmem:[%s230 + $0x384] sm:$0xf]
        %v478 = vld [vmem:[%s230 + $0x388] sm:$0xf]
        %v479 = vld [vmem:[%s230 + $0x38c] sm:$0xf]
        %v480 = vld [vmem:[%s230 + $0x390] sm:$0xf]
        %v481 = vld [vmem:[%s230 + $0x394] sm:$0xf]
        %v482 = vld [vmem:[%s230 + $0x398] sm:$0xf]
        %v483 = vld [vmem:[%s230 + $0x39c] sm:$0xf]
        %v484 = vld [vmem:[%s230 + $0x3a0] sm:$0xf]
        %v485 = vld [vmem:[%s230 + $0x3a4] sm:$0xf]
        %v486 = vld [vmem:[%s230 + $0x3a8] sm:$0xf]
        %v487 = vld [vmem:[%s230 + $0x3ac] sm:$0xf]
        %v488 = vld [vmem:[%s230 + $0x3b0] sm:$0xf]
        %v489 = vld [vmem:[%s230 + $0x3b4] sm:$0xf]
        %v490 = vld [vmem:[%s230 + $0x3b8] sm:$0xf]
        %v491 = vld [vmem:[%s230 + $0x3bc] sm:$0xf]
        %v492 = vld [vmem:[%s230 + $0x3c0] sm:$0xf]
        %v493 = vld [vmem:[%s230 + $0x3c4] sm:$0xf]
        %v494 = vld [vmem:[%s230 + $0x3c8] sm:$0xf]
        %v495 = vld [vmem:[%s230 + $0x3cc] sm:$0xf]
        %v496 = vld [vmem:[%s230 + $0x3d0] sm:$0xf]
        %v497 = vld [vmem:[%s230 + $0x3d4] sm:$0xf]
        %v498 = vld [vmem:[%s230 + $0x3d8] sm:$0xf]
        %v499 = vld [vmem:[%s230 + $0x3dc] sm:$0xf]
        %v500 = vld [vmem:[%s230 + $0x3e0] sm:$0xf]
        %v501 = vld [vmem:[%s230 + $0x3e4] sm:$0xf]
        %v502 = vld [vmem:[%s230 + $0x3e8] sm:$0xf]
        %v503 = vld [vmem:[%s230 + $0x3ec] sm:$0xf]
        %v504 = vld [vmem:[%s230 + $0x3f0] sm:$0xf]
        %v505 = vld [vmem:[%s230 + $0x3f4] sm:$0xf]
        %v506 = vld [vmem:[%s230 + $0x3f8] sm:$0xf]
        %v507 = vld [vmem:[%s230 + $0x3fc] sm:$0xf]
        %v508 = vld [vmem:[%s230 + $0x400] sm:$0xf]
        %v509 = vld [vmem:[%s230 + $0x404] sm:$0xf]
        %v510 = vld [vmem:[%s230 + $0x408] sm:$0xf]
        %v511 = vld [vmem:[%s230 + $0x40c] sm:$0xf]
        %v512 = vld [vmem:[%s230 + $0x410] sm:$0xf]
        %v513 = vld [vmem:[%s230 + $0x414] sm:$0xf]
        %v514 = vld [vmem:[%s230 + $0x418] sm:$0xf]
        %v515 = vld [vmem:[%s230 + $0x41c] sm:$0xf]
        %v516 = vld [vmem:[%s230 + $0x420] sm:$0xf]
        %v517 = vld [vmem:[%s230 + $0x424] sm:$0xf]
        %v518 = vld [vmem:[%s230 + $0x428] sm:$0xf]
        %v519 = vld [vmem:[%s230 + $0x42c] sm:$0xf]
        %v520 = vld [vmem:[%s230 + $0x430] sm:$0xf]
        %v521 = vld [vmem:[%s230 + $0x434] sm:$0xf]
        %v522 = vld [vmem:[%s230 + $0x438] sm:$0xf]
        %v523 = vld [vmem:[%s230 + $0x43c] sm:$0xf]
        %v524 = vld [vmem:[%s230 + $0x440] sm:$0xf]
        %v525 = vld [vmem:[%s230 + $0x444] sm:$0xf]
        %v526 = vld [vmem:[%s230 + $0x448] sm:$0xf]
        %v527 = vld [vmem:[%s230 + $0x44c] sm:$0xf]
        %v528 = vld [vmem:[%s230 + $0x450] sm:$0xf]
        %v529 = vld [vmem:[%s230 + $0x454] sm:$0xf]
        %v530 = vld [vmem:[%s230 + $0x458] sm:$0xf]
        %v531 = vld [vmem:[%s230 + $0x45c] sm:$0xf]
        %v532 = vld [vmem:[%s230 + $0x460] sm:$0xf]
        %v533 = vld [vmem:[%s230 + $0x464] sm:$0xf]
        %v534 = vld [vmem:[%s230 + $0x468] sm:$0xf]
        %v535 = vld [vmem:[%s230 + $0x46c] sm:$0xf]
        %v536 = vld [vmem:[%s230 + $0x470] sm:$0xf]
        %v537 = vld [vmem:[%s230 + $0x474] sm:$0xf]
        %v538 = vld [vmem:[%s230 + $0x478] sm:$0xf]
        %v539 = vld [vmem:[%s230 + $0x47c] sm:$0xf]
        %v540 = vld [vmem:[%s230 + $0x480] sm:$0xf]
        %v541 = vld [vmem:[%s230 + $0x484] sm:$0xf]
        %v542 = vld [vmem:[%s230 + $0x488] sm:$0xf]
        %v543 = vld [vmem:[%s230 + $0x48c] sm:$0xf]
        %v544 = vld [vmem:[%s230 + $0x490] sm:$0xf]
        %v545 = vld [vmem:[%s230 + $0x494] sm:$0xf]
        %v546 = vld [vmem:[%s230 + $0x498] sm:$0xf]
        %v547 = vld [vmem:[%s230 + $0x49c] sm:$0xf]
        %v548 = vld [vmem:[%s230 + $0x4a0] sm:$0xf]
        %v549 = vld [vmem:[%s230 + $0x4a4] sm:$0xf]
        %v550 = vld [vmem:[%s230 + $0x4a8] sm:$0xf]
        %v551 = vld [vmem:[%s230 + $0x4ac] sm:$0xf]
        %v552 = vld [vmem:[%s230 + $0x4b0] sm:$0xf]
        %v553 = vld [vmem:[%s230 + $0x4b4] sm:$0xf]
        %v554 = vld [vmem:[%s230 + $0x4b8] sm:$0xf]
        %v555 = vld [vmem:[%s230 + $0x4bc] sm:$0xf]
        %v556 = vld [vmem:[%s230 + $0x4c0] sm:$0xf]
        %v557 = vld [vmem:[%s230 + $0x4c4] sm:$0xf]
        %v558 = vld [vmem:[%s230 + $0x4c8] sm:$0xf]
        %v559 = vld [vmem:[%s230 + $0x4cc] sm:$0xf]
        %v560 = vld [vmem:[%s230 + $0x4d0] sm:$0xf]
        %v561 = vld [vmem:[%s230 + $0x4d4] sm:$0xf]
        %v562 = vld [vmem:[%s230 + $0x4d8] sm:$0xf]
        %v563 = vld [vmem:[%s230 + $0x4dc] sm:$0xf]
        %v564 = vld [vmem:[%s230 + $0x4e0] sm:$0xf]
        %v565 = vld [vmem:[%s230 + $0x4e4] sm:$0xf]
        %v566 = vld [vmem:[%s230 + $0x4e8] sm:$0xf]
        %v567 = vld [vmem:[%s230 + $0x4ec] sm:$0xf]
        %v568 = vld [vmem:[%s230 + $0x4f0] sm:$0xf]
        %v569 = vld [vmem:[%s230 + $0x4f4] sm:$0xf]
        %v570 = vld [vmem:[%s230 + $0x4f8] sm:$0xf]
        %v571 = vld [vmem:[%s230 + $0x4fc] sm:$0xf]
        %v572 = vld [vmem:[%s230 + $0x500] sm:$0xf]
        %v573 = vld [vmem:[%s230 + $0x504] sm:$0xf]
        %v574 = vld [vmem:[%s230 + $0x508] sm:$0xf]
        %v575 = vld [vmem:[%s230 + $0x50c] sm:$0xf]
        %v576 = vld [vmem:[%s230 + $0x510] sm:$0xf]
        %v577 = vld [vmem:[%s230 + $0x514] sm:$0xf]
        %v578 = vld [vmem:[%s230 + $0x518] sm:$0xf]
        %v579 = vld [vmem:[%s230 + $0x51c] sm:$0xf]
        %v580 = vld [vmem:[%s230 + $0x520] sm:$0xf]
        %v581 = vld [vmem:[%s230 + $0x524] sm:$0xf]
        %v582 = vld [vmem:[%s230 + $0x528] sm:$0xf]
        %v583 = vld [vmem:[%s230 + $0x52c] sm:$0xf]
        %v584 = vld [vmem:[%s230 + $0x530] sm:$0xf]
        %v585 = vld [vmem:[%s230 + $0x534] sm:$0xf]
        %v586 = vld [vmem:[%s230 + $0x538] sm:$0xf]
        %v587 = vld [vmem:[%s230 + $0x53c] sm:$0xf]
        %v588 = vld [vmem:[%s230 + $0x540] sm:$0xf]
        %v589 = vld [vmem:[%s230 + $0x544] sm:$0xf]
        %v590 = vld [vmem:[%s230 + $0x548] sm:$0xf]
        %v591 = vld [vmem:[%s230 + $0x54c] sm:$0xf]
        %v592 = vld [vmem:[%s230 + $0x550] sm:$0xf]
        %v593 = vld [vmem:[%s230 + $0x554] sm:$0xf]
        %v594 = vld [vmem:[%s230 + $0x558] sm:$0xf]
        %v595 = vld [vmem:[%s230 + $0x55c] sm:$0xf]
        %v596 = vld [vmem:[%s230 + $0x560] sm:$0xf]
        %v597 = vld [vmem:[%s230 + $0x564] sm:$0xf]
        %v598 = vld [vmem:[%s230 + $0x568] sm:$0xf]
        %v599 = vld [vmem:[%s230 + $0x56c] sm:$0xf]
        %v600 = vld [vmem:[%s230 + $0x570] sm:$0xf]
        %v601 = vld [vmem:[%s230 + $0x574] sm:$0xf]
        %v602 = vld [vmem:[%s230 + $0x578] sm:$0xf]
        %v603 = vld [vmem:[%s230 + $0x57c] sm:$0xf]
        %v604 = vld [vmem:[%s230 + $0x580] sm:$0xf]
        %v605 = vld [vmem:[%s230 + $0x584] sm:$0xf]
        %v606 = vld [vmem:[%s230 + $0x588] sm:$0xf]
        %v607 = vld [vmem:[%s230 + $0x58c] sm:$0xf]
        %v608 = vld [vmem:[%s230 + $0x590] sm:$0xf]
        %v609 = vld [vmem:[%s230 + $0x594] sm:$0xf]
        %v610 = vld [vmem:[%s230 + $0x598] sm:$0xf]
        %v611 = vld [vmem:[%s230 + $0x59c] sm:$0xf]
        %v612 = vld [vmem:[%s230 + $0x5a0] sm:$0xf]
        %v613 = vld [vmem:[%s230 + $0x5a4] sm:$0xf]
        %v614 = vld [vmem:[%s230 + $0x5a8] sm:$0xf]
        %v615 = vld [vmem:[%s230 + $0x5ac] sm:$0xf]
        %v616 = vld [vmem:[%s230 + $0x5b0] sm:$0xf]
        %v617 = vld [vmem:[%s230 + $0x5b4] sm:$0xf]
        %v618 = vld [vmem:[%s230 + $0x5b8] sm:$0xf]
        %v619 = vld [vmem:[%s230 + $0x5bc] sm:$0xf]
        %v620 = vld [vmem:[%s230 + $0x5c0] sm:$0xf]
        %v621 = vld [vmem:[%s230 + $0x5c4] sm:$0xf]
        %v622 = vld [vmem:[%s230 + $0x5c8] sm:$0xf]
        %v623 = vld [vmem:[%s230 + $0x5cc] sm:$0xf]
        %v624 = vld [vmem:[%s230 + $0x5d0] sm:$0xf]
        %v625 = vld [vmem:[%s230 + $0x5d4] sm:$0xf]
        %v626 = vld [vmem:[%s230 + $0x5d8] sm:$0xf]
        %v627 = vld [vmem:[%s230 + $0x5dc] sm:$0xf]
        %v628 = vld [vmem:[%s230 + $0x5e0] sm:$0xf]
        %v629 = vld [vmem:[%s230 + $0x5e4] sm:$0xf]
        %v630 = vld [vmem:[%s230 + $0x5e8] sm:$0xf]
        %v631 = vld [vmem:[%s230 + $0x5ec] sm:$0xf]
        %v632 = vld [vmem:[%s230 + $0x5f0] sm:$0xf]
        %v633 = vld [vmem:[%s230 + $0x5f4] sm:$0xf]
        %v634 = vld [vmem:[%s230 + $0x5f8] sm:$0xf]
        %v635 = vld [vmem:[%s230 + $0x5fc] sm:$0xf]
        %v636 = vld [vmem:[%s230 + $0x600] sm:$0xf]
        %v637 = vld [vmem:[%s230 + $0x604] sm:$0xf]
        %v638 = vld [vmem:[%s230 + $0x608] sm:$0xf]
        %v639 = vld [vmem:[%s230 + $0x60c] sm:$0xf]
        %v640 = vld [vmem:[%s230 + $0x610] sm:$0xf]
        %v641 = vld [vmem:[%s230 + $0x614] sm:$0xf]
        %v642 = vld [vmem:[%s230 + $0x618] sm:$0xf]
        %v643 = vld [vmem:[%s230 + $0x61c] sm:$0xf]
        %v644 = vld [vmem:[%s230 + $0x620] sm:$0xf]
        %v645 = vld [vmem:[%s230 + $0x624] sm:$0xf]
        %v646 = vld [vmem:[%s230 + $0x628] sm:$0xf]
        %v647 = vld [vmem:[%s230 + $0x62c] sm:$0xf]
        %v648 = vld [vmem:[%s230 + $0x630] sm:$0xf]
        %v649 = vld [vmem:[%s230 + $0x634] sm:$0xf]
        %v650 = vld [vmem:[%s230 + $0x638] sm:$0xf]
        %v651 = vld [vmem:[%s230 + $0x63c] sm:$0xf]
        %v652 = vld [vmem:[%s230 + $0x640] sm:$0xf]
        %v653 = vld [vmem:[%s230 + $0x644] sm:$0xf]
        %v654 = vld [vmem:[%s230 + $0x648] sm:$0xf]
        %v655 = vld [vmem:[%s230 + $0x64c] sm:$0xf]
        %v656 = vld [vmem:[%s230 + $0x650] sm:$0xf]
        %v657 = vld [vmem:[%s230 + $0x654] sm:$0xf]
        %v658 = vld [vmem:[%s230 + $0x658] sm:$0xf]
        %v659 = vld [vmem:[%s230 + $0x65c] sm:$0xf]
        %v660 = vld [vmem:[%s230 + $0x660] sm:$0xf]
        %v661 = vld [vmem:[%s230 + $0x664] sm:$0xf]
        %v662 = vld [vmem:[%s230 + $0x668] sm:$0xf]
        %v663 = vld [vmem:[%s230 + $0x66c] sm:$0xf]
        %v664 = vld [vmem:[%s230 + $0x670] sm:$0xf]
        %v665 = vld [vmem:[%s230 + $0x674] sm:$0xf]
        %v666 = vld [vmem:[%s230 + $0x678] sm:$0xf]
        %v667 = vld [vmem:[%s230 + $0x67c] sm:$0xf]
        %v668 = vld [vmem:[%s230 + $0x680] sm:$0xf]
        %v669 = vld [vmem:[%s230 + $0x684] sm:$0xf]
        %v670 = vld [vmem:[%s230 + $0x688] sm:$0xf]
        %v671 = vld [vmem:[%s230 + $0x68c] sm:$0xf]
        %v672 = vld [vmem:[%s230 + $0x690] sm:$0xf]
        %v673 = vld [vmem:[%s230 + $0x694] sm:$0xf]
        %v674 = vld [vmem:[%s230 + $0x698] sm:$0xf]
        %v675 = vld [vmem:[%s230 + $0x69c] sm:$0xf]
        %v676 = vld [vmem:[%s230 + $0x6a0] sm:$0xf]
        %v677 = vld [vmem:[%s230 + $0x6a4] sm:$0xf]
        %v678 = vld [vmem:[%s230 + $0x6a8] sm:$0xf]
        %v679 = vld [vmem:[%s230 + $0x6ac] sm:$0xf]
        %v680 = vld [vmem:[%s230 + $0x6b0] sm:$0xf]
        %v681 = vld [vmem:[%s230 + $0x6b4] sm:$0xf]
        %v682 = vld [vmem:[%s230 + $0x6b8] sm:$0xf]
        %v683 = vld [vmem:[%s230 + $0x6bc] sm:$0xf]
        %v684 = vld [vmem:[%s230 + $0x6c0] sm:$0xf]
        %v685 = vld [vmem:[%s230 + $0x6c4] sm:$0xf]
        %v686 = vld [vmem:[%s230 + $0x6c8] sm:$0xf]
        %v687 = vld [vmem:[%s230 + $0x6cc] sm:$0xf]
        %v688 = vld [vmem:[%s230 + $0x6d0] sm:$0xf]
        %v689 = vld [vmem:[%s230 + $0x6d4] sm:$0xf]
        %v690 = vld [vmem:[%s230 + $0x6d8] sm:$0xf]
        %v691 = vld [vmem:[%s230 + $0x6dc] sm:$0xf]
        %v692 = vld [vmem:[%s230 + $0x6e0] sm:$0xf]
        %v693 = vld [vmem:[%s230 + $0x6e4] sm:$0xf]
        %v694 = vld [vmem:[%s230 + $0x6e8] sm:$0xf]
        %v695 = vld [vmem:[%s230 + $0x6ec] sm:$0xf]
        %v696 = vld [vmem:[%s230 + $0x6f0] sm:$0xf]
        %v697 = vld [vmem:[%s230 + $0x6f4] sm:$0xf]
        %v698 = vld [vmem:[%s230 + $0x6f8] sm:$0xf]
        %v699 = vld [vmem:[%s230 + $0x6fc] sm:$0xf]
        %v700 = vld [vmem:[%s230 + $0x700] sm:$0xf]
        %v701 = vld [vmem:[%s230 + $0x704] sm:$0xf]
        %v702 = vld [vmem:[%s230 + $0x708] sm:$0xf]
        %v703 = vld [vmem:[%s230 + $0x70c] sm:$0xf]
        %v704 = vld [vmem:[%s230 + $0x710] sm:$0xf]
        %v705 = vld [vmem:[%s230 + $0x714] sm:$0xf]
        %v706 = vld [vmem:[%s230 + $0x718] sm:$0xf]
        %v707 = vld [vmem:[%s230 + $0x71c] sm:$0xf]
        %v708 = vld [vmem:[%s230 + $0x720] sm:$0xf]
        %v709 = vld [vmem:[%s230 + $0x724] sm:$0xf]
        %v710 = vld [vmem:[%s230 + $0x728] sm:$0xf]
        %v711 = vld [vmem:[%s230 + $0x72c] sm:$0xf]
        %v712 = vld [vmem:[%s230 + $0x730] sm:$0xf]
        %v713 = vld [vmem:[%s230 + $0x734] sm:$0xf]
        %v714 = vld [vmem:[%s230 + $0x738] sm:$0xf]
        %v715 = vld [vmem:[%s230 + $0x73c] sm:$0xf]
        %v716 = vld [vmem:[%s230 + $0x740] sm:$0xf]
        %v717 = vld [vmem:[%s230 + $0x744] sm:$0xf]
        %v718 = vld [vmem:[%s230 + $0x748] sm:$0xf]
        %v719 = vld [vmem:[%s230 + $0x74c] sm:$0xf]
        %v720 = vld [vmem:[%s230 + $0x750] sm:$0xf]
        %v721 = vld [vmem:[%s230 + $0x754] sm:$0xf]
        %v722 = vld [vmem:[%s230 + $0x758] sm:$0xf]
        %v723 = vld [vmem:[%s230 + $0x75c] sm:$0xf]
        %v724 = vld [vmem:[%s230 + $0x760] sm:$0xf]
        %v725 = vld [vmem:[%s230 + $0x764] sm:$0xf]
        %v726 = vld [vmem:[%s230 + $0x768] sm:$0xf]
        %v727 = vld [vmem:[%s230 + $0x76c] sm:$0xf]
        %v728 = vld [vmem:[%s230 + $0x770] sm:$0xf]
        %v729 = vld [vmem:[%s230 + $0x774] sm:$0xf]
        %v730 = vld [vmem:[%s230 + $0x778] sm:$0xf]
        %v731 = vld [vmem:[%s230 + $0x77c] sm:$0xf]
        %v732 = vld [vmem:[%s230 + $0x780] sm:$0xf]
        %v733 = vld [vmem:[%s230 + $0x784] sm:$0xf]
        %v734 = vld [vmem:[%s230 + $0x788] sm:$0xf]
        %v735 = vld [vmem:[%s230 + $0x78c] sm:$0xf]
        %v736 = vld [vmem:[%s230 + $0x790] sm:$0xf]
        %v737 = vld [vmem:[%s230 + $0x794] sm:$0xf]
        %v738 = vld [vmem:[%s230 + $0x798] sm:$0xf]
        %v739 = vld [vmem:[%s230 + $0x79c] sm:$0xf]
        %v740 = vld [vmem:[%s230 + $0x7a0] sm:$0xf]
        %v741 = vld [vmem:[%s230 + $0x7a4] sm:$0xf]
        %v742 = vld [vmem:[%s230 + $0x7a8] sm:$0xf]
        %v743 = vld [vmem:[%s230 + $0x7ac] sm:$0xf]
        %v744 = vld [vmem:[%s230 + $0x7b0] sm:$0xf]
        %v745 = vld [vmem:[%s230 + $0x7b4] sm:$0xf]
        %v746 = vld [vmem:[%s230 + $0x7b8] sm:$0xf]
        %v747 = vld [vmem:[%s230 + $0x7bc] sm:$0xf]
        %v748 = vld [vmem:[%s230 + $0x7c0] sm:$0xf]
        %v749 = vld [vmem:[%s230 + $0x7c4] sm:$0xf]
        %v750 = vld [vmem:[%s230 + $0x7c8] sm:$0xf]
        %v751 = vld [vmem:[%s230 + $0x7cc] sm:$0xf]
        %v752 = vld [vmem:[%s230 + $0x7d0] sm:$0xf]
        %v753 = vld [vmem:[%s230 + $0x7d4] sm:$0xf]
        %v754 = vld [vmem:[%s230 + $0x7d8] sm:$0xf]
        %v755 = vld [vmem:[%s230 + $0x7dc] sm:$0xf]
        %v756 = vld [vmem:[%s230 + $0x7e0] sm:$0xf]
        %v757 = vld [vmem:[%s230 + $0x7e4] sm:$0xf]
        %v758 = vld [vmem:[%s230 + $0x7e8] sm:$0xf]
        %v759 = vld [vmem:[%s230 + $0x7ec] sm:$0xf]
        %v760 = vld [vmem:[%s230 + $0x7f0] sm:$0xf]
        %v761 = vld [vmem:[%s230 + $0x7f4] sm:$0xf]
        %v762 = vld [vmem:[%s230 + $0x7f8] sm:$0xf]
        %v763 = vld [vmem:[%s230 + $0x7fc] sm:$0xf]
        %v764 = vld [vmem:[%s230 + $0x800] sm:$0xf]
        %v765 = vld [vmem:[%s230 + $0x804] sm:$0xf]
        %v766 = vld [vmem:[%s230 + $0x808] sm:$0xf]
        %v767 = vld [vmem:[%s230 + $0x80c] sm:$0xf]
        %v768 = vld [vmem:[%s230 + $0x810] sm:$0xf]
        %v769 = vld [vmem:[%s230 + $0x814] sm:$0xf]
        %v770 = vld [vmem:[%s230 + $0x818] sm:$0xf]
        %v771 = vld [vmem:[%s230 + $0x81c] sm:$0xf]
        %v772 = vld [vmem:[%s230 + $0x820] sm:$0xf]
        %v773 = vld [vmem:[%s230 + $0x824] sm:$0xf]
        %v774 = vld [vmem:[%s230 + $0x828] sm:$0xf]
        %v775 = vld [vmem:[%s230 + $0x82c] sm:$0xf]
        %v776 = vld [vmem:[%s230 + $0x830] sm:$0xf]
        %v777 = vld [vmem:[%s230 + $0x834] sm:$0xf]
        %v778 = vld [vmem:[%s230 + $0x838] sm:$0xf]
        %v779 = vld [vmem:[%s230 + $0x83c] sm:$0xf]
        %v780 = vld [vmem:[%s230 + $0x840] sm:$0xf]
        %v781 = vld [vmem:[%s230 + $0x844] sm:$0xf]
        %v782 = vld [vmem:[%s230 + $0x848] sm:$0xf]
        %v783 = vld [vmem:[%s230 + $0x84c] sm:$0xf]
        %v784 = vld [vmem:[%s230 + $0x850] sm:$0xf]
        %v785 = vld [vmem:[%s230 + $0x854] sm:$0xf]
        %v786 = vld [vmem:[%s230 + $0x858] sm:$0xf]
        %v787 = vld [vmem:[%s230 + $0x85c] sm:$0xf]
        %v788 = vld [vmem:[%s230 + $0x860] sm:$0xf]
        %v789 = vld [vmem:[%s230 + $0x864] sm:$0xf]
        %v790 = vld [vmem:[%s230 + $0x868] sm:$0xf]
        %v791 = vld [vmem:[%s230 + $0x86c] sm:$0xf]
        %v792 = vld [vmem:[%s230 + $0x870] sm:$0xf]
        %v793 = vld [vmem:[%s230 + $0x874] sm:$0xf]
        %v794 = vld [vmem:[%s230 + $0x878] sm:$0xf]
        %v795 = vld [vmem:[%s230 + $0x87c] sm:$0xf]
        %v796 = vld [vmem:[%s230 + $0x880] sm:$0xf]
        %v797 = vld [vmem:[%s230 + $0x884] sm:$0xf]
        %v798 = vld [vmem:[%s230 + $0x888] sm:$0xf]
        %v799 = vld [vmem:[%s230 + $0x88c] sm:$0xf]
        %v800 = vld [vmem:[%s230 + $0x890] sm:$0xf]
        %v801 = vld [vmem:[%s230 + $0x894] sm:$0xf]
        %v802 = vld [vmem:[%s230 + $0x898] sm:$0xf]
        %v803 = vld [vmem:[%s230 + $0x89c] sm:$0xf]
        %v804 = vld [vmem:[%s230 + $0x8a0] sm:$0xf]
        %v805 = vld [vmem:[%s230 + $0x8a4] sm:$0xf]
        %v806 = vld [vmem:[%s230 + $0x8a8] sm:$0xf]
        %v807 = vld [vmem:[%s230 + $0x8ac] sm:$0xf]
        %v808 = vld [vmem:[%s230 + $0x8b0] sm:$0xf]
        %v809 = vld [vmem:[%s230 + $0x8b4] sm:$0xf]
        %v810 = vld [vmem:[%s230 + $0x8b8] sm:$0xf]
        %v811 = vld [vmem:[%s230 + $0x8bc] sm:$0xf]
        %v812 = vld [vmem:[%s230 + $0x8c0] sm:$0xf]
        %v813 = vld [vmem:[%s230 + $0x8c4] sm:$0xf]
        %v814 = vld [vmem:[%s230 + $0x8c8] sm:$0xf]
        %v815 = vld [vmem:[%s230 + $0x8cc] sm:$0xf]
        %v816 = vld [vmem:[%s230 + $0x8d0] sm:$0xf]
        %v817 = vld [vmem:[%s230 + $0x8d4] sm:$0xf]
        %v818 = vld [vmem:[%s230 + $0x8d8] sm:$0xf]
        %v819 = vld [vmem:[%s230 + $0x8dc] sm:$0xf]
        %v820 = vld [vmem:[%s230 + $0x8e0] sm:$0xf]
        %v821 = vld [vmem:[%s230 + $0x8e4] sm:$0xf]
        %v822 = vld [vmem:[%s230 + $0x8e8] sm:$0xf]
        %v823 = vld [vmem:[%s230 + $0x8ec] sm:$0xf]
        %v824 = vld [vmem:[%s230 + $0x8f0] sm:$0xf]
        %v825 = vld [vmem:[%s230 + $0x8f4] sm:$0xf]
        %v826 = vld [vmem:[%s230 + $0x8f8] sm:$0xf]
        %v827 = vld [vmem:[%s230 + $0x8fc] sm:$0xf]
        %v828 = vld [vmem:[%s230 + $0x900] sm:$0xf]
        %v829 = vld [vmem:[%s230 + $0x904] sm:$0xf]
        %v830 = vld [vmem:[%s230 + $0x908] sm:$0xf]
        %v831 = vld [vmem:[%s230 + $0x90c] sm:$0xf]
        %v832 = vld [vmem:[%s230 + $0x910] sm:$0xf]
        %v833 = vld [vmem:[%s230 + $0x914] sm:$0xf]
        %v834 = vld [vmem:[%s230 + $0x918] sm:$0xf]
        %v835 = vld [vmem:[%s230 + $0x91c] sm:$0xf]
        %v836 = vld [vmem:[%s230 + $0x920] sm:$0xf]
        %v837 = vld [vmem:[%s230 + $0x924] sm:$0xf]
        %v838 = vld [vmem:[%s230 + $0x928] sm:$0xf]
        %v839 = vld [vmem:[%s230 + $0x92c] sm:$0xf]
        %v840 = vld [vmem:[%s230 + $0x930] sm:$0xf]
        %v841 = vld [vmem:[%s230 + $0x934] sm:$0xf]
        %v842 = vld [vmem:[%s230 + $0x938] sm:$0xf]
        %v843 = vld [vmem:[%s230 + $0x93c] sm:$0xf]
        %v844 = vld [vmem:[%s230 + $0x940] sm:$0xf]
        %v845 = vld [vmem:[%s230 + $0x944] sm:$0xf]
        %v846 = vld [vmem:[%s230 + $0x948] sm:$0xf]
        %v847 = vld [vmem:[%s230 + $0x94c] sm:$0xf]
        %v848 = vld [vmem:[%s230 + $0x950] sm:$0xf]
        %v849 = vld [vmem:[%s230 + $0x954] sm:$0xf]
        %v850 = vld [vmem:[%s230 + $0x958] sm:$0xf]
        %v851 = vld [vmem:[%s230 + $0x95c] sm:$0xf]
        %v852 = vld [vmem:[%s230 + $0x960] sm:$0xf]
        %v853 = vld [vmem:[%s230 + $0x964] sm:$0xf]
        %v854 = vld [vmem:[%s230 + $0x968] sm:$0xf]
        %v855 = vld [vmem:[%s230 + $0x96c] sm:$0xf]
        %v856 = vld [vmem:[%s230 + $0x970] sm:$0xf]
        %v857 = vld [vmem:[%s230 + $0x974] sm:$0xf]
        %v858 = vld [vmem:[%s230 + $0x978] sm:$0xf]
        %v859 = vld [vmem:[%s230 + $0x97c] sm:$0xf]
        %v860 = vld [vmem:[%s230 + $0x980] sm:$0xf]
        %v861 = vld [vmem:[%s230 + $0x984] sm:$0xf]
        %v862 = vld [vmem:[%s230 + $0x988] sm:$0xf]
        %v863 = vld [vmem:[%s230 + $0x98c] sm:$0xf]
        %v864 = vld [vmem:[%s230 + $0x990] sm:$0xf]
        %v865 = vld [vmem:[%s230 + $0x994] sm:$0xf]
        %v866 = vld [vmem:[%s230 + $0x998] sm:$0xf]
        %v867 = vld [vmem:[%s230 + $0x99c] sm:$0xf]
        %v868 = vld [vmem:[%s230 + $0x9a0] sm:$0xf]
        %v869 = vld [vmem:[%s230 + $0x9a4] sm:$0xf]
        %v870 = vld [vmem:[%s230 + $0x9a8] sm:$0xf]
        %v871 = vld [vmem:[%s230 + $0x9ac] sm:$0xf]
        %v872 = vld [vmem:[%s230 + $0x9b0] sm:$0xf]
        %v873 = vld [vmem:[%s230 + $0x9b4] sm:$0xf]
        %v874 = vld [vmem:[%s230 + $0x9b8] sm:$0xf]
        %v875 = vld [vmem:[%s230 + $0x9bc] sm:$0xf]
        %v876 = vld [vmem:[%s230 + $0x9c0] sm:$0xf]
        %v877 = vld [vmem:[%s230 + $0x9c4] sm:$0xf]
        %v878 = vld [vmem:[%s230 + $0x9c8] sm:$0xf]
        %v879 = vld [vmem:[%s230 + $0x9cc] sm:$0xf]
        %v880 = vld [vmem:[%s230 + $0x9d0] sm:$0xf]
        %v881 = vld [vmem:[%s230 + $0x9d4] sm:$0xf]
        %v882 = vld [vmem:[%s230 + $0x9d8] sm:$0xf]
        %v883 = vld [vmem:[%s230 + $0x9dc] sm:$0xf]
        %v884 = vld [vmem:[%s230 + $0x9e0] sm:$0xf]
        %v885 = vld [vmem:[%s230 + $0x9e4] sm:$0xf]
        %v886 = vld [vmem:[%s230 + $0x9e8] sm:$0xf]
        %v887 = vld [vmem:[%s230 + $0x9ec] sm:$0xf]
        %v888 = vld [vmem:[%s230 + $0x9f0] sm:$0xf]
        %v889 = vld [vmem:[%s230 + $0x9f4] sm:$0xf]
        %v890 = vld [vmem:[%s230 + $0x9f8] sm:$0xf]
        %v891 = vld [vmem:[%s230 + $0x9fc] sm:$0xf]
        %v892 = vld [vmem:[%s230 + $0xa00] sm:$0xf]
        %v893 = vld [vmem:[%s230 + $0xa04] sm:$0xf]
        %v894 = vld [vmem:[%s230 + $0xa08] sm:$0xf]
        %v895 = vld [vmem:[%s230 + $0xa0c] sm:$0xf]
        %v896 = vld [vmem:[%s230 + $0xa10] sm:$0xf]
        %v897 = vld [vmem:[%s230 + $0xa14] sm:$0xf]
        %v898 = vld [vmem:[%s230 + $0xa18] sm:$0xf]
        %v899 = vld [vmem:[%s230 + $0xa1c] sm:$0xf]
        %v900 = vld [vmem:[%s230 + $0xa20] sm:$0xf]
        %v901 = vld [vmem:[%s230 + $0xa24] sm:$0xf]
        %v902 = vld [vmem:[%s230 + $0xa28] sm:$0xf]
        %v903 = vld [vmem:[%s230 + $0xa2c] sm:$0xf]
        %v904 = vld [vmem:[%s230 + $0xa30] sm:$0xf]
        %v905 = vld [vmem:[%s230 + $0xa34] sm:$0xf]
        %v906 = vld [vmem:[%s230 + $0xa38] sm:$0xf]
        %v907 = vld [vmem:[%s230 + $0xa3c] sm:$0xf]
        %v908 = vld [vmem:[%s230 + $0xa40] sm:$0xf]
        %v909 = vld [vmem:[%s230 + $0xa44] sm:$0xf]
        %v910 = vld [vmem:[%s230 + $0xa48] sm:$0xf]
        %v911 = vld [vmem:[%s230 + $0xa4c] sm:$0xf]
        %v912 = vld [vmem:[%s230 + $0xa50] sm:$0xf]
        %v913 = vld [vmem:[%s230 + $0xa54] sm:$0xf]
        %v914 = vld [vmem:[%s230 + $0xa58] sm:$0xf]
        %v915 = vld [vmem:[%s230 + $0xa5c] sm:$0xf]
        %v916 = vld [vmem:[%s230 + $0xa60] sm:$0xf]
        %v917 = vld [vmem:[%s230 + $0xa64] sm:$0xf]
        %v918 = vld [vmem:[%s230 + $0xa68] sm:$0xf]
        %v919 = vld [vmem:[%s230 + $0xa6c] sm:$0xf]
        %v920 = vld [vmem:[%s230 + $0xa70] sm:$0xf]
        %v921 = vld [vmem:[%s230 + $0xa74] sm:$0xf]
        %v922 = vld [vmem:[%s230 + $0xa78] sm:$0xf]
        %v923 = vld [vmem:[%s230 + $0xa7c] sm:$0xf]
        %v924 = vld [vmem:[%s230 + $0xa80] sm:$0xf]
        %v925 = vld [vmem:[%s230 + $0xa84] sm:$0xf]
        %v926 = vld [vmem:[%s230 + $0xa88] sm:$0xf]
        %v927 = vld [vmem:[%s230 + $0xa8c] sm:$0xf]
        %v928 = vld [vmem:[%s230 + $0xa90] sm:$0xf]
        %v929 = vld [vmem:[%s230 + $0xa94] sm:$0xf]
        %v930 = vld [vmem:[%s230 + $0xa98] sm:$0xf]
        %v931 = vld [vmem:[%s230 + $0xa9c] sm:$0xf]
        %v932 = vld [vmem:[%s230 + $0xaa0] sm:$0xf]
        %v933 = vld [vmem:[%s230 + $0xaa4] sm:$0xf]
        %v934 = vld [vmem:[%s230 + $0xaa8] sm:$0xf]
        %v935 = vld [vmem:[%s230 + $0xaac] sm:$0xf]
        %v936 = vld [vmem:[%s230 + $0xab0] sm:$0xf]
        %v937 = vld [vmem:[%s230 + $0xab4] sm:$0xf]
        %v938 = vld [vmem:[%s230 + $0xab8] sm:$0xf]
        %v939 = vld [vmem:[%s230 + $0xabc] sm:$0xf]
        %v940 = vld [vmem:[%s230 + $0xac0] sm:$0xf]
        %v941 = vld [vmem:[%s230 + $0xac4] sm:$0xf]
        %v942 = vld [vmem:[%s230 + $0xac8] sm:$0xf]
        %v943 = vld [vmem:[%s230 + $0xacc] sm:$0xf]
        %v944 = vld [vmem:[%s230 + $0xad0] sm:$0xf]
        %v945 = vld [vmem:[%s230 + $0xad4] sm:$0xf]
        %v946 = vld [vmem:[%s230 + $0xad8] sm:$0xf]
        %v947 = vld [vmem:[%s230 + $0xadc] sm:$0xf]
        %v948 = vld [vmem:[%s230 + $0xae0] sm:$0xf]
        %v949 = vld [vmem:[%s230 + $0xae4] sm:$0xf]
        %v950 = vld [vmem:[%s230 + $0xae8] sm:$0xf]
        %v951 = vld [vmem:[%s230 + $0xaec] sm:$0xf]
        %v952 = vld [vmem:[%s230 + $0xaf0] sm:$0xf]
        %v953 = vld [vmem:[%s230 + $0xaf4] sm:$0xf]
        %v954 = vld [vmem:[%s230 + $0xaf8] sm:$0xf]
        %v955 = vld [vmem:[%s230 + $0xafc] sm:$0xf]
        %v956 = vld [vmem:[%s230 + $0xb00] sm:$0xf]
        %v957 = vld [vmem:[%s230 + $0xb04] sm:$0xf]
        %v958 = vld [vmem:[%s230 + $0xb08] sm:$0xf]
        %v959 = vld [vmem:[%s230 + $0xb0c] sm:$0xf]
        %v960 = vld [vmem:[%s230 + $0xb10] sm:$0xf]
        %v961 = vld [vmem:[%s230 + $0xb14] sm:$0xf]
        %v962 = vld [vmem:[%s230 + $0xb18] sm:$0xf]
        %v963 = vld [vmem:[%s230 + $0xb1c] sm:$0xf]
        %v964 = vld [vmem:[%s230 + $0xb20] sm:$0xf]
        %v965 = vld [vmem:[%s230 + $0xb24] sm:$0xf]
        %v966 = vld [vmem:[%s230 + $0xb28] sm:$0xf]
        %v967 = vld [vmem:[%s230 + $0xb2c] sm:$0xf]
        %v968 = vld [vmem:[%s230 + $0xb30] sm:$0xf]
        %v969 = vld [vmem:[%s230 + $0xb34] sm:$0xf]
        %v970 = vld [vmem:[%s230 + $0xb38] sm:$0xf]
        %v971 = vld [vmem:[%s230 + $0xb3c] sm:$0xf]
        %v972 = vld [vmem:[%s230 + $0xb40] sm:$0xf]
        %v973 = vld [vmem:[%s230 + $0xb44] sm:$0xf]
        %v974 = vld [vmem:[%s230 + $0xb48] sm:$0xf]
        %v975 = vld [vmem:[%s230 + $0xb4c] sm:$0xf]
        %v976 = vld [vmem:[%s230 + $0xb50] sm:$0xf]
        %v977 = vld [vmem:[%s230 + $0xb54] sm:$0xf]
        %v978 = vld [vmem:[%s230 + $0xb58] sm:$0xf]
        %v979 = vld [vmem:[%s230 + $0xb5c] sm:$0xf]
        %v980 = vld [vmem:[%s230 + $0xb60] sm:$0xf]
        %v981 = vld [vmem:[%s230 + $0xb64] sm:$0xf]
        %v982 = vld [vmem:[%s230 + $0xb68] sm:$0xf]
        %v983 = vld [vmem:[%s230 + $0xb6c] sm:$0xf]
        %v984 = vld [vmem:[%s230 + $0xb70] sm:$0xf]
        %v985 = vld [vmem:[%s230 + $0xb74] sm:$0xf]
        %v986 = vld [vmem:[%s230 + $0xb78] sm:$0xf]
        %v987 = vld [vmem:[%s230 + $0xb7c] sm:$0xf]
        %v988 = vld [vmem:[%s230 + $0xb80] sm:$0xf]
        %v989 = vld [vmem:[%s230 + $0xb84] sm:$0xf]
        %v990 = vld [vmem:[%s230 + $0xb88] sm:$0xf]
        %v991 = vld [vmem:[%s230 + $0xb8c] sm:$0xf]
        %v992 = vld [vmem:[%s230 + $0xb90] sm:$0xf]
        %v993 = vld [vmem:[%s230 + $0xb94] sm:$0xf]
        %v994 = vld [vmem:[%s230 + $0xb98] sm:$0xf]
        %v995 = vld [vmem:[%s230 + $0xb9c] sm:$0xf]
        %v996 = vld [vmem:[%s230 + $0xba0] sm:$0xf]
        %v997 = vld [vmem:[%s230 + $0xba4] sm:$0xf]
        %v998 = vld [vmem:[%s230 + $0xba8] sm:$0xf]
        %v999 = vld [vmem:[%s230 + $0xbac] sm:$0xf]
        %v1000 = vld [vmem:[%s230 + $0xbb0] sm:$0xf]
        %v1001 = vld [vmem:[%s230 + $0xbb4] sm:$0xf]
        %v1002 = vld [vmem:[%s230 + $0xbb8] sm:$0xf]
        %v1003 = vld [vmem:[%s230 + $0xbbc] sm:$0xf]
        %v1004 = vld [vmem:[%s230 + $0xbc0] sm:$0xf]
        %v1005 = vld [vmem:[%s230 + $0xbc4] sm:$0xf]
        %v1006 = vld [vmem:[%s230 + $0xbc8] sm:$0xf]
        %v1007 = vld [vmem:[%s230 + $0xbcc] sm:$0xf]
        %v1008 = vld [vmem:[%s230 + $0xbd0] sm:$0xf]
        %v1009 = vld [vmem:[%s230 + $0xbd4] sm:$0xf]
        %v1010 = vld [vmem:[%s230 + $0xbd8] sm:$0xf]
        %v1011 = vld [vmem:[%s230 + $0xbdc] sm:$0xf]
        %v1012 = vld [vmem:[%s230 + $0xbe0] sm:$0xf]
        %v1013 = vld [vmem:[%s230 + $0xbe4] sm:$0xf]
        %v1014 = vld [vmem:[%s230 + $0xbe8] sm:$0xf]
        %v1015 = vld [vmem:[%s230 + $0xbec] sm:$0xf]
        %v1016 = vld [vmem:[%s230 + $0xbf0] sm:$0xf]
        %v1017 = vld [vmem:[%s230 + $0xbf4] sm:$0xf]
        %v1018 = vld [vmem:[%s230 + $0xbf8] sm:$0xf]
        %v1019 = vld [vmem:[%s230 + $0xbfc] sm:$0xf]
        %v1020 = vld [vmem:[%s230 + $0xc00] sm:$0xf]
        %v1021 = vld [vmem:[%s230 + $0xc04] sm:$0xf]
        %v1022 = vld [vmem:[%s230 + $0xc08] sm:$0xf]
        %v1023 = vld [vmem:[%s230 + $0xc0c] sm:$0xf]
        %v1024 = vld [vmem:[%s230 + $0xc10] sm:$0xf]
        %v1025 = vld [vmem:[%s230 + $0xc14] sm:$0xf]
        %v1026 = vld [vmem:[%s230 + $0xc18] sm:$0xf]
        %v1027 = vld [vmem:[%s230 + $0xc1c] sm:$0xf]
        %v1028 = vld [vmem:[%s230 + $0xc20] sm:$0xf]
        %v1029 = vld [vmem:[%s230 + $0xc24] sm:$0xf]
        %v1030 = vld [vmem:[%s230 + $0xc28] sm:$0xf]
        %v1031 = vld [vmem:[%s230 + $0xc2c] sm:$0xf]
        %v1032 = vld [vmem:[%s230 + $0xc30] sm:$0xf]
        %v1033 = vld [vmem:[%s230 + $0xc34] sm:$0xf]
        %v1034 = vld [vmem:[%s230 + $0xc38] sm:$0xf]
        %v1035 = vld [vmem:[%s230 + $0xc3c] sm:$0xf]
        %v1036 = vld [vmem:[%s230 + $0xc40] sm:$0xf]
        %v1037 = vld [vmem:[%s230 + $0xc44] sm:$0xf]
        %v1038 = vld [vmem:[%s230 + $0xc48] sm:$0xf]
        %v1039 = vld [vmem:[%s230 + $0xc4c] sm:$0xf]
        %v1040 = vld [vmem:[%s230 + $0xc50] sm:$0xf]
        %v1041 = vld [vmem:[%s230 + $0xc54] sm:$0xf]
        %v1042 = vld [vmem:[%s230 + $0xc58] sm:$0xf]
        %v1043 = vld [vmem:[%s230 + $0xc5c] sm:$0xf]
        %v1044 = vld [vmem:[%s230 + $0xc60] sm:$0xf]
        %v1045 = vld [vmem:[%s230 + $0xc64] sm:$0xf]
        %v1046 = vld [vmem:[%s230 + $0xc68] sm:$0xf]
        %v1047 = vld [vmem:[%s230 + $0xc6c] sm:$0xf]
        %v1048 = vld [vmem:[%s230 + $0xc70] sm:$0xf]
        %v1049 = vld [vmem:[%s230 + $0xc74] sm:$0xf]
        %v1050 = vld [vmem:[%s230 + $0xc78] sm:$0xf]
        %v1051 = vld [vmem:[%s230 + $0xc7c] sm:$0xf]
        %v1052 = vld [vmem:[%s230 + $0xc80] sm:$0xf]
        %v1053 = vld [vmem:[%s230 + $0xc84] sm:$0xf]
        %v1054 = vld [vmem:[%s230 + $0xc88] sm:$0xf]
        %v1055 = vld [vmem:[%s230 + $0xc8c] sm:$0xf]
        %v1056 = vld [vmem:[%s230 + $0xc90] sm:$0xf]
        %v1057 = vld [vmem:[%s230 + $0xc94] sm:$0xf]
        %v1058 = vld [vmem:[%s230 + $0xc98] sm:$0xf]
        %v1059 = vld [vmem:[%s230 + $0xc9c] sm:$0xf]
        %v1060 = vld [vmem:[%s230 + $0xca0] sm:$0xf]
        %v1061 = vld [vmem:[%s230 + $0xca4] sm:$0xf]
        %v1062 = vld [vmem:[%s230 + $0xca8] sm:$0xf]
        %v1063 = vld [vmem:[%s230 + $0xcac] sm:$0xf]
        %v1064 = vld [vmem:[%s230 + $0xcb0] sm:$0xf]
        %v1065 = vld [vmem:[%s230 + $0xcb4] sm:$0xf]
        %v1066 = vld [vmem:[%s230 + $0xcb8] sm:$0xf]
        %v1067 = vld [vmem:[%s230 + $0xcbc] sm:$0xf]
        %v1068 = vld [vmem:[%s230 + $0xcc0] sm:$0xf]
        %v1069 = vld [vmem:[%s230 + $0xcc4] sm:$0xf]
        %v1070 = vld [vmem:[%s230 + $0xcc8] sm:$0xf]
        %v1071 = vld [vmem:[%s230 + $0xccc] sm:$0xf]
        %v1072 = vld [vmem:[%s230 + $0xcd0] sm:$0xf]
        %v1073 = vld [vmem:[%s230 + $0xcd4] sm:$0xf]
        %v1074 = vld [vmem:[%s230 + $0xcd8] sm:$0xf]
        %v1075 = vld [vmem:[%s230 + $0xcdc] sm:$0xf]
        %v1076 = vld [vmem:[%s230 + $0xce0] sm:$0xf]
        %v1077 = vld [vmem:[%s230 + $0xce4] sm:$0xf]
        %v1078 = vld [vmem:[%s230 + $0xce8] sm:$0xf]
        %v1079 = vld [vmem:[%s230 + $0xcec] sm:$0xf]
        %v1080 = vld [vmem:[%s230 + $0xcf0] sm:$0xf]
        %v1081 = vld [vmem:[%s230 + $0xcf4] sm:$0xf]
        %v1082 = vld [vmem:[%s230 + $0xcf8] sm:$0xf]
        %v1083 = vld [vmem:[%s230 + $0xcfc] sm:$0xf]
        %v1084 = vld [vmem:[%s230 + $0xd00] sm:$0xf]
        %v1085 = vld [vmem:[%s230 + $0xd04] sm:$0xf]
        %v1086 = vld [vmem:[%s230 + $0xd08] sm:$0xf]
        %v1087 = vld [vmem:[%s230 + $0xd0c] sm:$0xf]
        %v1088 = vld [vmem:[%s230 + $0xd10] sm:$0xf]
        %v1089 = vld [vmem:[%s230 + $0xd14] sm:$0xf]
        %v1090 = vld [vmem:[%s230 + $0xd18] sm:$0xf]
        %v1091 = vld [vmem:[%s230 + $0xd1c] sm:$0xf]
        %v1092 = vld [vmem:[%s230 + $0xd20] sm:$0xf]
        %v1093 = vld [vmem:[%s230 + $0xd24] sm:$0xf]
        %v1094 = vld [vmem:[%s230 + $0xd28] sm:$0xf]
        %v1095 = vld [vmem:[%s230 + $0xd2c] sm:$0xf]
        %v1096 = vld [vmem:[%s230 + $0xd30] sm:$0xf]
        %v1097 = vld [vmem:[%s230 + $0xd34] sm:$0xf]
        %v1098 = vld [vmem:[%s230 + $0xd38] sm:$0xf]
        %v1099 = vld [vmem:[%s230 + $0xd3c] sm:$0xf]
        %v1100 = vld [vmem:[%s230 + $0xd40] sm:$0xf]
        %v1101 = vld [vmem:[%s230 + $0xd44] sm:$0xf]
        %v1102 = vld [vmem:[%s230 + $0xd48] sm:$0xf]
        %v1103 = vld [vmem:[%s230 + $0xd4c] sm:$0xf]
        %v1104 = vld [vmem:[%s230 + $0xd50] sm:$0xf]
        %v1105 = vld [vmem:[%s230 + $0xd54] sm:$0xf]
        %v1106 = vld [vmem:[%s230 + $0xd58] sm:$0xf]
        %v1107 = vld [vmem:[%s230 + $0xd5c] sm:$0xf]
        %v1108 = vld [vmem:[%s230 + $0xd60] sm:$0xf]
        %v1109 = vld [vmem:[%s230 + $0xd64] sm:$0xf]
        %v1110 = vld [vmem:[%s230 + $0xd68] sm:$0xf]
        %v1111 = vld [vmem:[%s230 + $0xd6c] sm:$0xf]
        %v1112 = vld [vmem:[%s230 + $0xd70] sm:$0xf]
        %v1113 = vld [vmem:[%s230 + $0xd74] sm:$0xf]
        %v1114 = vld [vmem:[%s230 + $0xd78] sm:$0xf]
        %v1115 = vld [vmem:[%s230 + $0xd7c] sm:$0xf]
        %v1116 = vld [vmem:[%s230 + $0xd80] sm:$0xf]
        %v1117 = vld [vmem:[%s230 + $0xd84] sm:$0xf]
        %v1118 = vld [vmem:[%s230 + $0xd88] sm:$0xf]
        %v1119 = vld [vmem:[%s230 + $0xd8c] sm:$0xf]
        %v1120 = vld [vmem:[%s230 + $0xd90] sm:$0xf]
        %v1121 = vld [vmem:[%s230 + $0xd94] sm:$0xf]
        %v1122 = vld [vmem:[%s230 + $0xd98] sm:$0xf]
        %v1123 = vld [vmem:[%s230 + $0xd9c] sm:$0xf]
        %v1124 = vld [vmem:[%s230 + $0xda0] sm:$0xf]
        %v1125 = vld [vmem:[%s230 + $0xda4] sm:$0xf]
        %v1126 = vld [vmem:[%s230 + $0xda8] sm:$0xf]
        %v1127 = vld [vmem:[%s230 + $0xdac] sm:$0xf]
        %v1128 = vld [vmem:[%s230 + $0xdb0] sm:$0xf]
        %v1129 = vld [vmem:[%s230 + $0xdb4] sm:$0xf]
        %v1130 = vld [vmem:[%s230 + $0xdb8] sm:$0xf]
        %v1131 = vld [vmem:[%s230 + $0xdbc] sm:$0xf]
        %v1132 = vld [vmem:[%s230 + $0xdc0] sm:$0xf]
        %v1133 = vld [vmem:[%s230 + $0xdc4] sm:$0xf]
        %v1134 = vld [vmem:[%s230 + $0xdc8] sm:$0xf]
        %v1135 = vld [vmem:[%s230 + $0xdcc] sm:$0xf]
        %v1136 = vld [vmem:[%s230 + $0xdd0] sm:$0xf]
        %v1137 = vld [vmem:[%s230 + $0xdd4] sm:$0xf]
        %v1138 = vld [vmem:[%s230 + $0xdd8] sm:$0xf]
        %v1139 = vld [vmem:[%s230 + $0xddc] sm:$0xf]
        %v1140 = vld [vmem:[%s230 + $0xde0] sm:$0xf]
        %v1141 = vld [vmem:[%s230 + $0xde4] sm:$0xf]
        %v1142 = vld [vmem:[%s230 + $0xde8] sm:$0xf]
        %v1143 = vld [vmem:[%s230 + $0xdec] sm:$0xf]
        %v1144 = vld [vmem:[%s230 + $0xdf0] sm:$0xf]
        %v1145 = vld [vmem:[%s230 + $0xdf4] sm:$0xf]
        %v1146 = vld [vmem:[%s230 + $0xdf8] sm:$0xf]
        %v1147 = vld [vmem:[%s230 + $0xdfc] sm:$0xf]
        %v1148 = vld [vmem:[%s230 + $0xe00] sm:$0xf]
        %v1149 = vld [vmem:[%s230 + $0xe04] sm:$0xf]
        %v1150 = vld [vmem:[%s230 + $0xe08] sm:$0xf]
        %v1151 = vld [vmem:[%s230 + $0xe0c] sm:$0xf]
        %v1152 = vld [vmem:[%s230 + $0xe10] sm:$0xf]
        %v1153 = vld [vmem:[%s230 + $0xe14] sm:$0xf]
        %v1154 = vld [vmem:[%s230 + $0xe18] sm:$0xf]
        %v1155 = vld [vmem:[%s230 + $0xe1c] sm:$0xf]
        %v1156 = vld [vmem:[%s230 + $0xe20] sm:$0xf]
        %v1157 = vld [vmem:[%s230 + $0xe24] sm:$0xf]
        %v1158 = vld [vmem:[%s230 + $0xe28] sm:$0xf]
        %v1159 = vld [vmem:[%s230 + $0xe2c] sm:$0xf]
        %v1160 = vld [vmem:[%s230 + $0xe30] sm:$0xf]
        %v1161 = vld [vmem:[%s230 + $0xe34] sm:$0xf]
        %v1162 = vld [vmem:[%s230 + $0xe38] sm:$0xf]
        %v1163 = vld [vmem:[%s230 + $0xe3c] sm:$0xf]
        %v1164 = vld [vmem:[%s230 + $0xe40] sm:$0xf]
        %v1165 = vld [vmem:[%s230 + $0xe44] sm:$0xf]
        %v1166 = vld [vmem:[%s230 + $0xe48] sm:$0xf]
        %v1167 = vld [vmem:[%s230 + $0xe4c] sm:$0xf]
        %v1168 = vld [vmem:[%s230 + $0xe50] sm:$0xf]
        %v1169 = vld [vmem:[%s230 + $0xe54] sm:$0xf]
        %v1170 = vld [vmem:[%s230 + $0xe58] sm:$0xf]
        %v1171 = vld [vmem:[%s230 + $0xe5c] sm:$0xf]
        %v1172 = vld [vmem:[%s230 + $0xe60] sm:$0xf]
        %v1173 = vld [vmem:[%s230 + $0xe64] sm:$0xf]
        %v1174 = vld [vmem:[%s230 + $0xe68] sm:$0xf]
        %v1175 = vld [vmem:[%s230 + $0xe6c] sm:$0xf]
        %v1176 = vld [vmem:[%s230 + $0xe70] sm:$0xf]
        %v1177 = vld [vmem:[%s230 + $0xe74] sm:$0xf]
        %v1178 = vld [vmem:[%s230 + $0xe78] sm:$0xf]
        %v1179 = vld [vmem:[%s230 + $0xe7c] sm:$0xf]
        %v1180 = vld [vmem:[%s230 + $0xe80] sm:$0xf]
        %v1181 = vld [vmem:[%s230 + $0xe84] sm:$0xf]
        %v1182 = vld [vmem:[%s230 + $0xe88] sm:$0xf]
        %v1183 = vld [vmem:[%s230 + $0xe8c] sm:$0xf]
        %v1184 = vld [vmem:[%s230 + $0xe90] sm:$0xf]
        %v1185 = vld [vmem:[%s230 + $0xe94] sm:$0xf]
        %v1186 = vld [vmem:[%s230 + $0xe98] sm:$0xf]
        %v1187 = vld [vmem:[%s230 + $0xe9c] sm:$0xf]
        %v1188 = vld [vmem:[%s230 + $0xea0] sm:$0xf]
        %v1189 = vld [vmem:[%s230 + $0xea4] sm:$0xf]
        %v1190 = vld [vmem:[%s230 + $0xea8] sm:$0xf]
        %v1191 = vld [vmem:[%s230 + $0xeac] sm:$0xf]
        %v1192 = vld [vmem:[%s230 + $0xeb0] sm:$0xf]
        %v1193 = vld [vmem:[%s230 + $0xeb4] sm:$0xf]
        %v1194 = vld [vmem:[%s230 + $0xeb8] sm:$0xf]
        %v1195 = vld [vmem:[%s230 + $0xebc] sm:$0xf]
        %v1196 = vld [vmem:[%s230 + $0xec0] sm:$0xf]
        %v1197 = vld [vmem:[%s230 + $0xec4] sm:$0xf]
        %v1198 = vld [vmem:[%s230 + $0xec8] sm:$0xf]
        %v1199 = vld [vmem:[%s230 + $0xecc] sm:$0xf]
        %v1200 = vld [vmem:[%s230 + $0xed0] sm:$0xf]
        %v1201 = vld [vmem:[%s230 + $0xed4] sm:$0xf]
        %v1202 = vld [vmem:[%s230 + $0xed8] sm:$0xf]
        %v1203 = vld [vmem:[%s230 + $0xedc] sm:$0xf]
        %v1204 = vld [vmem:[%s230 + $0xee0] sm:$0xf]
        %v1205 = vld [vmem:[%s230 + $0xee4] sm:$0xf]
        %v1206 = vld [vmem:[%s230 + $0xee8] sm:$0xf]
        %v1207 = vld [vmem:[%s230 + $0xeec] sm:$0xf]
        %v1208 = vld [vmem:[%s230 + $0xef0] sm:$0xf]
        %v1209 = vld [vmem:[%s230 + $0xef4] sm:$0xf]
        %v1210 = vld [vmem:[%s230 + $0xef8] sm:$0xf]
        %v1211 = vld [vmem:[%s230 + $0xefc] sm:$0xf]
        %v1212 = vld [vmem:[%s230 + $0xf00] sm:$0xf]
        %v1213 = vld [vmem:[%s230 + $0xf04] sm:$0xf]
        %v1214 = vld [vmem:[%s230 + $0xf08] sm:$0xf]
        %v1215 = vld [vmem:[%s230 + $0xf0c] sm:$0xf]
        %v1216 = vld [vmem:[%s230 + $0xf10] sm:$0xf]
        %v1217 = vld [vmem:[%s230 + $0xf14] sm:$0xf]
        %v1218 = vld [vmem:[%s230 + $0xf18] sm:$0xf]
        %v1219 = vld [vmem:[%s230 + $0xf1c] sm:$0xf]
        %v1220 = vld [vmem:[%s230 + $0xf20] sm:$0xf]
        %v1221 = vld [vmem:[%s230 + $0xf24] sm:$0xf]
        %v1222 = vld [vmem:[%s230 + $0xf28] sm:$0xf]
        %v1223 = vld [vmem:[%s230 + $0xf2c] sm:$0xf]
        %v1224 = vld [vmem:[%s230 + $0xf30] sm:$0xf]
        %v1225 = vld [vmem:[%s230 + $0xf34] sm:$0xf]
        %v1226 = vld [vmem:[%s230 + $0xf38] sm:$0xf]
        %v1227 = vld [vmem:[%s230 + $0xf3c] sm:$0xf]
        %v1228 = vld [vmem:[%s230 + $0xf40] sm:$0xf]
        %v1229 = vld [vmem:[%s230 + $0xf44] sm:$0xf]
        %v1230 = vld [vmem:[%s230 + $0xf48] sm:$0xf]
        %v1231 = vld [vmem:[%s230 + $0xf4c] sm:$0xf]
        %v1232 = vld [vmem:[%s230 + $0xf50] sm:$0xf]
        %v1233 = vld [vmem:[%s230 + $0xf54] sm:$0xf]
        %v1234 = vld [vmem:[%s230 + $0xf58] sm:$0xf]
        %v1235 = vld [vmem:[%s230 + $0xf5c] sm:$0xf]
        %v1236 = vld [vmem:[%s230 + $0xf60] sm:$0xf]
        %v1237 = vld [vmem:[%s230 + $0xf64] sm:$0xf]
        %v1238 = vld [vmem:[%s230 + $0xf68] sm:$0xf]
        %v1239 = vld [vmem:[%s230 + $0xf6c] sm:$0xf]
        %v1240 = vld [vmem:[%s230 + $0xf70] sm:$0xf]
        %v1241 = vld [vmem:[%s230 + $0xf74] sm:$0xf]
        %v1242 = vld [vmem:[%s230 + $0xf78] sm:$0xf]
        %v1243 = vld [vmem:[%s230 + $0xf7c] sm:$0xf]
        %v1244 = vld [vmem:[%s230 + $0xf80] sm:$0xf]
        %v1245 = vld [vmem:[%s230 + $0xf84] sm:$0xf]
        %v1246 = vld [vmem:[%s230 + $0xf88] sm:$0xf]
        %v1247 = vld [vmem:[%s230 + $0xf8c] sm:$0xf]
        %v1248 = vld [vmem:[%s230 + $0xf90] sm:$0xf]
        %v1249 = vld [vmem:[%s230 + $0xf94] sm:$0xf]
        %v1250 = vld [vmem:[%s230 + $0xf98] sm:$0xf]
        %v1251 = vld [vmem:[%s230 + $0xf9c] sm:$0xf]
        %v1252 = vld [vmem:[%s230 + $0xfa0] sm:$0xf]
        %v1253 = vld [vmem:[%s230 + $0xfa4] sm:$0xf]
        %v1254 = vld [vmem:[%s230 + $0xfa8] sm:$0xf]
        %v1255 = vld [vmem:[%s230 + $0xfac] sm:$0xf]
        %v1256 = vld [vmem:[%s230 + $0xfb0] sm:$0xf]
        %v1257 = vld [vmem:[%s230 + $0xfb4] sm:$0xf]
        %v1258 = vld [vmem:[%s230 + $0xfb8] sm:$0xf]
        %v1259 = vld [vmem:[%s230 + $0xfbc] sm:$0xf]
        %v1260 = vld [vmem:[%s230 + $0xfc0] sm:$0xf]
        %v1261 = vld [vmem:[%s230 + $0xfc4] sm:$0xf]
        %v1262 = vld [vmem:[%s230 + $0xfc8] sm:$0xf]
        %v1263 = vld [vmem:[%s230 + $0xfcc] sm:$0xf]
        %v1264 = vld [vmem:[%s230 + $0xfd0] sm:$0xf]
        %v1265 = vld [vmem:[%s230 + $0xfd4] sm:$0xf]
        %v1266 = vld [vmem:[%s230 + $0xfd8] sm:$0xf]
        %v1267 = vld [vmem:[%s230 + $0xfdc] sm:$0xf]
        %v1268 = vld [vmem:[%s230 + $0xfe0] sm:$0xf]
        %v1269 = vld [vmem:[%s230 + $0xfe4] sm:$0xf]
        %v1270 = vld [vmem:[%s230 + $0xfe8] sm:$0xf]
        %v1271 = vld [vmem:[%s230 + $0xfec] sm:$0xf]
        %v1272 = vld [vmem:[%s230 + $0xff0] sm:$0xf]
        %v1273 = vld [vmem:[%s230 + $0xff4] sm:$0xf]
        %v1274 = vld [vmem:[%s230 + $0xff8] sm:$0xf]
        %v1275 = vld [vmem:[%s230 + $0xffc] sm:$0xf]
        %v1276 = vld [vmem:[%s230 + $0x1000] sm:$0xf]
        %v1277 = vld [vmem:[%s230 + $0x1004] sm:$0xf]
        %v1278 = vld [vmem:[%s230 + $0x1008] sm:$0xf]
        %v1279 = vld [vmem:[%s230 + $0x100c] sm:$0xf]
        %v1280 = vld [vmem:[%s230 + $0x1010] sm:$0xf]
        %v1281 = vld [vmem:[%s230 + $0x1014] sm:$0xf]
        %v1282 = vld [vmem:[%s230 + $0x1018] sm:$0xf]
        %v1283 = vld [vmem:[%s230 + $0x101c] sm:$0xf]
        %v1284 = vld [vmem:[%s230 + $0x1020] sm:$0xf]
        %v1285 = vld [vmem:[%s230 + $0x1024] sm:$0xf]
        %v1286 = vld [vmem:[%s230 + $0x1028] sm:$0xf]
        %v1287 = vld [vmem:[%s230 + $0x102c] sm:$0xf]
        %v1288 = vld [vmem:[%s230 + $0x1030] sm:$0xf]
        %v1289 = vld [vmem:[%s230 + $0x1034] sm:$0xf]
        %v1290 = vld [vmem:[%s230 + $0x1038] sm:$0xf]
        %v1291 = vld [vmem:[%s230 + $0x103c] sm:$0xf]
        %v1292 = vld [vmem:[%s230 + $0x1040] sm:$0xf]
        %v1293 = vld [vmem:[%s230 + $0x1044] sm:$0xf]
        %v1294 = vld [vmem:[%s230 + $0x1048] sm:$0xf]
        %v1295 = vld [vmem:[%s230 + $0x104c] sm:$0xf]
        %v1296 = vld [vmem:[%s230 + $0x1050] sm:$0xf]
        %v1297 = vld [vmem:[%s230 + $0x1054] sm:$0xf]
        %v1298 = vld [vmem:[%s230 + $0x1058] sm:$0xf]
        %v1299 = vld [vmem:[%s230 + $0x105c] sm:$0xf]
        %v1300 = vld [vmem:[%s230 + $0x1060] sm:$0xf]
        %v1301 = vld [vmem:[%s230 + $0x1064] sm:$0xf]
        %v1302 = vld [vmem:[%s230 + $0x1068] sm:$0xf]
        %v1303 = vld [vmem:[%s230 + $0x106c] sm:$0xf]
        %v1304 = vld [vmem:[%s230 + $0x1070] sm:$0xf]
        %v1305 = vld [vmem:[%s230 + $0x1074] sm:$0xf]
        %v1306 = vld [vmem:[%s230 + $0x1078] sm:$0xf]
        %v1307 = vld [vmem:[%s230 + $0x107c] sm:$0xf]
        %v1308 = vld [vmem:[%s230 + $0x1080] sm:$0xf]
        %v1309 = vld [vmem:[%s230 + $0x1084] sm:$0xf]
        %v1310 = vld [vmem:[%s230 + $0x1088] sm:$0xf]
        %v1311 = vld [vmem:[%s230 + $0x108c] sm:$0xf]
        %v1312 = vld [vmem:[%s230 + $0x1090] sm:$0xf]
        %v1313 = vld [vmem:[%s230 + $0x1094] sm:$0xf]
        %v1314 = vld [vmem:[%s230 + $0x1098] sm:$0xf]
        %v1315 = vld [vmem:[%s230 + $0x109c] sm:$0xf]
        %v1316 = vld [vmem:[%s230 + $0x10a0] sm:$0xf]
        %v1317 = vld [vmem:[%s230 + $0x10a4] sm:$0xf]
        %v1318 = vld [vmem:[%s230 + $0x10a8] sm:$0xf]
        %v1319 = vld [vmem:[%s230 + $0x10ac] sm:$0xf]
        %v1320 = vld [vmem:[%s230 + $0x10b0] sm:$0xf]
        %v1321 = vld [vmem:[%s230 + $0x10b4] sm:$0xf]
        %v1322 = vld [vmem:[%s230 + $0x10b8] sm:$0xf]
        %v1323 = vld [vmem:[%s230 + $0x10bc] sm:$0xf]
        %v1324 = vld [vmem:[%s230 + $0x10c0] sm:$0xf]
        %v1325 = vld [vmem:[%s230 + $0x10c4] sm:$0xf]
        %v1326 = vld [vmem:[%s230 + $0x10c8] sm:$0xf]
        %v1327 = vld [vmem:[%s230 + $0x10cc] sm:$0xf]
        %v1328 = vld [vmem:[%s230 + $0x10d0] sm:$0xf]
        %v1329 = vld [vmem:[%s230 + $0x10d4] sm:$0xf]
        %v1330 = vld [vmem:[%s230 + $0x10d8] sm:$0xf]
        %v1331 = vld [vmem:[%s230 + $0x10dc] sm:$0xf]
        %v1332 = vld [vmem:[%s230 + $0x10e0] sm:$0xf]
        %v1333 = vld [vmem:[%s230 + $0x10e4] sm:$0xf]
        %v1334 = vld [vmem:[%s230 + $0x10e8] sm:$0xf]
        %v1335 = vld [vmem:[%s230 + $0x10ec] sm:$0xf]
        %v1336 = vld [vmem:[%s230 + $0x10f0] sm:$0xf]
        %v1337 = vld [vmem:[%s230 + $0x10f4] sm:$0xf]
        %v1338 = vld [vmem:[%s230 + $0x10f8] sm:$0xf]
        %v1339 = vld [vmem:[%s230 + $0x10fc] sm:$0xf]
        %v1340 = vld [vmem:[%s230 + $0x1100] sm:$0xf]
        %v1341 = vld [vmem:[%s230 + $0x1104] sm:$0xf]
        %v1342 = vld [vmem:[%s230 + $0x1108] sm:$0xf]
        %v1343 = vld [vmem:[%s230 + $0x110c] sm:$0xf]
        %v1344 = vld [vmem:[%s230 + $0x1110] sm:$0xf]
        %v1345 = vld [vmem:[%s230 + $0x1114] sm:$0xf]
        %v1346 = vld [vmem:[%s230 + $0x1118] sm:$0xf]
        %v1347 = vld [vmem:[%s230 + $0x111c] sm:$0xf]
        %v1348 = vld [vmem:[%s230 + $0x1120] sm:$0xf]
        %v1349 = vld [vmem:[%s230 + $0x1124] sm:$0xf]
        %v1350 = vld [vmem:[%s230 + $0x1128] sm:$0xf]
        %v1351 = vld [vmem:[%s230 + $0x112c] sm:$0xf]
        %v1352 = vld [vmem:[%s230 + $0x1130] sm:$0xf]
        %v1353 = vld [vmem:[%s230 + $0x1134] sm:$0xf]
        %v1354 = vld [vmem:[%s230 + $0x1138] sm:$0xf]
        %v1355 = vld [vmem:[%s230 + $0x113c] sm:$0xf]
        %v1356 = vld [vmem:[%s230 + $0x1140] sm:$0xf]
        %v1357 = vld [vmem:[%s230 + $0x1144] sm:$0xf]
        %v1358 = vld [vmem:[%s230 + $0x1148] sm:$0xf]
        %v1359 = vld [vmem:[%s230 + $0x114c] sm:$0xf]
        %v1360 = vld [vmem:[%s230 + $0x1150] sm:$0xf]
        %v1361 = vld [vmem:[%s230 + $0x1154] sm:$0xf]
        %v1362 = vld [vmem:[%s230 + $0x1158] sm:$0xf]
        %v1363 = vld [vmem:[%s230 + $0x115c] sm:$0xf]
        %v1364 = vld [vmem:[%s230 + $0x1160] sm:$0xf]
        %v1365 = vld [vmem:[%s230 + $0x1164] sm:$0xf]
        %v1366 = vld [vmem:[%s230 + $0x1168] sm:$0xf]
        %v1367 = vld [vmem:[%s230 + $0x116c] sm:$0xf]
        %v1368 = vld [vmem:[%s230 + $0x1170] sm:$0xf]
        %v1369 = vld [vmem:[%s230 + $0x1174] sm:$0xf]
        %v1370 = vld [vmem:[%s230 + $0x1178] sm:$0xf]
        %v1371 = vld [vmem:[%s230 + $0x117c] sm:$0xf]
        %v1372 = vld [vmem:[%s230 + $0x1180] sm:$0xf]
        %v1373 = vld [vmem:[%s230 + $0x1184] sm:$0xf]
        %v1374 = vld [vmem:[%s230 + $0x1188] sm:$0xf]
        %v1375 = vld [vmem:[%s230 + $0x118c] sm:$0xf]
        %v1376 = vld [vmem:[%s230 + $0x1190] sm:$0xf]
        %v1377 = vld [vmem:[%s230 + $0x1194] sm:$0xf]
        %v1378 = vld [vmem:[%s230 + $0x1198] sm:$0xf]
        %v1379 = vld [vmem:[%s230 + $0x119c] sm:$0xf]
        %v1380 = vld [vmem:[%s230 + $0x11a0] sm:$0xf]
        %v1381 = vld [vmem:[%s230 + $0x11a4] sm:$0xf]
        %v1382 = vld [vmem:[%s230 + $0x11a8] sm:$0xf]
        %v1383 = vld [vmem:[%s230 + $0x11ac] sm:$0xf]
        %v1384 = vld [vmem:[%s230 + $0x11b0] sm:$0xf]
        %v1385 = vld [vmem:[%s230 + $0x11b4] sm:$0xf]
        %v1386 = vld [vmem:[%s230 + $0x11b8] sm:$0xf]
        %v1387 = vld [vmem:[%s230 + $0x11bc] sm:$0xf]
        %v1388 = vld [vmem:[%s230 + $0x11c0] sm:$0xf]
        %v1389 = vld [vmem:[%s230 + $0x11c4] sm:$0xf]
        %v1390 = vld [vmem:[%s230 + $0x11c8] sm:$0xf]
        %v1391 = vld [vmem:[%s230 + $0x11cc] sm:$0xf]
        %v1392 = vld [vmem:[%s230 + $0x11d0] sm:$0xf]
        %v1393 = vld [vmem:[%s230 + $0x11d4] sm:$0xf]
        %v1394 = vld [vmem:[%s230 + $0x11d8] sm:$0xf]
        %v1395 = vld [vmem:[%s230 + $0x11dc] sm:$0xf]
        %v1396 = vld [vmem:[%s230 + $0x11e0] sm:$0xf]
        %v1397 = vld [vmem:[%s230 + $0x11e4] sm:$0xf]
        %v1398 = vld [vmem:[%s230 + $0x11e8] sm:$0xf]
        %v1399 = vld [vmem:[%s230 + $0x11ec] sm:$0xf]
        %v1400 = vld [vmem:[%s230 + $0x11f0] sm:$0xf]
        %v1401 = vld [vmem:[%s230 + $0x11f4] sm:$0xf]
        %v1402 = vld [vmem:[%s230 + $0x11f8] sm:$0xf]
        %v1403 = vld [vmem:[%s230 + $0x11fc] sm:$0xf]
        %v1404 = vld [vmem:[%s230 + $0x1200] sm:$0xf]
        %v1405 = vld [vmem:[%s230 + $0x1204] sm:$0xf]
        %v1406 = vld [vmem:[%s230 + $0x1208] sm:$0xf]
        %v1407 = vld [vmem:[%s230 + $0x120c] sm:$0xf]
        %v1408 = vld [vmem:[%s230 + $0x1210] sm:$0xf]
        %v1409 = vld [vmem:[%s230 + $0x1214] sm:$0xf]
        %v1410 = vld [vmem:[%s230 + $0x1218] sm:$0xf]
        %v1411 = vld [vmem:[%s230 + $0x121c] sm:$0xf]
        %v1412 = vld [vmem:[%s230 + $0x1220] sm:$0xf]
        %v1413 = vld [vmem:[%s230 + $0x1224] sm:$0xf]
        %v1414 = vld [vmem:[%s230 + $0x1228] sm:$0xf]
        %v1415 = vld [vmem:[%s230 + $0x122c] sm:$0xf]
        %v1416 = vld [vmem:[%s230 + $0x1230] sm:$0xf]
        %v1417 = vld [vmem:[%s230 + $0x1234] sm:$0xf]
        %v1418 = vld [vmem:[%s230 + $0x1238] sm:$0xf]
        %v1419 = vld [vmem:[%s230 + $0x123c] sm:$0xf]
        %v1420 = vld [vmem:[%s230 + $0x1240] sm:$0xf]
        %v1421 = vld [vmem:[%s230 + $0x1244] sm:$0xf]
        %v1422 = vld [vmem:[%s230 + $0x1248] sm:$0xf]
        %v1423 = vld [vmem:[%s230 + $0x124c] sm:$0xf]
        %v1424 = vld [vmem:[%s230 + $0x1250] sm:$0xf]
        %v1425 = vld [vmem:[%s230 + $0x1254] sm:$0xf]
        %v1426 = vld [vmem:[%s230 + $0x1258] sm:$0xf]
        %v1427 = vld [vmem:[%s230 + $0x125c] sm:$0xf]
        %v1428 = vld [vmem:[%s230 + $0x1260] sm:$0xf]
        %v1429 = vld [vmem:[%s230 + $0x1264] sm:$0xf]
        %v1430 = vld [vmem:[%s230 + $0x1268] sm:$0xf]
        %v1431 = vld [vmem:[%s230 + $0x126c] sm:$0xf]
        %v1432 = vld [vmem:[%s230 + $0x1270] sm:$0xf]
        %v1433 = vld [vmem:[%s230 + $0x1274] sm:$0xf]
        %v1434 = vld [vmem:[%s230 + $0x1278] sm:$0xf]
        %v1435 = vld [vmem:[%s230 + $0x127c] sm:$0xf]
        %v1436 = vld [vmem:[%s230 + $0x1280] sm:$0xf]
        %v1437 = vld [vmem:[%s230 + $0x1284] sm:$0xf]
        %v1438 = vld [vmem:[%s230 + $0x1288] sm:$0xf]
        %v1439 = vld [vmem:[%s230 + $0x128c] sm:$0xf]
        %v1440 = vld [vmem:[%s230 + $0x1290] sm:$0xf]
        %v1441 = vld [vmem:[%s230 + $0x1294] sm:$0xf]
        %v1442 = vld [vmem:[%s230 + $0x1298] sm:$0xf]
        %v1443 = vld [vmem:[%s230 + $0x129c] sm:$0xf]
        %v1444 = vld [vmem:[%s230 + $0x12a0] sm:$0xf]
        %v1445 = vld [vmem:[%s230 + $0x12a4] sm:$0xf]
        %v1446 = vld [vmem:[%s230 + $0x12a8] sm:$0xf]
        %v1447 = vld [vmem:[%s230 + $0x12ac] sm:$0xf]
        %v1448 = vld [vmem:[%s230 + $0x12b0] sm:$0xf]
        %v1449 = vld [vmem:[%s230 + $0x12b4] sm:$0xf]
        %v1450 = vld [vmem:[%s230 + $0x12b8] sm:$0xf]
        %v1451 = vld [vmem:[%s230 + $0x12bc] sm:$0xf]
        %v1452 = vld [vmem:[%s230 + $0x12c0] sm:$0xf]
        %v1453 = vld [vmem:[%s230 + $0x12c4] sm:$0xf]
        %v1454 = vld [vmem:[%s230 + $0x12c8] sm:$0xf]
        %v1455 = vld [vmem:[%s230 + $0x12cc] sm:$0xf]
        %v1456 = vld [vmem:[%s230 + $0x12d0] sm:$0xf]
        %v1457 = vld [vmem:[%s230 + $0x12d4] sm:$0xf]
        %v1458 = vld [vmem:[%s230 + $0x12d8] sm:$0xf]
        %v1459 = vld [vmem:[%s230 + $0x12dc] sm:$0xf]
        %v1460 = vld [vmem:[%s230 + $0x12e0] sm:$0xf]
        %v1461 = vld [vmem:[%s230 + $0x12e4] sm:$0xf]
        %v1462 = vld [vmem:[%s230 + $0x12e8] sm:$0xf]
        %v1463 = vld [vmem:[%s230 + $0x12ec] sm:$0xf]
        %v1464 = vld [vmem:[%s230 + $0x12f0] sm:$0xf]
        %v1465 = vld [vmem:[%s230 + $0x12f4] sm:$0xf]
        %v1466 = vld [vmem:[%s230 + $0x12f8] sm:$0xf]
        %v1467 = vld [vmem:[%s230 + $0x12fc] sm:$0xf]
        %v1468 = vld [vmem:[%s230 + $0x1300] sm:$0xf]
        %v1469 = vld [vmem:[%s230 + $0x1304] sm:$0xf]
        %v1470 = vld [vmem:[%s230 + $0x1308] sm:$0xf]
        %v1471 = vld [vmem:[%s230 + $0x130c] sm:$0xf]
        %v1472 = vld [vmem:[%s230 + $0x1310] sm:$0xf]
        %v1473 = vld [vmem:[%s230 + $0x1314] sm:$0xf]
        %v1474 = vld [vmem:[%s230 + $0x1318] sm:$0xf]
        %v1475 = vld [vmem:[%s230 + $0x131c] sm:$0xf]
        %v1476 = vld [vmem:[%s230 + $0x1320] sm:$0xf]
        %v1477 = vld [vmem:[%s230 + $0x1324] sm:$0xf]
        %v1478 = vld [vmem:[%s230 + $0x1328] sm:$0xf]
        %v1479 = vld [vmem:[%s230 + $0x132c] sm:$0xf]
        %v1480 = vld [vmem:[%s230 + $0x1330] sm:$0xf]
        %v1481 = vld [vmem:[%s230 + $0x1334] sm:$0xf]
        %v1482 = vld [vmem:[%s230 + $0x1338] sm:$0xf]
        %v1483 = vld [vmem:[%s230 + $0x133c] sm:$0xf]
        %v1484 = vld [vmem:[%s230 + $0x1340] sm:$0xf]
        %v1485 = vld [vmem:[%s230 + $0x1344] sm:$0xf]
        %v1486 = vld [vmem:[%s230 + $0x1348] sm:$0xf]
        %v1487 = vld [vmem:[%s230 + $0x134c] sm:$0xf]
        %v1488 = vld [vmem:[%s230 + $0x1350] sm:$0xf]
        %v1489 = vld [vmem:[%s230 + $0x1354] sm:$0xf]
        %v1490 = vld [vmem:[%s230 + $0x1358] sm:$0xf]
        %v1491 = vld [vmem:[%s230 + $0x135c] sm:$0xf]
        %v1492 = vld [vmem:[%s230 + $0x1360] sm:$0xf]
        %v1493 = vld [vmem:[%s230 + $0x1364] sm:$0xf]
        %v1494 = vld [vmem:[%s230 + $0x1368] sm:$0xf]
        %v1495 = vld [vmem:[%s230 + $0x136c] sm:$0xf]
        %v1496 = vld [vmem:[%s230 + $0x1370] sm:$0xf]
        %v1497 = vld [vmem:[%s230 + $0x1374] sm:$0xf]
        %v1498 = vld [vmem:[%s230 + $0x1378] sm:$0xf]
        %v1499 = vld [vmem:[%s230 + $0x137c] sm:$0xf]
        %v1500 = vld [vmem:[%s230 + $0x1380] sm:$0xf]
        %v1501 = vld [vmem:[%s230 + $0x1384] sm:$0xf]
        %v1502 = vld [vmem:[%s230 + $0x1388] sm:$0xf]
        %v1503 = vld [vmem:[%s230 + $0x138c] sm:$0xf]
        %v1504 = vld [vmem:[%s230 + $0x1390] sm:$0xf]
        %v1505 = vld [vmem:[%s230 + $0x1394] sm:$0xf]
        %v1506 = vld [vmem:[%s230 + $0x1398] sm:$0xf]
        %v1507 = vld [vmem:[%s230 + $0x139c] sm:$0xf]
        %v1508 = vld [vmem:[%s230 + $0x13a0] sm:$0xf]
        %v1509 = vld [vmem:[%s230 + $0x13a4] sm:$0xf]
        %v1510 = vld [vmem:[%s230 + $0x13a8] sm:$0xf]
        %v1511 = vld [vmem:[%s230 + $0x13ac] sm:$0xf]
        %v1512 = vld [vmem:[%s230 + $0x13b0] sm:$0xf]
        %v1513 = vld [vmem:[%s230 + $0x13b4] sm:$0xf]
        %v1514 = vld [vmem:[%s230 + $0x13b8] sm:$0xf]
        %v1515 = vld [vmem:[%s230 + $0x13bc] sm:$0xf]
        %v1516 = vld [vmem:[%s230 + $0x13c0] sm:$0xf]
        %v1517 = vld [vmem:[%s230 + $0x13c4] sm:$0xf]
        %v1518 = vld [vmem:[%s230 + $0x13c8] sm:$0xf]
        %v1519 = vld [vmem:[%s230 + $0x13cc] sm:$0xf]
        %v1520 = vld [vmem:[%s230 + $0x13d0] sm:$0xf]
        %v1521 = vld [vmem:[%s230 + $0x13d4] sm:$0xf]
        %v1522 = vld [vmem:[%s230 + $0x13d8] sm:$0xf]
        %v1523 = vld [vmem:[%s230 + $0x13dc] sm:$0xf]
        %v1524 = vld [vmem:[%s230 + $0x13e0] sm:$0xf]
        %v1525 = vld [vmem:[%s230 + $0x13e4] sm:$0xf]
        %v1526 = vld [vmem:[%s230 + $0x13e8] sm:$0xf]
        %v1527 = vld [vmem:[%s230 + $0x13ec] sm:$0xf]
        %v1528 = vld [vmem:[%s230 + $0x13f0] sm:$0xf]
        %v1529 = vld [vmem:[%s230 + $0x13f4] sm:$0xf]
        %v1530 = vld [vmem:[%s230 + $0x13f8] sm:$0xf]
        %v1531 = vld [vmem:[%s230 + $0x13fc] sm:$0xf]
        %v1532 = vld [vmem:[%s230 + $0x1400] sm:$0xf]
        %v1533 = vld [vmem:[%s230 + $0x1404] sm:$0xf]
        %v1534 = vld [vmem:[%s230 + $0x1408] sm:$0xf]
        %v1535 = vld [vmem:[%s230 + $0x140c] sm:$0xf]
        %v1536 = vld [vmem:[%s230 + $0x1410] sm:$0xf]
        %v1537 = vld [vmem:[%s230 + $0x1414] sm:$0xf]
        %v1538 = vld [vmem:[%s230 + $0x1418] sm:$0xf]
        %v1539 = vld [vmem:[%s230 + $0x141c] sm:$0xf]
        %v1540 = vld [vmem:[%s230 + $0x1420] sm:$0xf]
        %v1541 = vld [vmem:[%s230 + $0x1424] sm:$0xf]
        %v1542 = vld [vmem:[%s230 + $0x1428] sm:$0xf]
        %v1543 = vld [vmem:[%s230 + $0x142c] sm:$0xf]
        %v1544 = vld [vmem:[%s230 + $0x1430] sm:$0xf]
        %v1545 = vld [vmem:[%s230 + $0x1434] sm:$0xf]
        %v1546 = vld [vmem:[%s230 + $0x1438] sm:$0xf]
        %v1547 = vld [vmem:[%s230 + $0x143c] sm:$0xf]
        %v1548 = vld [vmem:[%s230 + $0x1440] sm:$0xf]
        %v1549 = vld [vmem:[%s230 + $0x1444] sm:$0xf]
        %v1550 = vld [vmem:[%s230 + $0x1448] sm:$0xf]
        %v1551 = vld [vmem:[%s230 + $0x144c] sm:$0xf]
        %v1552 = vld [vmem:[%s230 + $0x1450] sm:$0xf]
        %v1553 = vld [vmem:[%s230 + $0x1454] sm:$0xf]
        %v1554 = vld [vmem:[%s230 + $0x1458] sm:$0xf]
        %v1555 = vld [vmem:[%s230 + $0x145c] sm:$0xf]
        %v1556 = vld [vmem:[%s230 + $0x1460] sm:$0xf]
        %v1557 = vld [vmem:[%s230 + $0x1464] sm:$0xf]
        %v1558 = vld [vmem:[%s230 + $0x1468] sm:$0xf]
        %v1559 = vld [vmem:[%s230 + $0x146c] sm:$0xf]
        %v1560 = vld [vmem:[%s230 + $0x1470] sm:$0xf]
        %v1561 = vld [vmem:[%s230 + $0x1474] sm:$0xf]
        %v1562 = vld [vmem:[%s230 + $0x1478] sm:$0xf]
        %v1563 = vld [vmem:[%s230 + $0x147c] sm:$0xf]
        %v1564 = vld [vmem:[%s230 + $0x1480] sm:$0xf]
        %v1565 = vld [vmem:[%s230 + $0x1484] sm:$0xf]
        %v1566 = vld [vmem:[%s230 + $0x1488] sm:$0xf]
        %v1567 = vld [vmem:[%s230 + $0x148c] sm:$0xf]
        %v1568 = vld [vmem:[%s230 + $0x1490] sm:$0xf]
        %v1569 = vld [vmem:[%s230 + $0x1494] sm:$0xf]
        %v1570 = vld [vmem:[%s230 + $0x1498] sm:$0xf]
        %v1571 = vld [vmem:[%s230 + $0x149c] sm:$0xf]
        %v1572 = vld [vmem:[%s230 + $0x14a0] sm:$0xf]
        %v1573 = vld [vmem:[%s230 + $0x14a4] sm:$0xf]
        %v1574 = vld [vmem:[%s230 + $0x14a8] sm:$0xf]
        %v1575 = vld [vmem:[%s230 + $0x14ac] sm:$0xf]
        %v1576 = vld [vmem:[%s230 + $0x14b0] sm:$0xf]
        %v1577 = vld [vmem:[%s230 + $0x14b4] sm:$0xf]
        %v1578 = vld [vmem:[%s230 + $0x14b8] sm:$0xf]
        %v1579 = vld [vmem:[%s230 + $0x14bc] sm:$0xf]
        %v1580 = vld [vmem:[%s230 + $0x14c0] sm:$0xf]
        %v1581 = vld [vmem:[%s230 + $0x14c4] sm:$0xf]
        %v1582 = vld [vmem:[%s230 + $0x14c8] sm:$0xf]
        %v1583 = vld [vmem:[%s230 + $0x14cc] sm:$0xf]
        %v1584 = vld [vmem:[%s230 + $0x14d0] sm:$0xf]
        %v1585 = vld [vmem:[%s230 + $0x14d4] sm:$0xf]
        %v1586 = vld [vmem:[%s230 + $0x14d8] sm:$0xf]
        %v1587 = vld [vmem:[%s230 + $0x14dc] sm:$0xf]
        %v1588 = vld [vmem:[%s230 + $0x14e0] sm:$0xf]
        %v1589 = vld [vmem:[%s230 + $0x14e4] sm:$0xf]
        %v1590 = vld [vmem:[%s230 + $0x14e8] sm:$0xf]
        %v1591 = vld [vmem:[%s230 + $0x14ec] sm:$0xf]
        %v1592 = vld [vmem:[%s230 + $0x14f0] sm:$0xf]
        %v1593 = vld [vmem:[%s230 + $0x14f4] sm:$0xf]
        %v1594 = vld [vmem:[%s230 + $0x14f8] sm:$0xf]
        %v1595 = vld [vmem:[%s230 + $0x14fc] sm:$0xf]
        %v1596 = vld [vmem:[%s230 + $0x1500] sm:$0xf]
        %v1597 = vld [vmem:[%s230 + $0x1504] sm:$0xf]
        %v1598 = vld [vmem:[%s230 + $0x1508] sm:$0xf]
        %v1599 = vld [vmem:[%s230 + $0x150c] sm:$0xf]
        %v1600 = vld [vmem:[%s230 + $0x1510] sm:$0xf]
        %v1601 = vld [vmem:[%s230 + $0x1514] sm:$0xf]
        %v1602 = vld [vmem:[%s230 + $0x1518] sm:$0xf]
        %v1603 = vld [vmem:[%s230 + $0x151c] sm:$0xf]
        %v1604 = vld [vmem:[%s230 + $0x1520] sm:$0xf]
        %v1605 = vld [vmem:[%s230 + $0x1524] sm:$0xf]
        %v1606 = vld [vmem:[%s230 + $0x1528] sm:$0xf]
        %v1607 = vld [vmem:[%s230 + $0x152c] sm:$0xf]
        %v1608 = vld [vmem:[%s230 + $0x1530] sm:$0xf]
        %v1609 = vld [vmem:[%s230 + $0x1534] sm:$0xf]
        %v1610 = vld [vmem:[%s230 + $0x1538] sm:$0xf]
        %v1611 = vld [vmem:[%s230 + $0x153c] sm:$0xf]
        %v1612 = vld [vmem:[%s230 + $0x1540] sm:$0xf]
        %v1613 = vld [vmem:[%s230 + $0x1544] sm:$0xf]
        %v1614 = vld [vmem:[%s230 + $0x1548] sm:$0xf]
        %v1615 = vld [vmem:[%s230 + $0x154c] sm:$0xf]
        %v1616 = vld [vmem:[%s230 + $0x1550] sm:$0xf]
        %v1617 = vld [vmem:[%s230 + $0x1554] sm:$0xf]
        %v1618 = vld [vmem:[%s230 + $0x1558] sm:$0xf]
        %v1619 = vld [vmem:[%s230 + $0x155c] sm:$0xf]
        %v1620 = vld [vmem:[%s230 + $0x1560] sm:$0xf]
        %v1621 = vld [vmem:[%s230 + $0x1564] sm:$0xf]
        %v1622 = vld [vmem:[%s230 + $0x1568] sm:$0xf]
        %v1623 = vld [vmem:[%s230 + $0x156c] sm:$0xf]
        %v1624 = vld [vmem:[%s230 + $0x1570] sm:$0xf]
        %v1625 = vld [vmem:[%s230 + $0x1574] sm:$0xf]
        %v1626 = vld [vmem:[%s230 + $0x1578] sm:$0xf]
        %v1627 = vld [vmem:[%s230 + $0x157c] sm:$0xf]
        %v1628 = vld [vmem:[%s230 + $0x1580] sm:$0xf]
        %v1629 = vld [vmem:[%s230 + $0x1584] sm:$0xf]
        %v1630 = vld [vmem:[%s230 + $0x1588] sm:$0xf]
        %v1631 = vld [vmem:[%s230 + $0x158c] sm:$0xf]
        %v1632 = vld [vmem:[%s230 + $0x1590] sm:$0xf]
        %v1633 = vld [vmem:[%s230 + $0x1594] sm:$0xf]
        %v1634 = vld [vmem:[%s230 + $0x1598] sm:$0xf]
        %v1635 = vld [vmem:[%s230 + $0x159c] sm:$0xf]
        %v1636 = vld [vmem:[%s230 + $0x15a0] sm:$0xf]
        %v1637 = vld [vmem:[%s230 + $0x15a4] sm:$0xf]
        %v1638 = vld [vmem:[%s230 + $0x15a8] sm:$0xf]
        %v1639 = vld [vmem:[%s230 + $0x15ac] sm:$0xf]
        %v1640 = vld [vmem:[%s230 + $0x15b0] sm:$0xf]
        %v1641 = vld [vmem:[%s230 + $0x15b4] sm:$0xf]
        %v1642 = vld [vmem:[%s230 + $0x15b8] sm:$0xf]
        %v1643 = vld [vmem:[%s230 + $0x15bc] sm:$0xf]
        %v1644 = vld [vmem:[%s230 + $0x15c0] sm:$0xf]
        %v1645 = vld [vmem:[%s230 + $0x15c4] sm:$0xf]
        %v1646 = vld [vmem:[%s230 + $0x15c8] sm:$0xf]
        %v1647 = vld [vmem:[%s230 + $0x15cc] sm:$0xf]
        %v1648 = vld [vmem:[%s230 + $0x15d0] sm:$0xf]
        %v1649 = vld [vmem:[%s230 + $0x15d4] sm:$0xf]
        %v1650 = vld [vmem:[%s230 + $0x15d8] sm:$0xf]
        %v1651 = vld [vmem:[%s230 + $0x15dc] sm:$0xf]
        %v1652 = vld [vmem:[%s230 + $0x15e0] sm:$0xf]
        %v1653 = vld [vmem:[%s230 + $0x15e4] sm:$0xf]
        %v1654 = vld [vmem:[%s230 + $0x15e8] sm:$0xf]
        %v1655 = vld [vmem:[%s230 + $0x15ec] sm:$0xf]
        %v1656 = vld [vmem:[%s230 + $0x15f0] sm:$0xf]
        %v1657 = vld [vmem:[%s230 + $0x15f4] sm:$0xf]
        %v1658 = vld [vmem:[%s230 + $0x15f8] sm:$0xf]
        %v1659 = vld [vmem:[%s230 + $0x15fc] sm:$0xf]
        %v1660 = vld [vmem:[%s230 + $0x1600] sm:$0xf]
        %v1661 = vld [vmem:[%s230 + $0x1604] sm:$0xf]
        %v1662 = vld [vmem:[%s230 + $0x1608] sm:$0xf]
        %v1663 = vld [vmem:[%s230 + $0x160c] sm:$0xf]
        %v1664 = vld [vmem:[%s230 + $0x1610] sm:$0xf]
        %v1665 = vld [vmem:[%s230 + $0x1614] sm:$0xf]
        %v1666 = vld [vmem:[%s230 + $0x1618] sm:$0xf]
        %v1667 = vld [vmem:[%s230 + $0x161c] sm:$0xf]
        %v1668 = vld [vmem:[%s230 + $0x1620] sm:$0xf]
        %v1669 = vld [vmem:[%s230 + $0x1624] sm:$0xf]
        %v1670 = vld [vmem:[%s230 + $0x1628] sm:$0xf]
        %v1671 = vld [vmem:[%s230 + $0x162c] sm:$0xf]
        %v1672 = vld [vmem:[%s230 + $0x1630] sm:$0xf]
        %v1673 = vld [vmem:[%s230 + $0x1634] sm:$0xf]
        %v1674 = vld [vmem:[%s230 + $0x1638] sm:$0xf]
        %v1675 = vld [vmem:[%s230 + $0x163c] sm:$0xf]
        %v1676 = vld [vmem:[%s230 + $0x1640] sm:$0xf]
        %v1677 = vld [vmem:[%s230 + $0x1644] sm:$0xf]
        %v1678 = vld [vmem:[%s230 + $0x1648] sm:$0xf]
        %v1679 = vld [vmem:[%s230 + $0x164c] sm:$0xf]
        %v1680 = vld [vmem:[%s230 + $0x1650] sm:$0xf]
        %v1681 = vld [vmem:[%s230 + $0x1654] sm:$0xf]
        %v1682 = vld [vmem:[%s230 + $0x1658] sm:$0xf]
        %v1683 = vld [vmem:[%s230 + $0x165c] sm:$0xf]
        %v1684 = vld [vmem:[%s230 + $0x1660] sm:$0xf]
        %v1685 = vld [vmem:[%s230 + $0x1664] sm:$0xf]
        %v1686 = vld [vmem:[%s230 + $0x1668] sm:$0xf]
        %v1687 = vld [vmem:[%s230 + $0x166c] sm:$0xf]
        %v1688 = vld [vmem:[%s230 + $0x1670] sm:$0xf]
        %v1689 = vld [vmem:[%s230 + $0x1674] sm:$0xf]
        %v1690 = vld [vmem:[%s230 + $0x1678] sm:$0xf]
        %v1691 = vld [vmem:[%s230 + $0x167c] sm:$0xf]
        %v1692 = vld [vmem:[%s230 + $0x1680] sm:$0xf]
        %v1693 = vld [vmem:[%s230 + $0x1684] sm:$0xf]
        %v1694 = vld [vmem:[%s230 + $0x1688] sm:$0xf]
        %v1695 = vld [vmem:[%s230 + $0x168c] sm:$0xf]
        %v1696 = vld [vmem:[%s230 + $0x1690] sm:$0xf]
        %v1697 = vld [vmem:[%s230 + $0x1694] sm:$0xf]
        %v1698 = vld [vmem:[%s230 + $0x1698] sm:$0xf]
        %v1699 = vld [vmem:[%s230 + $0x169c] sm:$0xf]
        %v1700 = vld [vmem:[%s230 + $0x16a0] sm:$0xf]
        %v1701 = vld [vmem:[%s230 + $0x16a4] sm:$0xf]
        %v1702 = vld [vmem:[%s230 + $0x16a8] sm:$0xf]
        %v1703 = vld [vmem:[%s230 + $0x16ac] sm:$0xf]
        %v1704 = vld [vmem:[%s230 + $0x16b0] sm:$0xf]
        %v1705 = vld [vmem:[%s230 + $0x16b4] sm:$0xf]
        %v1706 = vld [vmem:[%s230 + $0x16b8] sm:$0xf]
        %v1707 = vld [vmem:[%s230 + $0x16bc] sm:$0xf]
        %v1708 = vld [vmem:[%s230 + $0x16c0] sm:$0xf]
        %v1709 = vld [vmem:[%s230 + $0x16c4] sm:$0xf]
        %v1710 = vld [vmem:[%s230 + $0x16c8] sm:$0xf]
        %v1711 = vld [vmem:[%s230 + $0x16cc] sm:$0xf]
        %v1712 = vld [vmem:[%s230 + $0x16d0] sm:$0xf]
        %v1713 = vld [vmem:[%s230 + $0x16d4] sm:$0xf]
        %v1714 = vld [vmem:[%s230 + $0x16d8] sm:$0xf]
        %v1715 = vld [vmem:[%s230 + $0x16dc] sm:$0xf]
        %v1716 = vld [vmem:[%s230 + $0x16e0] sm:$0xf]
        %v1717 = vld [vmem:[%s230 + $0x16e4] sm:$0xf]
        %v1718 = vld [vmem:[%s230 + $0x16e8] sm:$0xf]
        %v1719 = vld [vmem:[%s230 + $0x16ec] sm:$0xf]
        %v1720 = vld [vmem:[%s230 + $0x16f0] sm:$0xf]
        %v1721 = vld [vmem:[%s230 + $0x16f4] sm:$0xf]
        %v1722 = vld [vmem:[%s230 + $0x16f8] sm:$0xf]
        %v1723 = vld [vmem:[%s230 + $0x16fc] sm:$0xf]
        %v1724 = vld [vmem:[%s230 + $0x1700] sm:$0xf]
        %v1725 = vld [vmem:[%s230 + $0x1704] sm:$0xf]
        %v1726 = vld [vmem:[%s230 + $0x1708] sm:$0xf]
        %v1727 = vld [vmem:[%s230 + $0x170c] sm:$0xf]
        %v1728 = vld [vmem:[%s230 + $0x1710] sm:$0xf]
        %v1729 = vld [vmem:[%s230 + $0x1714] sm:$0xf]
        %v1730 = vld [vmem:[%s230 + $0x1718] sm:$0xf]
        %v1731 = vld [vmem:[%s230 + $0x171c] sm:$0xf]
        %v1732 = vld [vmem:[%s230 + $0x1720] sm:$0xf]
        %v1733 = vld [vmem:[%s230 + $0x1724] sm:$0xf]
        %v1734 = vld [vmem:[%s230 + $0x1728] sm:$0xf]
        %v1735 = vld [vmem:[%s230 + $0x172c] sm:$0xf]
        %v1736 = vld [vmem:[%s230 + $0x1730] sm:$0xf]
        %v1737 = vld [vmem:[%s230 + $0x1734] sm:$0xf]
        %v1738 = vld [vmem:[%s230 + $0x1738] sm:$0xf]
        %v1739 = vld [vmem:[%s230 + $0x173c] sm:$0xf]
        %v1740 = vld [vmem:[%s230 + $0x1740] sm:$0xf]
        %v1741 = vld [vmem:[%s230 + $0x1744] sm:$0xf]
        %v1742 = vld [vmem:[%s230 + $0x1748] sm:$0xf]
        %v1743 = vld [vmem:[%s230 + $0x174c] sm:$0xf]
        %v1744 = vld [vmem:[%s230 + $0x1750] sm:$0xf]
        %v1745 = vld [vmem:[%s230 + $0x1754] sm:$0xf]
        %v1746 = vld [vmem:[%s230 + $0x1758] sm:$0xf]
        %v1747 = vld [vmem:[%s230 + $0x175c] sm:$0xf]
        %v1748 = vld [vmem:[%s230 + $0x1760] sm:$0xf]
        %v1749 = vld [vmem:[%s230 + $0x1764] sm:$0xf]
        %v1750 = vld [vmem:[%s230 + $0x1768] sm:$0xf]
        %v1751 = vld [vmem:[%s230 + $0x176c] sm:$0xf]
        %v1752 = vld [vmem:[%s230 + $0x1770] sm:$0xf]
        %v1753 = vld [vmem:[%s230 + $0x1774] sm:$0xf]
        %v1754 = vld [vmem:[%s230 + $0x1778] sm:$0xf]
        %v1755 = vld [vmem:[%s230 + $0x177c] sm:$0xf]
        %v1756 = vld [vmem:[%s230 + $0x1780] sm:$0xf]
        %v1757 = vld [vmem:[%s230 + $0x1784] sm:$0xf]
        %v1758 = vld [vmem:[%s230 + $0x1788] sm:$0xf]
        %v1759 = vld [vmem:[%s230 + $0x178c] sm:$0xf]
        %v1760 = vld [vmem:[%s230 + $0x1790] sm:$0xf]
        %v1761 = vld [vmem:[%s230 + $0x1794] sm:$0xf]
        %v1762 = vld [vmem:[%s230 + $0x1798] sm:$0xf]
        %v1763 = vld [vmem:[%s230 + $0x179c] sm:$0xf]
        %v1764 = vld [vmem:[%s230 + $0x17a0] sm:$0xf]
        %v1765 = vld [vmem:[%s230 + $0x17a4] sm:$0xf]
        %v1766 = vld [vmem:[%s230 + $0x17a8] sm:$0xf]
        %v1767 = vld [vmem:[%s230 + $0x17ac] sm:$0xf]
        %v1768 = vld [vmem:[%s230 + $0x17b0] sm:$0xf]
        %v1769 = vld [vmem:[%s230 + $0x17b4] sm:$0xf]
        %v1770 = vld [vmem:[%s230 + $0x17b8] sm:$0xf]
        %v1771 = vld [vmem:[%s230 + $0x17bc] sm:$0xf]
        %v1772 = vld [vmem:[%s230 + $0x17c0] sm:$0xf]
        %v1773 = vld [vmem:[%s230 + $0x17c4] sm:$0xf]
        %v1774 = vld [vmem:[%s230 + $0x17c8] sm:$0xf]
        %v1775 = vld [vmem:[%s230 + $0x17cc] sm:$0xf]
        %v1776 = vld [vmem:[%s230 + $0x17d0] sm:$0xf]
        %v1777 = vld [vmem:[%s230 + $0x17d4] sm:$0xf]
        %v1778 = vld [vmem:[%s230 + $0x17d8] sm:$0xf]
        %v1779 = vld [vmem:[%s230 + $0x17dc] sm:$0xf]
        %v1780 = vld [vmem:[%s230 + $0x17e0] sm:$0xf]
        %v1781 = vld [vmem:[%s230 + $0x17e4] sm:$0xf]
        %v1782 = vld [vmem:[%s230 + $0x17e8] sm:$0xf]
        %v1783 = vld [vmem:[%s230 + $0x17ec] sm:$0xf]
        %v1784 = vld [vmem:[%s230 + $0x17f0] sm:$0xf]
        %v1785 = vld [vmem:[%s230 + $0x17f4] sm:$0xf]
        %v1786 = vld [vmem:[%s230 + $0x17f8] sm:$0xf]
        %v1787 = vld [vmem:[%s230 + $0x17fc] sm:$0xf]
        %v1788 = vld [vmem:[%s230 + $0x1800] sm:$0xf]
        %v1789 = vld [vmem:[%s230 + $0x1804] sm:$0xf]
        %v1790 = vld [vmem:[%s230 + $0x1808] sm:$0xf]
        %v1791 = vld [vmem:[%s230 + $0x180c] sm:$0xf]
        %v1792 = vld [vmem:[%s230 + $0x1810] sm:$0xf]
        %v1793 = vld [vmem:[%s230 + $0x1814] sm:$0xf]
        %v1794 = vld [vmem:[%s230 + $0x1818] sm:$0xf]
        %v1795 = vld [vmem:[%s230 + $0x181c] sm:$0xf]
        %v1796 = vld [vmem:[%s230 + $0x1820] sm:$0xf]
        %v1797 = vld [vmem:[%s230 + $0x1824] sm:$0xf]
        %v1798 = vld [vmem:[%s230 + $0x1828] sm:$0xf]
        %v1799 = vld [vmem:[%s230 + $0x182c] sm:$0xf]
        %v1800 = vld [vmem:[%s230 + $0x1830] sm:$0xf]
        %v1801 = vld [vmem:[%s230 + $0x1834] sm:$0xf]
        %v1802 = vld [vmem:[%s230 + $0x1838] sm:$0xf]
        %v1803 = vld [vmem:[%s230 + $0x183c] sm:$0xf]
        %v1804 = vld [vmem:[%s230 + $0x1840] sm:$0xf]
        %v1805 = vld [vmem:[%s230 + $0x1844] sm:$0xf]
        %v1806 = vld [vmem:[%s230 + $0x1848] sm:$0xf]
        %v1807 = vld [vmem:[%s230 + $0x184c] sm:$0xf]
        %v1808 = vld [vmem:[%s230 + $0x1850] sm:$0xf]
        %v1809 = vld [vmem:[%s230 + $0x1854] sm:$0xf]
        %v1810 = vld [vmem:[%s230 + $0x1858] sm:$0xf]
        %v1811 = vld [vmem:[%s230 + $0x185c] sm:$0xf]
        %v1812 = vld [vmem:[%s230 + $0x1860] sm:$0xf]
        %v1813 = vld [vmem:[%s230 + $0x1864] sm:$0xf]
        %v1814 = vld [vmem:[%s230 + $0x1868] sm:$0xf]
        %v1815 = vld [vmem:[%s230 + $0x186c] sm:$0xf]
        %v1816 = vld [vmem:[%s230 + $0x1870] sm:$0xf]
        %v1817 = vld [vmem:[%s230 + $0x1874] sm:$0xf]
        %v1818 = vld [vmem:[%s230 + $0x1878] sm:$0xf]
        %v1819 = vld [vmem:[%s230 + $0x187c] sm:$0xf]
        %v1833 = vcombine.high %v239, %v239
        %v1835 = vunpack.c.l.s4 1966171168
        %v1836 = vunpack.c.0.s8 %v1835
        %v1837 = vlaneseq
        %v1838 = vshrl.u32 %v1837, 7
        %v1839 = vsub.s32 %v1836, %v1838
        %v1840 = vrot.slane %v239, %v1839
        %v1842 = vunpack.c.l.s4 1966171168
        %v1843 = vunpack.c.0.s8 %v1842
        %v1844 = vlaneseq
        %v1845 = vshrl.u32 %v1844, 7
        %v1846 = vsub.s32 %v1843, %v1845
        %v1847 = vrot.slane %v1833, %v1846
        %v1848 = vcombine.high %v1840, %v1840
        %v1849 = vcombine.high %v1847, %v1847
        %v1851 = vunpack.c.l.s4 1966171168
        %v1852 = vunpack.c.0.s8 %v1851
        %v1853 = vlaneseq
        %v1854 = vshrl.u32 %v1853, 7
        %v1855 = vsub.s32 %v1852, %v1854
        %v1856 = vrot.slane %v1840, %v1855
        %v1858 = vunpack.c.l.s4 1966171168
        %v1859 = vunpack.c.0.s8 %v1858
        %v1860 = vlaneseq
        %v1861 = vshrl.u32 %v1860, 7
        %v1862 = vsub.s32 %v1859, %v1861
        %v1863 = vrot.slane %v1847, %v1862
        %v1865 = vunpack.c.l.s4 1966171168
        %v1866 = vunpack.c.0.s8 %v1865
        %v1867 = vlaneseq
        %v1868 = vshrl.u32 %v1867, 7
        %v1869 = vsub.s32 %v1866, %v1868
        %v1870 = vrot.slane %v1848, %v1869
        %v1872 = vunpack.c.l.s4 1966171168
        %v1873 = vunpack.c.0.s8 %v1872
        %v1874 = vlaneseq
        %v1875 = vshrl.u32 %v1874, 7
        %v1876 = vsub.s32 %v1873, %v1875
        %v1877 = vrot.slane %v1849, %v1876
        %v1878 = vcombine.high %v1856, %v1856
        %v1879 = vcombine.high %v1863, %v1863
        %v1880 = vcombine.high %v1870, %v1870
        %v1881 = vcombine.high %v1877, %v1877
        %v1882 = vcombine.high %v240, %v240
        %v1884 = vunpack.c.l.s4 1966171168
        %v1885 = vunpack.c.0.s8 %v1884
        %v1886 = vlaneseq
        %v1887 = vshrl.u32 %v1886, 7
        %v1888 = vsub.s32 %v1885, %v1887
        %v1889 = vrot.slane %v240, %v1888
        %v1891 = vunpack.c.l.s4 1966171168
        %v1892 = vunpack.c.0.s8 %v1891
        %v1893 = vlaneseq
        %v1894 = vshrl.u32 %v1893, 7
        %v1895 = vsub.s32 %v1892, %v1894
        %v1896 = vrot.slane %v1882, %v1895
        %v1897 = vcombine.high %v1889, %v1889
        %v1898 = vcombine.high %v1896, %v1896
        %v1900 = vunpack.c.l.s4 1966171168
        %v1901 = vunpack.c.0.s8 %v1900
        %v1902 = vlaneseq
        %v1903 = vshrl.u32 %v1902, 7
        %v1904 = vsub.s32 %v1901, %v1903
        %v1905 = vrot.slane %v1889, %v1904
        %v1907 = vunpack.c.l.s4 1966171168
        %v1908 = vunpack.c.0.s8 %v1907
        %v1909 = vlaneseq
        %v1910 = vshrl.u32 %v1909, 7
        %v1911 = vsub.s32 %v1908, %v1910
        %v1912 = vrot.slane %v1896, %v1911
        %v1914 = vunpack.c.l.s4 1966171168
        %v1915 = vunpack.c.0.s8 %v1914
        %v1916 = vlaneseq
        %v1917 = vshrl.u32 %v1916, 7
        %v1918 = vsub.s32 %v1915, %v1917
        %v1919 = vrot.slane %v1897, %v1918
        %v1921 = vunpack.c.l.s4 1966171168
        %v1922 = vunpack.c.0.s8 %v1921
        %v1923 = vlaneseq
        %v1924 = vshrl.u32 %v1923, 7
        %v1925 = vsub.s32 %v1922, %v1924
        %v1926 = vrot.slane %v1898, %v1925
        %v1927 = vcombine.high %v1905, %v1905
        %v1928 = vcombine.high %v1912, %v1912
        %v1929 = vcombine.high %v1919, %v1919
        %v1930 = vcombine.high %v1926, %v1926
        %v1931 = vcombine.high %v241, %v241
        %v1933 = vunpack.c.l.s4 1966171168
        %v1934 = vunpack.c.0.s8 %v1933
        %v1935 = vlaneseq
        %v1936 = vshrl.u32 %v1935, 7
        %v1937 = vsub.s32 %v1934, %v1936
        %v1938 = vrot.slane %v241, %v1937
        %v1940 = vunpack.c.l.s4 1966171168
        %v1941 = vunpack.c.0.s8 %v1940
        %v1942 = vlaneseq
        %v1943 = vshrl.u32 %v1942, 7
        %v1944 = vsub.s32 %v1941, %v1943
        %v1945 = vrot.slane %v1931, %v1944
        %v1946 = vcombine.high %v1938, %v1938
        %v1947 = vcombine.high %v1945, %v1945
        %v1949 = vunpack.c.l.s4 1966171168
        %v1950 = vunpack.c.0.s8 %v1949
        %v1951 = vlaneseq
        %v1952 = vshrl.u32 %v1951, 7
        %v1953 = vsub.s32 %v1950, %v1952
        %v1954 = vrot.slane %v1938, %v1953
        %v1956 = vunpack.c.l.s4 1966171168
        %v1957 = vunpack.c.0.s8 %v1956
        %v1958 = vlaneseq
        %v1959 = vshrl.u32 %v1958, 7
        %v1960 = vsub.s32 %v1957, %v1959
        %v1961 = vrot.slane %v1945, %v1960
        %v1963 = vunpack.c.l.s4 1966171168
        %v1964 = vunpack.c.0.s8 %v1963
        %v1965 = vlaneseq
        %v1966 = vshrl.u32 %v1965, 7
        %v1967 = vsub.s32 %v1964, %v1966
        %v1968 = vrot.slane %v1946, %v1967
        %v1970 = vunpack.c.l.s4 1966171168
        %v1971 = vunpack.c.0.s8 %v1970
        %v1972 = vlaneseq
        %v1973 = vshrl.u32 %v1972, 7
        %v1974 = vsub.s32 %v1971, %v1973
        %v1975 = vrot.slane %v1947, %v1974
        %v1976 = vcombine.high %v1954, %v1954
        %v1977 = vcombine.high %v1961, %v1961
        %v1978 = vcombine.high %v1968, %v1968
        %v1979 = vcombine.high %v1975, %v1975
        %v1980 = vcombine.high %v242, %v242
        %v1982 = vunpack.c.l.s4 1966171168
        %v1983 = vunpack.c.0.s8 %v1982
        %v1984 = vlaneseq
        %v1985 = vshrl.u32 %v1984, 7
        %v1986 = vsub.s32 %v1983, %v1985
        %v1987 = vrot.slane %v242, %v1986
        %v1989 = vunpack.c.l.s4 1966171168
        %v1990 = vunpack.c.0.s8 %v1989
        %v1991 = vlaneseq
        %v1992 = vshrl.u32 %v1991, 7
        %v1993 = vsub.s32 %v1990, %v1992
        %v1994 = vrot.slane %v1980, %v1993
        %v1995 = vcombine.high %v1987, %v1987
        %v1996 = vcombine.high %v1994, %v1994
        %v1998 = vunpack.c.l.s4 1966171168
        %v1999 = vunpack.c.0.s8 %v1998
        %v2000 = vlaneseq
        %v2001 = vshrl.u32 %v2000, 7
        %v2002 = vsub.s32 %v1999, %v2001
        %v2003 = vrot.slane %v1987, %v2002
        %v2005 = vunpack.c.l.s4 1966171168
        %v2006 = vunpack.c.0.s8 %v2005
        %v2007 = vlaneseq
        %v2008 = vshrl.u32 %v2007, 7
        %v2009 = vsub.s32 %v2006, %v2008
        %v2010 = vrot.slane %v1994, %v2009
        %v2012 = vunpack.c.l.s4 1966171168
        %v2013 = vunpack.c.0.s8 %v2012
        %v2014 = vlaneseq
        %v2015 = vshrl.u32 %v2014, 7
        %v2016 = vsub.s32 %v2013, %v2015
        %v2017 = vrot.slane %v1995, %v2016
        %v2019 = vunpack.c.l.s4 1966171168
        %v2020 = vunpack.c.0.s8 %v2019
        %v2021 = vlaneseq
        %v2022 = vshrl.u32 %v2021, 7
        %v2023 = vsub.s32 %v2020, %v2022
        %v2024 = vrot.slane %v1996, %v2023
        %v2025 = vcombine.high %v2003, %v2003
        %v2026 = vcombine.high %v2010, %v2010
        %v2027 = vcombine.high %v2017, %v2017
        %v2028 = vcombine.high %v2024, %v2024
        %v2029 = vcombine.high %v243, %v243
        %v2031 = vunpack.c.l.s4 1966171168
        %v2032 = vunpack.c.0.s8 %v2031
        %v2033 = vlaneseq
        %v2034 = vshrl.u32 %v2033, 7
        %v2035 = vsub.s32 %v2032, %v2034
        %v2036 = vrot.slane %v243, %v2035
        %v2038 = vunpack.c.l.s4 1966171168
        %v2039 = vunpack.c.0.s8 %v2038
        %v2040 = vlaneseq
        %v2041 = vshrl.u32 %v2040, 7
        %v2042 = vsub.s32 %v2039, %v2041
        %v2043 = vrot.slane %v2029, %v2042
        %v2044 = vcombine.high %v2036, %v2036
        %v2045 = vcombine.high %v2043, %v2043
        %v2047 = vunpack.c.l.s4 1966171168
        %v2048 = vunpack.c.0.s8 %v2047
        %v2049 = vlaneseq
        %v2050 = vshrl.u32 %v2049, 7
        %v2051 = vsub.s32 %v2048, %v2050
        %v2052 = vrot.slane %v2036, %v2051
        %v2054 = vunpack.c.l.s4 1966171168
        %v2055 = vunpack.c.0.s8 %v2054
        %v2056 = vlaneseq
        %v2057 = vshrl.u32 %v2056, 7
        %v2058 = vsub.s32 %v2055, %v2057
        %v2059 = vrot.slane %v2043, %v2058
        %v2061 = vunpack.c.l.s4 1966171168
        %v2062 = vunpack.c.0.s8 %v2061
        %v2063 = vlaneseq
        %v2064 = vshrl.u32 %v2063, 7
        %v2065 = vsub.s32 %v2062, %v2064
        %v2066 = vrot.slane %v2044, %v2065
        %v2068 = vunpack.c.l.s4 1966171168
        %v2069 = vunpack.c.0.s8 %v2068
        %v2070 = vlaneseq
        %v2071 = vshrl.u32 %v2070, 7
        %v2072 = vsub.s32 %v2069, %v2071
        %v2073 = vrot.slane %v2045, %v2072
        %v2074 = vcombine.high %v2052, %v2052
        %v2075 = vcombine.high %v2059, %v2059
        %v2076 = vcombine.high %v2066, %v2066
        %v2077 = vcombine.high %v2073, %v2073
        %v2078 = vcombine.high %v244, %v244
        %v2080 = vunpack.c.l.s4 1966171168
        %v2081 = vunpack.c.0.s8 %v2080
        %v2082 = vlaneseq
        %v2083 = vshrl.u32 %v2082, 7
        %v2084 = vsub.s32 %v2081, %v2083
        %v2085 = vrot.slane %v244, %v2084
        %v2087 = vunpack.c.l.s4 1966171168
        %v2088 = vunpack.c.0.s8 %v2087
        %v2089 = vlaneseq
        %v2090 = vshrl.u32 %v2089, 7
        %v2091 = vsub.s32 %v2088, %v2090
        %v2092 = vrot.slane %v2078, %v2091
        %v2093 = vcombine.high %v2085, %v2085
        %v2094 = vcombine.high %v2092, %v2092
        %v2096 = vunpack.c.l.s4 1966171168
        %v2097 = vunpack.c.0.s8 %v2096
        %v2098 = vlaneseq
        %v2099 = vshrl.u32 %v2098, 7
        %v2100 = vsub.s32 %v2097, %v2099
        %v2101 = vrot.slane %v2085, %v2100
        %v2103 = vunpack.c.l.s4 1966171168
        %v2104 = vunpack.c.0.s8 %v2103
        %v2105 = vlaneseq
        %v2106 = vshrl.u32 %v2105, 7
        %v2107 = vsub.s32 %v2104, %v2106
        %v2108 = vrot.slane %v2092, %v2107
        %v2110 = vunpack.c.l.s4 1966171168
        %v2111 = vunpack.c.0.s8 %v2110
        %v2112 = vlaneseq
        %v2113 = vshrl.u32 %v2112, 7
        %v2114 = vsub.s32 %v2111, %v2113
        %v2115 = vrot.slane %v2093, %v2114
        %v2117 = vunpack.c.l.s4 1966171168
        %v2118 = vunpack.c.0.s8 %v2117
        %v2119 = vlaneseq
        %v2120 = vshrl.u32 %v2119, 7
        %v2121 = vsub.s32 %v2118, %v2120
        %v2122 = vrot.slane %v2094, %v2121
        %v2123 = vcombine.high %v2101, %v2101
        %v2124 = vcombine.high %v2108, %v2108
        %v2125 = vcombine.high %v2115, %v2115
        %v2126 = vcombine.high %v2122, %v2122
        %v2127 = vcombine.high %v245, %v245
        %v2129 = vunpack.c.l.s4 1966171168
        %v2130 = vunpack.c.0.s8 %v2129
        %v2131 = vlaneseq
        %v2132 = vshrl.u32 %v2131, 7
        %v2133 = vsub.s32 %v2130, %v2132
        %v2134 = vrot.slane %v245, %v2133
        %v2136 = vunpack.c.l.s4 1966171168
        %v2137 = vunpack.c.0.s8 %v2136
        %v2138 = vlaneseq
        %v2139 = vshrl.u32 %v2138, 7
        %v2140 = vsub.s32 %v2137, %v2139
        %v2141 = vrot.slane %v2127, %v2140
        %v2142 = vcombine.high %v2134, %v2134
        %v2143 = vcombine.high %v2141, %v2141
        %v2145 = vunpack.c.l.s4 1966171168
        %v2146 = vunpack.c.0.s8 %v2145
        %v2147 = vlaneseq
        %v2148 = vshrl.u32 %v2147, 7
        %v2149 = vsub.s32 %v2146, %v2148
        %v2150 = vrot.slane %v2134, %v2149
        %v2152 = vunpack.c.l.s4 1966171168
        %v2153 = vunpack.c.0.s8 %v2152
        %v2154 = vlaneseq
        %v2155 = vshrl.u32 %v2154, 7
        %v2156 = vsub.s32 %v2153, %v2155
        %v2157 = vrot.slane %v2141, %v2156
        %v2159 = vunpack.c.l.s4 1966171168
        %v2160 = vunpack.c.0.s8 %v2159
        %v2161 = vlaneseq
        %v2162 = vshrl.u32 %v2161, 7
        %v2163 = vsub.s32 %v2160, %v2162
        %v2164 = vrot.slane %v2142, %v2163
        %v2166 = vunpack.c.l.s4 1966171168
        %v2167 = vunpack.c.0.s8 %v2166
        %v2168 = vlaneseq
        %v2169 = vshrl.u32 %v2168, 7
        %v2170 = vsub.s32 %v2167, %v2169
        %v2171 = vrot.slane %v2143, %v2170
        %v2172 = vcombine.high %v2150, %v2150
        %v2173 = vcombine.high %v2157, %v2157
        %v2174 = vcombine.high %v2164, %v2164
        %v2175 = vcombine.high %v2171, %v2171
        %v2176 = vcombine.high %v246, %v246
        %v2178 = vunpack.c.l.s4 1966171168
        %v2179 = vunpack.c.0.s8 %v2178
        %v2180 = vlaneseq
        %v2181 = vshrl.u32 %v2180, 7
        %v2182 = vsub.s32 %v2179, %v2181
        %v2183 = vrot.slane %v246, %v2182
        %v2185 = vunpack.c.l.s4 1966171168
        %v2186 = vunpack.c.0.s8 %v2185
        %v2187 = vlaneseq
        %v2188 = vshrl.u32 %v2187, 7
        %v2189 = vsub.s32 %v2186, %v2188
        %v2190 = vrot.slane %v2176, %v2189
        %v2191 = vcombine.high %v2183, %v2183
        %v2192 = vcombine.high %v2190, %v2190
        %v2194 = vunpack.c.l.s4 1966171168
        %v2195 = vunpack.c.0.s8 %v2194
        %v2196 = vlaneseq
        %v2197 = vshrl.u32 %v2196, 7
        %v2198 = vsub.s32 %v2195, %v2197
        %v2199 = vrot.slane %v2183, %v2198
        %v2201 = vunpack.c.l.s4 1966171168
        %v2202 = vunpack.c.0.s8 %v2201
        %v2203 = vlaneseq
        %v2204 = vshrl.u32 %v2203, 7
        %v2205 = vsub.s32 %v2202, %v2204
        %v2206 = vrot.slane %v2190, %v2205
        %v2208 = vunpack.c.l.s4 1966171168
        %v2209 = vunpack.c.0.s8 %v2208
        %v2210 = vlaneseq
        %v2211 = vshrl.u32 %v2210, 7
        %v2212 = vsub.s32 %v2209, %v2211
        %v2213 = vrot.slane %v2191, %v2212
        %v2215 = vunpack.c.l.s4 1966171168
        %v2216 = vunpack.c.0.s8 %v2215
        %v2217 = vlaneseq
        %v2218 = vshrl.u32 %v2217, 7
        %v2219 = vsub.s32 %v2216, %v2218
        %v2220 = vrot.slane %v2192, %v2219
        %v2221 = vcombine.high %v2199, %v2199
        %v2222 = vcombine.high %v2206, %v2206
        %v2223 = vcombine.high %v2213, %v2213
        %v2224 = vcombine.high %v2220, %v2220
        %v2225 = vcombine.high %v247, %v247
        %v2227 = vunpack.c.l.s4 1966171168
        %v2228 = vunpack.c.0.s8 %v2227
        %v2229 = vlaneseq
        %v2230 = vshrl.u32 %v2229, 7
        %v2231 = vsub.s32 %v2228, %v2230
        %v2232 = vrot.slane %v247, %v2231
        %v2234 = vunpack.c.l.s4 1966171168
        %v2235 = vunpack.c.0.s8 %v2234
        %v2236 = vlaneseq
        %v2237 = vshrl.u32 %v2236, 7
        %v2238 = vsub.s32 %v2235, %v2237
        %v2239 = vrot.slane %v2225, %v2238
        %v2240 = vcombine.high %v2232, %v2232
        %v2241 = vcombine.high %v2239, %v2239
        %v2243 = vunpack.c.l.s4 1966171168
        %v2244 = vunpack.c.0.s8 %v2243
        %v2245 = vlaneseq
        %v2246 = vshrl.u32 %v2245, 7
        %v2247 = vsub.s32 %v2244, %v2246
        %v2248 = vrot.slane %v2232, %v2247
        %v2250 = vunpack.c.l.s4 1966171168
        %v2251 = vunpack.c.0.s8 %v2250
        %v2252 = vlaneseq
        %v2253 = vshrl.u32 %v2252, 7
        %v2254 = vsub.s32 %v2251, %v2253
        %v2255 = vrot.slane %v2239, %v2254
        %v2257 = vunpack.c.l.s4 1966171168
        %v2258 = vunpack.c.0.s8 %v2257
        %v2259 = vlaneseq
        %v2260 = vshrl.u32 %v2259, 7
        %v2261 = vsub.s32 %v2258, %v2260
        %v2262 = vrot.slane %v2240, %v2261
        %v2264 = vunpack.c.l.s4 1966171168
        %v2265 = vunpack.c.0.s8 %v2264
        %v2266 = vlaneseq
        %v2267 = vshrl.u32 %v2266, 7
        %v2268 = vsub.s32 %v2265, %v2267
        %v2269 = vrot.slane %v2241, %v2268
        %v2270 = vcombine.high %v2248, %v2248
        %v2271 = vcombine.high %v2255, %v2255
        %v2272 = vcombine.high %v2262, %v2262
        %v2273 = vcombine.high %v2269, %v2269
        %v2274 = vcombine.high %v248, %v248
        %v2276 = vunpack.c.l.s4 1966171168
        %v2277 = vunpack.c.0.s8 %v2276
        %v2278 = vlaneseq
        %v2279 = vshrl.u32 %v2278, 7
        %v2280 = vsub.s32 %v2277, %v2279
        %v2281 = vrot.slane %v248, %v2280
        %v2283 = vunpack.c.l.s4 1966171168
        %v2284 = vunpack.c.0.s8 %v2283
        %v2285 = vlaneseq
        %v2286 = vshrl.u32 %v2285, 7
        %v2287 = vsub.s32 %v2284, %v2286
        %v2288 = vrot.slane %v2274, %v2287
        %v2289 = vcombine.high %v2281, %v2281
        %v2290 = vcombine.high %v2288, %v2288
        %v2292 = vunpack.c.l.s4 1966171168
        %v2293 = vunpack.c.0.s8 %v2292
        %v2294 = vlaneseq
        %v2295 = vshrl.u32 %v2294, 7
        %v2296 = vsub.s32 %v2293, %v2295
        %v2297 = vrot.slane %v2281, %v2296
        %v2299 = vunpack.c.l.s4 1966171168
        %v2300 = vunpack.c.0.s8 %v2299
        %v2301 = vlaneseq
        %v2302 = vshrl.u32 %v2301, 7
        %v2303 = vsub.s32 %v2300, %v2302
        %v2304 = vrot.slane %v2288, %v2303
        %v2306 = vunpack.c.l.s4 1966171168
        %v2307 = vunpack.c.0.s8 %v2306
        %v2308 = vlaneseq
        %v2309 = vshrl.u32 %v2308, 7
        %v2310 = vsub.s32 %v2307, %v2309
        %v2311 = vrot.slane %v2289, %v2310
        %v2313 = vunpack.c.l.s4 1966171168
        %v2314 = vunpack.c.0.s8 %v2313
        %v2315 = vlaneseq
        %v2316 = vshrl.u32 %v2315, 7
        %v2317 = vsub.s32 %v2314, %v2316
        %v2318 = vrot.slane %v2290, %v2317
        %v2319 = vcombine.high %v2297, %v2297
        %v2320 = vcombine.high %v2304, %v2304
        %v2321 = vcombine.high %v2311, %v2311
        %v2322 = vcombine.high %v2318, %v2318
        %v2323 = vcombine.high %v249, %v249
        %v2325 = vunpack.c.l.s4 1966171168
        %v2326 = vunpack.c.0.s8 %v2325
        %v2327 = vlaneseq
        %v2328 = vshrl.u32 %v2327, 7
        %v2329 = vsub.s32 %v2326, %v2328
        %v2330 = vrot.slane %v249, %v2329
        %v2332 = vunpack.c.l.s4 1966171168
        %v2333 = vunpack.c.0.s8 %v2332
        %v2334 = vlaneseq
        %v2335 = vshrl.u32 %v2334, 7
        %v2336 = vsub.s32 %v2333, %v2335
        %v2337 = vrot.slane %v2323, %v2336
        %v2338 = vcombine.high %v2330, %v2330
        %v2339 = vcombine.high %v2337, %v2337
        %v2341 = vunpack.c.l.s4 1966171168
        %v2342 = vunpack.c.0.s8 %v2341
        %v2343 = vlaneseq
        %v2344 = vshrl.u32 %v2343, 7
        %v2345 = vsub.s32 %v2342, %v2344
        %v2346 = vrot.slane %v2330, %v2345
        %v2348 = vunpack.c.l.s4 1966171168
        %v2349 = vunpack.c.0.s8 %v2348
        %v2350 = vlaneseq
        %v2351 = vshrl.u32 %v2350, 7
        %v2352 = vsub.s32 %v2349, %v2351
        %v2353 = vrot.slane %v2337, %v2352
        %v2355 = vunpack.c.l.s4 1966171168
        %v2356 = vunpack.c.0.s8 %v2355
        %v2357 = vlaneseq
        %v2358 = vshrl.u32 %v2357, 7
        %v2359 = vsub.s32 %v2356, %v2358
        %v2360 = vrot.slane %v2338, %v2359
        %v2362 = vunpack.c.l.s4 1966171168
        %v2363 = vunpack.c.0.s8 %v2362
        %v2364 = vlaneseq
        %v2365 = vshrl.u32 %v2364, 7
        %v2366 = vsub.s32 %v2363, %v2365
        %v2367 = vrot.slane %v2339, %v2366
        %v2368 = vcombine.high %v2346, %v2346
        %v2369 = vcombine.high %v2353, %v2353
        %v2370 = vcombine.high %v2360, %v2360
        %v2371 = vcombine.high %v2367, %v2367
        %v2372 = vcombine.high %v250, %v250
        %v2374 = vunpack.c.l.s4 1966171168
        %v2375 = vunpack.c.0.s8 %v2374
        %v2376 = vlaneseq
        %v2377 = vshrl.u32 %v2376, 7
        %v2378 = vsub.s32 %v2375, %v2377
        %v2379 = vrot.slane %v250, %v2378
        %v2381 = vunpack.c.l.s4 1966171168
        %v2382 = vunpack.c.0.s8 %v2381
        %v2383 = vlaneseq
        %v2384 = vshrl.u32 %v2383, 7
        %v2385 = vsub.s32 %v2382, %v2384
        %v2386 = vrot.slane %v2372, %v2385
        %v2387 = vcombine.high %v2379, %v2379
        %v2388 = vcombine.high %v2386, %v2386
        %v2390 = vunpack.c.l.s4 1966171168
        %v2391 = vunpack.c.0.s8 %v2390
        %v2392 = vlaneseq
        %v2393 = vshrl.u32 %v2392, 7
        %v2394 = vsub.s32 %v2391, %v2393
        %v2395 = vrot.slane %v2379, %v2394
        %v2397 = vunpack.c.l.s4 1966171168
        %v2398 = vunpack.c.0.s8 %v2397
        %v2399 = vlaneseq
        %v2400 = vshrl.u32 %v2399, 7
        %v2401 = vsub.s32 %v2398, %v2400
        %v2402 = vrot.slane %v2386, %v2401
        %v2404 = vunpack.c.l.s4 1966171168
        %v2405 = vunpack.c.0.s8 %v2404
        %v2406 = vlaneseq
        %v2407 = vshrl.u32 %v2406, 7
        %v2408 = vsub.s32 %v2405, %v2407
        %v2409 = vrot.slane %v2387, %v2408
        %v2411 = vunpack.c.l.s4 1966171168
        %v2412 = vunpack.c.0.s8 %v2411
        %v2413 = vlaneseq
        %v2414 = vshrl.u32 %v2413, 7
        %v2415 = vsub.s32 %v2412, %v2414
        %v2416 = vrot.slane %v2388, %v2415
        %v2417 = vcombine.high %v2395, %v2395
        %v2418 = vcombine.high %v2402, %v2402
        %v2419 = vcombine.high %v2409, %v2409
        %v2420 = vcombine.high %v2416, %v2416
        %v2422 = vunpack.c.l.s4 1966171168
        %v2423 = vunpack.c.0.s8 %v2422
        %v2424 = vlaneseq
        %v2425 = vshrl.u32 %v2424, 7
        %v2426 = vsub.s32 %v2423, %v2425
        %v2427 = vrot.slane %v251, %v2426
        %v2428 = vcombine.high %v2427, %v2427
        %v2430 = vunpack.c.l.s4 1966171168
        %v2431 = vunpack.c.0.s8 %v2430
        %v2432 = vlaneseq
        %v2433 = vshrl.u32 %v2432, 7
        %v2434 = vsub.s32 %v2431, %v2433
        %v2435 = vrot.slane %v2427, %v2434
        %v2437 = vunpack.c.l.s4 1966171168
        %v2438 = vunpack.c.0.s8 %v2437
        %v2439 = vlaneseq
        %v2440 = vshrl.u32 %v2439, 7
        %v2441 = vsub.s32 %v2438, %v2440
        %v2442 = vrot.slane %v2428, %v2441
        %v4109 = vunpack.c.l.b16 %v252
        %v4110 = vunpack.c.l.b16 %v253
        %v4111 = vunpack.c.l.b16 %v254
        %v4112 = vunpack.c.l.b16 %v255
        %v4113 = vunpack.c.l.b16 %v256
        %v4114 = vunpack.c.l.b16 %v257
        %v4115 = vunpack.c.l.b16 %v258
        %v4116 = vunpack.c.l.b16 %v259
        %v4117 = vunpack.c.l.b16 %v260
        %v4118 = vunpack.c.l.b16 %v261
        %v4119 = vunpack.c.l.b16 %v262
        %v4120 = vunpack.c.l.b16 %v263
        %v4121 = vunpack.c.l.b16 %v264
        %v4122 = vunpack.c.l.b16 %v265
        %v4123 = vunpack.c.l.b16 %v266
        %v4124 = vunpack.c.l.b16 %v267
        %v4125 = vunpack.c.l.b16 %v268
        %v4126 = vunpack.c.l.b16 %v269
        %v4127 = vunpack.c.l.b16 %v270
        %v4128 = vunpack.c.l.b16 %v271
        %v4129 = vunpack.c.l.b16 %v272
        %v4130 = vunpack.c.l.b16 %v273
        %v4131 = vunpack.c.l.b16 %v274
        %v4132 = vunpack.c.l.b16 %v275
        %v4133 = vunpack.c.l.b16 %v276
        %v4134 = vunpack.c.l.b16 %v277
        %v4135 = vunpack.c.l.b16 %v278
        %v4136 = vunpack.c.l.b16 %v279
        %v4137 = vunpack.c.l.b16 %v280
        %v4138 = vunpack.c.l.b16 %v281
        %v4139 = vunpack.c.l.b16 %v282
        %v4140 = vunpack.c.l.b16 %v283
        %v4141 = vunpack.c.l.b16 %v284
        %v4142 = vunpack.c.l.b16 %v285
        %v4143 = vunpack.c.l.b16 %v286
        %v4144 = vunpack.c.l.b16 %v287
        %v4145 = vunpack.c.l.b16 %v288
        %v4146 = vunpack.c.l.b16 %v289
        %v4147 = vunpack.c.l.b16 %v290
        %v4148 = vunpack.c.l.b16 %v291
        %v4149 = vunpack.c.l.b16 %v292
        %v4150 = vunpack.c.l.b16 %v293
        %v4151 = vunpack.c.l.b16 %v294
        %v4152 = vunpack.c.l.b16 %v295
        %v4153 = vunpack.c.l.b16 %v296
        %v4154 = vunpack.c.l.b16 %v297
        %v4155 = vunpack.c.l.b16 %v298
        %v4156 = vunpack.c.l.b16 %v299
        %v4157 = vunpack.c.l.b16 %v300
        %v4158 = vunpack.c.l.b16 %v301
        %v4159 = vunpack.c.l.b16 %v302
        %v4160 = vunpack.c.l.b16 %v303
        %v4161 = vunpack.c.l.b16 %v304
        %v4162 = vunpack.c.l.b16 %v305
        %v4163 = vunpack.c.l.b16 %v306
        %v4164 = vunpack.c.l.b16 %v307
        %v4165 = vunpack.c.l.b16 %v308
        %v4166 = vunpack.c.l.b16 %v309
        %v4167 = vunpack.c.l.b16 %v310
        %v4168 = vunpack.c.l.b16 %v311
        %v4169 = vunpack.c.l.b16 %v312
        %v4170 = vunpack.c.l.b16 %v313
        %v4171 = vunpack.c.l.b16 %v314
        %v4172 = vunpack.c.l.b16 %v315
        %v4173 = vunpack.c.l.b16 %v316
        %v4174 = vunpack.c.l.b16 %v317
        %v4175 = vunpack.c.l.b16 %v318
        %v4176 = vunpack.c.l.b16 %v319
        %v4177 = vunpack.c.l.b16 %v320
        %v4178 = vunpack.c.l.b16 %v321
        %v4179 = vunpack.c.l.b16 %v322
        %v4180 = vunpack.c.l.b16 %v323
        %v4181 = vunpack.c.l.b16 %v324
        %v4182 = vunpack.c.l.b16 %v325
        %v4183 = vunpack.c.l.b16 %v326
        %v4184 = vunpack.c.l.b16 %v327
        %v4185 = vunpack.c.l.b16 %v328
        %v4186 = vunpack.c.l.b16 %v329
        %v4187 = vunpack.c.l.b16 %v330
        %v4188 = vunpack.c.l.b16 %v331
        %v4189 = vunpack.c.l.b16 %v332
        %v4190 = vunpack.c.l.b16 %v333
        %v4191 = vunpack.c.l.b16 %v334
        %v4192 = vunpack.c.l.b16 %v335
        %v4193 = vunpack.c.l.b16 %v336
        %v4194 = vunpack.c.l.b16 %v337
        %v4195 = vunpack.c.l.b16 %v338
        %v4196 = vunpack.c.l.b16 %v339
        %v4197 = vunpack.c.l.b16 %v340
        %v4198 = vunpack.c.l.b16 %v341
        %v4199 = vunpack.c.l.b16 %v342
        %v4200 = vunpack.c.l.b16 %v343
        %v4201 = vunpack.c.l.b16 %v344
        %v4202 = vunpack.c.l.b16 %v345
        %v4203 = vunpack.c.l.b16 %v346
        %v4204 = vunpack.c.l.b16 %v347
        %v4205 = vunpack.c.l.b16 %v348
        %v4206 = vunpack.c.l.b16 %v349
        %v4207 = vunpack.c.l.b16 %v350
        %v4208 = vunpack.c.l.b16 %v351
        %v4209 = vunpack.c.l.b16 %v352
        %v4210 = vunpack.c.l.b16 %v353
        %v4211 = vunpack.c.l.b16 %v354
        %v4212 = vunpack.c.l.b16 %v355
        %v4213 = vunpack.c.l.b16 %v356
        %v4214 = vunpack.c.l.b16 %v357
        %v4215 = vunpack.c.l.b16 %v358
        %v4216 = vunpack.c.l.b16 %v359
        %v4217 = vunpack.c.l.b16 %v360
        %v4218 = vunpack.c.l.b16 %v361
        %v4219 = vunpack.c.l.b16 %v362
        %v4220 = vunpack.c.l.b16 %v363
        %v4221 = vunpack.c.l.b16 %v364
        %v4222 = vunpack.c.l.b16 %v365
        %v4223 = vunpack.c.l.b16 %v366
        %v4224 = vunpack.c.l.b16 %v367
        %v4225 = vunpack.c.l.b16 %v368
        %v4226 = vunpack.c.l.b16 %v369
        %v4227 = vunpack.c.l.b16 %v370
        %v4228 = vunpack.c.l.b16 %v371
        %v4229 = vunpack.c.l.b16 %v372
        %v4230 = vunpack.c.l.b16 %v373
        %v4231 = vunpack.c.l.b16 %v374
        %v4232 = vunpack.c.l.b16 %v375
        %v4233 = vunpack.c.l.b16 %v376
        %v4234 = vunpack.c.l.b16 %v377
        %v4235 = vunpack.c.l.b16 %v378
        %v4236 = vunpack.c.l.b16 %v379
        %v4237 = vunpack.c.l.b16 %v380
        %v4238 = vunpack.c.l.b16 %v381
        %v4239 = vunpack.c.l.b16 %v382
        %v4240 = vunpack.c.l.b16 %v383
        %v4241 = vunpack.c.l.b16 %v384
        %v4242 = vunpack.c.l.b16 %v385
        %v4243 = vunpack.c.l.b16 %v386
        %v4244 = vunpack.c.l.b16 %v387
        %v4245 = vunpack.c.l.b16 %v388
        %v4246 = vunpack.c.l.b16 %v389
        %v4247 = vunpack.c.l.b16 %v390
        %v4248 = vunpack.c.l.b16 %v391
        %v4249 = vunpack.c.l.b16 %v392
        %v4250 = vunpack.c.l.b16 %v393
        %v4251 = vunpack.c.l.b16 %v394
        %v4252 = vunpack.c.l.b16 %v395
        %v4253 = vunpack.c.l.b16 %v396
        %v4254 = vunpack.c.l.b16 %v397
        %v4255 = vunpack.c.l.b16 %v398
        %v4256 = vunpack.c.l.b16 %v399
        %v4257 = vunpack.c.l.b16 %v400
        %v4258 = vunpack.c.l.b16 %v401
        %v4259 = vunpack.c.l.b16 %v402
        %v4260 = vunpack.c.l.b16 %v403
        %v4261 = vunpack.c.l.b16 %v404
        %v4262 = vunpack.c.l.b16 %v405
        %v4263 = vunpack.c.l.b16 %v406
        %v4264 = vunpack.c.l.b16 %v407
        %v4265 = vunpack.c.l.b16 %v408
        %v4266 = vunpack.c.l.b16 %v409
        %v4267 = vunpack.c.l.b16 %v410
        %v4268 = vunpack.c.l.b16 %v411
        %v4269 = vunpack.c.l.b16 %v412
        %v4270 = vunpack.c.l.b16 %v413
        %v4271 = vunpack.c.l.b16 %v414
        %v4272 = vunpack.c.l.b16 %v415
        %v4273 = vunpack.c.l.b16 %v416
        %v4274 = vunpack.c.l.b16 %v417
        %v4275 = vunpack.c.l.b16 %v418
        %v4276 = vunpack.c.l.b16 %v419
        %v4277 = vunpack.c.l.b16 %v420
        %v4278 = vunpack.c.l.b16 %v421
        %v4279 = vunpack.c.l.b16 %v422
        %v4280 = vunpack.c.l.b16 %v423
        %v4281 = vunpack.c.l.b16 %v424
        %v4282 = vunpack.c.l.b16 %v425
        %v4283 = vunpack.c.l.b16 %v426
        %v4284 = vunpack.c.l.b16 %v427
        %v4285 = vunpack.c.l.b16 %v428
        %v4286 = vunpack.c.l.b16 %v429
        %v4287 = vunpack.c.l.b16 %v430
        %v4288 = vunpack.c.l.b16 %v431
        %v4289 = vunpack.c.l.b16 %v432
        %v4290 = vunpack.c.l.b16 %v433
        %v4291 = vunpack.c.l.b16 %v434
        %v4292 = vunpack.c.l.b16 %v435
        %v4293 = vunpack.c.l.b16 %v436
        %v4294 = vunpack.c.l.b16 %v437
        %v4295 = vunpack.c.l.b16 %v438
        %v4296 = vunpack.c.l.b16 %v439
        %v4297 = vunpack.c.l.b16 %v440
        %v4298 = vunpack.c.l.b16 %v441
        %v4299 = vunpack.c.l.b16 %v442
        %v4300 = vunpack.c.l.b16 %v443
        %v4301 = vunpack.c.l.b16 %v444
        %v4302 = vunpack.c.l.b16 %v445
        %v4303 = vunpack.c.l.b16 %v446
        %v4304 = vunpack.c.l.b16 %v447
        %v4305 = vunpack.c.l.b16 %v448
        %v4306 = vunpack.c.l.b16 %v449
        %v4307 = vunpack.c.l.b16 %v450
        %v4308 = vunpack.c.l.b16 %v451
        %v4309 = vunpack.c.l.b16 %v452
        %v4310 = vunpack.c.l.b16 %v453
        %v4311 = vunpack.c.l.b16 %v454
        %v4312 = vunpack.c.l.b16 %v455
        %v4313 = vunpack.c.l.b16 %v456
        %v4314 = vunpack.c.l.b16 %v457
        %v4315 = vunpack.c.l.b16 %v458
        %v4316 = vunpack.c.l.b16 %v459
        %v4317 = vunpack.c.l.b16 %v460
        %v4318 = vunpack.c.l.b16 %v461
        %v4319 = vunpack.c.l.b16 %v462
        %v4320 = vunpack.c.l.b16 %v463
        %v4321 = vunpack.c.l.b16 %v464
        %v4322 = vunpack.c.l.b16 %v465
        %v4323 = vunpack.c.l.b16 %v466
        %v4324 = vunpack.c.l.b16 %v467
        %v4325 = vunpack.c.l.b16 %v468
        %v4326 = vunpack.c.l.b16 %v469
        %v4327 = vunpack.c.l.b16 %v470
        %v4328 = vunpack.c.l.b16 %v471
        %v4329 = vunpack.c.l.b16 %v472
        %v4330 = vunpack.c.l.b16 %v473
        %v4331 = vunpack.c.l.b16 %v474
        %v4332 = vunpack.c.l.b16 %v475
        %v4333 = vunpack.c.l.b16 %v476
        %v4334 = vunpack.c.l.b16 %v477
        %v4335 = vunpack.c.l.b16 %v478
        %v4336 = vunpack.c.l.b16 %v479
        %v4337 = vunpack.c.l.b16 %v480
        %v4338 = vunpack.c.l.b16 %v481
        %v4339 = vunpack.c.l.b16 %v482
        %v4340 = vunpack.c.l.b16 %v483
        %v4341 = vunpack.c.l.b16 %v484
        %v4342 = vunpack.c.l.b16 %v485
        %v4343 = vunpack.c.l.b16 %v486
        %v4344 = vunpack.c.l.b16 %v487
        %v4345 = vunpack.c.l.b16 %v488
        %v4346 = vunpack.c.l.b16 %v489
        %v4347 = vunpack.c.l.b16 %v490
        %v4348 = vunpack.c.l.b16 %v491
        %v4349 = vunpack.c.l.b16 %v492
        %v4350 = vunpack.c.l.b16 %v493
        %v4351 = vunpack.c.l.b16 %v494
        %v4352 = vunpack.c.l.b16 %v495
        %v4353 = vunpack.c.l.b16 %v496
        %v4354 = vunpack.c.l.b16 %v497
        %v4355 = vunpack.c.l.b16 %v498
        %v4356 = vunpack.c.l.b16 %v499
        %v4357 = vunpack.c.l.b16 %v500
        %v4358 = vunpack.c.l.b16 %v501
        %v4359 = vunpack.c.l.b16 %v502
        %v4360 = vunpack.c.l.b16 %v503
        %v4361 = vunpack.c.l.b16 %v504
        %v4362 = vunpack.c.l.b16 %v505
        %v4363 = vunpack.c.l.b16 %v506
        %v4364 = vunpack.c.l.b16 %v507
        %v4365 = vunpack.c.l.b16 %v508
        %v4366 = vunpack.c.l.b16 %v509
        %v4367 = vunpack.c.l.b16 %v510
        %v4368 = vunpack.c.l.b16 %v511
        %v4369 = vunpack.c.l.b16 %v512
        %v4370 = vunpack.c.l.b16 %v513
        %v4371 = vunpack.c.l.b16 %v514
        %v4372 = vunpack.c.l.b16 %v515
        %v4373 = vunpack.c.l.b16 %v516
        %v4374 = vunpack.c.l.b16 %v517
        %v4375 = vunpack.c.l.b16 %v518
        %v4376 = vunpack.c.l.b16 %v519
        %v4377 = vunpack.c.l.b16 %v520
        %v4378 = vunpack.c.l.b16 %v521
        %v4379 = vunpack.c.l.b16 %v522
        %v4380 = vunpack.c.l.b16 %v523
        %v4381 = vunpack.c.l.b16 %v524
        %v4382 = vunpack.c.l.b16 %v525
        %v4383 = vunpack.c.l.b16 %v526
        %v4384 = vunpack.c.l.b16 %v527
        %v4385 = vunpack.c.l.b16 %v528
        %v4386 = vunpack.c.l.b16 %v529
        %v4387 = vunpack.c.l.b16 %v530
        %v4388 = vunpack.c.l.b16 %v531
        %v4389 = vunpack.c.l.b16 %v532
        %v4390 = vunpack.c.l.b16 %v533
        %v4391 = vunpack.c.l.b16 %v534
        %v4392 = vunpack.c.l.b16 %v535
        %v4393 = vunpack.c.l.b16 %v536
        %v4394 = vunpack.c.l.b16 %v537
        %v4395 = vunpack.c.l.b16 %v538
        %v4396 = vunpack.c.l.b16 %v539
        %v4397 = vunpack.c.l.b16 %v540
        %v4398 = vunpack.c.l.b16 %v541
        %v4399 = vunpack.c.l.b16 %v542
        %v4400 = vunpack.c.l.b16 %v543
        %v4401 = vunpack.c.l.b16 %v544
        %v4402 = vunpack.c.l.b16 %v545
        %v4403 = vunpack.c.l.b16 %v546
        %v4404 = vunpack.c.l.b16 %v547
        %v4405 = vunpack.c.l.b16 %v548
        %v4406 = vunpack.c.l.b16 %v549
        %v4407 = vunpack.c.l.b16 %v550
        %v4408 = vunpack.c.l.b16 %v551
        %v4409 = vunpack.c.l.b16 %v552
        %v4410 = vunpack.c.l.b16 %v553
        %v4411 = vunpack.c.l.b16 %v554
        %v4412 = vunpack.c.l.b16 %v555
        %v4413 = vunpack.c.l.b16 %v556
        %v4414 = vunpack.c.l.b16 %v557
        %v4415 = vunpack.c.l.b16 %v558
        %v4416 = vunpack.c.l.b16 %v559
        %v4417 = vunpack.c.l.b16 %v560
        %v4418 = vunpack.c.l.b16 %v561
        %v4419 = vunpack.c.l.b16 %v562
        %v4420 = vunpack.c.l.b16 %v563
        %v4421 = vunpack.c.l.b16 %v564
        %v4422 = vunpack.c.l.b16 %v565
        %v4423 = vunpack.c.l.b16 %v566
        %v4424 = vunpack.c.l.b16 %v567
        %v4425 = vunpack.c.l.b16 %v568
        %v4426 = vunpack.c.l.b16 %v569
        %v4427 = vunpack.c.l.b16 %v570
        %v4428 = vunpack.c.l.b16 %v571
        %v4429 = vunpack.c.l.b16 %v572
        %v4430 = vunpack.c.l.b16 %v573
        %v4431 = vunpack.c.l.b16 %v574
        %v4432 = vunpack.c.l.b16 %v575
        %v4433 = vunpack.c.l.b16 %v576
        %v4434 = vunpack.c.l.b16 %v577
        %v4435 = vunpack.c.l.b16 %v578
        %v4436 = vunpack.c.l.b16 %v579
        %v4437 = vunpack.c.l.b16 %v580
        %v4438 = vunpack.c.l.b16 %v581
        %v4439 = vunpack.c.l.b16 %v582
        %v4440 = vunpack.c.l.b16 %v583
        %v4441 = vunpack.c.l.b16 %v584
        %v4442 = vunpack.c.l.b16 %v585
        %v4443 = vunpack.c.l.b16 %v586
        %v4444 = vunpack.c.l.b16 %v587
        %v4445 = vunpack.c.l.b16 %v588
        %v4446 = vunpack.c.l.b16 %v589
        %v4447 = vunpack.c.l.b16 %v590
        %v4448 = vunpack.c.l.b16 %v591
        %v4449 = vunpack.c.l.b16 %v592
        %v4450 = vunpack.c.l.b16 %v593
        %v4451 = vunpack.c.l.b16 %v594
        %v4452 = vunpack.c.l.b16 %v595
        %v4453 = vunpack.c.l.b16 %v596
        %v4454 = vunpack.c.l.b16 %v597
        %v4455 = vunpack.c.l.b16 %v598
        %v4456 = vunpack.c.l.b16 %v599
        %v4457 = vunpack.c.l.b16 %v600
        %v4458 = vunpack.c.l.b16 %v601
        %v4459 = vunpack.c.l.b16 %v602
        %v4460 = vunpack.c.l.b16 %v603
        %v4461 = vunpack.c.l.b16 %v604
        %v4462 = vunpack.c.l.b16 %v605
        %v4463 = vunpack.c.l.b16 %v606
        %v4464 = vunpack.c.l.b16 %v607
        %v4465 = vunpack.c.l.b16 %v608
        %v4466 = vunpack.c.l.b16 %v609
        %v4467 = vunpack.c.l.b16 %v610
        %v4468 = vunpack.c.l.b16 %v611
        %v4469 = vunpack.c.l.b16 %v612
        %v4470 = vunpack.c.l.b16 %v613
        %v4471 = vunpack.c.l.b16 %v614
        %v4472 = vunpack.c.l.b16 %v615
        %v4473 = vunpack.c.l.b16 %v616
        %v4474 = vunpack.c.l.b16 %v617
        %v4475 = vunpack.c.l.b16 %v618
        %v4476 = vunpack.c.l.b16 %v619
        %v4477 = vunpack.c.l.b16 %v620
        %v4478 = vunpack.c.l.b16 %v621
        %v4479 = vunpack.c.l.b16 %v622
        %v4480 = vunpack.c.l.b16 %v623
        %v4481 = vunpack.c.l.b16 %v624
        %v4482 = vunpack.c.l.b16 %v625
        %v4483 = vunpack.c.l.b16 %v626
        %v4484 = vunpack.c.l.b16 %v627
        %v4485 = vunpack.c.l.b16 %v628
        %v4486 = vunpack.c.l.b16 %v629
        %v4487 = vunpack.c.l.b16 %v630
        %v4488 = vunpack.c.l.b16 %v631
        %v4489 = vunpack.c.l.b16 %v632
        %v4490 = vunpack.c.l.b16 %v633
        %v4491 = vunpack.c.l.b16 %v634
        %v4492 = vunpack.c.l.b16 %v635
        %v4493 = vunpack.c.l.b16 %v636
        %v4494 = vunpack.c.l.b16 %v637
        %v4495 = vunpack.c.l.b16 %v638
        %v4496 = vunpack.c.l.b16 %v639
        %v4497 = vunpack.c.l.b16 %v640
        %v4498 = vunpack.c.l.b16 %v641
        %v4499 = vunpack.c.l.b16 %v642
        %v4500 = vunpack.c.l.b16 %v643
        %v4501 = vunpack.c.l.b16 %v644
        %v4502 = vunpack.c.l.b16 %v645
        %v4503 = vunpack.c.l.b16 %v646
        %v4504 = vunpack.c.l.b16 %v647
        %v4505 = vunpack.c.l.b16 %v648
        %v4506 = vunpack.c.l.b16 %v649
        %v4507 = vunpack.c.l.b16 %v650
        %v4508 = vunpack.c.l.b16 %v651
        %v4509 = vunpack.c.l.b16 %v652
        %v4510 = vunpack.c.l.b16 %v653
        %v4511 = vunpack.c.l.b16 %v654
        %v4512 = vunpack.c.l.b16 %v655
        %v4513 = vunpack.c.l.b16 %v656
        %v4514 = vunpack.c.l.b16 %v657
        %v4515 = vunpack.c.l.b16 %v658
        %v4516 = vunpack.c.l.b16 %v659
        %v4517 = vunpack.c.l.b16 %v660
        %v4518 = vunpack.c.l.b16 %v661
        %v4519 = vunpack.c.l.b16 %v662
        %v4520 = vunpack.c.l.b16 %v663
        %v4521 = vunpack.c.l.b16 %v664
        %v4522 = vunpack.c.l.b16 %v665
        %v4523 = vunpack.c.l.b16 %v666
        %v4524 = vunpack.c.l.b16 %v667
        %v4525 = vunpack.c.l.b16 %v668
        %v4526 = vunpack.c.l.b16 %v669
        %v4527 = vunpack.c.l.b16 %v670
        %v4528 = vunpack.c.l.b16 %v671
        %v4529 = vunpack.c.l.b16 %v672
        %v4530 = vunpack.c.l.b16 %v673
        %v4531 = vunpack.c.l.b16 %v674
        %v4532 = vunpack.c.l.b16 %v675
        %v4533 = vunpack.c.l.b16 %v676
        %v4534 = vunpack.c.l.b16 %v677
        %v4535 = vunpack.c.l.b16 %v678
        %v4536 = vunpack.c.l.b16 %v679
        %v4537 = vunpack.c.l.b16 %v680
        %v4538 = vunpack.c.l.b16 %v681
        %v4539 = vunpack.c.l.b16 %v682
        %v4540 = vunpack.c.l.b16 %v683
        %v4541 = vunpack.c.l.b16 %v684
        %v4542 = vunpack.c.l.b16 %v685
        %v4543 = vunpack.c.l.b16 %v686
        %v4544 = vunpack.c.l.b16 %v687
        %v4545 = vunpack.c.l.b16 %v688
        %v4546 = vunpack.c.l.b16 %v689
        %v4547 = vunpack.c.l.b16 %v690
        %v4548 = vunpack.c.l.b16 %v691
        %v4549 = vunpack.c.l.b16 %v692
        %v4550 = vunpack.c.l.b16 %v693
        %v4551 = vunpack.c.l.b16 %v694
        %v4552 = vunpack.c.l.b16 %v695
        %v4553 = vunpack.c.l.b16 %v696
        %v4554 = vunpack.c.l.b16 %v697
        %v4555 = vunpack.c.l.b16 %v698
        %v4556 = vunpack.c.l.b16 %v699
        %v4557 = vunpack.c.l.b16 %v700
        %v4558 = vunpack.c.l.b16 %v701
        %v4559 = vunpack.c.l.b16 %v702
        %v4560 = vunpack.c.l.b16 %v703
        %v4561 = vunpack.c.l.b16 %v704
        %v4562 = vunpack.c.l.b16 %v705
        %v4563 = vunpack.c.l.b16 %v706
        %v4564 = vunpack.c.l.b16 %v707
        %v4565 = vunpack.c.l.b16 %v708
        %v4566 = vunpack.c.l.b16 %v709
        %v4567 = vunpack.c.l.b16 %v710
        %v4568 = vunpack.c.l.b16 %v711
        %v4569 = vunpack.c.l.b16 %v712
        %v4570 = vunpack.c.l.b16 %v713
        %v4571 = vunpack.c.l.b16 %v714
        %v4572 = vunpack.c.l.b16 %v715
        %v4573 = vunpack.c.l.b16 %v716
        %v4574 = vunpack.c.l.b16 %v717
        %v4575 = vunpack.c.l.b16 %v718
        %v4576 = vunpack.c.l.b16 %v719
        %v4577 = vunpack.c.l.b16 %v720
        %v4578 = vunpack.c.l.b16 %v721
        %v4579 = vunpack.c.l.b16 %v722
        %v4580 = vunpack.c.l.b16 %v723
        %v4581 = vunpack.c.l.b16 %v724
        %v4582 = vunpack.c.l.b16 %v725
        %v4583 = vunpack.c.l.b16 %v726
        %v4584 = vunpack.c.l.b16 %v727
        %v4585 = vunpack.c.l.b16 %v728
        %v4586 = vunpack.c.l.b16 %v729
        %v4587 = vunpack.c.l.b16 %v730
        %v4588 = vunpack.c.l.b16 %v731
        %v4589 = vunpack.c.l.b16 %v732
        %v4590 = vunpack.c.l.b16 %v733
        %v4591 = vunpack.c.l.b16 %v734
        %v4592 = vunpack.c.l.b16 %v735
        %v4593 = vunpack.c.l.b16 %v736
        %v4594 = vunpack.c.l.b16 %v737
        %v4595 = vunpack.c.l.b16 %v738
        %v4596 = vunpack.c.l.b16 %v739
        %v4597 = vunpack.c.l.b16 %v740
        %v4598 = vunpack.c.l.b16 %v741
        %v4599 = vunpack.c.l.b16 %v742
        %v4600 = vunpack.c.l.b16 %v743
        %v4601 = vunpack.c.l.b16 %v744
        %v4602 = vunpack.c.l.b16 %v745
        %v4603 = vunpack.c.l.b16 %v746
        %v4604 = vunpack.c.l.b16 %v747
        %v4605 = vunpack.c.l.b16 %v748
        %v4606 = vunpack.c.l.b16 %v749
        %v4607 = vunpack.c.l.b16 %v750
        %v4608 = vunpack.c.l.b16 %v751
        %v4609 = vunpack.c.l.b16 %v752
        %v4610 = vunpack.c.l.b16 %v753
        %v4611 = vunpack.c.l.b16 %v754
        %v4612 = vunpack.c.l.b16 %v755
        %v4613 = vunpack.c.l.b16 %v756
        %v4614 = vunpack.c.l.b16 %v757
        %v4615 = vunpack.c.l.b16 %v758
        %v4616 = vunpack.c.l.b16 %v759
        %v4617 = vunpack.c.l.b16 %v760
        %v4618 = vunpack.c.l.b16 %v761
        %v4619 = vunpack.c.l.b16 %v762
        %v4620 = vunpack.c.l.b16 %v763
        %v4621 = vunpack.c.l.b16 %v764
        %v4622 = vunpack.c.l.b16 %v765
        %v4623 = vunpack.c.l.b16 %v766
        %v4624 = vunpack.c.l.b16 %v767
        %v4625 = vunpack.c.l.b16 %v768
        %v4626 = vunpack.c.l.b16 %v769
        %v4627 = vunpack.c.l.b16 %v770
        %v4628 = vunpack.c.l.b16 %v771
        %v4629 = vunpack.c.l.b16 %v772
        %v4630 = vunpack.c.l.b16 %v773
        %v4631 = vunpack.c.l.b16 %v774
        %v4632 = vunpack.c.l.b16 %v775
        %v4633 = vunpack.c.l.b16 %v776
        %v4634 = vunpack.c.l.b16 %v777
        %v4635 = vunpack.c.l.b16 %v778
        %v4636 = vunpack.c.l.b16 %v779
        %v4637 = vunpack.c.l.b16 %v780
        %v4638 = vunpack.c.l.b16 %v781
        %v4639 = vunpack.c.l.b16 %v782
        %v4640 = vunpack.c.l.b16 %v783
        %v4641 = vunpack.c.l.b16 %v784
        %v4642 = vunpack.c.l.b16 %v785
        %v4643 = vunpack.c.l.b16 %v786
        %v4644 = vunpack.c.l.b16 %v787
        %v4645 = vunpack.c.l.b16 %v788
        %v4646 = vunpack.c.l.b16 %v789
        %v4647 = vunpack.c.l.b16 %v790
        %v4648 = vunpack.c.l.b16 %v791
        %v4649 = vunpack.c.l.b16 %v792
        %v4650 = vunpack.c.l.b16 %v793
        %v4651 = vunpack.c.l.b16 %v794
        %v4652 = vunpack.c.l.b16 %v795
        %v4653 = vunpack.c.l.b16 %v796
        %v4654 = vunpack.c.l.b16 %v797
        %v4655 = vunpack.c.l.b16 %v798
        %v4656 = vunpack.c.l.b16 %v799
        %v4657 = vunpack.c.l.b16 %v800
        %v4658 = vunpack.c.l.b16 %v801
        %v4659 = vunpack.c.l.b16 %v802
        %v4660 = vunpack.c.l.b16 %v803
        %v4661 = vunpack.c.l.b16 %v804
        %v4662 = vunpack.c.l.b16 %v805
        %v4663 = vunpack.c.l.b16 %v806
        %v4664 = vunpack.c.l.b16 %v807
        %v4665 = vunpack.c.l.b16 %v808
        %v4666 = vunpack.c.l.b16 %v809
        %v4667 = vunpack.c.l.b16 %v810
        %v4668 = vunpack.c.l.b16 %v811
        %v4669 = vunpack.c.l.b16 %v812
        %v4670 = vunpack.c.l.b16 %v813
        %v4671 = vunpack.c.l.b16 %v814
        %v4672 = vunpack.c.l.b16 %v815
        %v4673 = vunpack.c.l.b16 %v816
        %v4674 = vunpack.c.l.b16 %v817
        %v4675 = vunpack.c.l.b16 %v818
        %v4676 = vunpack.c.l.b16 %v819
        %v4677 = vunpack.c.l.b16 %v820
        %v4678 = vunpack.c.l.b16 %v821
        %v4679 = vunpack.c.l.b16 %v822
        %v4680 = vunpack.c.l.b16 %v823
        %v4681 = vunpack.c.l.b16 %v824
        %v4682 = vunpack.c.l.b16 %v825
        %v4683 = vunpack.c.l.b16 %v826
        %v4684 = vunpack.c.l.b16 %v827
        %v4685 = vunpack.c.l.b16 %v828
        %v4686 = vunpack.c.l.b16 %v829
        %v4687 = vunpack.c.l.b16 %v830
        %v4688 = vunpack.c.l.b16 %v831
        %v4689 = vunpack.c.l.b16 %v832
        %v4690 = vunpack.c.l.b16 %v833
        %v4691 = vunpack.c.l.b16 %v834
        %v4692 = vunpack.c.l.b16 %v835
        %v4693 = vunpack.c.l.b16 %v836
        %v4694 = vunpack.c.l.b16 %v837
        %v4695 = vunpack.c.l.b16 %v838
        %v4696 = vunpack.c.l.b16 %v839
        %v4697 = vunpack.c.l.b16 %v840
        %v4698 = vunpack.c.l.b16 %v841
        %v4699 = vunpack.c.l.b16 %v842
        %v4700 = vunpack.c.l.b16 %v843
        %v4701 = vunpack.c.l.b16 %v844
        %v4702 = vunpack.c.l.b16 %v845
        %v4703 = vunpack.c.l.b16 %v846
        %v4704 = vunpack.c.l.b16 %v847
        %v4705 = vunpack.c.l.b16 %v848
        %v4706 = vunpack.c.l.b16 %v849
        %v4707 = vunpack.c.l.b16 %v850
        %v4708 = vunpack.c.l.b16 %v851
        %v4709 = vunpack.c.l.b16 %v852
        %v4710 = vunpack.c.l.b16 %v853
        %v4711 = vunpack.c.l.b16 %v854
        %v4712 = vunpack.c.l.b16 %v855
        %v4713 = vunpack.c.l.b16 %v856
        %v4714 = vunpack.c.l.b16 %v857
        %v4715 = vunpack.c.l.b16 %v858
        %v4716 = vunpack.c.l.b16 %v859
        %v4717 = vunpack.c.l.b16 %v860
        %v4718 = vunpack.c.l.b16 %v861
        %v4719 = vunpack.c.l.b16 %v862
        %v4720 = vunpack.c.l.b16 %v863
        %v4721 = vunpack.c.l.b16 %v864
        %v4722 = vunpack.c.l.b16 %v865
        %v4723 = vunpack.c.l.b16 %v866
        %v4724 = vunpack.c.l.b16 %v867
        %v4725 = vunpack.c.l.b16 %v868
        %v4726 = vunpack.c.l.b16 %v869
        %v4727 = vunpack.c.l.b16 %v870
        %v4728 = vunpack.c.l.b16 %v871
        %v4729 = vunpack.c.l.b16 %v872
        %v4730 = vunpack.c.l.b16 %v873
        %v4731 = vunpack.c.l.b16 %v874
        %v4732 = vunpack.c.l.b16 %v875
        %v4733 = vunpack.c.l.b16 %v876
        %v4734 = vunpack.c.l.b16 %v877
        %v4735 = vunpack.c.l.b16 %v878
        %v4736 = vunpack.c.l.b16 %v879
        %v4737 = vunpack.c.l.b16 %v880
        %v4738 = vunpack.c.l.b16 %v881
        %v4739 = vunpack.c.l.b16 %v882
        %v4740 = vunpack.c.l.b16 %v883
        %v4741 = vunpack.c.l.b16 %v884
        %v4742 = vunpack.c.l.b16 %v885
        %v4743 = vunpack.c.l.b16 %v886
        %v4744 = vunpack.c.l.b16 %v887
        %v4745 = vunpack.c.l.b16 %v888
        %v4746 = vunpack.c.l.b16 %v889
        %v4747 = vunpack.c.l.b16 %v890
        %v4748 = vunpack.c.l.b16 %v891
        %v4749 = vunpack.c.l.b16 %v892
        %v4750 = vunpack.c.l.b16 %v893
        %v4751 = vunpack.c.l.b16 %v894
        %v4752 = vunpack.c.l.b16 %v895
        %v4753 = vunpack.c.l.b16 %v896
        %v4754 = vunpack.c.l.b16 %v897
        %v4755 = vunpack.c.l.b16 %v898
        %v4756 = vunpack.c.l.b16 %v899
        %v4757 = vunpack.c.l.b16 %v900
        %v4758 = vunpack.c.l.b16 %v901
        %v4759 = vunpack.c.l.b16 %v902
        %v4760 = vunpack.c.l.b16 %v903
        %v4761 = vunpack.c.l.b16 %v904
        %v4762 = vunpack.c.l.b16 %v905
        %v4763 = vunpack.c.l.b16 %v906
        %v4764 = vunpack.c.l.b16 %v907
        %v4765 = vunpack.c.l.b16 %v908
        %v4766 = vunpack.c.l.b16 %v909
        %v4767 = vunpack.c.l.b16 %v910
        %v4768 = vunpack.c.l.b16 %v911
        %v4769 = vunpack.c.l.b16 %v912
        %v4770 = vunpack.c.l.b16 %v913
        %v4771 = vunpack.c.l.b16 %v914
        %v4772 = vunpack.c.l.b16 %v915
        %v4773 = vunpack.c.l.b16 %v916
        %v4774 = vunpack.c.l.b16 %v917
        %v4775 = vunpack.c.l.b16 %v918
        %v4776 = vunpack.c.l.b16 %v919
        %v4777 = vunpack.c.l.b16 %v920
        %v4778 = vunpack.c.l.b16 %v921
        %v4779 = vunpack.c.l.b16 %v922
        %v4780 = vunpack.c.l.b16 %v923
        %v4781 = vunpack.c.l.b16 %v924
        %v4782 = vunpack.c.l.b16 %v925
        %v4783 = vunpack.c.l.b16 %v926
        %v4784 = vunpack.c.l.b16 %v927
        %v4785 = vunpack.c.l.b16 %v928
        %v4786 = vunpack.c.l.b16 %v929
        %v4787 = vunpack.c.l.b16 %v930
        %v4788 = vunpack.c.l.b16 %v931
        %v4789 = vunpack.c.l.b16 %v932
        %v4790 = vunpack.c.l.b16 %v933
        %v4791 = vunpack.c.l.b16 %v934
        %v4792 = vunpack.c.l.b16 %v935
        %v4793 = vunpack.c.l.b16 %v936
        %v4794 = vunpack.c.l.b16 %v937
        %v4795 = vunpack.c.l.b16 %v938
        %v4796 = vunpack.c.l.b16 %v939
        %v4797 = vunpack.c.l.b16 %v940
        %v4798 = vunpack.c.l.b16 %v941
        %v4799 = vunpack.c.l.b16 %v942
        %v4800 = vunpack.c.l.b16 %v943
        %v4801 = vunpack.c.l.b16 %v944
        %v4802 = vunpack.c.l.b16 %v945
        %v4803 = vunpack.c.l.b16 %v946
        %v4804 = vunpack.c.l.b16 %v947
        %v4805 = vunpack.c.l.b16 %v948
        %v4806 = vunpack.c.l.b16 %v949
        %v4807 = vunpack.c.l.b16 %v950
        %v4808 = vunpack.c.l.b16 %v951
        %v4809 = vunpack.c.l.b16 %v952
        %v4810 = vunpack.c.l.b16 %v953
        %v4811 = vunpack.c.l.b16 %v954
        %v4812 = vunpack.c.l.b16 %v955
        %v4813 = vunpack.c.l.b16 %v956
        %v4814 = vunpack.c.l.b16 %v957
        %v4815 = vunpack.c.l.b16 %v958
        %v4816 = vunpack.c.l.b16 %v959
        %v4817 = vunpack.c.l.b16 %v960
        %v4818 = vunpack.c.l.b16 %v961
        %v4819 = vunpack.c.l.b16 %v962
        %v4820 = vunpack.c.l.b16 %v963
        %v4821 = vunpack.c.l.b16 %v964
        %v4822 = vunpack.c.l.b16 %v965
        %v4823 = vunpack.c.l.b16 %v966
        %v4824 = vunpack.c.l.b16 %v967
        %v4825 = vunpack.c.l.b16 %v968
        %v4826 = vunpack.c.l.b16 %v969
        %v4827 = vunpack.c.l.b16 %v970
        %v4828 = vunpack.c.l.b16 %v971
        %v4829 = vunpack.c.l.b16 %v972
        %v4830 = vunpack.c.l.b16 %v973
        %v4831 = vunpack.c.l.b16 %v974
        %v4832 = vunpack.c.l.b16 %v975
        %v4833 = vunpack.c.l.b16 %v976
        %v4834 = vunpack.c.l.b16 %v977
        %v4835 = vunpack.c.l.b16 %v978
        %v4836 = vunpack.c.l.b16 %v979
        %v4837 = vunpack.c.l.b16 %v980
        %v4838 = vunpack.c.l.b16 %v981
        %v4839 = vunpack.c.l.b16 %v982
        %v4840 = vunpack.c.l.b16 %v983
        %v4841 = vunpack.c.l.b16 %v984
        %v4842 = vunpack.c.l.b16 %v985
        %v4843 = vunpack.c.l.b16 %v986
        %v4844 = vunpack.c.l.b16 %v987
        %v4845 = vunpack.c.l.b16 %v988
        %v4846 = vunpack.c.l.b16 %v989
        %v4847 = vunpack.c.l.b16 %v990
        %v4848 = vunpack.c.l.b16 %v991
        %v4849 = vunpack.c.l.b16 %v992
        %v4850 = vunpack.c.l.b16 %v993
        %v4851 = vunpack.c.l.b16 %v994
        %v4852 = vunpack.c.l.b16 %v995
        %v4853 = vunpack.c.l.b16 %v996
        %v4854 = vunpack.c.l.b16 %v997
        %v4855 = vunpack.c.l.b16 %v998
        %v4856 = vunpack.c.l.b16 %v999
        %v4857 = vunpack.c.l.b16 %v1000
        %v4858 = vunpack.c.l.b16 %v1001
        %v4859 = vunpack.c.l.b16 %v1002
        %v4860 = vunpack.c.l.b16 %v1003
        %v4861 = vunpack.c.l.b16 %v1004
        %v4862 = vunpack.c.l.b16 %v1005
        %v4863 = vunpack.c.l.b16 %v1006
        %v4864 = vunpack.c.l.b16 %v1007
        %v4865 = vunpack.c.l.b16 %v1008
        %v4866 = vunpack.c.l.b16 %v1009
        %v4867 = vunpack.c.l.b16 %v1010
        %v4868 = vunpack.c.l.b16 %v1011
        %v4869 = vunpack.c.l.b16 %v1012
        %v4870 = vunpack.c.l.b16 %v1013
        %v4871 = vunpack.c.l.b16 %v1014
        %v4872 = vunpack.c.l.b16 %v1015
        %v4873 = vunpack.c.l.b16 %v1016
        %v4874 = vunpack.c.l.b16 %v1017
        %v4875 = vunpack.c.l.b16 %v1018
        %v4876 = vunpack.c.l.b16 %v1019
        %v4877 = vunpack.c.l.b16 %v1020
        %v4878 = vunpack.c.l.b16 %v1021
        %v4879 = vunpack.c.l.b16 %v1022
        %v4880 = vunpack.c.l.b16 %v1023
        %v4881 = vunpack.c.l.b16 %v1024
        %v4882 = vunpack.c.l.b16 %v1025
        %v4883 = vunpack.c.l.b16 %v1026
        %v4884 = vunpack.c.l.b16 %v1027
        %v4885 = vunpack.c.l.b16 %v1028
        %v4886 = vunpack.c.l.b16 %v1029
        %v4887 = vunpack.c.l.b16 %v1030
        %v4888 = vunpack.c.l.b16 %v1031
        %v4889 = vunpack.c.l.b16 %v1032
        %v4890 = vunpack.c.l.b16 %v1033
        %v4891 = vunpack.c.l.b16 %v1034
        %v4892 = vunpack.c.l.b16 %v1035
        %v4893 = vunpack.c.l.b16 %v1036
        %v4894 = vunpack.c.l.b16 %v1037
        %v4895 = vunpack.c.l.b16 %v1038
        %v4896 = vunpack.c.l.b16 %v1039
        %v4897 = vunpack.c.l.b16 %v1040
        %v4898 = vunpack.c.l.b16 %v1041
        %v4899 = vunpack.c.l.b16 %v1042
        %v4900 = vunpack.c.l.b16 %v1043
        %v4901 = vunpack.c.l.b16 %v1044
        %v4902 = vunpack.c.l.b16 %v1045
        %v4903 = vunpack.c.l.b16 %v1046
        %v4904 = vunpack.c.l.b16 %v1047
        %v4905 = vunpack.c.l.b16 %v1048
        %v4906 = vunpack.c.l.b16 %v1049
        %v4907 = vunpack.c.l.b16 %v1050
        %v4908 = vunpack.c.l.b16 %v1051
        %v4909 = vunpack.c.l.b16 %v1052
        %v4910 = vunpack.c.l.b16 %v1053
        %v4911 = vunpack.c.l.b16 %v1054
        %v4912 = vunpack.c.l.b16 %v1055
        %v4913 = vunpack.c.l.b16 %v1056
        %v4914 = vunpack.c.l.b16 %v1057
        %v4915 = vunpack.c.l.b16 %v1058
        %v4916 = vunpack.c.l.b16 %v1059
        %v4917 = vunpack.c.l.b16 %v1060
        %v4918 = vunpack.c.l.b16 %v1061
        %v4919 = vunpack.c.l.b16 %v1062
        %v4920 = vunpack.c.l.b16 %v1063
        %v4921 = vunpack.c.l.b16 %v1064
        %v4922 = vunpack.c.l.b16 %v1065
        %v4923 = vunpack.c.l.b16 %v1066
        %v4924 = vunpack.c.l.b16 %v1067
        %v4925 = vunpack.c.l.b16 %v1068
        %v4926 = vunpack.c.l.b16 %v1069
        %v4927 = vunpack.c.l.b16 %v1070
        %v4928 = vunpack.c.l.b16 %v1071
        %v4929 = vunpack.c.l.b16 %v1072
        %v4930 = vunpack.c.l.b16 %v1073
        %v4931 = vunpack.c.l.b16 %v1074
        %v4932 = vunpack.c.l.b16 %v1075
        %v4933 = vunpack.c.l.b16 %v1076
        %v4934 = vunpack.c.l.b16 %v1077
        %v4935 = vunpack.c.l.b16 %v1078
        %v4936 = vunpack.c.l.b16 %v1079
        %v4937 = vunpack.c.l.b16 %v1080
        %v4938 = vunpack.c.l.b16 %v1081
        %v4939 = vunpack.c.l.b16 %v1082
        %v4940 = vunpack.c.l.b16 %v1083
        %v4941 = vunpack.c.l.b16 %v1084
        %v4942 = vunpack.c.l.b16 %v1085
        %v4943 = vunpack.c.l.b16 %v1086
        %v4944 = vunpack.c.l.b16 %v1087
        %v4945 = vunpack.c.l.b16 %v1088
        %v4946 = vunpack.c.l.b16 %v1089
        %v4947 = vunpack.c.l.b16 %v1090
        %v4948 = vunpack.c.l.b16 %v1091
        %v4949 = vunpack.c.l.b16 %v1092
        %v4950 = vunpack.c.l.b16 %v1093
        %v4951 = vunpack.c.l.b16 %v1094
        %v4952 = vunpack.c.l.b16 %v1095
        %v4953 = vunpack.c.l.b16 %v1096
        %v4954 = vunpack.c.l.b16 %v1097
        %v4955 = vunpack.c.l.b16 %v1098
        %v4956 = vunpack.c.l.b16 %v1099
        %v4957 = vunpack.c.l.b16 %v1100
        %v4958 = vunpack.c.l.b16 %v1101
        %v4959 = vunpack.c.l.b16 %v1102
        %v4960 = vunpack.c.l.b16 %v1103
        %v4961 = vunpack.c.l.b16 %v1104
        %v4962 = vunpack.c.l.b16 %v1105
        %v4963 = vunpack.c.l.b16 %v1106
        %v4964 = vunpack.c.l.b16 %v1107
        %v4965 = vunpack.c.l.b16 %v1108
        %v4966 = vunpack.c.l.b16 %v1109
        %v4967 = vunpack.c.l.b16 %v1110
        %v4968 = vunpack.c.l.b16 %v1111
        %v4969 = vunpack.c.l.b16 %v1112
        %v4970 = vunpack.c.l.b16 %v1113
        %v4971 = vunpack.c.l.b16 %v1114
        %v4972 = vunpack.c.l.b16 %v1115
        %v4973 = vunpack.c.l.b16 %v1116
        %v4974 = vunpack.c.l.b16 %v1117
        %v4975 = vunpack.c.l.b16 %v1118
        %v4976 = vunpack.c.l.b16 %v1119
        %v4977 = vunpack.c.l.b16 %v1120
        %v4978 = vunpack.c.l.b16 %v1121
        %v4979 = vunpack.c.l.b16 %v1122
        %v4980 = vunpack.c.l.b16 %v1123
        %v4981 = vunpack.c.l.b16 %v1124
        %v4982 = vunpack.c.l.b16 %v1125
        %v4983 = vunpack.c.l.b16 %v1126
        %v4984 = vunpack.c.l.b16 %v1127
        %v4985 = vunpack.c.l.b16 %v1128
        %v4986 = vunpack.c.l.b16 %v1129
        %v4987 = vunpack.c.l.b16 %v1130
        %v4988 = vunpack.c.l.b16 %v1131
        %v4989 = vunpack.c.l.b16 %v1132
        %v4990 = vunpack.c.l.b16 %v1133
        %v4991 = vunpack.c.l.b16 %v1134
        %v4992 = vunpack.c.l.b16 %v1135
        %v4993 = vunpack.c.l.b16 %v1136
        %v4994 = vunpack.c.l.b16 %v1137
        %v4995 = vunpack.c.l.b16 %v1138
        %v4996 = vunpack.c.l.b16 %v1139
        %v4997 = vunpack.c.l.b16 %v1140
        %v4998 = vunpack.c.l.b16 %v1141
        %v4999 = vunpack.c.l.b16 %v1142
        %v5000 = vunpack.c.l.b16 %v1143
        %v5001 = vunpack.c.l.b16 %v1144
        %v5002 = vunpack.c.l.b16 %v1145
        %v5003 = vunpack.c.l.b16 %v1146
        %v5004 = vunpack.c.l.b16 %v1147
        %v5005 = vunpack.c.l.b16 %v1148
        %v5006 = vunpack.c.l.b16 %v1149
        %v5007 = vunpack.c.l.b16 %v1150
        %v5008 = vunpack.c.l.b16 %v1151
        %v5009 = vunpack.c.l.b16 %v1152
        %v5010 = vunpack.c.l.b16 %v1153
        %v5011 = vunpack.c.l.b16 %v1154
        %v5012 = vunpack.c.l.b16 %v1155
        %v5013 = vunpack.c.l.b16 %v1156
        %v5014 = vunpack.c.l.b16 %v1157
        %v5015 = vunpack.c.l.b16 %v1158
        %v5016 = vunpack.c.l.b16 %v1159
        %v5017 = vunpack.c.l.b16 %v1160
        %v5018 = vunpack.c.l.b16 %v1161
        %v5019 = vunpack.c.l.b16 %v1162
        %v5020 = vunpack.c.l.b16 %v1163
        %v5021 = vunpack.c.l.b16 %v1164
        %v5022 = vunpack.c.l.b16 %v1165
        %v5023 = vunpack.c.l.b16 %v1166
        %v5024 = vunpack.c.l.b16 %v1167
        %v5025 = vunpack.c.l.b16 %v1168
        %v5026 = vunpack.c.l.b16 %v1169
        %v5027 = vunpack.c.l.b16 %v1170
        %v5028 = vunpack.c.l.b16 %v1171
        %v5029 = vunpack.c.l.b16 %v1172
        %v5030 = vunpack.c.l.b16 %v1173
        %v5031 = vunpack.c.l.b16 %v1174
        %v5032 = vunpack.c.l.b16 %v1175
        %v5033 = vunpack.c.l.b16 %v1176
        %v5034 = vunpack.c.l.b16 %v1177
        %v5035 = vunpack.c.l.b16 %v1178
        %v5036 = vunpack.c.l.b16 %v1179
        %v5037 = vunpack.c.l.b16 %v1180
        %v5038 = vunpack.c.l.b16 %v1181
        %v5039 = vunpack.c.l.b16 %v1182
        %v5040 = vunpack.c.l.b16 %v1183
        %v5041 = vunpack.c.l.b16 %v1184
        %v5042 = vunpack.c.l.b16 %v1185
        %v5043 = vunpack.c.l.b16 %v1186
        %v5044 = vunpack.c.l.b16 %v1187
        %v5045 = vunpack.c.l.b16 %v1188
        %v5046 = vunpack.c.l.b16 %v1189
        %v5047 = vunpack.c.l.b16 %v1190
        %v5048 = vunpack.c.l.b16 %v1191
        %v5049 = vunpack.c.l.b16 %v1192
        %v5050 = vunpack.c.l.b16 %v1193
        %v5051 = vunpack.c.l.b16 %v1194
        %v5052 = vunpack.c.l.b16 %v1195
        %v5053 = vunpack.c.l.b16 %v1196
        %v5054 = vunpack.c.l.b16 %v1197
        %v5055 = vunpack.c.l.b16 %v1198
        %v5056 = vunpack.c.l.b16 %v1199
        %v5057 = vunpack.c.l.b16 %v1200
        %v5058 = vunpack.c.l.b16 %v1201
        %v5059 = vunpack.c.l.b16 %v1202
        %v5060 = vunpack.c.l.b16 %v1203
        %v5061 = vunpack.c.l.b16 %v1204
        %v5062 = vunpack.c.l.b16 %v1205
        %v5063 = vunpack.c.l.b16 %v1206
        %v5064 = vunpack.c.l.b16 %v1207
        %v5065 = vunpack.c.l.b16 %v1208
        %v5066 = vunpack.c.l.b16 %v1209
        %v5067 = vunpack.c.l.b16 %v1210
        %v5068 = vunpack.c.l.b16 %v1211
        %v5069 = vunpack.c.l.b16 %v1212
        %v5070 = vunpack.c.l.b16 %v1213
        %v5071 = vunpack.c.l.b16 %v1214
        %v5072 = vunpack.c.l.b16 %v1215
        %v5073 = vunpack.c.l.b16 %v1216
        %v5074 = vunpack.c.l.b16 %v1217
        %v5075 = vunpack.c.l.b16 %v1218
        %v5076 = vunpack.c.l.b16 %v1219
        %v5077 = vunpack.c.l.b16 %v1220
        %v5078 = vunpack.c.l.b16 %v1221
        %v5079 = vunpack.c.l.b16 %v1222
        %v5080 = vunpack.c.l.b16 %v1223
        %v5081 = vunpack.c.l.b16 %v1224
        %v5082 = vunpack.c.l.b16 %v1225
        %v5083 = vunpack.c.l.b16 %v1226
        %v5084 = vunpack.c.l.b16 %v1227
        %v5085 = vunpack.c.l.b16 %v1228
        %v5086 = vunpack.c.l.b16 %v1229
        %v5087 = vunpack.c.l.b16 %v1230
        %v5088 = vunpack.c.l.b16 %v1231
        %v5089 = vunpack.c.l.b16 %v1232
        %v5090 = vunpack.c.l.b16 %v1233
        %v5091 = vunpack.c.l.b16 %v1234
        %v5092 = vunpack.c.l.b16 %v1235
        %v5093 = vunpack.c.l.b16 %v1236
        %v5094 = vunpack.c.l.b16 %v1237
        %v5095 = vunpack.c.l.b16 %v1238
        %v5096 = vunpack.c.l.b16 %v1239
        %v5097 = vunpack.c.l.b16 %v1240
        %v5098 = vunpack.c.l.b16 %v1241
        %v5099 = vunpack.c.l.b16 %v1242
        %v5100 = vunpack.c.l.b16 %v1243
        %v5101 = vunpack.c.l.b16 %v1244
        %v5102 = vunpack.c.l.b16 %v1245
        %v5103 = vunpack.c.l.b16 %v1246
        %v5104 = vunpack.c.l.b16 %v1247
        %v5105 = vunpack.c.l.b16 %v1248
        %v5106 = vunpack.c.l.b16 %v1249
        %v5107 = vunpack.c.l.b16 %v1250
        %v5108 = vunpack.c.l.b16 %v1251
        %v5109 = vunpack.c.l.b16 %v1252
        %v5110 = vunpack.c.l.b16 %v1253
        %v5111 = vunpack.c.l.b16 %v1254
        %v5112 = vunpack.c.l.b16 %v1255
        %v5113 = vunpack.c.l.b16 %v1256
        %v5114 = vunpack.c.l.b16 %v1257
        %v5115 = vunpack.c.l.b16 %v1258
        %v5116 = vunpack.c.l.b16 %v1259
        %v5117 = vunpack.c.l.b16 %v1260
        %v5118 = vunpack.c.l.b16 %v1261
        %v5119 = vunpack.c.l.b16 %v1262
        %v5120 = vunpack.c.l.b16 %v1263
        %v5121 = vunpack.c.l.b16 %v1264
        %v5122 = vunpack.c.l.b16 %v1265
        %v5123 = vunpack.c.l.b16 %v1266
        %v5124 = vunpack.c.l.b16 %v1267
        %v5125 = vunpack.c.l.b16 %v1268
        %v5126 = vunpack.c.l.b16 %v1269
        %v5127 = vunpack.c.l.b16 %v1270
        %v5128 = vunpack.c.l.b16 %v1271
        %v5129 = vunpack.c.l.b16 %v1272
        %v5130 = vunpack.c.l.b16 %v1273
        %v5131 = vunpack.c.l.b16 %v1274
        %v5132 = vunpack.c.l.b16 %v1275
        %v5133 = vunpack.c.l.b16 %v1276
        %v5134 = vunpack.c.l.b16 %v1277
        %v5135 = vunpack.c.l.b16 %v1278
        %v5136 = vunpack.c.l.b16 %v1279
        %v5137 = vunpack.c.l.b16 %v1280
        %v5138 = vunpack.c.l.b16 %v1281
        %v5139 = vunpack.c.l.b16 %v1282
        %v5140 = vunpack.c.l.b16 %v1283
        %v5141 = vunpack.c.l.b16 %v1284
        %v5142 = vunpack.c.l.b16 %v1285
        %v5143 = vunpack.c.l.b16 %v1286
        %v5144 = vunpack.c.l.b16 %v1287
        %v5145 = vunpack.c.l.b16 %v1288
        %v5146 = vunpack.c.l.b16 %v1289
        %v5147 = vunpack.c.l.b16 %v1290
        %v5148 = vunpack.c.l.b16 %v1291
        %v5149 = vunpack.c.l.b16 %v1292
        %v5150 = vunpack.c.l.b16 %v1293
        %v5151 = vunpack.c.l.b16 %v1294
        %v5152 = vunpack.c.l.b16 %v1295
        %v5153 = vunpack.c.l.b16 %v1296
        %v5154 = vunpack.c.l.b16 %v1297
        %v5155 = vunpack.c.l.b16 %v1298
        %v5156 = vunpack.c.l.b16 %v1299
        %v5157 = vunpack.c.l.b16 %v1300
        %v5158 = vunpack.c.l.b16 %v1301
        %v5159 = vunpack.c.l.b16 %v1302
        %v5160 = vunpack.c.l.b16 %v1303
        %v5161 = vunpack.c.l.b16 %v1304
        %v5162 = vunpack.c.l.b16 %v1305
        %v5163 = vunpack.c.l.b16 %v1306
        %v5164 = vunpack.c.l.b16 %v1307
        %v5165 = vunpack.c.l.b16 %v1308
        %v5166 = vunpack.c.l.b16 %v1309
        %v5167 = vunpack.c.l.b16 %v1310
        %v5168 = vunpack.c.l.b16 %v1311
        %v5169 = vunpack.c.l.b16 %v1312
        %v5170 = vunpack.c.l.b16 %v1313
        %v5171 = vunpack.c.l.b16 %v1314
        %v5172 = vunpack.c.l.b16 %v1315
        %v5173 = vunpack.c.l.b16 %v1316
        %v5174 = vunpack.c.l.b16 %v1317
        %v5175 = vunpack.c.l.b16 %v1318
        %v5176 = vunpack.c.l.b16 %v1319
        %v5177 = vunpack.c.l.b16 %v1320
        %v5178 = vunpack.c.l.b16 %v1321
        %v5179 = vunpack.c.l.b16 %v1322
        %v5180 = vunpack.c.l.b16 %v1323
        %v5181 = vunpack.c.l.b16 %v1324
        %v5182 = vunpack.c.l.b16 %v1325
        %v5183 = vunpack.c.l.b16 %v1326
        %v5184 = vunpack.c.l.b16 %v1327
        %v5185 = vunpack.c.l.b16 %v1328
        %v5186 = vunpack.c.l.b16 %v1329
        %v5187 = vunpack.c.l.b16 %v1330
        %v5188 = vunpack.c.l.b16 %v1331
        %v5189 = vunpack.c.l.b16 %v1332
        %v5190 = vunpack.c.l.b16 %v1333
        %v5191 = vunpack.c.l.b16 %v1334
        %v5192 = vunpack.c.l.b16 %v1335
        %v5193 = vunpack.c.l.b16 %v1336
        %v5194 = vunpack.c.l.b16 %v1337
        %v5195 = vunpack.c.l.b16 %v1338
        %v5196 = vunpack.c.l.b16 %v1339
        %v5197 = vunpack.c.l.b16 %v1340
        %v5198 = vunpack.c.l.b16 %v1341
        %v5199 = vunpack.c.l.b16 %v1342
        %v5200 = vunpack.c.l.b16 %v1343
        %v5201 = vunpack.c.l.b16 %v1344
        %v5202 = vunpack.c.l.b16 %v1345
        %v5203 = vunpack.c.l.b16 %v1346
        %v5204 = vunpack.c.l.b16 %v1347
        %v5205 = vunpack.c.l.b16 %v1348
        %v5206 = vunpack.c.l.b16 %v1349
        %v5207 = vunpack.c.l.b16 %v1350
        %v5208 = vunpack.c.l.b16 %v1351
        %v5209 = vunpack.c.l.b16 %v1352
        %v5210 = vunpack.c.l.b16 %v1353
        %v5211 = vunpack.c.l.b16 %v1354
        %v5212 = vunpack.c.l.b16 %v1355
        %v5213 = vunpack.c.l.b16 %v1356
        %v5214 = vunpack.c.l.b16 %v1357
        %v5215 = vunpack.c.l.b16 %v1358
        %v5216 = vunpack.c.l.b16 %v1359
        %v5217 = vunpack.c.l.b16 %v1360
        %v5218 = vunpack.c.l.b16 %v1361
        %v5219 = vunpack.c.l.b16 %v1362
        %v5220 = vunpack.c.l.b16 %v1363
        %v5221 = vunpack.c.l.b16 %v1364
        %v5222 = vunpack.c.l.b16 %v1365
        %v5223 = vunpack.c.l.b16 %v1366
        %v5224 = vunpack.c.l.b16 %v1367
        %v5225 = vunpack.c.l.b16 %v1368
        %v5226 = vunpack.c.l.b16 %v1369
        %v5227 = vunpack.c.l.b16 %v1370
        %v5228 = vunpack.c.l.b16 %v1371
        %v5229 = vunpack.c.l.b16 %v1372
        %v5230 = vunpack.c.l.b16 %v1373
        %v5231 = vunpack.c.l.b16 %v1374
        %v5232 = vunpack.c.l.b16 %v1375
        %v5233 = vunpack.c.l.b16 %v1376
        %v5234 = vunpack.c.l.b16 %v1377
        %v5235 = vunpack.c.l.b16 %v1378
        %v5236 = vunpack.c.l.b16 %v1379
        %v5237 = vunpack.c.l.b16 %v1380
        %v5238 = vunpack.c.l.b16 %v1381
        %v5239 = vunpack.c.l.b16 %v1382
        %v5240 = vunpack.c.l.b16 %v1383
        %v5241 = vunpack.c.l.b16 %v1384
        %v5242 = vunpack.c.l.b16 %v1385
        %v5243 = vunpack.c.l.b16 %v1386
        %v5244 = vunpack.c.l.b16 %v1387
        %v5245 = vunpack.c.l.b16 %v1388
        %v5246 = vunpack.c.l.b16 %v1389
        %v5247 = vunpack.c.l.b16 %v1390
        %v5248 = vunpack.c.l.b16 %v1391
        %v5249 = vunpack.c.l.b16 %v1392
        %v5250 = vunpack.c.l.b16 %v1393
        %v5251 = vunpack.c.l.b16 %v1394
        %v5252 = vunpack.c.l.b16 %v1395
        %v5253 = vunpack.c.l.b16 %v1396
        %v5254 = vunpack.c.l.b16 %v1397
        %v5255 = vunpack.c.l.b16 %v1398
        %v5256 = vunpack.c.l.b16 %v1399
        %v5257 = vunpack.c.l.b16 %v1400
        %v5258 = vunpack.c.l.b16 %v1401
        %v5259 = vunpack.c.l.b16 %v1402
        %v5260 = vunpack.c.l.b16 %v1403
        %v5261 = vunpack.c.l.b16 %v1404
        %v5262 = vunpack.c.l.b16 %v1405
        %v5263 = vunpack.c.l.b16 %v1406
        %v5264 = vunpack.c.l.b16 %v1407
        %v5265 = vunpack.c.l.b16 %v1408
        %v5266 = vunpack.c.l.b16 %v1409
        %v5267 = vunpack.c.l.b16 %v1410
        %v5268 = vunpack.c.l.b16 %v1411
        %v5269 = vunpack.c.l.b16 %v1412
        %v5270 = vunpack.c.l.b16 %v1413
        %v5271 = vunpack.c.l.b16 %v1414
        %v5272 = vunpack.c.l.b16 %v1415
        %v5273 = vunpack.c.l.b16 %v1416
        %v5274 = vunpack.c.l.b16 %v1417
        %v5275 = vunpack.c.l.b16 %v1418
        %v5276 = vunpack.c.l.b16 %v1419
        %v5277 = vunpack.c.l.b16 %v1420
        %v5278 = vunpack.c.l.b16 %v1421
        %v5279 = vunpack.c.l.b16 %v1422
        %v5280 = vunpack.c.l.b16 %v1423
        %v5281 = vunpack.c.l.b16 %v1424
        %v5282 = vunpack.c.l.b16 %v1425
        %v5283 = vunpack.c.l.b16 %v1426
        %v5284 = vunpack.c.l.b16 %v1427
        %v5285 = vunpack.c.l.b16 %v1428
        %v5286 = vunpack.c.l.b16 %v1429
        %v5287 = vunpack.c.l.b16 %v1430
        %v5288 = vunpack.c.l.b16 %v1431
        %v5289 = vunpack.c.l.b16 %v1432
        %v5290 = vunpack.c.l.b16 %v1433
        %v5291 = vunpack.c.l.b16 %v1434
        %v5292 = vunpack.c.l.b16 %v1435
        %v5293 = vunpack.c.l.b16 %v1436
        %v5294 = vunpack.c.l.b16 %v1437
        %v5295 = vunpack.c.l.b16 %v1438
        %v5296 = vunpack.c.l.b16 %v1439
        %v5297 = vunpack.c.l.b16 %v1440
        %v5298 = vunpack.c.l.b16 %v1441
        %v5299 = vunpack.c.l.b16 %v1442
        %v5300 = vunpack.c.l.b16 %v1443
        %v5301 = vunpack.c.l.b16 %v1444
        %v5302 = vunpack.c.l.b16 %v1445
        %v5303 = vunpack.c.l.b16 %v1446
        %v5304 = vunpack.c.l.b16 %v1447
        %v5305 = vunpack.c.l.b16 %v1448
        %v5306 = vunpack.c.l.b16 %v1449
        %v5307 = vunpack.c.l.b16 %v1450
        %v5308 = vunpack.c.l.b16 %v1451
        %v5309 = vunpack.c.l.b16 %v1452
        %v5310 = vunpack.c.l.b16 %v1453
        %v5311 = vunpack.c.l.b16 %v1454
        %v5312 = vunpack.c.l.b16 %v1455
        %v5313 = vunpack.c.l.b16 %v1456
        %v5314 = vunpack.c.l.b16 %v1457
        %v5315 = vunpack.c.l.b16 %v1458
        %v5316 = vunpack.c.l.b16 %v1459
        %v5317 = vunpack.c.l.b16 %v1460
        %v5318 = vunpack.c.l.b16 %v1461
        %v5319 = vunpack.c.l.b16 %v1462
        %v5320 = vunpack.c.l.b16 %v1463
        %v5321 = vunpack.c.l.b16 %v1464
        %v5322 = vunpack.c.l.b16 %v1465
        %v5323 = vunpack.c.l.b16 %v1466
        %v5324 = vunpack.c.l.b16 %v1467
        %v5325 = vunpack.c.l.b16 %v1468
        %v5326 = vunpack.c.l.b16 %v1469
        %v5327 = vunpack.c.l.b16 %v1470
        %v5328 = vunpack.c.l.b16 %v1471
        %v5329 = vunpack.c.l.b16 %v1472
        %v5330 = vunpack.c.l.b16 %v1473
        %v5331 = vunpack.c.l.b16 %v1474
        %v5332 = vunpack.c.l.b16 %v1475
        %v5333 = vunpack.c.l.b16 %v1476
        %v5334 = vunpack.c.l.b16 %v1477
        %v5335 = vunpack.c.l.b16 %v1478
        %v5336 = vunpack.c.l.b16 %v1479
        %v5337 = vunpack.c.l.b16 %v1480
        %v5338 = vunpack.c.l.b16 %v1481
        %v5339 = vunpack.c.l.b16 %v1482
        %v5340 = vunpack.c.l.b16 %v1483
        %v5341 = vunpack.c.l.b16 %v1484
        %v5342 = vunpack.c.l.b16 %v1485
        %v5343 = vunpack.c.l.b16 %v1486
        %v5344 = vunpack.c.l.b16 %v1487
        %v5345 = vunpack.c.l.b16 %v1488
        %v5346 = vunpack.c.l.b16 %v1489
        %v5347 = vunpack.c.l.b16 %v1490
        %v5348 = vunpack.c.l.b16 %v1491
        %v5349 = vunpack.c.l.b16 %v1492
        %v5350 = vunpack.c.l.b16 %v1493
        %v5351 = vunpack.c.l.b16 %v1494
        %v5352 = vunpack.c.l.b16 %v1495
        %v5353 = vunpack.c.l.b16 %v1496
        %v5354 = vunpack.c.l.b16 %v1497
        %v5355 = vunpack.c.l.b16 %v1498
        %v5356 = vunpack.c.l.b16 %v1499
        %v5357 = vunpack.c.l.b16 %v1500
        %v5358 = vunpack.c.l.b16 %v1501
        %v5359 = vunpack.c.l.b16 %v1502
        %v5360 = vunpack.c.l.b16 %v1503
        %v5361 = vunpack.c.l.b16 %v1504
        %v5362 = vunpack.c.l.b16 %v1505
        %v5363 = vunpack.c.l.b16 %v1506
        %v5364 = vunpack.c.l.b16 %v1507
        %v5365 = vunpack.c.l.b16 %v1508
        %v5366 = vunpack.c.l.b16 %v1509
        %v5367 = vunpack.c.l.b16 %v1510
        %v5368 = vunpack.c.l.b16 %v1511
        %v5369 = vunpack.c.l.b16 %v1512
        %v5370 = vunpack.c.l.b16 %v1513
        %v5371 = vunpack.c.l.b16 %v1514
        %v5372 = vunpack.c.l.b16 %v1515
        %v5373 = vunpack.c.l.b16 %v1516
        %v5374 = vunpack.c.l.b16 %v1517
        %v5375 = vunpack.c.l.b16 %v1518
        %v5376 = vunpack.c.l.b16 %v1519
        %v5377 = vunpack.c.l.b16 %v1520
        %v5378 = vunpack.c.l.b16 %v1521
        %v5379 = vunpack.c.l.b16 %v1522
        %v5380 = vunpack.c.l.b16 %v1523
        %v5381 = vunpack.c.l.b16 %v1524
        %v5382 = vunpack.c.l.b16 %v1525
        %v5383 = vunpack.c.l.b16 %v1526
        %v5384 = vunpack.c.l.b16 %v1527
        %v5385 = vunpack.c.l.b16 %v1528
        %v5386 = vunpack.c.l.b16 %v1529
        %v5387 = vunpack.c.l.b16 %v1530
        %v5388 = vunpack.c.l.b16 %v1531
        %v5389 = vunpack.c.l.b16 %v1532
        %v5390 = vunpack.c.l.b16 %v1533
        %v5391 = vunpack.c.l.b16 %v1534
        %v5392 = vunpack.c.l.b16 %v1535
        %v5393 = vunpack.c.l.b16 %v1536
        %v5394 = vunpack.c.l.b16 %v1537
        %v5395 = vunpack.c.l.b16 %v1538
        %v5396 = vunpack.c.l.b16 %v1539
        %v5397 = vunpack.c.l.b16 %v1540
        %v5398 = vunpack.c.l.b16 %v1541
        %v5399 = vunpack.c.l.b16 %v1542
        %v5400 = vunpack.c.l.b16 %v1543
        %v5401 = vunpack.c.l.b16 %v1544
        %v5402 = vunpack.c.l.b16 %v1545
        %v5403 = vunpack.c.l.b16 %v1546
        %v5404 = vunpack.c.l.b16 %v1547
        %v5405 = vunpack.c.l.b16 %v1548
        %v5406 = vunpack.c.l.b16 %v1549
        %v5407 = vunpack.c.l.b16 %v1550
        %v5408 = vunpack.c.l.b16 %v1551
        %v5409 = vunpack.c.l.b16 %v1552
        %v5410 = vunpack.c.l.b16 %v1553
        %v5411 = vunpack.c.l.b16 %v1554
        %v5412 = vunpack.c.l.b16 %v1555
        %v5413 = vunpack.c.l.b16 %v1556
        %v5414 = vunpack.c.l.b16 %v1557
        %v5415 = vunpack.c.l.b16 %v1558
        %v5416 = vunpack.c.l.b16 %v1559
        %v5417 = vunpack.c.l.b16 %v1560
        %v5418 = vunpack.c.l.b16 %v1561
        %v5419 = vunpack.c.l.b16 %v1562
        %v5420 = vunpack.c.l.b16 %v1563
        %v5421 = vunpack.c.l.b16 %v1564
        %v5422 = vunpack.c.l.b16 %v1565
        %v5423 = vunpack.c.l.b16 %v1566
        %v5424 = vunpack.c.l.b16 %v1567
        %v5425 = vunpack.c.l.b16 %v1568
        %v5426 = vunpack.c.l.b16 %v1569
        %v5427 = vunpack.c.l.b16 %v1570
        %v5428 = vunpack.c.l.b16 %v1571
        %v5429 = vunpack.c.l.b16 %v1572
        %v5430 = vunpack.c.l.b16 %v1573
        %v5431 = vunpack.c.l.b16 %v1574
        %v5432 = vunpack.c.l.b16 %v1575
        %v5433 = vunpack.c.l.b16 %v1576
        %v5434 = vunpack.c.l.b16 %v1577
        %v5435 = vunpack.c.l.b16 %v1578
        %v5436 = vunpack.c.l.b16 %v1579
        %v5437 = vunpack.c.l.b16 %v1580
        %v5438 = vunpack.c.l.b16 %v1581
        %v5439 = vunpack.c.l.b16 %v1582
        %v5440 = vunpack.c.l.b16 %v1583
        %v5441 = vunpack.c.l.b16 %v1584
        %v5442 = vunpack.c.l.b16 %v1585
        %v5443 = vunpack.c.l.b16 %v1586
        %v5444 = vunpack.c.l.b16 %v1587
        %v5445 = vunpack.c.l.b16 %v1588
        %v5446 = vunpack.c.l.b16 %v1589
        %v5447 = vunpack.c.l.b16 %v1590
        %v5448 = vunpack.c.l.b16 %v1591
        %v5449 = vunpack.c.l.b16 %v1592
        %v5450 = vunpack.c.l.b16 %v1593
        %v5451 = vunpack.c.l.b16 %v1594
        %v5452 = vunpack.c.l.b16 %v1595
        %v5453 = vunpack.c.l.b16 %v1596
        %v5454 = vunpack.c.l.b16 %v1597
        %v5455 = vunpack.c.l.b16 %v1598
        %v5456 = vunpack.c.l.b16 %v1599
        %v5457 = vunpack.c.l.b16 %v1600
        %v5458 = vunpack.c.l.b16 %v1601
        %v5459 = vunpack.c.l.b16 %v1602
        %v5460 = vunpack.c.l.b16 %v1603
        %v5461 = vunpack.c.l.b16 %v1604
        %v5462 = vunpack.c.l.b16 %v1605
        %v5463 = vunpack.c.l.b16 %v1606
        %v5464 = vunpack.c.l.b16 %v1607
        %v5465 = vunpack.c.l.b16 %v1608
        %v5466 = vunpack.c.l.b16 %v1609
        %v5467 = vunpack.c.l.b16 %v1610
        %v5468 = vunpack.c.l.b16 %v1611
        %v5469 = vunpack.c.l.b16 %v1612
        %v5470 = vunpack.c.l.b16 %v1613
        %v5471 = vunpack.c.l.b16 %v1614
        %v5472 = vunpack.c.l.b16 %v1615
        %v5473 = vunpack.c.l.b16 %v1616
        %v5474 = vunpack.c.l.b16 %v1617
        %v5475 = vunpack.c.l.b16 %v1618
        %v5476 = vunpack.c.l.b16 %v1619
        %v5477 = vunpack.c.l.b16 %v1620
        %v5478 = vunpack.c.l.b16 %v1621
        %v5479 = vunpack.c.l.b16 %v1622
        %v5480 = vunpack.c.l.b16 %v1623
        %v5481 = vunpack.c.l.b16 %v1624
        %v5482 = vunpack.c.l.b16 %v1625
        %v5483 = vunpack.c.l.b16 %v1626
        %v5484 = vunpack.c.l.b16 %v1627
        %v5485 = vunpack.c.l.b16 %v1628
        %v5486 = vunpack.c.l.b16 %v1629
        %v5487 = vunpack.c.l.b16 %v1630
        %v5488 = vunpack.c.l.b16 %v1631
        %v5489 = vunpack.c.l.b16 %v1632
        %v5490 = vunpack.c.l.b16 %v1633
        %v5491 = vunpack.c.l.b16 %v1634
        %v5492 = vunpack.c.l.b16 %v1635
        %v5493 = vunpack.c.l.b16 %v1636
        %v5494 = vunpack.c.l.b16 %v1637
        %v5495 = vunpack.c.l.b16 %v1638
        %v5496 = vunpack.c.l.b16 %v1639
        %v5497 = vunpack.c.l.b16 %v1640
        %v5498 = vunpack.c.l.b16 %v1641
        %v5499 = vunpack.c.l.b16 %v1642
        %v5500 = vunpack.c.l.b16 %v1643
        %v5501 = vunpack.c.l.b16 %v1644
        %v5502 = vunpack.c.l.b16 %v1645
        %v5503 = vunpack.c.l.b16 %v1646
        %v5504 = vunpack.c.l.b16 %v1647
        %v5505 = vunpack.c.l.b16 %v1648
        %v5506 = vunpack.c.l.b16 %v1649
        %v5507 = vunpack.c.l.b16 %v1650
        %v5508 = vunpack.c.l.b16 %v1651
        %v5509 = vunpack.c.l.b16 %v1652
        %v5510 = vunpack.c.l.b16 %v1653
        %v5511 = vunpack.c.l.b16 %v1654
        %v5512 = vunpack.c.l.b16 %v1655
        %v5513 = vunpack.c.l.b16 %v1656
        %v5514 = vunpack.c.l.b16 %v1657
        %v5515 = vunpack.c.l.b16 %v1658
        %v5516 = vunpack.c.l.b16 %v1659
        %v5517 = vunpack.c.l.b16 %v1660
        %v5518 = vunpack.c.l.b16 %v1661
        %v5519 = vunpack.c.l.b16 %v1662
        %v5520 = vunpack.c.l.b16 %v1663
        %v5521 = vunpack.c.l.b16 %v1664
        %v5522 = vunpack.c.l.b16 %v1665
        %v5523 = vunpack.c.l.b16 %v1666
        %v5524 = vunpack.c.l.b16 %v1667
        %v5525 = vunpack.c.l.b16 %v1668
        %v5526 = vunpack.c.l.b16 %v1669
        %v5527 = vunpack.c.l.b16 %v1670
        %v5528 = vunpack.c.l.b16 %v1671
        %v5529 = vunpack.c.l.b16 %v1672
        %v5530 = vunpack.c.l.b16 %v1673
        %v5531 = vunpack.c.l.b16 %v1674
        %v5532 = vunpack.c.l.b16 %v1675
        %v5533 = vunpack.c.l.b16 %v1676
        %v5534 = vunpack.c.l.b16 %v1677
        %v5535 = vunpack.c.l.b16 %v1678
        %v5536 = vunpack.c.l.b16 %v1679
        %v5537 = vunpack.c.l.b16 %v1680
        %v5538 = vunpack.c.l.b16 %v1681
        %v5539 = vunpack.c.l.b16 %v1682
        %v5540 = vunpack.c.l.b16 %v1683
        %v5541 = vunpack.c.l.b16 %v1684
        %v5542 = vunpack.c.l.b16 %v1685
        %v5543 = vunpack.c.l.b16 %v1686
        %v5544 = vunpack.c.l.b16 %v1687
        %v5545 = vunpack.c.l.b16 %v1688
        %v5546 = vunpack.c.l.b16 %v1689
        %v5547 = vunpack.c.l.b16 %v1690
        %v5548 = vunpack.c.l.b16 %v1691
        %v5549 = vunpack.c.l.b16 %v1692
        %v5550 = vunpack.c.l.b16 %v1693
        %v5551 = vunpack.c.l.b16 %v1694
        %v5552 = vunpack.c.l.b16 %v1695
        %v5553 = vunpack.c.l.b16 %v1696
        %v5554 = vunpack.c.l.b16 %v1697
        %v5555 = vunpack.c.l.b16 %v1698
        %v5556 = vunpack.c.l.b16 %v1699
        %v5557 = vunpack.c.l.b16 %v1700
        %v5558 = vunpack.c.l.b16 %v1701
        %v5559 = vunpack.c.l.b16 %v1702
        %v5560 = vunpack.c.l.b16 %v1703
        %v5561 = vunpack.c.l.b16 %v1704
        %v5562 = vunpack.c.l.b16 %v1705
        %v5563 = vunpack.c.l.b16 %v1706
        %v5564 = vunpack.c.l.b16 %v1707
        %v5565 = vunpack.c.l.b16 %v1708
        %v5566 = vunpack.c.l.b16 %v1709
        %v5567 = vunpack.c.l.b16 %v1710
        %v5568 = vunpack.c.l.b16 %v1711
        %v5569 = vunpack.c.l.b16 %v1712
        %v5570 = vunpack.c.l.b16 %v1713
        %v5571 = vunpack.c.l.b16 %v1714
        %v5572 = vunpack.c.l.b16 %v1715
        %v5573 = vunpack.c.l.b16 %v1716
        %v5574 = vunpack.c.l.b16 %v1717
        %v5575 = vunpack.c.l.b16 %v1718
        %v5576 = vunpack.c.l.b16 %v1719
        %v5577 = vunpack.c.l.b16 %v1720
        %v5578 = vunpack.c.l.b16 %v1721
        %v5579 = vunpack.c.l.b16 %v1722
        %v5580 = vunpack.c.l.b16 %v1723
        %v5581 = vunpack.c.l.b16 %v1724
        %v5582 = vunpack.c.l.b16 %v1725
        %v5583 = vunpack.c.l.b16 %v1726
        %v5584 = vunpack.c.l.b16 %v1727
        %v5585 = vunpack.c.l.b16 %v1728
        %v5586 = vunpack.c.l.b16 %v1729
        %v5587 = vunpack.c.l.b16 %v1730
        %v5588 = vunpack.c.l.b16 %v1731
        %v5589 = vunpack.c.l.b16 %v1732
        %v5590 = vunpack.c.l.b16 %v1733
        %v5591 = vunpack.c.l.b16 %v1734
        %v5592 = vunpack.c.l.b16 %v1735
        %v5593 = vunpack.c.l.b16 %v1736
        %v5594 = vunpack.c.l.b16 %v1737
        %v5595 = vunpack.c.l.b16 %v1738
        %v5596 = vunpack.c.l.b16 %v1739
        %v5597 = vunpack.c.l.b16 %v1740
        %v5598 = vunpack.c.l.b16 %v1741
        %v5599 = vunpack.c.l.b16 %v1742
        %v5600 = vunpack.c.l.b16 %v1743
        %v5601 = vunpack.c.l.b16 %v1744
        %v5602 = vunpack.c.l.b16 %v1745
        %v5603 = vunpack.c.l.b16 %v1746
        %v5604 = vunpack.c.l.b16 %v1747
        %v5605 = vunpack.c.l.b16 %v1748
        %v5606 = vunpack.c.l.b16 %v1749
        %v5607 = vunpack.c.l.b16 %v1750
        %v5608 = vunpack.c.l.b16 %v1751
        %v5609 = vunpack.c.l.b16 %v1752
        %v5610 = vunpack.c.l.b16 %v1753
        %v5611 = vunpack.c.l.b16 %v1754
        %v5612 = vunpack.c.l.b16 %v1755
        %v5613 = vunpack.c.l.b16 %v1756
        %v5614 = vunpack.c.l.b16 %v1757
        %v5615 = vunpack.c.l.b16 %v1758
        %v5616 = vunpack.c.l.b16 %v1759
        %v5617 = vunpack.c.l.b16 %v1760
        %v5618 = vunpack.c.l.b16 %v1761
        %v5619 = vunpack.c.l.b16 %v1762
        %v5620 = vunpack.c.l.b16 %v1763
        %v5621 = vunpack.c.l.b16 %v1764
        %v5622 = vunpack.c.l.b16 %v1765
        %v5623 = vunpack.c.l.b16 %v1766
        %v5624 = vunpack.c.l.b16 %v1767
        %v5625 = vunpack.c.l.b16 %v1768
        %v5626 = vunpack.c.l.b16 %v1769
        %v5627 = vunpack.c.l.b16 %v1770
        %v5628 = vunpack.c.l.b16 %v1771
        %v5629 = vunpack.c.l.b16 %v1772
        %v5630 = vunpack.c.l.b16 %v1773
        %v5631 = vunpack.c.l.b16 %v1774
        %v5632 = vunpack.c.l.b16 %v1775
        %v5633 = vunpack.c.l.b16 %v1776
        %v5634 = vunpack.c.l.b16 %v1777
        %v5635 = vunpack.c.l.b16 %v1778
        %v5636 = vunpack.c.l.b16 %v1779
        %v5637 = vunpack.c.l.b16 %v1780
        %v5638 = vunpack.c.l.b16 %v1781
        %v5639 = vunpack.c.l.b16 %v1782
        %v5640 = vunpack.c.l.b16 %v1783
        %v5641 = vunpack.c.l.b16 %v1784
        %v5642 = vunpack.c.l.b16 %v1785
        %v5643 = vunpack.c.l.b16 %v1786
        %v5644 = vunpack.c.l.b16 %v1787
        %v5645 = vunpack.c.l.b16 %v1788
        %v5646 = vunpack.c.l.b16 %v1789
        %v5647 = vunpack.c.l.b16 %v1790
        %v5648 = vunpack.c.l.b16 %v1791
        %v5649 = vunpack.c.l.b16 %v1792
        %v5650 = vunpack.c.l.b16 %v1793
        %v5651 = vunpack.c.l.b16 %v1794
        %v5652 = vunpack.c.l.b16 %v1795
        %v5653 = vunpack.c.l.b16 %v1796
        %v5654 = vunpack.c.l.b16 %v1797
        %v5655 = vunpack.c.l.b16 %v1798
        %v5656 = vunpack.c.l.b16 %v1799
        %v5657 = vunpack.c.l.b16 %v1800
        %v5658 = vunpack.c.l.b16 %v1801
        %v5659 = vunpack.c.l.b16 %v1802
        %v5660 = vunpack.c.l.b16 %v1803
        %v5661 = vunpack.c.l.b16 %v1804
        %v5662 = vunpack.c.l.b16 %v1805
        %v5663 = vunpack.c.l.b16 %v1806
        %v5664 = vunpack.c.l.b16 %v1807
        %v5665 = vunpack.c.l.b16 %v1808
        %v5666 = vunpack.c.l.b16 %v1809
        %v5667 = vunpack.c.l.b16 %v1810
        %v5668 = vunpack.c.l.b16 %v1811
        %v5669 = vunpack.c.l.b16 %v1812
        %v5670 = vunpack.c.l.b16 %v1813
        %v5671 = vunpack.c.l.b16 %v1814
        %v5672 = vunpack.c.l.b16 %v1815
        %v5673 = vunpack.c.l.b16 %v1816
        %v5674 = vunpack.c.l.b16 %v1817
        %v5675 = vunpack.c.l.b16 %v1818
        %v5676 = vunpack.c.l.b16 %v1819
        %v5677 = vpack.c.b16 %v4110, %v4109
        %v5678 = vpack.c.b16 %v4112, %v4111
        %v5679 = vpack.c.b16 %v4114, %v4113
        %v5680 = vpack.c.b16 %v4116, %v4115
        %v5681 = vpack.c.b16 %v4118, %v4117
        %v5682 = vpack.c.b16 %v4120, %v4119
        %v5683 = vpack.c.b16 %v4122, %v4121
        %v5684 = vpack.c.b16 %v4124, %v4123
        %v5685 = vpack.c.b16 %v4126, %v4125
        %v5686 = vpack.c.b16 %v4128, %v4127
        %v5687 = vpack.c.b16 %v4130, %v4129
        %v5688 = vpack.c.b16 %v4132, %v4131
        %v5689 = vpack.c.b16 %v4134, %v4133
        %v5690 = vpack.c.b16 %v4136, %v4135
        %v5691 = vpack.c.b16 %v4138, %v4137
        %v5692 = vpack.c.b16 %v4140, %v4139
        %v5693 = vpack.c.b16 %v4142, %v4141
        %v5694 = vpack.c.b16 %v4144, %v4143
        %v5695 = vpack.c.b16 %v4146, %v4145
        %v5696 = vpack.c.b16 %v4148, %v4147
        %v5697 = vpack.c.b16 %v4150, %v4149
        %v5698 = vpack.c.b16 %v4152, %v4151
        %v5699 = vpack.c.b16 %v4154, %v4153
        %v5700 = vpack.c.b16 %v4156, %v4155
        %v5701 = vpack.c.b16 %v4158, %v4157
        %v5702 = vpack.c.b16 %v4160, %v4159
        %v5703 = vpack.c.b16 %v4162, %v4161
        %v5704 = vpack.c.b16 %v4164, %v4163
        %v5705 = vpack.c.b16 %v4166, %v4165
        %v5706 = vpack.c.b16 %v4168, %v4167
        %v5707 = vpack.c.b16 %v4170, %v4169
        %v5708 = vpack.c.b16 %v4172, %v4171
        %v5709 = vpack.c.b16 %v4174, %v4173
        %v5710 = vpack.c.b16 %v4176, %v4175
        %v5711 = vpack.c.b16 %v4178, %v4177
        %v5712 = vpack.c.b16 %v4180, %v4179
        %v5713 = vpack.c.b16 %v4182, %v4181
        %v5714 = vpack.c.b16 %v4184, %v4183
        %v5715 = vpack.c.b16 %v4186, %v4185
        %v5716 = vpack.c.b16 %v4188, %v4187
        %v5717 = vpack.c.b16 %v4190, %v4189
        %v5718 = vpack.c.b16 %v4192, %v4191
        %v5719 = vpack.c.b16 %v4194, %v4193
        %v5720 = vpack.c.b16 %v4196, %v4195
        %v5721 = vpack.c.b16 %v4198, %v4197
        %v5722 = vpack.c.b16 %v4200, %v4199
        %v5723 = vpack.c.b16 %v4202, %v4201
        %v5724 = vpack.c.b16 %v4204, %v4203
        %v5725 = vpack.c.b16 %v4206, %v4205
        %v5726 = vpack.c.b16 %v4208, %v4207
        %v5727 = vpack.c.b16 %v4210, %v4209
        %v5728 = vpack.c.b16 %v4212, %v4211
        %v5729 = vpack.c.b16 %v4214, %v4213
        %v5730 = vpack.c.b16 %v4216, %v4215
        %v5731 = vpack.c.b16 %v4218, %v4217
        %v5732 = vpack.c.b16 %v4220, %v4219
        %v5733 = vpack.c.b16 %v4222, %v4221
        %v5734 = vpack.c.b16 %v4224, %v4223
        %v5735 = vpack.c.b16 %v4226, %v4225
        %v5736 = vpack.c.b16 %v4228, %v4227
        %v5737 = vpack.c.b16 %v4230, %v4229
        %v5738 = vpack.c.b16 %v4232, %v4231
        %v5739 = vpack.c.b16 %v4234, %v4233
        %v5740 = vpack.c.b16 %v4236, %v4235
        %v5741 = vpack.c.b16 %v4238, %v4237
        %v5742 = vpack.c.b16 %v4240, %v4239
        %v5743 = vpack.c.b16 %v4242, %v4241
        %v5744 = vpack.c.b16 %v4244, %v4243
        %v5745 = vpack.c.b16 %v4246, %v4245
        %v5746 = vpack.c.b16 %v4248, %v4247
        %v5747 = vpack.c.b16 %v4250, %v4249
        %v5748 = vpack.c.b16 %v4252, %v4251
        %v5749 = vpack.c.b16 %v4254, %v4253
        %v5750 = vpack.c.b16 %v4256, %v4255
        %v5751 = vpack.c.b16 %v4258, %v4257
        %v5752 = vpack.c.b16 %v4260, %v4259
        %v5753 = vpack.c.b16 %v4262, %v4261
        %v5754 = vpack.c.b16 %v4264, %v4263
        %v5755 = vpack.c.b16 %v4266, %v4265
        %v5756 = vpack.c.b16 %v4268, %v4267
        %v5757 = vpack.c.b16 %v4270, %v4269
        %v5758 = vpack.c.b16 %v4272, %v4271
        %v5759 = vpack.c.b16 %v4274, %v4273
        %v5760 = vpack.c.b16 %v4276, %v4275
        %v5761 = vpack.c.b16 %v4278, %v4277
        %v5762 = vpack.c.b16 %v4280, %v4279
        %v5763 = vpack.c.b16 %v4282, %v4281
        %v5764 = vpack.c.b16 %v4284, %v4283
        %v5765 = vpack.c.b16 %v4286, %v4285
        %v5766 = vpack.c.b16 %v4288, %v4287
        %v5767 = vpack.c.b16 %v4290, %v4289
        %v5768 = vpack.c.b16 %v4292, %v4291
        %v5769 = vpack.c.b16 %v4294, %v4293
        %v5770 = vpack.c.b16 %v4296, %v4295
        %v5771 = vpack.c.b16 %v4298, %v4297
        %v5772 = vpack.c.b16 %v4300, %v4299
        %v5773 = vpack.c.b16 %v4302, %v4301
        %v5774 = vpack.c.b16 %v4304, %v4303
        %v5775 = vpack.c.b16 %v4306, %v4305
        %v5776 = vpack.c.b16 %v4308, %v4307
        %v5777 = vpack.c.b16 %v4310, %v4309
        %v5778 = vpack.c.b16 %v4312, %v4311
        %v5779 = vpack.c.b16 %v4314, %v4313
        %v5780 = vpack.c.b16 %v4316, %v4315
        %v5781 = vpack.c.b16 %v4318, %v4317
        %v5782 = vpack.c.b16 %v4320, %v4319
        %v5783 = vpack.c.b16 %v4322, %v4321
        %v5784 = vpack.c.b16 %v4324, %v4323
        %v5785 = vpack.c.b16 %v4326, %v4325
        %v5786 = vpack.c.b16 %v4328, %v4327
        %v5787 = vpack.c.b16 %v4330, %v4329
        %v5788 = vpack.c.b16 %v4332, %v4331
        %v5789 = vpack.c.b16 %v4334, %v4333
        %v5790 = vpack.c.b16 %v4336, %v4335
        %v5791 = vpack.c.b16 %v4338, %v4337
        %v5792 = vpack.c.b16 %v4340, %v4339
        %v5793 = vpack.c.b16 %v4342, %v4341
        %v5794 = vpack.c.b16 %v4344, %v4343
        %v5795 = vpack.c.b16 %v4346, %v4345
        %v5796 = vpack.c.b16 %v4348, %v4347
        %v5797 = vpack.c.b16 %v4350, %v4349
        %v5798 = vpack.c.b16 %v4352, %v4351
        %v5799 = vpack.c.b16 %v4354, %v4353
        %v5800 = vpack.c.b16 %v4356, %v4355
        %v5801 = vpack.c.b16 %v4358, %v4357
        %v5802 = vpack.c.b16 %v4360, %v4359
        %v5803 = vpack.c.b16 %v4362, %v4361
        %v5804 = vpack.c.b16 %v4364, %v4363
        %v5805 = vpack.c.b16 %v4366, %v4365
        %v5806 = vpack.c.b16 %v4368, %v4367
        %v5807 = vpack.c.b16 %v4370, %v4369
        %v5808 = vpack.c.b16 %v4372, %v4371
        %v5809 = vpack.c.b16 %v4374, %v4373
        %v5810 = vpack.c.b16 %v4376, %v4375
        %v5811 = vpack.c.b16 %v4378, %v4377
        %v5812 = vpack.c.b16 %v4380, %v4379
        %v5813 = vpack.c.b16 %v4382, %v4381
        %v5814 = vpack.c.b16 %v4384, %v4383
        %v5815 = vpack.c.b16 %v4386, %v4385
        %v5816 = vpack.c.b16 %v4388, %v4387
        %v5817 = vpack.c.b16 %v4390, %v4389
        %v5818 = vpack.c.b16 %v4392, %v4391
        %v5819 = vpack.c.b16 %v4394, %v4393
        %v5820 = vpack.c.b16 %v4396, %v4395
        %v5821 = vpack.c.b16 %v4398, %v4397
        %v5822 = vpack.c.b16 %v4400, %v4399
        %v5823 = vpack.c.b16 %v4402, %v4401
        %v5824 = vpack.c.b16 %v4404, %v4403
        %v5825 = vpack.c.b16 %v4406, %v4405
        %v5826 = vpack.c.b16 %v4408, %v4407
        %v5827 = vpack.c.b16 %v4410, %v4409
        %v5828 = vpack.c.b16 %v4412, %v4411
        %v5829 = vpack.c.b16 %v4414, %v4413
        %v5830 = vpack.c.b16 %v4416, %v4415
        %v5831 = vpack.c.b16 %v4418, %v4417
        %v5832 = vpack.c.b16 %v4420, %v4419
        %v5833 = vpack.c.b16 %v4422, %v4421
        %v5834 = vpack.c.b16 %v4424, %v4423
        %v5835 = vpack.c.b16 %v4426, %v4425
        %v5836 = vpack.c.b16 %v4428, %v4427
        %v5837 = vpack.c.b16 %v4430, %v4429
        %v5838 = vpack.c.b16 %v4432, %v4431
        %v5839 = vpack.c.b16 %v4434, %v4433
        %v5840 = vpack.c.b16 %v4436, %v4435
        %v5841 = vpack.c.b16 %v4438, %v4437
        %v5842 = vpack.c.b16 %v4440, %v4439
        %v5843 = vpack.c.b16 %v4442, %v4441
        %v5844 = vpack.c.b16 %v4444, %v4443
        %v5845 = vpack.c.b16 %v4446, %v4445
        %v5846 = vpack.c.b16 %v4448, %v4447
        %v5847 = vpack.c.b16 %v4450, %v4449
        %v5848 = vpack.c.b16 %v4452, %v4451
        %v5849 = vpack.c.b16 %v4454, %v4453
        %v5850 = vpack.c.b16 %v4456, %v4455
        %v5851 = vpack.c.b16 %v4458, %v4457
        %v5852 = vpack.c.b16 %v4460, %v4459
        %v5853 = vpack.c.b16 %v4462, %v4461
        %v5854 = vpack.c.b16 %v4464, %v4463
        %v5855 = vpack.c.b16 %v4466, %v4465
        %v5856 = vpack.c.b16 %v4468, %v4467
        %v5857 = vpack.c.b16 %v4470, %v4469
        %v5858 = vpack.c.b16 %v4472, %v4471
        %v5859 = vpack.c.b16 %v4474, %v4473
        %v5860 = vpack.c.b16 %v4476, %v4475
        %v5861 = vpack.c.b16 %v4478, %v4477
        %v5862 = vpack.c.b16 %v4480, %v4479
        %v5863 = vpack.c.b16 %v4482, %v4481
        %v5864 = vpack.c.b16 %v4484, %v4483
        %v5865 = vpack.c.b16 %v4486, %v4485
        %v5866 = vpack.c.b16 %v4488, %v4487
        %v5867 = vpack.c.b16 %v4490, %v4489
        %v5868 = vpack.c.b16 %v4492, %v4491
        %v5869 = vpack.c.b16 %v4494, %v4493
        %v5870 = vpack.c.b16 %v4496, %v4495
        %v5871 = vpack.c.b16 %v4498, %v4497
        %v5872 = vpack.c.b16 %v4500, %v4499
        %v5873 = vpack.c.b16 %v4502, %v4501
        %v5874 = vpack.c.b16 %v4504, %v4503
        %v5875 = vpack.c.b16 %v4506, %v4505
        %v5876 = vpack.c.b16 %v4508, %v4507
        %v5877 = vpack.c.b16 %v4510, %v4509
        %v5878 = vpack.c.b16 %v4512, %v4511
        %v5879 = vpack.c.b16 %v4514, %v4513
        %v5880 = vpack.c.b16 %v4516, %v4515
        %v5881 = vpack.c.b16 %v4518, %v4517
        %v5882 = vpack.c.b16 %v4520, %v4519
        %v5883 = vpack.c.b16 %v4522, %v4521
        %v5884 = vpack.c.b16 %v4524, %v4523
        %v5885 = vpack.c.b16 %v4526, %v4525
        %v5886 = vpack.c.b16 %v4528, %v4527
        %v5887 = vpack.c.b16 %v4530, %v4529
        %v5888 = vpack.c.b16 %v4532, %v4531
        %v5889 = vpack.c.b16 %v4534, %v4533
        %v5890 = vpack.c.b16 %v4536, %v4535
        %v5891 = vpack.c.b16 %v4538, %v4537
        %v5892 = vpack.c.b16 %v4540, %v4539
        %v5893 = vpack.c.b16 %v4542, %v4541
        %v5894 = vpack.c.b16 %v4544, %v4543
        %v5895 = vpack.c.b16 %v4546, %v4545
        %v5896 = vpack.c.b16 %v4548, %v4547
        %v5897 = vpack.c.b16 %v4550, %v4549
        %v5898 = vpack.c.b16 %v4552, %v4551
        %v5899 = vpack.c.b16 %v4554, %v4553
        %v5900 = vpack.c.b16 %v4556, %v4555
        %v5901 = vpack.c.b16 %v4558, %v4557
        %v5902 = vpack.c.b16 %v4560, %v4559
        %v5903 = vpack.c.b16 %v4562, %v4561
        %v5904 = vpack.c.b16 %v4564, %v4563
        %v5905 = vpack.c.b16 %v4566, %v4565
        %v5906 = vpack.c.b16 %v4568, %v4567
        %v5907 = vpack.c.b16 %v4570, %v4569
        %v5908 = vpack.c.b16 %v4572, %v4571
        %v5909 = vpack.c.b16 %v4574, %v4573
        %v5910 = vpack.c.b16 %v4576, %v4575
        %v5911 = vpack.c.b16 %v4578, %v4577
        %v5912 = vpack.c.b16 %v4580, %v4579
        %v5913 = vpack.c.b16 %v4582, %v4581
        %v5914 = vpack.c.b16 %v4584, %v4583
        %v5915 = vpack.c.b16 %v4586, %v4585
        %v5916 = vpack.c.b16 %v4588, %v4587
        %v5917 = vpack.c.b16 %v4590, %v4589
        %v5918 = vpack.c.b16 %v4592, %v4591
        %v5919 = vpack.c.b16 %v4594, %v4593
        %v5920 = vpack.c.b16 %v4596, %v4595
        %v5921 = vpack.c.b16 %v4598, %v4597
        %v5922 = vpack.c.b16 %v4600, %v4599
        %v5923 = vpack.c.b16 %v4602, %v4601
        %v5924 = vpack.c.b16 %v4604, %v4603
        %v5925 = vpack.c.b16 %v4606, %v4605
        %v5926 = vpack.c.b16 %v4608, %v4607
        %v5927 = vpack.c.b16 %v4610, %v4609
        %v5928 = vpack.c.b16 %v4612, %v4611
        %v5929 = vpack.c.b16 %v4614, %v4613
        %v5930 = vpack.c.b16 %v4616, %v4615
        %v5931 = vpack.c.b16 %v4618, %v4617
        %v5932 = vpack.c.b16 %v4620, %v4619
        %v5933 = vpack.c.b16 %v4622, %v4621
        %v5934 = vpack.c.b16 %v4624, %v4623
        %v5935 = vpack.c.b16 %v4626, %v4625
        %v5936 = vpack.c.b16 %v4628, %v4627
        %v5937 = vpack.c.b16 %v4630, %v4629
        %v5938 = vpack.c.b16 %v4632, %v4631
        %v5939 = vpack.c.b16 %v4634, %v4633
        %v5940 = vpack.c.b16 %v4636, %v4635
        %v5941 = vpack.c.b16 %v4638, %v4637
        %v5942 = vpack.c.b16 %v4640, %v4639
        %v5943 = vpack.c.b16 %v4642, %v4641
        %v5944 = vpack.c.b16 %v4644, %v4643
        %v5945 = vpack.c.b16 %v4646, %v4645
        %v5946 = vpack.c.b16 %v4648, %v4647
        %v5947 = vpack.c.b16 %v4650, %v4649
        %v5948 = vpack.c.b16 %v4652, %v4651
        %v5949 = vpack.c.b16 %v4654, %v4653
        %v5950 = vpack.c.b16 %v4656, %v4655
        %v5951 = vpack.c.b16 %v4658, %v4657
        %v5952 = vpack.c.b16 %v4660, %v4659
        %v5953 = vpack.c.b16 %v4662, %v4661
        %v5954 = vpack.c.b16 %v4664, %v4663
        %v5955 = vpack.c.b16 %v4666, %v4665
        %v5956 = vpack.c.b16 %v4668, %v4667
        %v5957 = vpack.c.b16 %v4670, %v4669
        %v5958 = vpack.c.b16 %v4672, %v4671
        %v5959 = vpack.c.b16 %v4674, %v4673
        %v5960 = vpack.c.b16 %v4676, %v4675
        %v5961 = vpack.c.b16 %v4678, %v4677
        %v5962 = vpack.c.b16 %v4680, %v4679
        %v5963 = vpack.c.b16 %v4682, %v4681
        %v5964 = vpack.c.b16 %v4684, %v4683
        %v5965 = vpack.c.b16 %v4686, %v4685
        %v5966 = vpack.c.b16 %v4688, %v4687
        %v5967 = vpack.c.b16 %v4690, %v4689
        %v5968 = vpack.c.b16 %v4692, %v4691
        %v5969 = vpack.c.b16 %v4694, %v4693
        %v5970 = vpack.c.b16 %v4696, %v4695
        %v5971 = vpack.c.b16 %v4698, %v4697
        %v5972 = vpack.c.b16 %v4700, %v4699
        %v5973 = vpack.c.b16 %v4702, %v4701
        %v5974 = vpack.c.b16 %v4704, %v4703
        %v5975 = vpack.c.b16 %v4706, %v4705
        %v5976 = vpack.c.b16 %v4708, %v4707
        %v5977 = vpack.c.b16 %v4710, %v4709
        %v5978 = vpack.c.b16 %v4712, %v4711
        %v5979 = vpack.c.b16 %v4714, %v4713
        %v5980 = vpack.c.b16 %v4716, %v4715
        %v5981 = vpack.c.b16 %v4718, %v4717
        %v5982 = vpack.c.b16 %v4720, %v4719
        %v5983 = vpack.c.b16 %v4722, %v4721
        %v5984 = vpack.c.b16 %v4724, %v4723
        %v5985 = vpack.c.b16 %v4726, %v4725
        %v5986 = vpack.c.b16 %v4728, %v4727
        %v5987 = vpack.c.b16 %v4730, %v4729
        %v5988 = vpack.c.b16 %v4732, %v4731
        %v5989 = vpack.c.b16 %v4734, %v4733
        %v5990 = vpack.c.b16 %v4736, %v4735
        %v5991 = vpack.c.b16 %v4738, %v4737
        %v5992 = vpack.c.b16 %v4740, %v4739
        %v5993 = vpack.c.b16 %v4742, %v4741
        %v5994 = vpack.c.b16 %v4744, %v4743
        %v5995 = vpack.c.b16 %v4746, %v4745
        %v5996 = vpack.c.b16 %v4748, %v4747
        %v5997 = vpack.c.b16 %v4750, %v4749
        %v5998 = vpack.c.b16 %v4752, %v4751
        %v5999 = vpack.c.b16 %v4754, %v4753
        %v6000 = vpack.c.b16 %v4756, %v4755
        %v6001 = vpack.c.b16 %v4758, %v4757
        %v6002 = vpack.c.b16 %v4760, %v4759
        %v6003 = vpack.c.b16 %v4762, %v4761
        %v6004 = vpack.c.b16 %v4764, %v4763
        %v6005 = vpack.c.b16 %v4766, %v4765
        %v6006 = vpack.c.b16 %v4768, %v4767
        %v6007 = vpack.c.b16 %v4770, %v4769
        %v6008 = vpack.c.b16 %v4772, %v4771
        %v6009 = vpack.c.b16 %v4774, %v4773
        %v6010 = vpack.c.b16 %v4776, %v4775
        %v6011 = vpack.c.b16 %v4778, %v4777
        %v6012 = vpack.c.b16 %v4780, %v4779
        %v6013 = vpack.c.b16 %v4782, %v4781
        %v6014 = vpack.c.b16 %v4784, %v4783
        %v6015 = vpack.c.b16 %v4786, %v4785
        %v6016 = vpack.c.b16 %v4788, %v4787
        %v6017 = vpack.c.b16 %v4790, %v4789
        %v6018 = vpack.c.b16 %v4792, %v4791
        %v6019 = vpack.c.b16 %v4794, %v4793
        %v6020 = vpack.c.b16 %v4796, %v4795
        %v6021 = vpack.c.b16 %v4798, %v4797
        %v6022 = vpack.c.b16 %v4800, %v4799
        %v6023 = vpack.c.b16 %v4802, %v4801
        %v6024 = vpack.c.b16 %v4804, %v4803
        %v6025 = vpack.c.b16 %v4806, %v4805
        %v6026 = vpack.c.b16 %v4808, %v4807
        %v6027 = vpack.c.b16 %v4810, %v4809
        %v6028 = vpack.c.b16 %v4812, %v4811
        %v6029 = vpack.c.b16 %v4814, %v4813
        %v6030 = vpack.c.b16 %v4816, %v4815
        %v6031 = vpack.c.b16 %v4818, %v4817
        %v6032 = vpack.c.b16 %v4820, %v4819
        %v6033 = vpack.c.b16 %v4822, %v4821
        %v6034 = vpack.c.b16 %v4824, %v4823
        %v6035 = vpack.c.b16 %v4826, %v4825
        %v6036 = vpack.c.b16 %v4828, %v4827
        %v6037 = vpack.c.b16 %v4830, %v4829
        %v6038 = vpack.c.b16 %v4832, %v4831
        %v6039 = vpack.c.b16 %v4834, %v4833
        %v6040 = vpack.c.b16 %v4836, %v4835
        %v6041 = vpack.c.b16 %v4838, %v4837
        %v6042 = vpack.c.b16 %v4840, %v4839
        %v6043 = vpack.c.b16 %v4842, %v4841
        %v6044 = vpack.c.b16 %v4844, %v4843
        %v6045 = vpack.c.b16 %v4846, %v4845
        %v6046 = vpack.c.b16 %v4848, %v4847
        %v6047 = vpack.c.b16 %v4850, %v4849
        %v6048 = vpack.c.b16 %v4852, %v4851
        %v6049 = vpack.c.b16 %v4854, %v4853
        %v6050 = vpack.c.b16 %v4856, %v4855
        %v6051 = vpack.c.b16 %v4858, %v4857
        %v6052 = vpack.c.b16 %v4860, %v4859
        %v6053 = vpack.c.b16 %v4862, %v4861
        %v6054 = vpack.c.b16 %v4864, %v4863
        %v6055 = vpack.c.b16 %v4866, %v4865
        %v6056 = vpack.c.b16 %v4868, %v4867
        %v6057 = vpack.c.b16 %v4870, %v4869
        %v6058 = vpack.c.b16 %v4872, %v4871
        %v6059 = vpack.c.b16 %v4874, %v4873
        %v6060 = vpack.c.b16 %v4876, %v4875
        %v6061 = vpack.c.b16 %v4878, %v4877
        %v6062 = vpack.c.b16 %v4880, %v4879
        %v6063 = vpack.c.b16 %v4882, %v4881
        %v6064 = vpack.c.b16 %v4884, %v4883
        %v6065 = vpack.c.b16 %v4886, %v4885
        %v6066 = vpack.c.b16 %v4888, %v4887
        %v6067 = vpack.c.b16 %v4890, %v4889
        %v6068 = vpack.c.b16 %v4892, %v4891
        %v6069 = vpack.c.b16 %v4894, %v4893
        %v6070 = vpack.c.b16 %v4896, %v4895
        %v6071 = vpack.c.b16 %v4898, %v4897
        %v6072 = vpack.c.b16 %v4900, %v4899
        %v6073 = vpack.c.b16 %v4902, %v4901
        %v6074 = vpack.c.b16 %v4904, %v4903
        %v6075 = vpack.c.b16 %v4906, %v4905
        %v6076 = vpack.c.b16 %v4908, %v4907
        %v6077 = vpack.c.b16 %v4910, %v4909
        %v6078 = vpack.c.b16 %v4912, %v4911
        %v6079 = vpack.c.b16 %v4914, %v4913
        %v6080 = vpack.c.b16 %v4916, %v4915
        %v6081 = vpack.c.b16 %v4918, %v4917
        %v6082 = vpack.c.b16 %v4920, %v4919
        %v6083 = vpack.c.b16 %v4922, %v4921
        %v6084 = vpack.c.b16 %v4924, %v4923
        %v6085 = vpack.c.b16 %v4926, %v4925
        %v6086 = vpack.c.b16 %v4928, %v4927
        %v6087 = vpack.c.b16 %v4930, %v4929
        %v6088 = vpack.c.b16 %v4932, %v4931
        %v6089 = vpack.c.b16 %v4934, %v4933
        %v6090 = vpack.c.b16 %v4936, %v4935
        %v6091 = vpack.c.b16 %v4938, %v4937
        %v6092 = vpack.c.b16 %v4940, %v4939
        %v6093 = vpack.c.b16 %v4942, %v4941
        %v6094 = vpack.c.b16 %v4944, %v4943
        %v6095 = vpack.c.b16 %v4946, %v4945
        %v6096 = vpack.c.b16 %v4948, %v4947
        %v6097 = vpack.c.b16 %v4950, %v4949
        %v6098 = vpack.c.b16 %v4952, %v4951
        %v6099 = vpack.c.b16 %v4954, %v4953
        %v6100 = vpack.c.b16 %v4956, %v4955
        %v6101 = vpack.c.b16 %v4958, %v4957
        %v6102 = vpack.c.b16 %v4960, %v4959
        %v6103 = vpack.c.b16 %v4962, %v4961
        %v6104 = vpack.c.b16 %v4964, %v4963
        %v6105 = vpack.c.b16 %v4966, %v4965
        %v6106 = vpack.c.b16 %v4968, %v4967
        %v6107 = vpack.c.b16 %v4970, %v4969
        %v6108 = vpack.c.b16 %v4972, %v4971
        %v6109 = vpack.c.b16 %v4974, %v4973
        %v6110 = vpack.c.b16 %v4976, %v4975
        %v6111 = vpack.c.b16 %v4978, %v4977
        %v6112 = vpack.c.b16 %v4980, %v4979
        %v6113 = vpack.c.b16 %v4982, %v4981
        %v6114 = vpack.c.b16 %v4984, %v4983
        %v6115 = vpack.c.b16 %v4986, %v4985
        %v6116 = vpack.c.b16 %v4988, %v4987
        %v6117 = vpack.c.b16 %v4990, %v4989
        %v6118 = vpack.c.b16 %v4992, %v4991
        %v6119 = vpack.c.b16 %v4994, %v4993
        %v6120 = vpack.c.b16 %v4996, %v4995
        %v6121 = vpack.c.b16 %v4998, %v4997
        %v6122 = vpack.c.b16 %v5000, %v4999
        %v6123 = vpack.c.b16 %v5002, %v5001
        %v6124 = vpack.c.b16 %v5004, %v5003
        %v6125 = vpack.c.b16 %v5006, %v5005
        %v6126 = vpack.c.b16 %v5008, %v5007
        %v6127 = vpack.c.b16 %v5010, %v5009
        %v6128 = vpack.c.b16 %v5012, %v5011
        %v6129 = vpack.c.b16 %v5014, %v5013
        %v6130 = vpack.c.b16 %v5016, %v5015
        %v6131 = vpack.c.b16 %v5018, %v5017
        %v6132 = vpack.c.b16 %v5020, %v5019
        %v6133 = vpack.c.b16 %v5022, %v5021
        %v6134 = vpack.c.b16 %v5024, %v5023
        %v6135 = vpack.c.b16 %v5026, %v5025
        %v6136 = vpack.c.b16 %v5028, %v5027
        %v6137 = vpack.c.b16 %v5030, %v5029
        %v6138 = vpack.c.b16 %v5032, %v5031
        %v6139 = vpack.c.b16 %v5034, %v5033
        %v6140 = vpack.c.b16 %v5036, %v5035
        %v6141 = vpack.c.b16 %v5038, %v5037
        %v6142 = vpack.c.b16 %v5040, %v5039
        %v6143 = vpack.c.b16 %v5042, %v5041
        %v6144 = vpack.c.b16 %v5044, %v5043
        %v6145 = vpack.c.b16 %v5046, %v5045
        %v6146 = vpack.c.b16 %v5048, %v5047
        %v6147 = vpack.c.b16 %v5050, %v5049
        %v6148 = vpack.c.b16 %v5052, %v5051
        %v6149 = vpack.c.b16 %v5054, %v5053
        %v6150 = vpack.c.b16 %v5056, %v5055
        %v6151 = vpack.c.b16 %v5058, %v5057
        %v6152 = vpack.c.b16 %v5060, %v5059
        %v6153 = vpack.c.b16 %v5062, %v5061
        %v6154 = vpack.c.b16 %v5064, %v5063
        %v6155 = vpack.c.b16 %v5066, %v5065
        %v6156 = vpack.c.b16 %v5068, %v5067
        %v6157 = vpack.c.b16 %v5070, %v5069
        %v6158 = vpack.c.b16 %v5072, %v5071
        %v6159 = vpack.c.b16 %v5074, %v5073
        %v6160 = vpack.c.b16 %v5076, %v5075
        %v6161 = vpack.c.b16 %v5078, %v5077
        %v6162 = vpack.c.b16 %v5080, %v5079
        %v6163 = vpack.c.b16 %v5082, %v5081
        %v6164 = vpack.c.b16 %v5084, %v5083
        %v6165 = vpack.c.b16 %v5086, %v5085
        %v6166 = vpack.c.b16 %v5088, %v5087
        %v6167 = vpack.c.b16 %v5090, %v5089
        %v6168 = vpack.c.b16 %v5092, %v5091
        %v6169 = vpack.c.b16 %v5094, %v5093
        %v6170 = vpack.c.b16 %v5096, %v5095
        %v6171 = vpack.c.b16 %v5098, %v5097
        %v6172 = vpack.c.b16 %v5100, %v5099
        %v6173 = vpack.c.b16 %v5102, %v5101
        %v6174 = vpack.c.b16 %v5104, %v5103
        %v6175 = vpack.c.b16 %v5106, %v5105
        %v6176 = vpack.c.b16 %v5108, %v5107
        %v6177 = vpack.c.b16 %v5110, %v5109
        %v6178 = vpack.c.b16 %v5112, %v5111
        %v6179 = vpack.c.b16 %v5114, %v5113
        %v6180 = vpack.c.b16 %v5116, %v5115
        %v6181 = vpack.c.b16 %v5118, %v5117
        %v6182 = vpack.c.b16 %v5120, %v5119
        %v6183 = vpack.c.b16 %v5122, %v5121
        %v6184 = vpack.c.b16 %v5124, %v5123
        %v6185 = vpack.c.b16 %v5126, %v5125
        %v6186 = vpack.c.b16 %v5128, %v5127
        %v6187 = vpack.c.b16 %v5130, %v5129
        %v6188 = vpack.c.b16 %v5132, %v5131
        %v6189 = vpack.c.b16 %v5134, %v5133
        %v6190 = vpack.c.b16 %v5136, %v5135
        %v6191 = vpack.c.b16 %v5138, %v5137
        %v6192 = vpack.c.b16 %v5140, %v5139
        %v6193 = vpack.c.b16 %v5142, %v5141
        %v6194 = vpack.c.b16 %v5144, %v5143
        %v6195 = vpack.c.b16 %v5146, %v5145
        %v6196 = vpack.c.b16 %v5148, %v5147
        %v6197 = vpack.c.b16 %v5150, %v5149
        %v6198 = vpack.c.b16 %v5152, %v5151
        %v6199 = vpack.c.b16 %v5154, %v5153
        %v6200 = vpack.c.b16 %v5156, %v5155
        %v6201 = vpack.c.b16 %v5158, %v5157
        %v6202 = vpack.c.b16 %v5160, %v5159
        %v6203 = vpack.c.b16 %v5162, %v5161
        %v6204 = vpack.c.b16 %v5164, %v5163
        %v6205 = vpack.c.b16 %v5166, %v5165
        %v6206 = vpack.c.b16 %v5168, %v5167
        %v6207 = vpack.c.b16 %v5170, %v5169
        %v6208 = vpack.c.b16 %v5172, %v5171
        %v6209 = vpack.c.b16 %v5174, %v5173
        %v6210 = vpack.c.b16 %v5176, %v5175
        %v6211 = vpack.c.b16 %v5178, %v5177
        %v6212 = vpack.c.b16 %v5180, %v5179
        %v6213 = vpack.c.b16 %v5182, %v5181
        %v6214 = vpack.c.b16 %v5184, %v5183
        %v6215 = vpack.c.b16 %v5186, %v5185
        %v6216 = vpack.c.b16 %v5188, %v5187
        %v6217 = vpack.c.b16 %v5190, %v5189
        %v6218 = vpack.c.b16 %v5192, %v5191
        %v6219 = vpack.c.b16 %v5194, %v5193
        %v6220 = vpack.c.b16 %v5196, %v5195
        %v6221 = vpack.c.b16 %v5198, %v5197
        %v6222 = vpack.c.b16 %v5200, %v5199
        %v6223 = vpack.c.b16 %v5202, %v5201
        %v6224 = vpack.c.b16 %v5204, %v5203
        %v6225 = vpack.c.b16 %v5206, %v5205
        %v6226 = vpack.c.b16 %v5208, %v5207
        %v6227 = vpack.c.b16 %v5210, %v5209
        %v6228 = vpack.c.b16 %v5212, %v5211
        %v6229 = vpack.c.b16 %v5214, %v5213
        %v6230 = vpack.c.b16 %v5216, %v5215
        %v6231 = vpack.c.b16 %v5218, %v5217
        %v6232 = vpack.c.b16 %v5220, %v5219
        %v6233 = vpack.c.b16 %v5222, %v5221
        %v6234 = vpack.c.b16 %v5224, %v5223
        %v6235 = vpack.c.b16 %v5226, %v5225
        %v6236 = vpack.c.b16 %v5228, %v5227
        %v6237 = vpack.c.b16 %v5230, %v5229
        %v6238 = vpack.c.b16 %v5232, %v5231
        %v6239 = vpack.c.b16 %v5234, %v5233
        %v6240 = vpack.c.b16 %v5236, %v5235
        %v6241 = vpack.c.b16 %v5238, %v5237
        %v6242 = vpack.c.b16 %v5240, %v5239
        %v6243 = vpack.c.b16 %v5242, %v5241
        %v6244 = vpack.c.b16 %v5244, %v5243
        %v6245 = vpack.c.b16 %v5246, %v5245
        %v6246 = vpack.c.b16 %v5248, %v5247
        %v6247 = vpack.c.b16 %v5250, %v5249
        %v6248 = vpack.c.b16 %v5252, %v5251
        %v6249 = vpack.c.b16 %v5254, %v5253
        %v6250 = vpack.c.b16 %v5256, %v5255
        %v6251 = vpack.c.b16 %v5258, %v5257
        %v6252 = vpack.c.b16 %v5260, %v5259
        %v6253 = vpack.c.b16 %v5262, %v5261
        %v6254 = vpack.c.b16 %v5264, %v5263
        %v6255 = vpack.c.b16 %v5266, %v5265
        %v6256 = vpack.c.b16 %v5268, %v5267
        %v6257 = vpack.c.b16 %v5270, %v5269
        %v6258 = vpack.c.b16 %v5272, %v5271
        %v6259 = vpack.c.b16 %v5274, %v5273
        %v6260 = vpack.c.b16 %v5276, %v5275
        %v6261 = vpack.c.b16 %v5278, %v5277
        %v6262 = vpack.c.b16 %v5280, %v5279
        %v6263 = vpack.c.b16 %v5282, %v5281
        %v6264 = vpack.c.b16 %v5284, %v5283
        %v6265 = vpack.c.b16 %v5286, %v5285
        %v6266 = vpack.c.b16 %v5288, %v5287
        %v6267 = vpack.c.b16 %v5290, %v5289
        %v6268 = vpack.c.b16 %v5292, %v5291
        %v6269 = vpack.c.b16 %v5294, %v5293
        %v6270 = vpack.c.b16 %v5296, %v5295
        %v6271 = vpack.c.b16 %v5298, %v5297
        %v6272 = vpack.c.b16 %v5300, %v5299
        %v6273 = vpack.c.b16 %v5302, %v5301
        %v6274 = vpack.c.b16 %v5304, %v5303
        %v6275 = vpack.c.b16 %v5306, %v5305
        %v6276 = vpack.c.b16 %v5308, %v5307
        %v6277 = vpack.c.b16 %v5310, %v5309
        %v6278 = vpack.c.b16 %v5312, %v5311
        %v6279 = vpack.c.b16 %v5314, %v5313
        %v6280 = vpack.c.b16 %v5316, %v5315
        %v6281 = vpack.c.b16 %v5318, %v5317
        %v6282 = vpack.c.b16 %v5320, %v5319
        %v6283 = vpack.c.b16 %v5322, %v5321
        %v6284 = vpack.c.b16 %v5324, %v5323
        %v6285 = vpack.c.b16 %v5326, %v5325
        %v6286 = vpack.c.b16 %v5328, %v5327
        %v6287 = vpack.c.b16 %v5330, %v5329
        %v6288 = vpack.c.b16 %v5332, %v5331
        %v6289 = vpack.c.b16 %v5334, %v5333
        %v6290 = vpack.c.b16 %v5336, %v5335
        %v6291 = vpack.c.b16 %v5338, %v5337
        %v6292 = vpack.c.b16 %v5340, %v5339
        %v6293 = vpack.c.b16 %v5342, %v5341
        %v6294 = vpack.c.b16 %v5344, %v5343
        %v6295 = vpack.c.b16 %v5346, %v5345
        %v6296 = vpack.c.b16 %v5348, %v5347
        %v6297 = vpack.c.b16 %v5350, %v5349
        %v6298 = vpack.c.b16 %v5352, %v5351
        %v6299 = vpack.c.b16 %v5354, %v5353
        %v6300 = vpack.c.b16 %v5356, %v5355
        %v6301 = vpack.c.b16 %v5358, %v5357
        %v6302 = vpack.c.b16 %v5360, %v5359
        %v6303 = vpack.c.b16 %v5362, %v5361
        %v6304 = vpack.c.b16 %v5364, %v5363
        %v6305 = vpack.c.b16 %v5366, %v5365
        %v6306 = vpack.c.b16 %v5368, %v5367
        %v6307 = vpack.c.b16 %v5370, %v5369
        %v6308 = vpack.c.b16 %v5372, %v5371
        %v6309 = vpack.c.b16 %v5374, %v5373
        %v6310 = vpack.c.b16 %v5376, %v5375
        %v6311 = vpack.c.b16 %v5378, %v5377
        %v6312 = vpack.c.b16 %v5380, %v5379
        %v6313 = vpack.c.b16 %v5382, %v5381
        %v6314 = vpack.c.b16 %v5384, %v5383
        %v6315 = vpack.c.b16 %v5386, %v5385
        %v6316 = vpack.c.b16 %v5388, %v5387
        %v6317 = vpack.c.b16 %v5390, %v5389
        %v6318 = vpack.c.b16 %v5392, %v5391
        %v6319 = vpack.c.b16 %v5394, %v5393
        %v6320 = vpack.c.b16 %v5396, %v5395
        %v6321 = vpack.c.b16 %v5398, %v5397
        %v6322 = vpack.c.b16 %v5400, %v5399
        %v6323 = vpack.c.b16 %v5402, %v5401
        %v6324 = vpack.c.b16 %v5404, %v5403
        %v6325 = vpack.c.b16 %v5406, %v5405
        %v6326 = vpack.c.b16 %v5408, %v5407
        %v6327 = vpack.c.b16 %v5410, %v5409
        %v6328 = vpack.c.b16 %v5412, %v5411
        %v6329 = vpack.c.b16 %v5414, %v5413
        %v6330 = vpack.c.b16 %v5416, %v5415
        %v6331 = vpack.c.b16 %v5418, %v5417
        %v6332 = vpack.c.b16 %v5420, %v5419
        %v6333 = vpack.c.b16 %v5422, %v5421
        %v6334 = vpack.c.b16 %v5424, %v5423
        %v6335 = vpack.c.b16 %v5426, %v5425
        %v6336 = vpack.c.b16 %v5428, %v5427
        %v6337 = vpack.c.b16 %v5430, %v5429
        %v6338 = vpack.c.b16 %v5432, %v5431
        %v6339 = vpack.c.b16 %v5434, %v5433
        %v6340 = vpack.c.b16 %v5436, %v5435
        %v6341 = vpack.c.b16 %v5438, %v5437
        %v6342 = vpack.c.b16 %v5440, %v5439
        %v6343 = vpack.c.b16 %v5442, %v5441
        %v6344 = vpack.c.b16 %v5444, %v5443
        %v6345 = vpack.c.b16 %v5446, %v5445
        %v6346 = vpack.c.b16 %v5448, %v5447
        %v6347 = vpack.c.b16 %v5450, %v5449
        %v6348 = vpack.c.b16 %v5452, %v5451
        %v6349 = vpack.c.b16 %v5454, %v5453
        %v6350 = vpack.c.b16 %v5456, %v5455
        %v6351 = vpack.c.b16 %v5458, %v5457
        %v6352 = vpack.c.b16 %v5460, %v5459
        %v6353 = vpack.c.b16 %v5462, %v5461
        %v6354 = vpack.c.b16 %v5464, %v5463
        %v6355 = vpack.c.b16 %v5466, %v5465
        %v6356 = vpack.c.b16 %v5468, %v5467
        %v6357 = vpack.c.b16 %v5470, %v5469
        %v6358 = vpack.c.b16 %v5472, %v5471
        %v6359 = vpack.c.b16 %v5474, %v5473
        %v6360 = vpack.c.b16 %v5476, %v5475
        %v6361 = vpack.c.b16 %v5478, %v5477
        %v6362 = vpack.c.b16 %v5480, %v5479
        %v6363 = vpack.c.b16 %v5482, %v5481
        %v6364 = vpack.c.b16 %v5484, %v5483
        %v6365 = vpack.c.b16 %v5486, %v5485
        %v6366 = vpack.c.b16 %v5488, %v5487
        %v6367 = vpack.c.b16 %v5490, %v5489
        %v6368 = vpack.c.b16 %v5492, %v5491
        %v6369 = vpack.c.b16 %v5494, %v5493
        %v6370 = vpack.c.b16 %v5496, %v5495
        %v6371 = vpack.c.b16 %v5498, %v5497
        %v6372 = vpack.c.b16 %v5500, %v5499
        %v6373 = vpack.c.b16 %v5502, %v5501
        %v6374 = vpack.c.b16 %v5504, %v5503
        %v6375 = vpack.c.b16 %v5506, %v5505
        %v6376 = vpack.c.b16 %v5508, %v5507
        %v6377 = vpack.c.b16 %v5510, %v5509
        %v6378 = vpack.c.b16 %v5512, %v5511
        %v6379 = vpack.c.b16 %v5514, %v5513
        %v6380 = vpack.c.b16 %v5516, %v5515
        %v6381 = vpack.c.b16 %v5518, %v5517
        %v6382 = vpack.c.b16 %v5520, %v5519
        %v6383 = vpack.c.b16 %v5522, %v5521
        %v6384 = vpack.c.b16 %v5524, %v5523
        %v6385 = vpack.c.b16 %v5526, %v5525
        %v6386 = vpack.c.b16 %v5528, %v5527
        %v6387 = vpack.c.b16 %v5530, %v5529
        %v6388 = vpack.c.b16 %v5532, %v5531
        %v6389 = vpack.c.b16 %v5534, %v5533
        %v6390 = vpack.c.b16 %v5536, %v5535
        %v6391 = vpack.c.b16 %v5538, %v5537
        %v6392 = vpack.c.b16 %v5540, %v5539
        %v6393 = vpack.c.b16 %v5542, %v5541
        %v6394 = vpack.c.b16 %v5544, %v5543
        %v6395 = vpack.c.b16 %v5546, %v5545
        %v6396 = vpack.c.b16 %v5548, %v5547
        %v6397 = vpack.c.b16 %v5550, %v5549
        %v6398 = vpack.c.b16 %v5552, %v5551
        %v6399 = vpack.c.b16 %v5554, %v5553
        %v6400 = vpack.c.b16 %v5556, %v5555
        %v6401 = vpack.c.b16 %v5558, %v5557
        %v6402 = vpack.c.b16 %v5560, %v5559
        %v6403 = vpack.c.b16 %v5562, %v5561
        %v6404 = vpack.c.b16 %v5564, %v5563
        %v6405 = vpack.c.b16 %v5566, %v5565
        %v6406 = vpack.c.b16 %v5568, %v5567
        %v6407 = vpack.c.b16 %v5570, %v5569
        %v6408 = vpack.c.b16 %v5572, %v5571
        %v6409 = vpack.c.b16 %v5574, %v5573
        %v6410 = vpack.c.b16 %v5576, %v5575
        %v6411 = vpack.c.b16 %v5578, %v5577
        %v6412 = vpack.c.b16 %v5580, %v5579
        %v6413 = vpack.c.b16 %v5582, %v5581
        %v6414 = vpack.c.b16 %v5584, %v5583
        %v6415 = vpack.c.b16 %v5586, %v5585
        %v6416 = vpack.c.b16 %v5588, %v5587
        %v6417 = vpack.c.b16 %v5590, %v5589
        %v6418 = vpack.c.b16 %v5592, %v5591
        %v6419 = vpack.c.b16 %v5594, %v5593
        %v6420 = vpack.c.b16 %v5596, %v5595
        %v6421 = vpack.c.b16 %v5598, %v5597
        %v6422 = vpack.c.b16 %v5600, %v5599
        %v6423 = vpack.c.b16 %v5602, %v5601
        %v6424 = vpack.c.b16 %v5604, %v5603
        %v6425 = vpack.c.b16 %v5606, %v5605
        %v6426 = vpack.c.b16 %v5608, %v5607
        %v6427 = vpack.c.b16 %v5610, %v5609
        %v6428 = vpack.c.b16 %v5612, %v5611
        %v6429 = vpack.c.b16 %v5614, %v5613
        %v6430 = vpack.c.b16 %v5616, %v5615
        %v6431 = vpack.c.b16 %v5618, %v5617
        %v6432 = vpack.c.b16 %v5620, %v5619
        %v6433 = vpack.c.b16 %v5622, %v5621
        %v6434 = vpack.c.b16 %v5624, %v5623
        %v6435 = vpack.c.b16 %v5626, %v5625
        %v6436 = vpack.c.b16 %v5628, %v5627
        %v6437 = vpack.c.b16 %v5630, %v5629
        %v6438 = vpack.c.b16 %v5632, %v5631
        %v6439 = vpack.c.b16 %v5634, %v5633
        %v6440 = vpack.c.b16 %v5636, %v5635
        %v6441 = vpack.c.b16 %v5638, %v5637
        %v6442 = vpack.c.b16 %v5640, %v5639
        %v6443 = vpack.c.b16 %v5642, %v5641
        %v6444 = vpack.c.b16 %v5644, %v5643
        %v6445 = vpack.c.b16 %v5646, %v5645
        %v6446 = vpack.c.b16 %v5648, %v5647
        %v6447 = vpack.c.b16 %v5650, %v5649
        %v6448 = vpack.c.b16 %v5652, %v5651
        %v6449 = vpack.c.b16 %v5654, %v5653
        %v6450 = vpack.c.b16 %v5656, %v5655
        %v6451 = vpack.c.b16 %v5658, %v5657
        %v6452 = vpack.c.b16 %v5660, %v5659
        %v6453 = vpack.c.b16 %v5662, %v5661
        %v6454 = vpack.c.b16 %v5664, %v5663
        %v6455 = vpack.c.b16 %v5666, %v5665
        %v6456 = vpack.c.b16 %v5668, %v5667
        %v6457 = vpack.c.b16 %v5670, %v5669
        %v6458 = vpack.c.b16 %v5672, %v5671
        %v6459 = vpack.c.b16 %v5674, %v5673
        %v6460 = vpack.c.b16 %v5676, %v5675
        %7245 = vmatprep.subr.bf16.mxu0 0
        %7246 = vmatpush1.bf16.msra.mxu0 %v5677
        %7247 = vmatprep.subr.bf16.mxu0 0
        %7248 = vmatpush1.bf16.msra.mxu0 %v5678
        %7249 = vmatprep.subr.bf16.mxu0 0
        %7250 = vmatpush1.bf16.msra.mxu0 %v5679
        %7251 = vmatprep.subr.bf16.mxu0 0
        %7252 = vmatpush1.bf16.msra.mxu0 %v5680
        %7253 = vmatprep.subr.bf16.mxu0 0
        %7254 = vmatpush1.bf16.msra.mxu0 %v5681
        %7255 = vmatprep.subr.bf16.mxu0 0
        %7256 = vmatpush1.bf16.msra.mxu0 %v5682
        %7257 = vmatprep.subr.bf16.mxu0 0
        %7258 = vmatpush1.bf16.msra.mxu0 %v5683
        %7259 = vmatprep.subr.bf16.mxu0 0
        %7260 = vmatpush1.bf16.msra.mxu0 %v5684
        %7261 = vmatprep.subr.bf16.mxu0 0
        %7262 = vmatpush1.bf16.msra.mxu0 %v5685
        %7263 = vmatprep.subr.bf16.mxu0 0
        %7264 = vmatpush1.bf16.msra.mxu0 %v5686
        %7265 = vmatprep.subr.bf16.mxu0 0
        %7266 = vmatpush1.bf16.msra.mxu0 %v5687
        %7267 = vmatprep.subr.bf16.mxu0 0
        %7268 = vmatpush1.bf16.msra.mxu0 %v5688
        %7269 = vmatprep.subr.bf16.mxu0 0
        %7270 = vmatpush1.bf16.msra.mxu0 %v5689
        %7271 = vmatprep.subr.bf16.mxu0 0
        %7272 = vmatpush1.bf16.msra.mxu0 %v5690
        %7273 = vmatprep.subr.bf16.mxu0 0
        %7274 = vmatpush1.bf16.msra.mxu0 %v5691
        %7275 = vmatprep.subr.bf16.mxu0 0
        %7276 = vmatpush1.bf16.msra.mxu0 %v5692
        %7277 = vmatprep.mubr.bf16.mxu0 %v1870
        %7278 = vmatmul.mubr.bf16.gmra.mrb[0].mxu0 %v1856
        %v7279 = vpop.f32.mrb[0].mxu0
        %v7280 = vadd.f32 0.0, %v7279
        %v7281 = vpop.f32.mrb[0].mxu0
        %v7282 = vpop.f32.mrb[0].mxu0
        %v7283 = vpop.f32.mrb[0].mxu0
        %7284 = vdwg.mxu0
        %7285 = vmatprep.subr.bf16.mxu0 0
        %7286 = vmatpush1.bf16.msra.mxu0 %v5693
        %7287 = vmatprep.subr.bf16.mxu0 0
        %7288 = vmatpush1.bf16.msra.mxu0 %v5694
        %7289 = vmatprep.subr.bf16.mxu0 0
        %7290 = vmatpush1.bf16.msra.mxu0 %v5695
        %7291 = vmatprep.subr.bf16.mxu0 0
        %7292 = vmatpush1.bf16.msra.mxu0 %v5696
        %7293 = vmatprep.subr.bf16.mxu0 0
        %7294 = vmatpush1.bf16.msra.mxu0 %v5697
        %7295 = vmatprep.subr.bf16.mxu0 0
        %7296 = vmatpush1.bf16.msra.mxu0 %v5698
        %7297 = vmatprep.subr.bf16.mxu0 0
        %7298 = vmatpush1.bf16.msra.mxu0 %v5699
        %7299 = vmatprep.subr.bf16.mxu0 0
        %7300 = vmatpush1.bf16.msra.mxu0 %v5700
        %7301 = vmatprep.subr.bf16.mxu0 0
        %7302 = vmatpush1.bf16.msra.mxu0 %v5701
        %7303 = vmatprep.subr.bf16.mxu0 0
        %7304 = vmatpush1.bf16.msra.mxu0 %v5702
        %7305 = vmatprep.subr.bf16.mxu0 0
        %7306 = vmatpush1.bf16.msra.mxu0 %v5703
        %7307 = vmatprep.subr.bf16.mxu0 0
        %7308 = vmatpush1.bf16.msra.mxu0 %v5704
        %7309 = vmatprep.subr.bf16.mxu0 0
        %7310 = vmatpush1.bf16.msra.mxu0 %v5705
        %7311 = vmatprep.subr.bf16.mxu0 0
        %7312 = vmatpush1.bf16.msra.mxu0 %v5706
        %7313 = vmatprep.subr.bf16.mxu0 0
        %7314 = vmatpush1.bf16.msra.mxu0 %v5707
        %7315 = vmatprep.subr.bf16.mxu0 0
        %7316 = vmatpush1.bf16.msra.mxu0 %v5708
        %7317 = vmatprep.mubr.bf16.mxu0 %v1880
        %7318 = vmatmul.mubr.bf16.gmra.mrb[0].mxu0 %v1878
        %v7319 = vpop.f32.mrb[0].mxu0
        %v7320 = vadd.f32 %v7280, %v7319
        %v7321 = vpop.f32.mrb[0].mxu0
        %v7322 = vpop.f32.mrb[0].mxu0
        %v7323 = vpop.f32.mrb[0].mxu0
        %7324 = vdwg.mxu0
        %7325 = vmatprep.subr.bf16.mxu0 0
        %7326 = vmatpush1.bf16.msra.mxu0 %v5709
        %7327 = vmatprep.subr.bf16.mxu0 0
        %7328 = vmatpush1.bf16.msra.mxu0 %v5710
        %7329 = vmatprep.subr.bf16.mxu0 0
        %7330 = vmatpush1.bf16.msra.mxu0 %v5711
        %7331 = vmatprep.subr.bf16.mxu0 0
        %7332 = vmatpush1.bf16.msra.mxu0 %v5712
        %7333 = vmatprep.subr.bf16.mxu0 0
        %7334 = vmatpush1.bf16.msra.mxu0 %v5713
        %7335 = vmatprep.subr.bf16.mxu0 0
        %7336 = vmatpush1.bf16.msra.mxu0 %v5714
        %7337 = vmatprep.subr.bf16.mxu0 0
        %7338 = vmatpush1.bf16.msra.mxu0 %v5715
        %7339 = vmatprep.subr.bf16.mxu0 0
        %7340 = vmatpush1.bf16.msra.mxu0 %v5716
        %7341 = vmatprep.subr.bf16.mxu0 0
        %7342 = vmatpush1.bf16.msra.mxu0 %v5717
        %7343 = vmatprep.subr.bf16.mxu0 0
        %7344 = vmatpush1.bf16.msra.mxu0 %v5718
        %7345 = vmatprep.subr.bf16.mxu0 0
        %7346 = vmatpush1.bf16.msra.mxu0 %v5719
        %7347 = vmatprep.subr.bf16.mxu0 0
        %7348 = vmatpush1.bf16.msra.mxu0 %v5720
        %7349 = vmatprep.subr.bf16.mxu0 0
        %7350 = vmatpush1.bf16.msra.mxu0 %v5721
        %7351 = vmatprep.subr.bf16.mxu0 0
        %7352 = vmatpush1.bf16.msra.mxu0 %v5722
        %7353 = vmatprep.subr.bf16.mxu0 0
        %7354 = vmatpush1.bf16.msra.mxu0 %v5723
        %7355 = vmatprep.subr.bf16.mxu0 0
        %7356 = vmatpush1.bf16.msra.mxu0 %v5724
        %7357 = vmatprep.mubr.bf16.mxu0 %v1877
        %7358 = vmatmul.mubr.bf16.gmra.mrb[0].mxu0 %v1863
        %v7359 = vpop.f32.mrb[0].mxu0
        %v7360 = vadd.f32 %v7320, %v7359
        %v7361 = vpop.f32.mrb[0].mxu0
        %v7362 = vpop.f32.mrb[0].mxu0
        %v7363 = vpop.f32.mrb[0].mxu0
        %7364 = vdwg.mxu0
        %7365 = vmatprep.subr.bf16.mxu0 0
        %7366 = vmatpush1.bf16.msra.mxu0 %v5725
        %7367 = vmatprep.subr.bf16.mxu0 0
        %7368 = vmatpush1.bf16.msra.mxu0 %v5726
        %7369 = vmatprep.subr.bf16.mxu0 0
        %7370 = vmatpush1.bf16.msra.mxu0 %v5727
        %7371 = vmatprep.subr.bf16.mxu0 0
        %7372 = vmatpush1.bf16.msra.mxu0 %v5728
        %7373 = vmatprep.subr.bf16.mxu0 0
        %7374 = vmatpush1.bf16.msra.mxu0 %v5729
        %7375 = vmatprep.subr.bf16.mxu0 0
        %7376 = vmatpush1.bf16.msra.mxu0 %v5730
        %7377 = vmatprep.subr.bf16.mxu0 0
        %7378 = vmatpush1.bf16.msra.mxu0 %v5731
        %7379 = vmatprep.subr.bf16.mxu0 0
        %7380 = vmatpush1.bf16.msra.mxu0 %v5732
        %7381 = vmatprep.subr.bf16.mxu0 0
        %7382 = vmatpush1.bf16.msra.mxu0 %v5733
        %7383 = vmatprep.subr.bf16.mxu0 0
        %7384 = vmatpush1.bf16.msra.mxu0 %v5734
        %7385 = vmatprep.subr.bf16.mxu0 0
        %7386 = vmatpush1.bf16.msra.mxu0 %v5735
        %7387 = vmatprep.subr.bf16.mxu0 0
        %7388 = vmatpush1.bf16.msra.mxu0 %v5736
        %7389 = vmatprep.subr.bf16.mxu0 0
        %7390 = vmatpush1.bf16.msra.mxu0 %v5737
        %7391 = vmatprep.subr.bf16.mxu0 0
        %7392 = vmatpush1.bf16.msra.mxu0 %v5738
        %7393 = vmatprep.subr.bf16.mxu0 0
        %7394 = vmatpush1.bf16.msra.mxu0 %v5739
        %7395 = vmatprep.subr.bf16.mxu0 0
        %7396 = vmatpush1.bf16.msra.mxu0 %v5740
        %7397 = vmatprep.mubr.bf16.mxu0 %v1881
        %7398 = vmatmul.mubr.bf16.gmra.mrb[0].mxu0 %v1879
        %v7399 = vpop.f32.mrb[0].mxu0
        %v7400 = vadd.f32 %v7360, %v7399
        %v7401 = vpop.f32.mrb[0].mxu0
        %v7402 = vpop.f32.mrb[0].mxu0
        %v7403 = vpop.f32.mrb[0].mxu0
        %7404 = vdwg.mxu0
        %7405 = vmatprep.subr.bf16.mxu0 0
        %7406 = vmatpush1.bf16.msra.mxu0 %v5741
        %7407 = vmatprep.subr.bf16.mxu0 0
        %7408 = vmatpush1.bf16.msra.mxu0 %v5742
        %7409 = vmatprep.subr.bf16.mxu0 0
        %7410 = vmatpush1.bf16.msra.mxu0 %v5743
        %7411 = vmatprep.subr.bf16.mxu0 0
        %7412 = vmatpush1.bf16.msra.mxu0 %v5744
        %7413 = vmatprep.subr.bf16.mxu0 0
        %7414 = vmatpush1.bf16.msra.mxu0 %v5745
        %7415 = vmatprep.subr.bf16.mxu0 0
        %7416 = vmatpush1.bf16.msra.mxu0 %v5746
        %7417 = vmatprep.subr.bf16.mxu0 0
        %7418 = vmatpush1.bf16.msra.mxu0 %v5747
        %7419 = vmatprep.subr.bf16.mxu0 0
        %7420 = vmatpush1.bf16.msra.mxu0 %v5748
        %7421 = vmatprep.subr.bf16.mxu0 0
        %7422 = vmatpush1.bf16.msra.mxu0 %v5749
        %7423 = vmatprep.subr.bf16.mxu0 0
        %7424 = vmatpush1.bf16.msra.mxu0 %v5750
        %7425 = vmatprep.subr.bf16.mxu0 0
        %7426 = vmatpush1.bf16.msra.mxu0 %v5751
        %7427 = vmatprep.subr.bf16.mxu0 0
        %7428 = vmatpush1.bf16.msra.mxu0 %v5752
        %7429 = vmatprep.subr.bf16.mxu0 0
        %7430 = vmatpush1.bf16.msra.mxu0 %v5753
        %7431 = vmatprep.subr.bf16.mxu0 0
        %7432 = vmatpush1.bf16.msra.mxu0 %v5754
        %7433 = vmatprep.subr.bf16.mxu0 0
        %7434 = vmatpush1.bf16.msra.mxu0 %v5755
        %7435 = vmatprep.subr.bf16.mxu0 0
        %7436 = vmatpush1.bf16.msra.mxu0 %v5756
        %7437 = vmatprep.mubr.bf16.mxu0 %v1919
        %7438 = vmatmul.mubr.bf16.gmra.mrb[0].mxu0 %v1905
        %v7439 = vpop.f32.mrb[0].mxu0
        %v7440 = vadd.f32 %v7400, %v7439
        %v7441 = vpop.f32.mrb[0].mxu0
        %v7442 = vpop.f32.mrb[0].mxu0
        %v7443 = vpop.f32.mrb[0].mxu0
        %7444 = vdwg.mxu0
        %7445 = vmatprep.subr.bf16.mxu0 0
        %7446 = vmatpush1.bf16.msra.mxu0 %v5757
        %7447 = vmatprep.subr.bf16.mxu0 0
        %7448 = vmatpush1.bf16.msra.mxu0 %v5758
        %7449 = vmatprep.subr.bf16.mxu0 0
        %7450 = vmatpush1.bf16.msra.mxu0 %v5759
        %7451 = vmatprep.subr.bf16.mxu0 0
        %7452 = vmatpush1.bf16.msra.mxu0 %v5760
        %7453 = vmatprep.subr.bf16.mxu0 0
        %7454 = vmatpush1.bf16.msra.mxu0 %v5761
        %7455 = vmatprep.subr.bf16.mxu0 0
        %7456 = vmatpush1.bf16.msra.mxu0 %v5762
        %7457 = vmatprep.subr.bf16.mxu0 0
        %7458 = vmatpush1.bf16.msra.mxu0 %v5763
        %7459 = vmatprep.subr.bf16.mxu0 0
        %7460 = vmatpush1.bf16.msra.mxu0 %v5764
        %7461 = vmatprep.subr.bf16.mxu0 0
        %7462 = vmatpush1.bf16.msra.mxu0 %v5765
        %7463 = vmatprep.subr.bf16.mxu0 0
        %7464 = vmatpush1.bf16.msra.mxu0 %v5766
        %7465 = vmatprep.subr.bf16.mxu0 0
        %7466 = vmatpush1.bf16.msra.mxu0 %v5767
        %7467 = vmatprep.subr.bf16.mxu0 0
        %7468 = vmatpush1.bf16.msra.mxu0 %v5768
        %7469 = vmatprep.subr.bf16.mxu0 0
        %7470 = vmatpush1.bf16.msra.mxu0 %v5769
        %7471 = vmatprep.subr.bf16.mxu0 0
        %7472 = vmatpush1.bf16.msra.mxu0 %v5770
        %7473 = vmatprep.subr.bf16.mxu0 0
        %7474 = vmatpush1.bf16.msra.mxu0 %v5771
        %7475 = vmatprep.subr.bf16.mxu0 0
        %7476 = vmatpush1.bf16.msra.mxu0 %v5772
        %7477 = vmatprep.mubr.bf16.mxu0 %v1929
        %7478 = vmatmul.mubr.bf16.gmra.mrb[0].mxu0 %v1927
        %v7479 = vpop.f32.mrb[0].mxu0
        %v7480 = vadd.f32 %v7440, %v7479
        %v7481 = vpop.f32.mrb[0].mxu0
        %v7482 = vpop.f32.mrb[0].mxu0
        %v7483 = vpop.f32.mrb[0].mxu0
        %7484 = vdwg.mxu0
        %7485 = vmatprep.subr.bf16.mxu0 0
        %7486 = vmatpush1.bf16.msra.mxu0 %v5773
        %7487 = vmatprep.subr.bf16.mxu0 0
        %7488 = vmatpush1.bf16.msra.mxu0 %v5774
        %7489 = vmatprep.subr.bf16.mxu0 0
        %7490 = vmatpush1.bf16.msra.mxu0 %v5775
        %7491 = vmatprep.subr.bf16.mxu0 0
        %7492 = vmatpush1.bf16.msra.mxu0 %v5776
        %7493 = vmatprep.subr.bf16.mxu0 0
        %7494 = vmatpush1.bf16.msra.mxu0 %v5777
        %7495 = vmatprep.subr.bf16.mxu0 0
        %7496 = vmatpush1.bf16.msra.mxu0 %v5778
        %7497 = vmatprep.subr.bf16.mxu0 0
        %7498 = vmatpush1.bf16.msra.mxu0 %v5779
        %7499 = vmatprep.subr.bf16.mxu0 0
        %7500 = vmatpush1.bf16.msra.mxu0 %v5780
        %7501 = vmatprep.subr.bf16.mxu0 0
        %7502 = vmatpush1.bf16.msra.mxu0 %v5781
        %7503 = vmatprep.subr.bf16.mxu0 0
        %7504 = vmatpush1.bf16.msra.mxu0 %v5782
        %7505 = vmatprep.subr.bf16.mxu0 0
        %7506 = vmatpush1.bf16.msra.mxu0 %v5783
        %7507 = vmatprep.subr.bf16.mxu0 0
        %7508 = vmatpush1.bf16.msra.mxu0 %v5784
        %7509 = vmatprep.subr.bf16.mxu0 0
        %7510 = vmatpush1.bf16.msra.mxu0 %v5785
        %7511 = vmatprep.subr.bf16.mxu0 0
        %7512 = vmatpush1.bf16.msra.mxu0 %v5786
        %7513 = vmatprep.subr.bf16.mxu0 0
        %7514 = vmatpush1.bf16.msra.mxu0 %v5787
        %7515 = vmatprep.subr.bf16.mxu0 0
        %7516 = vmatpush1.bf16.msra.mxu0 %v5788
        %7517 = vmatprep.mubr.bf16.mxu0 %v1926
        %7518 = vmatmul.mubr.bf16.gmra.mrb[0].mxu0 %v1912
        %v7519 = vpop.f32.mrb[0].mxu0
        %v7520 = vadd.f32 %v7480, %v7519
        %v7521 = vpop.f32.mrb[0].mxu0
        %v7522 = vpop.f32.mrb[0].mxu0
        %v7523 = vpop.f32.mrb[0].mxu0
        %7524 = vdwg.mxu0
        %7525 = vmatprep.subr.bf16.mxu0 0
        %7526 = vmatpush1.bf16.msra.mxu0 %v5789
        %7527 = vmatprep.subr.bf16.mxu0 0
        %7528 = vmatpush1.bf16.msra.mxu0 %v5790
        %7529 = vmatprep.subr.bf16.mxu0 0
        %7530 = vmatpush1.bf16.msra.mxu0 %v5791
        %7531 = vmatprep.subr.bf16.mxu0 0
        %7532 = vmatpush1.bf16.msra.mxu0 %v5792
        %7533 = vmatprep.subr.bf16.mxu0 0
        %7534 = vmatpush1.bf16.msra.mxu0 %v5793
        %7535 = vmatprep.subr.bf16.mxu0 0
        %7536 = vmatpush1.bf16.msra.mxu0 %v5794
        %7537 = vmatprep.subr.bf16.mxu0 0
        %7538 = vmatpush1.bf16.msra.mxu0 %v5795
        %7539 = vmatprep.subr.bf16.mxu0 0
        %7540 = vmatpush1.bf16.msra.mxu0 %v5796
        %7541 = vmatprep.subr.bf16.mxu0 0
        %7542 = vmatpush1.bf16.msra.mxu0 %v5797
        %7543 = vmatprep.subr.bf16.mxu0 0
        %7544 = vmatpush1.bf16.msra.mxu0 %v5798
        %7545 = vmatprep.subr.bf16.mxu0 0
        %7546 = vmatpush1.bf16.msra.mxu0 %v5799
        %7547 = vmatprep.subr.bf16.mxu0 0
        %7548 = vmatpush1.bf16.msra.mxu0 %v5800
        %7549 = vmatprep.subr.bf16.mxu0 0
        %7550 = vmatpush1.bf16.msra.mxu0 %v5801
        %7551 = vmatprep.subr.bf16.mxu0 0
        %7552 = vmatpush1.bf16.msra.mxu0 %v5802
        %7553 = vmatprep.subr.bf16.mxu0 0
        %7554 = vmatpush1.bf16.msra.mxu0 %v5803
        %7555 = vmatprep.subr.bf16.mxu0 0
        %7556 = vmatpush1.bf16.msra.mxu0 %v5804
        %7557 = vmatprep.mubr.bf16.mxu0 %v1930
        %7558 = vmatmul.mubr.bf16.gmra.mrb[0].mxu0 %v1928
        %v7559 = vpop.f32.mrb[0].mxu0
        %v7560 = vadd.f32 %v7520, %v7559
        %v7561 = vpop.f32.mrb[0].mxu0
        %v7562 = vpop.f32.mrb[0].mxu0
        %v7563 = vpop.f32.mrb[0].mxu0
        %7564 = vdwg.mxu0
        %7565 = vmatprep.subr.bf16.mxu0 0
        %7566 = vmatpush1.bf16.msra.mxu0 %v5805
        %7567 = vmatprep.subr.bf16.mxu0 0
        %7568 = vmatpush1.bf16.msra.mxu0 %v5806
        %7569 = vmatprep.subr.bf16.mxu0 0
        %7570 = vmatpush1.bf16.msra.mxu0 %v5807
        %7571 = vmatprep.subr.bf16.mxu0 0
        %7572 = vmatpush1.bf16.msra.mxu0 %v5808
        %7573 = vmatprep.subr.bf16.mxu0 0
        %7574 = vmatpush1.bf16.msra.mxu0 %v5809
        %7575 = vmatprep.subr.bf16.mxu0 0
        %7576 = vmatpush1.bf16.msra.mxu0 %v5810
        %7577 = vmatprep.subr.bf16.mxu0 0
        %7578 = vmatpush1.bf16.msra.mxu0 %v5811
        %7579 = vmatprep.subr.bf16.mxu0 0
        %7580 = vmatpush1.bf16.msra.mxu0 %v5812
        %7581 = vmatprep.subr.bf16.mxu0 0
        %7582 = vmatpush1.bf16.msra.mxu0 %v5813
        %7583 = vmatprep.subr.bf16.mxu0 0
        %7584 = vmatpush1.bf16.msra.mxu0 %v5814
        %7585 = vmatprep.subr.bf16.mxu0 0
        %7586 = vmatpush1.bf16.msra.mxu0 %v5815
        %7587 = vmatprep.subr.bf16.mxu0 0
        %7588 = vmatpush1.bf16.msra.mxu0 %v5816
        %7589 = vmatprep.subr.bf16.mxu0 0
        %7590 = vmatpush1.bf16.msra.mxu0 %v5817
        %7591 = vmatprep.subr.bf16.mxu0 0
        %7592 = vmatpush1.bf16.msra.mxu0 %v5818
        %7593 = vmatprep.subr.bf16.mxu0 0
        %7594 = vmatpush1.bf16.msra.mxu0 %v5819
        %7595 = vmatprep.subr.bf16.mxu0 0
        %7596 = vmatpush1.bf16.msra.mxu0 %v5820
        %7597 = vmatprep.mubr.bf16.mxu0 %v1968
        %7598 = vmatmul.mubr.bf16.gmra.mrb[0].mxu0 %v1954
        %v7599 = vpop.f32.mrb[0].mxu0
        %v7600 = vadd.f32 %v7560, %v7599
        %v7601 = vpop.f32.mrb[0].mxu0
        %v7602 = vpop.f32.mrb[0].mxu0
        %v7603 = vpop.f32.mrb[0].mxu0
        %7604 = vdwg.mxu0
        %7605 = vmatprep.subr.bf16.mxu0 0
        %7606 = vmatpush1.bf16.msra.mxu0 %v5821
        %7607 = vmatprep.subr.bf16.mxu0 0
        %7608 = vmatpush1.bf16.msra.mxu0 %v5822
        %7609 = vmatprep.subr.bf16.mxu0 0
        %7610 = vmatpush1.bf16.msra.mxu0 %v5823
        %7611 = vmatprep.subr.bf16.mxu0 0
        %7612 = vmatpush1.bf16.msra.mxu0 %v5824
        %7613 = vmatprep.subr.bf16.mxu0 0
        %7614 = vmatpush1.bf16.msra.mxu0 %v5825
        %7615 = vmatprep.subr.bf16.mxu0 0
        %7616 = vmatpush1.bf16.msra.mxu0 %v5826
        %7617 = vmatprep.subr.bf16.mxu0 0
        %7618 = vmatpush1.bf16.msra.mxu0 %v5827
        %7619 = vmatprep.subr.bf16.mxu0 0
        %7620 = vmatpush1.bf16.msra.mxu0 %v5828
        %7621 = vmatprep.subr.bf16.mxu0 0
        %7622 = vmatpush1.bf16.msra.mxu0 %v5829
        %7623 = vmatprep.subr.bf16.mxu0 0
        %7624 = vmatpush1.bf16.msra.mxu0 %v5830
        %7625 = vmatprep.subr.bf16.mxu0 0
        %7626 = vmatpush1.bf16.msra.mxu0 %v5831
        %7627 = vmatprep.subr.bf16.mxu0 0
        %7628 = vmatpush1.bf16.msra.mxu0 %v5832
        %7629 = vmatprep.subr.bf16.mxu0 0
        %7630 = vmatpush1.bf16.msra.mxu0 %v5833
        %7631 = vmatprep.subr.bf16.mxu0 0
        %7632 = vmatpush1.bf16.msra.mxu0 %v5834
        %7633 = vmatprep.subr.bf16.mxu0 0
        %7634 = vmatpush1.bf16.msra.mxu0 %v5835
        %7635 = vmatprep.subr.bf16.mxu0 0
        %7636 = vmatpush1.bf16.msra.mxu0 %v5836
        %7637 = vmatprep.mubr.bf16.mxu0 %v1978
        %7638 = vmatmul.mubr.bf16.gmra.mrb[0].mxu0 %v1976
        %v7639 = vpop.f32.mrb[0].mxu0
        %v7640 = vadd.f32 %v7600, %v7639
        %v7641 = vpop.f32.mrb[0].mxu0
        %v7642 = vpop.f32.mrb[0].mxu0
        %v7643 = vpop.f32.mrb[0].mxu0
        %7644 = vdwg.mxu0
        %7645 = vmatprep.subr.bf16.mxu0 0
        %7646 = vmatpush1.bf16.msra.mxu0 %v5837
        %7647 = vmatprep.subr.bf16.mxu0 0
        %7648 = vmatpush1.bf16.msra.mxu0 %v5838
        %7649 = vmatprep.subr.bf16.mxu0 0
        %7650 = vmatpush1.bf16.msra.mxu0 %v5839
        %7651 = vmatprep.subr.bf16.mxu0 0
        %7652 = vmatpush1.bf16.msra.mxu0 %v5840
        %7653 = vmatprep.subr.bf16.mxu0 0
        %7654 = vmatpush1.bf16.msra.mxu0 %v5841
        %7655 = vmatprep.subr.bf16.mxu0 0
        %7656 = vmatpush1.bf16.msra.mxu0 %v5842
        %7657 = vmatprep.subr.bf16.mxu0 0
        %7658 = vmatpush1.bf16.msra.mxu0 %v5843
        %7659 = vmatprep.subr.bf16.mxu0 0
        %7660 = vmatpush1.bf16.msra.mxu0 %v5844
        %7661 = vmatprep.subr.bf16.mxu0 0
        %7662 = vmatpush1.bf16.msra.mxu0 %v5845
        %7663 = vmatprep.subr.bf16.mxu0 0
        %7664 = vmatpush1.bf16.msra.mxu0 %v5846
        %7665 = vmatprep.subr.bf16.mxu0 0
        %7666 = vmatpush1.bf16.msra.mxu0 %v5847
        %7667 = vmatprep.subr.bf16.mxu0 0
        %7668 = vmatpush1.bf16.msra.mxu0 %v5848
        %7669 = vmatprep.subr.bf16.mxu0 0
        %7670 = vmatpush1.bf16.msra.mxu0 %v5849
        %7671 = vmatprep.subr.bf16.mxu0 0
        %7672 = vmatpush1.bf16.msra.mxu0 %v5850
        %7673 = vmatprep.subr.bf16.mxu0 0
        %7674 = vmatpush1.bf16.msra.mxu0 %v5851
        %7675 = vmatprep.subr.bf16.mxu0 0
        %7676 = vmatpush1.bf16.msra.mxu0 %v5852
        %7677 = vmatprep.mubr.bf16.mxu0 %v1975
        %7678 = vmatmul.mubr.bf16.gmra.mrb[0].mxu0 %v1961
        %v7679 = vpop.f32.mrb[0].mxu0
        %v7680 = vadd.f32 %v7640, %v7679
        %v7681 = vpop.f32.mrb[0].mxu0
        %v7682 = vpop.f32.mrb[0].mxu0
        %v7683 = vpop.f32.mrb[0].mxu0
        %7684 = vdwg.mxu0
        %7685 = vmatprep.subr.bf16.mxu0 0
        %7686 = vmatpush1.bf16.msra.mxu0 %v5853
        %7687 = vmatprep.subr.bf16.mxu0 0
        %7688 = vmatpush1.bf16.msra.mxu0 %v5854
        %7689 = vmatprep.subr.bf16.mxu0 0
        %7690 = vmatpush1.bf16.msra.mxu0 %v5855
        %7691 = vmatprep.subr.bf16.mxu0 0
        %7692 = vmatpush1.bf16.msra.mxu0 %v5856
        %7693 = vmatprep.subr.bf16.mxu0 0
        %7694 = vmatpush1.bf16.msra.mxu0 %v5857
        %7695 = vmatprep.subr.bf16.mxu0 0
        %7696 = vmatpush1.bf16.msra.mxu0 %v5858
        %7697 = vmatprep.subr.bf16.mxu0 0
        %7698 = vmatpush1.bf16.msra.mxu0 %v5859
        %7699 = vmatprep.subr.bf16.mxu0 0
        %7700 = vmatpush1.bf16.msra.mxu0 %v5860
        %7701 = vmatprep.subr.bf16.mxu0 0
        %7702 = vmatpush1.bf16.msra.mxu0 %v5861
        %7703 = vmatprep.subr.bf16.mxu0 0
        %7704 = vmatpush1.bf16.msra.mxu0 %v5862
        %7705 = vmatprep.subr.bf16.mxu0 0
        %7706 = vmatpush1.bf16.msra.mxu0 %v5863
        %7707 = vmatprep.subr.bf16.mxu0 0
        %7708 = vmatpush1.bf16.msra.mxu0 %v5864
        %7709 = vmatprep.subr.bf16.mxu0 0
        %7710 = vmatpush1.bf16.msra.mxu0 %v5865
        %7711 = vmatprep.subr.bf16.mxu0 0
        %7712 = vmatpush1.bf16.msra.mxu0 %v5866
        %7713 = vmatprep.subr.bf16.mxu0 0
        %7714 = vmatpush1.bf16.msra.mxu0 %v5867
        %7715 = vmatprep.subr.bf16.mxu0 0
        %7716 = vmatpush1.bf16.msra.mxu0 %v5868
        %7717 = vmatprep.mubr.bf16.mxu0 %v1979
        %7718 = vmatmul.mubr.bf16.gmra.mrb[0].mxu0 %v1977
        %v7719 = vpop.f32.mrb[0].mxu0
        %v7720 = vadd.f32 %v7680, %v7719
        %v7721 = vpop.f32.mrb[0].mxu0
        %v7722 = vpop.f32.mrb[0].mxu0
        %v7723 = vpop.f32.mrb[0].mxu0
        %7724 = vdwg.mxu0
        %7725 = vmatprep.subr.bf16.mxu0 0
        %7726 = vmatpush1.bf16.msra.mxu0 %v5869
        %7727 = vmatprep.subr.bf16.mxu0 0
        %7728 = vmatpush1.bf16.msra.mxu0 %v5870
        %7729 = vmatprep.subr.bf16.mxu0 0
        %7730 = vmatpush1.bf16.msra.mxu0 %v5871
        %7731 = vmatprep.subr.bf16.mxu0 0
        %7732 = vmatpush1.bf16.msra.mxu0 %v5872
        %7733 = vmatprep.subr.bf16.mxu0 0
        %7734 = vmatpush1.bf16.msra.mxu0 %v5873
        %7735 = vmatprep.subr.bf16.mxu0 0
        %7736 = vmatpush1.bf16.msra.mxu0 %v5874
        %7737 = vmatprep.subr.bf16.mxu0 0
        %7738 = vmatpush1.bf16.msra.mxu0 %v5875
        %7739 = vmatprep.subr.bf16.mxu0 0
        %7740 = vmatpush1.bf16.msra.mxu0 %v5876
        %7741 = vmatprep.subr.bf16.mxu0 0
        %7742 = vmatpush1.bf16.msra.mxu0 %v5877
        %7743 = vmatprep.subr.bf16.mxu0 0
        %7744 = vmatpush1.bf16.msra.mxu0 %v5878
        %7745 = vmatprep.subr.bf16.mxu0 0
        %7746 = vmatpush1.bf16.msra.mxu0 %v5879
        %7747 = vmatprep.subr.bf16.mxu0 0
        %7748 = vmatpush1.bf16.msra.mxu0 %v5880
        %7749 = vmatprep.subr.bf16.mxu0 0
        %7750 = vmatpush1.bf16.msra.mxu0 %v5881
        %7751 = vmatprep.subr.bf16.mxu0 0
        %7752 = vmatpush1.bf16.msra.mxu0 %v5882
        %7753 = vmatprep.subr.bf16.mxu0 0
        %7754 = vmatpush1.bf16.msra.mxu0 %v5883
        %7755 = vmatprep.subr.bf16.mxu0 0
        %7756 = vmatpush1.bf16.msra.mxu0 %v5884
        %7757 = vmatprep.mubr.bf16.mxu0 %v2017
        %7758 = vmatmul.mubr.bf16.gmra.mrb[0].mxu0 %v2003
        %v7759 = vpop.f32.mrb[0].mxu0
        %v7760 = vadd.f32 %v7720, %v7759
        %v7761 = vpop.f32.mrb[0].mxu0
        %v7762 = vpop.f32.mrb[0].mxu0
        %v7763 = vpop.f32.mrb[0].mxu0
        %7764 = vdwg.mxu0
        %7765 = vmatprep.subr.bf16.mxu0 0
        %7766 = vmatpush1.bf16.msra.mxu0 %v5885
        %7767 = vmatprep.subr.bf16.mxu0 0
        %7768 = vmatpush1.bf16.msra.mxu0 %v5886
        %7769 = vmatprep.subr.bf16.mxu0 0
        %7770 = vmatpush1.bf16.msra.mxu0 %v5887
        %7771 = vmatprep.subr.bf16.mxu0 0
        %7772 = vmatpush1.bf16.msra.mxu0 %v5888
        %7773 = vmatprep.subr.bf16.mxu0 0
        %7774 = vmatpush1.bf16.msra.mxu0 %v5889
        %7775 = vmatprep.subr.bf16.mxu0 0
        %7776 = vmatpush1.bf16.msra.mxu0 %v5890
        %7777 = vmatprep.subr.bf16.mxu0 0
        %7778 = vmatpush1.bf16.msra.mxu0 %v5891
        %7779 = vmatprep.subr.bf16.mxu0 0
        %7780 = vmatpush1.bf16.msra.mxu0 %v5892
        %7781 = vmatprep.subr.bf16.mxu0 0
        %7782 = vmatpush1.bf16.msra.mxu0 %v5893
        %7783 = vmatprep.subr.bf16.mxu0 0
        %7784 = vmatpush1.bf16.msra.mxu0 %v5894
        %7785 = vmatprep.subr.bf16.mxu0 0
        %7786 = vmatpush1.bf16.msra.mxu0 %v5895
        %7787 = vmatprep.subr.bf16.mxu0 0
        %7788 = vmatpush1.bf16.msra.mxu0 %v5896
        %7789 = vmatprep.subr.bf16.mxu0 0
        %7790 = vmatpush1.bf16.msra.mxu0 %v5897
        %7791 = vmatprep.subr.bf16.mxu0 0
        %7792 = vmatpush1.bf16.msra.mxu0 %v5898
        %7793 = vmatprep.subr.bf16.mxu0 0
        %7794 = vmatpush1.bf16.msra.mxu0 %v5899
        %7795 = vmatprep.subr.bf16.mxu0 0
        %7796 = vmatpush1.bf16.msra.mxu0 %v5900
        %7797 = vmatprep.mubr.bf16.mxu0 %v2027
        %7798 = vmatmul.mubr.bf16.gmra.mrb[0].mxu0 %v2025
        %v7799 = vpop.f32.mrb[0].mxu0
        %v7800 = vadd.f32 %v7760, %v7799
        %v7801 = vpop.f32.mrb[0].mxu0
        %v7802 = vpop.f32.mrb[0].mxu0
        %v7803 = vpop.f32.mrb[0].mxu0
        %7804 = vdwg.mxu0
        %7805 = vmatprep.subr.bf16.mxu0 0
        %7806 = vmatpush1.bf16.msra.mxu0 %v5901
        %7807 = vmatprep.subr.bf16.mxu0 0
        %7808 = vmatpush1.bf16.msra.mxu0 %v5902
        %7809 = vmatprep.subr.bf16.mxu0 0
        %7810 = vmatpush1.bf16.msra.mxu0 %v5903
        %7811 = vmatprep.subr.bf16.mxu0 0
        %7812 = vmatpush1.bf16.msra.mxu0 %v5904
        %7813 = vmatprep.subr.bf16.mxu0 0
        %7814 = vmatpush1.bf16.msra.mxu0 %v5905
        %7815 = vmatprep.subr.bf16.mxu0 0
        %7816 = vmatpush1.bf16.msra.mxu0 %v5906
        %7817 = vmatprep.subr.bf16.mxu0 0
        %7818 = vmatpush1.bf16.msra.mxu0 %v5907
        %7819 = vmatprep.subr.bf16.mxu0 0
        %7820 = vmatpush1.bf16.msra.mxu0 %v5908
        %7821 = vmatprep.subr.bf16.mxu0 0
        %7822 = vmatpush1.bf16.msra.mxu0 %v5909
        %7823 = vmatprep.subr.bf16.mxu0 0
        %7824 = vmatpush1.bf16.msra.mxu0 %v5910
        %7825 = vmatprep.subr.bf16.mxu0 0
        %7826 = vmatpush1.bf16.msra.mxu0 %v5911
        %7827 = vmatprep.subr.bf16.mxu0 0
        %7828 = vmatpush1.bf16.msra.mxu0 %v5912
        %7829 = vmatprep.subr.bf16.mxu0 0
        %7830 = vmatpush1.bf16.msra.mxu0 %v5913
        %7831 = vmatprep.subr.bf16.mxu0 0
        %7832 = vmatpush1.bf16.msra.mxu0 %v5914
        %7833 = vmatprep.subr.bf16.mxu0 0
        %7834 = vmatpush1.bf16.msra.mxu0 %v5915
        %7835 = vmatprep.subr.bf16.mxu0 0
        %7836 = vmatpush1.bf16.msra.mxu0 %v5916
        %7837 = vmatprep.mubr.bf16.mxu0 %v2024
        %7838 = vmatmul.mubr.bf16.gmra.mrb[0].mxu0 %v2010
        %v7839 = vpop.f32.mrb[0].mxu0
        %v7840 = vadd.f32 %v7800, %v7839
        %v7841 = vpop.f32.mrb[0].mxu0
        %v7842 = vpop.f32.mrb[0].mxu0
        %v7843 = vpop.f32.mrb[0].mxu0
        %7844 = vdwg.mxu0
        %7845 = vmatprep.subr.bf16.mxu0 0
        %7846 = vmatpush1.bf16.msra.mxu0 %v5917
        %7847 = vmatprep.subr.bf16.mxu0 0
        %7848 = vmatpush1.bf16.msra.mxu0 %v5918
        %7849 = vmatprep.subr.bf16.mxu0 0
        %7850 = vmatpush1.bf16.msra.mxu0 %v5919
        %7851 = vmatprep.subr.bf16.mxu0 0
        %7852 = vmatpush1.bf16.msra.mxu0 %v5920
        %7853 = vmatprep.subr.bf16.mxu0 0
        %7854 = vmatpush1.bf16.msra.mxu0 %v5921
        %7855 = vmatprep.subr.bf16.mxu0 0
        %7856 = vmatpush1.bf16.msra.mxu0 %v5922
        %7857 = vmatprep.subr.bf16.mxu0 0
        %7858 = vmatpush1.bf16.msra.mxu0 %v5923
        %7859 = vmatprep.subr.bf16.mxu0 0
        %7860 = vmatpush1.bf16.msra.mxu0 %v5924
        %7861 = vmatprep.subr.bf16.mxu0 0
        %7862 = vmatpush1.bf16.msra.mxu0 %v5925
        %7863 = vmatprep.subr.bf16.mxu0 0
        %7864 = vmatpush1.bf16.msra.mxu0 %v5926
        %7865 = vmatprep.subr.bf16.mxu0 0
        %7866 = vmatpush1.bf16.msra.mxu0 %v5927
        %7867 = vmatprep.subr.bf16.mxu0 0
        %7868 = vmatpush1.bf16.msra.mxu0 %v5928
        %7869 = vmatprep.subr.bf16.mxu0 0
        %7870 = vmatpush1.bf16.msra.mxu0 %v5929
        %7871 = vmatprep.subr.bf16.mxu0 0
        %7872 = vmatpush1.bf16.msra.mxu0 %v5930
        %7873 = vmatprep.subr.bf16.mxu0 0
        %7874 = vmatpush1.bf16.msra.mxu0 %v5931
        %7875 = vmatprep.subr.bf16.mxu0 0
        %7876 = vmatpush1.bf16.msra.mxu0 %v5932
        %7877 = vmatprep.mubr.bf16.mxu0 %v2028
        %7878 = vmatmul.mubr.bf16.gmra.mrb[0].mxu0 %v2026
        %v7879 = vpop.f32.mrb[0].mxu0
        %v7880 = vadd.f32 %v7840, %v7879
        %v7881 = vpop.f32.mrb[0].mxu0
        %v7882 = vpop.f32.mrb[0].mxu0
        %v7883 = vpop.f32.mrb[0].mxu0
        %7884 = vdwg.mxu0
        %7885 = vmatprep.subr.bf16.mxu0 0
        %7886 = vmatpush1.bf16.msra.mxu0 %v5933
        %7887 = vmatprep.subr.bf16.mxu0 0
        %7888 = vmatpush1.bf16.msra.mxu0 %v5934
        %7889 = vmatprep.subr.bf16.mxu0 0
        %7890 = vmatpush1.bf16.msra.mxu0 %v5935
        %7891 = vmatprep.subr.bf16.mxu0 0
        %7892 = vmatpush1.bf16.msra.mxu0 %v5936
        %7893 = vmatprep.subr.bf16.mxu0 0
        %7894 = vmatpush1.bf16.msra.mxu0 %v5937
        %7895 = vmatprep.subr.bf16.mxu0 0
        %7896 = vmatpush1.bf16.msra.mxu0 %v5938
        %7897 = vmatprep.subr.bf16.mxu0 0
        %7898 = vmatpush1.bf16.msra.mxu0 %v5939
        %7899 = vmatprep.subr.bf16.mxu0 0
        %7900 = vmatpush1.bf16.msra.mxu0 %v5940
        %7901 = vmatprep.subr.bf16.mxu0 0
        %7902 = vmatpush1.bf16.msra.mxu0 %v5941
        %7903 = vmatprep.subr.bf16.mxu0 0
        %7904 = vmatpush1.bf16.msra.mxu0 %v5942
        %7905 = vmatprep.subr.bf16.mxu0 0
        %7906 = vmatpush1.bf16.msra.mxu0 %v5943
        %7907 = vmatprep.subr.bf16.mxu0 0
        %7908 = vmatpush1.bf16.msra.mxu0 %v5944
        %7909 = vmatprep.subr.bf16.mxu0 0
        %7910 = vmatpush1.bf16.msra.mxu0 %v5945
        %7911 = vmatprep.subr.bf16.mxu0 0
        %7912 = vmatpush1.bf16.msra.mxu0 %v5946
        %7913 = vmatprep.subr.bf16.mxu0 0
        %7914 = vmatpush1.bf16.msra.mxu0 %v5947
        %7915 = vmatprep.subr.bf16.mxu0 0
        %7916 = vmatpush1.bf16.msra.mxu0 %v5948
        %7917 = vmatprep.mubr.bf16.mxu0 %v2066
        %7918 = vmatmul.mubr.bf16.gmra.mrb[0].mxu0 %v2052
        %v7919 = vpop.f32.mrb[0].mxu0
        %v7920 = vadd.f32 %v7880, %v7919
        %v7921 = vpop.f32.mrb[0].mxu0
        %v7922 = vpop.f32.mrb[0].mxu0
        %v7923 = vpop.f32.mrb[0].mxu0
        %7924 = vdwg.mxu0
        %7925 = vmatprep.subr.bf16.mxu0 0
        %7926 = vmatpush1.bf16.msra.mxu0 %v5949
        %7927 = vmatprep.subr.bf16.mxu0 0
        %7928 = vmatpush1.bf16.msra.mxu0 %v5950
        %7929 = vmatprep.subr.bf16.mxu0 0
        %7930 = vmatpush1.bf16.msra.mxu0 %v5951
        %7931 = vmatprep.subr.bf16.mxu0 0
        %7932 = vmatpush1.bf16.msra.mxu0 %v5952
        %7933 = vmatprep.subr.bf16.mxu0 0
        %7934 = vmatpush1.bf16.msra.mxu0 %v5953
        %7935 = vmatprep.subr.bf16.mxu0 0
        %7936 = vmatpush1.bf16.msra.mxu0 %v5954
        %7937 = vmatprep.subr.bf16.mxu0 0
        %7938 = vmatpush1.bf16.msra.mxu0 %v5955
        %7939 = vmatprep.subr.bf16.mxu0 0
        %7940 = vmatpush1.bf16.msra.mxu0 %v5956
        %7941 = vmatprep.subr.bf16.mxu0 0
        %7942 = vmatpush1.bf16.msra.mxu0 %v5957
        %7943 = vmatprep.subr.bf16.mxu0 0
        %7944 = vmatpush1.bf16.msra.mxu0 %v5958
        %7945 = vmatprep.subr.bf16.mxu0 0
        %7946 = vmatpush1.bf16.msra.mxu0 %v5959
        %7947 = vmatprep.subr.bf16.mxu0 0
        %7948 = vmatpush1.bf16.msra.mxu0 %v5960
        %7949 = vmatprep.subr.bf16.mxu0 0
        %7950 = vmatpush1.bf16.msra.mxu0 %v5961
        %7951 = vmatprep.subr.bf16.mxu0 0
        %7952 = vmatpush1.bf16.msra.mxu0 %v5962
        %7953 = vmatprep.subr.bf16.mxu0 0
        %7954 = vmatpush1.bf16.msra.mxu0 %v5963
        %7955 = vmatprep.subr.bf16.mxu0 0
        %7956 = vmatpush1.bf16.msra.mxu0 %v5964
        %7957 = vmatprep.mubr.bf16.mxu0 %v2076
        %7958 = vmatmul.mubr.bf16.gmra.mrb[0].mxu0 %v2074
        %v7959 = vpop.f32.mrb[0].mxu0
        %v7960 = vadd.f32 %v7920, %v7959
        %v7961 = vpop.f32.mrb[0].mxu0
        %v7962 = vpop.f32.mrb[0].mxu0
        %v7963 = vpop.f32.mrb[0].mxu0
        %7964 = vdwg.mxu0
        %7965 = vmatprep.subr.bf16.mxu0 0
        %7966 = vmatpush1.bf16.msra.mxu0 %v5965
        %7967 = vmatprep.subr.bf16.mxu0 0
        %7968 = vmatpush1.bf16.msra.mxu0 %v5966
        %7969 = vmatprep.subr.bf16.mxu0 0
        %7970 = vmatpush1.bf16.msra.mxu0 %v5967
        %7971 = vmatprep.subr.bf16.mxu0 0
        %7972 = vmatpush1.bf16.msra.mxu0 %v5968
        %7973 = vmatprep.subr.bf16.mxu0 0
        %7974 = vmatpush1.bf16.msra.mxu0 %v5969
        %7975 = vmatprep.subr.bf16.mxu0 0
        %7976 = vmatpush1.bf16.msra.mxu0 %v5970
        %7977 = vmatprep.subr.bf16.mxu0 0
        %7978 = vmatpush1.bf16.msra.mxu0 %v5971
        %7979 = vmatprep.subr.bf16.mxu0 0
        %7980 = vmatpush1.bf16.msra.mxu0 %v5972
        %7981 = vmatprep.subr.bf16.mxu0 0
        %7982 = vmatpush1.bf16.msra.mxu0 %v5973
        %7983 = vmatprep.subr.bf16.mxu0 0
        %7984 = vmatpush1.bf16.msra.mxu0 %v5974
        %7985 = vmatprep.subr.bf16.mxu0 0
        %7986 = vmatpush1.bf16.msra.mxu0 %v5975
        %7987 = vmatprep.subr.bf16.mxu0 0
        %7988 = vmatpush1.bf16.msra.mxu0 %v5976
        %7989 = vmatprep.subr.bf16.mxu0 0
        %7990 = vmatpush1.bf16.msra.mxu0 %v5977
        %7991 = vmatprep.subr.bf16.mxu0 0
        %7992 = vmatpush1.bf16.msra.mxu0 %v5978
        %7993 = vmatprep.subr.bf16.mxu0 0
        %7994 = vmatpush1.bf16.msra.mxu0 %v5979
        %7995 = vmatprep.subr.bf16.mxu0 0
        %7996 = vmatpush1.bf16.msra.mxu0 %v5980
        %7997 = vmatprep.mubr.bf16.mxu0 %v2073
        %7998 = vmatmul.mubr.bf16.gmra.mrb[0].mxu0 %v2059
        %v7999 = vpop.f32.mrb[0].mxu0
        %v8000 = vadd.f32 %v7960, %v7999
        %v8001 = vpop.f32.mrb[0].mxu0
        %v8002 = vpop.f32.mrb[0].mxu0
        %v8003 = vpop.f32.mrb[0].mxu0
        %8004 = vdwg.mxu0
        %8005 = vmatprep.subr.bf16.mxu0 0
        %8006 = vmatpush1.bf16.msra.mxu0 %v5981
        %8007 = vmatprep.subr.bf16.mxu0 0
        %8008 = vmatpush1.bf16.msra.mxu0 %v5982
        %8009 = vmatprep.subr.bf16.mxu0 0
        %8010 = vmatpush1.bf16.msra.mxu0 %v5983
        %8011 = vmatprep.subr.bf16.mxu0 0
        %8012 = vmatpush1.bf16.msra.mxu0 %v5984
        %8013 = vmatprep.subr.bf16.mxu0 0
        %8014 = vmatpush1.bf16.msra.mxu0 %v5985
        %8015 = vmatprep.subr.bf16.mxu0 0
        %8016 = vmatpush1.bf16.msra.mxu0 %v5986
        %8017 = vmatprep.subr.bf16.mxu0 0
        %8018 = vmatpush1.bf16.msra.mxu0 %v5987
        %8019 = vmatprep.subr.bf16.mxu0 0
        %8020 = vmatpush1.bf16.msra.mxu0 %v5988
        %8021 = vmatprep.subr.bf16.mxu0 0
        %8022 = vmatpush1.bf16.msra.mxu0 %v5989
        %8023 = vmatprep.subr.bf16.mxu0 0
        %8024 = vmatpush1.bf16.msra.mxu0 %v5990
        %8025 = vmatprep.subr.bf16.mxu0 0
        %8026 = vmatpush1.bf16.msra.mxu0 %v5991
        %8027 = vmatprep.subr.bf16.mxu0 0
        %8028 = vmatpush1.bf16.msra.mxu0 %v5992
        %8029 = vmatprep.subr.bf16.mxu0 0
        %8030 = vmatpush1.bf16.msra.mxu0 %v5993
        %8031 = vmatprep.subr.bf16.mxu0 0
        %8032 = vmatpush1.bf16.msra.mxu0 %v5994
        %8033 = vmatprep.subr.bf16.mxu0 0
        %8034 = vmatpush1.bf16.msra.mxu0 %v5995
        %8035 = vmatprep.subr.bf16.mxu0 0
        %8036 = vmatpush1.bf16.msra.mxu0 %v5996
        %8037 = vmatprep.mubr.bf16.mxu0 %v2077
        %8038 = vmatmul.mubr.bf16.gmra.mrb[0].mxu0 %v2075
        %v8039 = vpop.f32.mrb[0].mxu0
        %v8040 = vadd.f32 %v8000, %v8039
        %v8041 = vpop.f32.mrb[0].mxu0
        %v8042 = vpop.f32.mrb[0].mxu0
        %v8043 = vpop.f32.mrb[0].mxu0
        %8044 = vdwg.mxu0
        %8045 = vmatprep.subr.bf16.mxu0 0
        %8046 = vmatpush1.bf16.msra.mxu0 %v5997
        %8047 = vmatprep.subr.bf16.mxu0 0
        %8048 = vmatpush1.bf16.msra.mxu0 %v5998
        %8049 = vmatprep.subr.bf16.mxu0 0
        %8050 = vmatpush1.bf16.msra.mxu0 %v5999
        %8051 = vmatprep.subr.bf16.mxu0 0
        %8052 = vmatpush1.bf16.msra.mxu0 %v6000
        %8053 = vmatprep.subr.bf16.mxu0 0
        %8054 = vmatpush1.bf16.msra.mxu0 %v6001
        %8055 = vmatprep.subr.bf16.mxu0 0
        %8056 = vmatpush1.bf16.msra.mxu0 %v6002
        %8057 = vmatprep.subr.bf16.mxu0 0
        %8058 = vmatpush1.bf16.msra.mxu0 %v6003
        %8059 = vmatprep.subr.bf16.mxu0 0
        %8060 = vmatpush1.bf16.msra.mxu0 %v6004
        %8061 = vmatprep.subr.bf16.mxu0 0
        %8062 = vmatpush1.bf16.msra.mxu0 %v6005
        %8063 = vmatprep.subr.bf16.mxu0 0
        %8064 = vmatpush1.bf16.msra.mxu0 %v6006
        %8065 = vmatprep.subr.bf16.mxu0 0
        %8066 = vmatpush1.bf16.msra.mxu0 %v6007
        %8067 = vmatprep.subr.bf16.mxu0 0
        %8068 = vmatpush1.bf16.msra.mxu0 %v6008
        %8069 = vmatprep.subr.bf16.mxu0 0
        %8070 = vmatpush1.bf16.msra.mxu0 %v6009
        %8071 = vmatprep.subr.bf16.mxu0 0
        %8072 = vmatpush1.bf16.msra.mxu0 %v6010
        %8073 = vmatprep.subr.bf16.mxu0 0
        %8074 = vmatpush1.bf16.msra.mxu0 %v6011
        %8075 = vmatprep.subr.bf16.mxu0 0
        %8076 = vmatpush1.bf16.msra.mxu0 %v6012
        %8077 = vmatprep.mubr.bf16.mxu0 %v2115
        %8078 = vmatmul.mubr.bf16.gmra.mrb[0].mxu0 %v2101
        %v8079 = vpop.f32.mrb[0].mxu0
        %v8080 = vadd.f32 %v8040, %v8079
        %v8081 = vpop.f32.mrb[0].mxu0
        %v8082 = vpop.f32.mrb[0].mxu0
        %v8083 = vpop.f32.mrb[0].mxu0
        %8084 = vdwg.mxu0
        %8085 = vmatprep.subr.bf16.mxu0 0
        %8086 = vmatpush1.bf16.msra.mxu0 %v6013
        %8087 = vmatprep.subr.bf16.mxu0 0
        %8088 = vmatpush1.bf16.msra.mxu0 %v6014
        %8089 = vmatprep.subr.bf16.mxu0 0
        %8090 = vmatpush1.bf16.msra.mxu0 %v6015
        %8091 = vmatprep.subr.bf16.mxu0 0
        %8092 = vmatpush1.bf16.msra.mxu0 %v6016
        %8093 = vmatprep.subr.bf16.mxu0 0
        %8094 = vmatpush1.bf16.msra.mxu0 %v6017
        %8095 = vmatprep.subr.bf16.mxu0 0
        %8096 = vmatpush1.bf16.msra.mxu0 %v6018
        %8097 = vmatprep.subr.bf16.mxu0 0
        %8098 = vmatpush1.bf16.msra.mxu0 %v6019
        %8099 = vmatprep.subr.bf16.mxu0 0
        %8100 = vmatpush1.bf16.msra.mxu0 %v6020
        %8101 = vmatprep.subr.bf16.mxu0 0
        %8102 = vmatpush1.bf16.msra.mxu0 %v6021
        %8103 = vmatprep.subr.bf16.mxu0 0
        %8104 = vmatpush1.bf16.msra.mxu0 %v6022
        %8105 = vmatprep.subr.bf16.mxu0 0
        %8106 = vmatpush1.bf16.msra.mxu0 %v6023
        %8107 = vmatprep.subr.bf16.mxu0 0
        %8108 = vmatpush1.bf16.msra.mxu0 %v6024
        %8109 = vmatprep.subr.bf16.mxu0 0
        %8110 = vmatpush1.bf16.msra.mxu0 %v6025
        %8111 = vmatprep.subr.bf16.mxu0 0
        %8112 = vmatpush1.bf16.msra.mxu0 %v6026
        %8113 = vmatprep.subr.bf16.mxu0 0
        %8114 = vmatpush1.bf16.msra.mxu0 %v6027
        %8115 = vmatprep.subr.bf16.mxu0 0
        %8116 = vmatpush1.bf16.msra.mxu0 %v6028
        %8117 = vmatprep.mubr.bf16.mxu0 %v2125
        %8118 = vmatmul.mubr.bf16.gmra.mrb[0].mxu0 %v2123
        %v8119 = vpop.f32.mrb[0].mxu0
        %v8120 = vadd.f32 %v8080, %v8119
        %v8121 = vpop.f32.mrb[0].mxu0
        %v8122 = vpop.f32.mrb[0].mxu0
        %v8123 = vpop.f32.mrb[0].mxu0
        %8124 = vdwg.mxu0
        %8125 = vmatprep.subr.bf16.mxu0 0
        %8126 = vmatpush1.bf16.msra.mxu0 %v6029
        %8127 = vmatprep.subr.bf16.mxu0 0
        %8128 = vmatpush1.bf16.msra.mxu0 %v6030
        %8129 = vmatprep.subr.bf16.mxu0 0
        %8130 = vmatpush1.bf16.msra.mxu0 %v6031
        %8131 = vmatprep.subr.bf16.mxu0 0
        %8132 = vmatpush1.bf16.msra.mxu0 %v6032
        %8133 = vmatprep.subr.bf16.mxu0 0
        %8134 = vmatpush1.bf16.msra.mxu0 %v6033
        %8135 = vmatprep.subr.bf16.mxu0 0
        %8136 = vmatpush1.bf16.msra.mxu0 %v6034
        %8137 = vmatprep.subr.bf16.mxu0 0
        %8138 = vmatpush1.bf16.msra.mxu0 %v6035
        %8139 = vmatprep.subr.bf16.mxu0 0
        %8140 = vmatpush1.bf16.msra.mxu0 %v6036
        %8141 = vmatprep.subr.bf16.mxu0 0
        %8142 = vmatpush1.bf16.msra.mxu0 %v6037
        %8143 = vmatprep.subr.bf16.mxu0 0
        %8144 = vmatpush1.bf16.msra.mxu0 %v6038
        %8145 = vmatprep.subr.bf16.mxu0 0
        %8146 = vmatpush1.bf16.msra.mxu0 %v6039
        %8147 = vmatprep.subr.bf16.mxu0 0
        %8148 = vmatpush1.bf16.msra.mxu0 %v6040
        %8149 = vmatprep.subr.bf16.mxu0 0
        %8150 = vmatpush1.bf16.msra.mxu0 %v6041
        %8151 = vmatprep.subr.bf16.mxu0 0
        %8152 = vmatpush1.bf16.msra.mxu0 %v6042
        %8153 = vmatprep.subr.bf16.mxu0 0
        %8154 = vmatpush1.bf16.msra.mxu0 %v6043
        %8155 = vmatprep.subr.bf16.mxu0 0
        %8156 = vmatpush1.bf16.msra.mxu0 %v6044
        %8157 = vmatprep.mubr.bf16.mxu0 %v2122
        %8158 = vmatmul.mubr.bf16.gmra.mrb[0].mxu0 %v2108
        %v8159 = vpop.f32.mrb[0].mxu0
        %v8160 = vadd.f32 %v8120, %v8159
        %v8161 = vpop.f32.mrb[0].mxu0
        %v8162 = vpop.f32.mrb[0].mxu0
        %v8163 = vpop.f32.mrb[0].mxu0
        %8164 = vdwg.mxu0
        %8165 = vmatprep.subr.bf16.mxu0 0
        %8166 = vmatpush1.bf16.msra.mxu0 %v6045
        %8167 = vmatprep.subr.bf16.mxu0 0
        %8168 = vmatpush1.bf16.msra.mxu0 %v6046
        %8169 = vmatprep.subr.bf16.mxu0 0
        %8170 = vmatpush1.bf16.msra.mxu0 %v6047
        %8171 = vmatprep.subr.bf16.mxu0 0
        %8172 = vmatpush1.bf16.msra.mxu0 %v6048
        %8173 = vmatprep.subr.bf16.mxu0 0
        %8174 = vmatpush1.bf16.msra.mxu0 %v6049
        %8175 = vmatprep.subr.bf16.mxu0 0
        %8176 = vmatpush1.bf16.msra.mxu0 %v6050
        %8177 = vmatprep.subr.bf16.mxu0 0
        %8178 = vmatpush1.bf16.msra.mxu0 %v6051
        %8179 = vmatprep.subr.bf16.mxu0 0
        %8180 = vmatpush1.bf16.msra.mxu0 %v6052
        %8181 = vmatprep.subr.bf16.mxu0 0
        %8182 = vmatpush1.bf16.msra.mxu0 %v6053
        %8183 = vmatprep.subr.bf16.mxu0 0
        %8184 = vmatpush1.bf16.msra.mxu0 %v6054
        %8185 = vmatprep.subr.bf16.mxu0 0
        %8186 = vmatpush1.bf16.msra.mxu0 %v6055
        %8187 = vmatprep.subr.bf16.mxu0 0
        %8188 = vmatpush1.bf16.msra.mxu0 %v6056
        %8189 = vmatprep.subr.bf16.mxu0 0
        %8190 = vmatpush1.bf16.msra.mxu0 %v6057
        %8191 = vmatprep.subr.bf16.mxu0 0
        %8192 = vmatpush1.bf16.msra.mxu0 %v6058
        %8193 = vmatprep.subr.bf16.mxu0 0
        %8194 = vmatpush1.bf16.msra.mxu0 %v6059
        %8195 = vmatprep.subr.bf16.mxu0 0
        %8196 = vmatpush1.bf16.msra.mxu0 %v6060
        %8197 = vmatprep.mubr.bf16.mxu0 %v2126
        %8198 = vmatmul.mubr.bf16.gmra.mrb[0].mxu0 %v2124
        %v8199 = vpop.f32.mrb[0].mxu0
        %v8200 = vadd.f32 %v8160, %v8199
        %v8201 = vpop.f32.mrb[0].mxu0
        %v8202 = vpop.f32.mrb[0].mxu0
        %v8203 = vpop.f32.mrb[0].mxu0
        %8204 = vdwg.mxu0
        %8205 = vmatprep.subr.bf16.mxu0 0
        %8206 = vmatpush1.bf16.msra.mxu0 %v6061
        %8207 = vmatprep.subr.bf16.mxu0 0
        %8208 = vmatpush1.bf16.msra.mxu0 %v6062
        %8209 = vmatprep.subr.bf16.mxu0 0
        %8210 = vmatpush1.bf16.msra.mxu0 %v6063
        %8211 = vmatprep.subr.bf16.mxu0 0
        %8212 = vmatpush1.bf16.msra.mxu0 %v6064
        %8213 = vmatprep.subr.bf16.mxu0 0
        %8214 = vmatpush1.bf16.msra.mxu0 %v6065
        %8215 = vmatprep.subr.bf16.mxu0 0
        %8216 = vmatpush1.bf16.msra.mxu0 %v6066
        %8217 = vmatprep.subr.bf16.mxu0 0
        %8218 = vmatpush1.bf16.msra.mxu0 %v6067
        %8219 = vmatprep.subr.bf16.mxu0 0
        %8220 = vmatpush1.bf16.msra.mxu0 %v6068
        %8221 = vmatprep.subr.bf16.mxu0 0
        %8222 = vmatpush1.bf16.msra.mxu0 %v6069
        %8223 = vmatprep.subr.bf16.mxu0 0
        %8224 = vmatpush1.bf16.msra.mxu0 %v6070
        %8225 = vmatprep.subr.bf16.mxu0 0
        %8226 = vmatpush1.bf16.msra.mxu0 %v6071
        %8227 = vmatprep.subr.bf16.mxu0 0
        %8228 = vmatpush1.bf16.msra.mxu0 %v6072
        %8229 = vmatprep.subr.bf16.mxu0 0
        %8230 = vmatpush1.bf16.msra.mxu0 %v6073
        %8231 = vmatprep.subr.bf16.mxu0 0
        %8232 = vmatpush1.bf16.msra.mxu0 %v6074
        %8233 = vmatprep.subr.bf16.mxu0 0
        %8234 = vmatpush1.bf16.msra.mxu0 %v6075
        %8235 = vmatprep.subr.bf16.mxu0 0
        %8236 = vmatpush1.bf16.msra.mxu0 %v6076
        %8237 = vmatprep.mubr.bf16.mxu0 %v2164
        %8238 = vmatmul.mubr.bf16.gmra.mrb[0].mxu0 %v2150
        %v8239 = vpop.f32.mrb[0].mxu0
        %v8240 = vadd.f32 %v8200, %v8239
        %v8241 = vpop.f32.mrb[0].mxu0
        %v8242 = vpop.f32.mrb[0].mxu0
        %v8243 = vpop.f32.mrb[0].mxu0
        %8244 = vdwg.mxu0
        %8245 = vmatprep.subr.bf16.mxu0 0
        %8246 = vmatpush1.bf16.msra.mxu0 %v6077
        %8247 = vmatprep.subr.bf16.mxu0 0
        %8248 = vmatpush1.bf16.msra.mxu0 %v6078
        %8249 = vmatprep.subr.bf16.mxu0 0
        %8250 = vmatpush1.bf16.msra.mxu0 %v6079
        %8251 = vmatprep.subr.bf16.mxu0 0
        %8252 = vmatpush1.bf16.msra.mxu0 %v6080
        %8253 = vmatprep.subr.bf16.mxu0 0
        %8254 = vmatpush1.bf16.msra.mxu0 %v6081
        %8255 = vmatprep.subr.bf16.mxu0 0
        %8256 = vmatpush1.bf16.msra.mxu0 %v6082
        %8257 = vmatprep.subr.bf16.mxu0 0
        %8258 = vmatpush1.bf16.msra.mxu0 %v6083
        %8259 = vmatprep.subr.bf16.mxu0 0
        %8260 = vmatpush1.bf16.msra.mxu0 %v6084
        %8261 = vmatprep.subr.bf16.mxu0 0
        %8262 = vmatpush1.bf16.msra.mxu0 %v6085
        %8263 = vmatprep.subr.bf16.mxu0 0
        %8264 = vmatpush1.bf16.msra.mxu0 %v6086
        %8265 = vmatprep.subr.bf16.mxu0 0
        %8266 = vmatpush1.bf16.msra.mxu0 %v6087
        %8267 = vmatprep.subr.bf16.mxu0 0
        %8268 = vmatpush1.bf16.msra.mxu0 %v6088
        %8269 = vmatprep.subr.bf16.mxu0 0
        %8270 = vmatpush1.bf16.msra.mxu0 %v6089
        %8271 = vmatprep.subr.bf16.mxu0 0
        %8272 = vmatpush1.bf16.msra.mxu0 %v6090
        %8273 = vmatprep.subr.bf16.mxu0 0
        %8274 = vmatpush1.bf16.msra.mxu0 %v6091
        %8275 = vmatprep.subr.bf16.mxu0 0
        %8276 = vmatpush1.bf16.msra.mxu0 %v6092
        %8277 = vmatprep.mubr.bf16.mxu0 %v2174
        %8278 = vmatmul.mubr.bf16.gmra.mrb[0].mxu0 %v2172
        %v8279 = vpop.f32.mrb[0].mxu0
        %v8280 = vadd.f32 %v8240, %v8279
        %v8281 = vpop.f32.mrb[0].mxu0
        %v8282 = vpop.f32.mrb[0].mxu0
        %v8283 = vpop.f32.mrb[0].mxu0
        %8284 = vdwg.mxu0
        %8285 = vmatprep.subr.bf16.mxu0 0
        %8286 = vmatpush1.bf16.msra.mxu0 %v6093
        %8287 = vmatprep.subr.bf16.mxu0 0
        %8288 = vmatpush1.bf16.msra.mxu0 %v6094
        %8289 = vmatprep.subr.bf16.mxu0 0
        %8290 = vmatpush1.bf16.msra.mxu0 %v6095
        %8291 = vmatprep.subr.bf16.mxu0 0
        %8292 = vmatpush1.bf16.msra.mxu0 %v6096
        %8293 = vmatprep.subr.bf16.mxu0 0
        %8294 = vmatpush1.bf16.msra.mxu0 %v6097
        %8295 = vmatprep.subr.bf16.mxu0 0
        %8296 = vmatpush1.bf16.msra.mxu0 %v6098
        %8297 = vmatprep.subr.bf16.mxu0 0
        %8298 = vmatpush1.bf16.msra.mxu0 %v6099
        %8299 = vmatprep.subr.bf16.mxu0 0
        %8300 = vmatpush1.bf16.msra.mxu0 %v6100
        %8301 = vmatprep.subr.bf16.mxu0 0
        %8302 = vmatpush1.bf16.msra.mxu0 %v6101
        %8303 = vmatprep.subr.bf16.mxu0 0
        %8304 = vmatpush1.bf16.msra.mxu0 %v6102
        %8305 = vmatprep.subr.bf16.mxu0 0
        %8306 = vmatpush1.bf16.msra.mxu0 %v6103
        %8307 = vmatprep.subr.bf16.mxu0 0
        %8308 = vmatpush1.bf16.msra.mxu0 %v6104
        %8309 = vmatprep.subr.bf16.mxu0 0
        %8310 = vmatpush1.bf16.msra.mxu0 %v6105
        %8311 = vmatprep.subr.bf16.mxu0 0
        %8312 = vmatpush1.bf16.msra.mxu0 %v6106
        %8313 = vmatprep.subr.bf16.mxu0 0
        %8314 = vmatpush1.bf16.msra.mxu0 %v6107
        %8315 = vmatprep.subr.bf16.mxu0 0
        %8316 = vmatpush1.bf16.msra.mxu0 %v6108
        %8317 = vmatprep.mubr.bf16.mxu0 %v2171
        %8318 = vmatmul.mubr.bf16.gmra.mrb[0].mxu0 %v2157
        %v8319 = vpop.f32.mrb[0].mxu0
        %v8320 = vadd.f32 %v8280, %v8319
        %v8321 = vpop.f32.mrb[0].mxu0
        %v8322 = vpop.f32.mrb[0].mxu0
        %v8323 = vpop.f32.mrb[0].mxu0
        %8324 = vdwg.mxu0
        %8325 = vmatprep.subr.bf16.mxu0 0
        %8326 = vmatpush1.bf16.msra.mxu0 %v6109
        %8327 = vmatprep.subr.bf16.mxu0 0
        %8328 = vmatpush1.bf16.msra.mxu0 %v6110
        %8329 = vmatprep.subr.bf16.mxu0 0
        %8330 = vmatpush1.bf16.msra.mxu0 %v6111
        %8331 = vmatprep.subr.bf16.mxu0 0
        %8332 = vmatpush1.bf16.msra.mxu0 %v6112
        %8333 = vmatprep.subr.bf16.mxu0 0
        %8334 = vmatpush1.bf16.msra.mxu0 %v6113
        %8335 = vmatprep.subr.bf16.mxu0 0
        %8336 = vmatpush1.bf16.msra.mxu0 %v6114
        %8337 = vmatprep.subr.bf16.mxu0 0
        %8338 = vmatpush1.bf16.msra.mxu0 %v6115
        %8339 = vmatprep.subr.bf16.mxu0 0
        %8340 = vmatpush1.bf16.msra.mxu0 %v6116
        %8341 = vmatprep.subr.bf16.mxu0 0
        %8342 = vmatpush1.bf16.msra.mxu0 %v6117
        %8343 = vmatprep.subr.bf16.mxu0 0
        %8344 = vmatpush1.bf16.msra.mxu0 %v6118
        %8345 = vmatprep.subr.bf16.mxu0 0
        %8346 = vmatpush1.bf16.msra.mxu0 %v6119
        %8347 = vmatprep.subr.bf16.mxu0 0
        %8348 = vmatpush1.bf16.msra.mxu0 %v6120
        %8349 = vmatprep.subr.bf16.mxu0 0
        %8350 = vmatpush1.bf16.msra.mxu0 %v6121
        %8351 = vmatprep.subr.bf16.mxu0 0
        %8352 = vmatpush1.bf16.msra.mxu0 %v6122
        %8353 = vmatprep.subr.bf16.mxu0 0
        %8354 = vmatpush1.bf16.msra.mxu0 %v6123
        %8355 = vmatprep.subr.bf16.mxu0 0
        %8356 = vmatpush1.bf16.msra.mxu0 %v6124
        %8357 = vmatprep.mubr.bf16.mxu0 %v2175
        %8358 = vmatmul.mubr.bf16.gmra.mrb[0].mxu0 %v2173
        %v8359 = vpop.f32.mrb[0].mxu0
        %v8360 = vadd.f32 %v8320, %v8359
        %v8361 = vpop.f32.mrb[0].mxu0
        %v8362 = vpop.f32.mrb[0].mxu0
        %v8363 = vpop.f32.mrb[0].mxu0
        %8364 = vdwg.mxu0
        %8365 = vmatprep.subr.bf16.mxu0 0
        %8366 = vmatpush1.bf16.msra.mxu0 %v6125
        %8367 = vmatprep.subr.bf16.mxu0 0
        %8368 = vmatpush1.bf16.msra.mxu0 %v6126
        %8369 = vmatprep.subr.bf16.mxu0 0
        %8370 = vmatpush1.bf16.msra.mxu0 %v6127
        %8371 = vmatprep.subr.bf16.mxu0 0
        %8372 = vmatpush1.bf16.msra.mxu0 %v6128
        %8373 = vmatprep.subr.bf16.mxu0 0
        %8374 = vmatpush1.bf16.msra.mxu0 %v6129
        %8375 = vmatprep.subr.bf16.mxu0 0
        %8376 = vmatpush1.bf16.msra.mxu0 %v6130
        %8377 = vmatprep.subr.bf16.mxu0 0
        %8378 = vmatpush1.bf16.msra.mxu0 %v6131
        %8379 = vmatprep.subr.bf16.mxu0 0
        %8380 = vmatpush1.bf16.msra.mxu0 %v6132
        %8381 = vmatprep.subr.bf16.mxu0 0
        %8382 = vmatpush1.bf16.msra.mxu0 %v6133
        %8383 = vmatprep.subr.bf16.mxu0 0
        %8384 = vmatpush1.bf16.msra.mxu0 %v6134
        %8385 = vmatprep.subr.bf16.mxu0 0
        %8386 = vmatpush1.bf16.msra.mxu0 %v6135
        %8387 = vmatprep.subr.bf16.mxu0 0
        %8388 = vmatpush1.bf16.msra.mxu0 %v6136
        %8389 = vmatprep.subr.bf16.mxu0 0
        %8390 = vmatpush1.bf16.msra.mxu0 %v6137
        %8391 = vmatprep.subr.bf16.mxu0 0
        %8392 = vmatpush1.bf16.msra.mxu0 %v6138
        %8393 = vmatprep.subr.bf16.mxu0 0
        %8394 = vmatpush1.bf16.msra.mxu0 %v6139
        %8395 = vmatprep.subr.bf16.mxu0 0
        %8396 = vmatpush1.bf16.msra.mxu0 %v6140
        %8397 = vmatprep.mubr.bf16.mxu0 %v2213
        %8398 = vmatmul.mubr.bf16.gmra.mrb[0].mxu0 %v2199
        %v8399 = vpop.f32.mrb[0].mxu0
        %v8400 = vadd.f32 %v8360, %v8399
        %v8401 = vpop.f32.mrb[0].mxu0
        %v8402 = vpop.f32.mrb[0].mxu0
        %v8403 = vpop.f32.mrb[0].mxu0
        %8404 = vdwg.mxu0
        %8405 = vmatprep.subr.bf16.mxu0 0
        %8406 = vmatpush1.bf16.msra.mxu0 %v6141
        %8407 = vmatprep.subr.bf16.mxu0 0
        %8408 = vmatpush1.bf16.msra.mxu0 %v6142
        %8409 = vmatprep.subr.bf16.mxu0 0
        %8410 = vmatpush1.bf16.msra.mxu0 %v6143
        %8411 = vmatprep.subr.bf16.mxu0 0
        %8412 = vmatpush1.bf16.msra.mxu0 %v6144
        %8413 = vmatprep.subr.bf16.mxu0 0
        %8414 = vmatpush1.bf16.msra.mxu0 %v6145
        %8415 = vmatprep.subr.bf16.mxu0 0
        %8416 = vmatpush1.bf16.msra.mxu0 %v6146
        %8417 = vmatprep.subr.bf16.mxu0 0
        %8418 = vmatpush1.bf16.msra.mxu0 %v6147
        %8419 = vmatprep.subr.bf16.mxu0 0
        %8420 = vmatpush1.bf16.msra.mxu0 %v6148
        %8421 = vmatprep.subr.bf16.mxu0 0
        %8422 = vmatpush1.bf16.msra.mxu0 %v6149
        %8423 = vmatprep.subr.bf16.mxu0 0
        %8424 = vmatpush1.bf16.msra.mxu0 %v6150
        %8425 = vmatprep.subr.bf16.mxu0 0
        %8426 = vmatpush1.bf16.msra.mxu0 %v6151
        %8427 = vmatprep.subr.bf16.mxu0 0
        %8428 = vmatpush1.bf16.msra.mxu0 %v6152
        %8429 = vmatprep.subr.bf16.mxu0 0
        %8430 = vmatpush1.bf16.msra.mxu0 %v6153
        %8431 = vmatprep.subr.bf16.mxu0 0
        %8432 = vmatpush1.bf16.msra.mxu0 %v6154
        %8433 = vmatprep.subr.bf16.mxu0 0
        %8434 = vmatpush1.bf16.msra.mxu0 %v6155
        %8435 = vmatprep.subr.bf16.mxu0 0
        %8436 = vmatpush1.bf16.msra.mxu0 %v6156
        %8437 = vmatprep.mubr.bf16.mxu0 %v2223
        %8438 = vmatmul.mubr.bf16.gmra.mrb[0].mxu0 %v2221
        %v8439 = vpop.f32.mrb[0].mxu0
        %v8440 = vadd.f32 %v8400, %v8439
        %v8441 = vpop.f32.mrb[0].mxu0
        %v8442 = vpop.f32.mrb[0].mxu0
        %v8443 = vpop.f32.mrb[0].mxu0
        %8444 = vdwg.mxu0
        %8445 = vmatprep.subr.bf16.mxu0 0
        %8446 = vmatpush1.bf16.msra.mxu0 %v6157
        %8447 = vmatprep.subr.bf16.mxu0 0
        %8448 = vmatpush1.bf16.msra.mxu0 %v6158
        %8449 = vmatprep.subr.bf16.mxu0 0
        %8450 = vmatpush1.bf16.msra.mxu0 %v6159
        %8451 = vmatprep.subr.bf16.mxu0 0
        %8452 = vmatpush1.bf16.msra.mxu0 %v6160
        %8453 = vmatprep.subr.bf16.mxu0 0
        %8454 = vmatpush1.bf16.msra.mxu0 %v6161
        %8455 = vmatprep.subr.bf16.mxu0 0
        %8456 = vmatpush1.bf16.msra.mxu0 %v6162
        %8457 = vmatprep.subr.bf16.mxu0 0
        %8458 = vmatpush1.bf16.msra.mxu0 %v6163
        %8459 = vmatprep.subr.bf16.mxu0 0
        %8460 = vmatpush1.bf16.msra.mxu0 %v6164
        %8461 = vmatprep.subr.bf16.mxu0 0
        %8462 = vmatpush1.bf16.msra.mxu0 %v6165
        %8463 = vmatprep.subr.bf16.mxu0 0
        %8464 = vmatpush1.bf16.msra.mxu0 %v6166
        %8465 = vmatprep.subr.bf16.mxu0 0
        %8466 = vmatpush1.bf16.msra.mxu0 %v6167
        %8467 = vmatprep.subr.bf16.mxu0 0
        %8468 = vmatpush1.bf16.msra.mxu0 %v6168
        %8469 = vmatprep.subr.bf16.mxu0 0
        %8470 = vmatpush1.bf16.msra.mxu0 %v6169
        %8471 = vmatprep.subr.bf16.mxu0 0
        %8472 = vmatpush1.bf16.msra.mxu0 %v6170
        %8473 = vmatprep.subr.bf16.mxu0 0
        %8474 = vmatpush1.bf16.msra.mxu0 %v6171
        %8475 = vmatprep.subr.bf16.mxu0 0
        %8476 = vmatpush1.bf16.msra.mxu0 %v6172
        %8477 = vmatprep.mubr.bf16.mxu0 %v2220
        %8478 = vmatmul.mubr.bf16.gmra.mrb[0].mxu0 %v2206
        %v8479 = vpop.f32.mrb[0].mxu0
        %v8480 = vadd.f32 %v8440, %v8479
        %v8481 = vpop.f32.mrb[0].mxu0
        %v8482 = vpop.f32.mrb[0].mxu0
        %v8483 = vpop.f32.mrb[0].mxu0
        %8484 = vdwg.mxu0
        %8485 = vmatprep.subr.bf16.mxu0 0
        %8486 = vmatpush1.bf16.msra.mxu0 %v6173
        %8487 = vmatprep.subr.bf16.mxu0 0
        %8488 = vmatpush1.bf16.msra.mxu0 %v6174
        %8489 = vmatprep.subr.bf16.mxu0 0
        %8490 = vmatpush1.bf16.msra.mxu0 %v6175
        %8491 = vmatprep.subr.bf16.mxu0 0
        %8492 = vmatpush1.bf16.msra.mxu0 %v6176
        %8493 = vmatprep.subr.bf16.mxu0 0
        %8494 = vmatpush1.bf16.msra.mxu0 %v6177
        %8495 = vmatprep.subr.bf16.mxu0 0
        %8496 = vmatpush1.bf16.msra.mxu0 %v6178
        %8497 = vmatprep.subr.bf16.mxu0 0
        %8498 = vmatpush1.bf16.msra.mxu0 %v6179
        %8499 = vmatprep.subr.bf16.mxu0 0
        %8500 = vmatpush1.bf16.msra.mxu0 %v6180
        %8501 = vmatprep.subr.bf16.mxu0 0
        %8502 = vmatpush1.bf16.msra.mxu0 %v6181
        %8503 = vmatprep.subr.bf16.mxu0 0
        %8504 = vmatpush1.bf16.msra.mxu0 %v6182
        %8505 = vmatprep.subr.bf16.mxu0 0
        %8506 = vmatpush1.bf16.msra.mxu0 %v6183
        %8507 = vmatprep.subr.bf16.mxu0 0
        %8508 = vmatpush1.bf16.msra.mxu0 %v6184
        %8509 = vmatprep.subr.bf16.mxu0 0
        %8510 = vmatpush1.bf16.msra.mxu0 %v6185
        %8511 = vmatprep.subr.bf16.mxu0 0
        %8512 = vmatpush1.bf16.msra.mxu0 %v6186
        %8513 = vmatprep.subr.bf16.mxu0 0
        %8514 = vmatpush1.bf16.msra.mxu0 %v6187
        %8515 = vmatprep.subr.bf16.mxu0 0
        %8516 = vmatpush1.bf16.msra.mxu0 %v6188
        %8517 = vmatprep.mubr.bf16.mxu0 %v2224
        %8518 = vmatmul.mubr.bf16.gmra.mrb[0].mxu0 %v2222
        %v8519 = vpop.f32.mrb[0].mxu0
        %v8520 = vadd.f32 %v8480, %v8519
        %v8521 = vpop.f32.mrb[0].mxu0
        %v8522 = vpop.f32.mrb[0].mxu0
        %v8523 = vpop.f32.mrb[0].mxu0
        %8524 = vdwg.mxu0
        %8525 = vmatprep.subr.bf16.mxu0 0
        %8526 = vmatpush1.bf16.msra.mxu0 %v6189
        %8527 = vmatprep.subr.bf16.mxu0 0
        %8528 = vmatpush1.bf16.msra.mxu0 %v6190
        %8529 = vmatprep.subr.bf16.mxu0 0
        %8530 = vmatpush1.bf16.msra.mxu0 %v6191
        %8531 = vmatprep.subr.bf16.mxu0 0
        %8532 = vmatpush1.bf16.msra.mxu0 %v6192
        %8533 = vmatprep.subr.bf16.mxu0 0
        %8534 = vmatpush1.bf16.msra.mxu0 %v6193
        %8535 = vmatprep.subr.bf16.mxu0 0
        %8536 = vmatpush1.bf16.msra.mxu0 %v6194
        %8537 = vmatprep.subr.bf16.mxu0 0
        %8538 = vmatpush1.bf16.msra.mxu0 %v6195
        %8539 = vmatprep.subr.bf16.mxu0 0
        %8540 = vmatpush1.bf16.msra.mxu0 %v6196
        %8541 = vmatprep.subr.bf16.mxu0 0
        %8542 = vmatpush1.bf16.msra.mxu0 %v6197
        %8543 = vmatprep.subr.bf16.mxu0 0
        %8544 = vmatpush1.bf16.msra.mxu0 %v6198
        %8545 = vmatprep.subr.bf16.mxu0 0
        %8546 = vmatpush1.bf16.msra.mxu0 %v6199
        %8547 = vmatprep.subr.bf16.mxu0 0
        %8548 = vmatpush1.bf16.msra.mxu0 %v6200
        %8549 = vmatprep.subr.bf16.mxu0 0
        %8550 = vmatpush1.bf16.msra.mxu0 %v6201
        %8551 = vmatprep.subr.bf16.mxu0 0
        %8552 = vmatpush1.bf16.msra.mxu0 %v6202
        %8553 = vmatprep.subr.bf16.mxu0 0
        %8554 = vmatpush1.bf16.msra.mxu0 %v6203
        %8555 = vmatprep.subr.bf16.mxu0 0
        %8556 = vmatpush1.bf16.msra.mxu0 %v6204
        %8557 = vmatprep.mubr.bf16.mxu0 %v2262
        %8558 = vmatmul.mubr.bf16.gmra.mrb[0].mxu0 %v2248
        %v8559 = vpop.f32.mrb[0].mxu0
        %v8560 = vadd.f32 %v8520, %v8559
        %v8561 = vpop.f32.mrb[0].mxu0
        %v8562 = vpop.f32.mrb[0].mxu0
        %v8563 = vpop.f32.mrb[0].mxu0
        %8564 = vdwg.mxu0
        %8565 = vmatprep.subr.bf16.mxu0 0
        %8566 = vmatpush1.bf16.msra.mxu0 %v6205
        %8567 = vmatprep.subr.bf16.mxu0 0
        %8568 = vmatpush1.bf16.msra.mxu0 %v6206
        %8569 = vmatprep.subr.bf16.mxu0 0
        %8570 = vmatpush1.bf16.msra.mxu0 %v6207
        %8571 = vmatprep.subr.bf16.mxu0 0
        %8572 = vmatpush1.bf16.msra.mxu0 %v6208
        %8573 = vmatprep.subr.bf16.mxu0 0
        %8574 = vmatpush1.bf16.msra.mxu0 %v6209
        %8575 = vmatprep.subr.bf16.mxu0 0
        %8576 = vmatpush1.bf16.msra.mxu0 %v6210
        %8577 = vmatprep.subr.bf16.mxu0 0
        %8578 = vmatpush1.bf16.msra.mxu0 %v6211
        %8579 = vmatprep.subr.bf16.mxu0 0
        %8580 = vmatpush1.bf16.msra.mxu0 %v6212
        %8581 = vmatprep.subr.bf16.mxu0 0
        %8582 = vmatpush1.bf16.msra.mxu0 %v6213
        %8583 = vmatprep.subr.bf16.mxu0 0
        %8584 = vmatpush1.bf16.msra.mxu0 %v6214
        %8585 = vmatprep.subr.bf16.mxu0 0
        %8586 = vmatpush1.bf16.msra.mxu0 %v6215
        %8587 = vmatprep.subr.bf16.mxu0 0
        %8588 = vmatpush1.bf16.msra.mxu0 %v6216
        %8589 = vmatprep.subr.bf16.mxu0 0
        %8590 = vmatpush1.bf16.msra.mxu0 %v6217
        %8591 = vmatprep.subr.bf16.mxu0 0
        %8592 = vmatpush1.bf16.msra.mxu0 %v6218
        %8593 = vmatprep.subr.bf16.mxu0 0
        %8594 = vmatpush1.bf16.msra.mxu0 %v6219
        %8595 = vmatprep.subr.bf16.mxu0 0
        %8596 = vmatpush1.bf16.msra.mxu0 %v6220
        %8597 = vmatprep.mubr.bf16.mxu0 %v2272
        %8598 = vmatmul.mubr.bf16.gmra.mrb[0].mxu0 %v2270
        %v8599 = vpop.f32.mrb[0].mxu0
        %v8600 = vadd.f32 %v8560, %v8599
        %v8601 = vpop.f32.mrb[0].mxu0
        %v8602 = vpop.f32.mrb[0].mxu0
        %v8603 = vpop.f32.mrb[0].mxu0
        %8604 = vdwg.mxu0
        %8605 = vmatprep.subr.bf16.mxu0 0
        %8606 = vmatpush1.bf16.msra.mxu0 %v6221
        %8607 = vmatprep.subr.bf16.mxu0 0
        %8608 = vmatpush1.bf16.msra.mxu0 %v6222
        %8609 = vmatprep.subr.bf16.mxu0 0
        %8610 = vmatpush1.bf16.msra.mxu0 %v6223
        %8611 = vmatprep.subr.bf16.mxu0 0
        %8612 = vmatpush1.bf16.msra.mxu0 %v6224
        %8613 = vmatprep.subr.bf16.mxu0 0
        %8614 = vmatpush1.bf16.msra.mxu0 %v6225
        %8615 = vmatprep.subr.bf16.mxu0 0
        %8616 = vmatpush1.bf16.msra.mxu0 %v6226
        %8617 = vmatprep.subr.bf16.mxu0 0
        %8618 = vmatpush1.bf16.msra.mxu0 %v6227
        %8619 = vmatprep.subr.bf16.mxu0 0
        %8620 = vmatpush1.bf16.msra.mxu0 %v6228
        %8621 = vmatprep.subr.bf16.mxu0 0
        %8622 = vmatpush1.bf16.msra.mxu0 %v6229
        %8623 = vmatprep.subr.bf16.mxu0 0
        %8624 = vmatpush1.bf16.msra.mxu0 %v6230
        %8625 = vmatprep.subr.bf16.mxu0 0
        %8626 = vmatpush1.bf16.msra.mxu0 %v6231
        %8627 = vmatprep.subr.bf16.mxu0 0
        %8628 = vmatpush1.bf16.msra.mxu0 %v6232
        %8629 = vmatprep.subr.bf16.mxu0 0
        %8630 = vmatpush1.bf16.msra.mxu0 %v6233
        %8631 = vmatprep.subr.bf16.mxu0 0
        %8632 = vmatpush1.bf16.msra.mxu0 %v6234
        %8633 = vmatprep.subr.bf16.mxu0 0
        %8634 = vmatpush1.bf16.msra.mxu0 %v6235
        %8635 = vmatprep.subr.bf16.mxu0 0
        %8636 = vmatpush1.bf16.msra.mxu0 %v6236
        %8637 = vmatprep.mubr.bf16.mxu0 %v2269
        %8638 = vmatmul.mubr.bf16.gmra.mrb[0].mxu0 %v2255
        %v8639 = vpop.f32.mrb[0].mxu0
        %v8640 = vadd.f32 %v8600, %v8639
        %v8641 = vpop.f32.mrb[0].mxu0
        %v8642 = vpop.f32.mrb[0].mxu0
        %v8643 = vpop.f32.mrb[0].mxu0
        %8644 = vdwg.mxu0
        %8645 = vmatprep.subr.bf16.mxu0 0
        %8646 = vmatpush1.bf16.msra.mxu0 %v6237
        %8647 = vmatprep.subr.bf16.mxu0 0
        %8648 = vmatpush1.bf16.msra.mxu0 %v6238
        %8649 = vmatprep.subr.bf16.mxu0 0
        %8650 = vmatpush1.bf16.msra.mxu0 %v6239
        %8651 = vmatprep.subr.bf16.mxu0 0
        %8652 = vmatpush1.bf16.msra.mxu0 %v6240
        %8653 = vmatprep.subr.bf16.mxu0 0
        %8654 = vmatpush1.bf16.msra.mxu0 %v6241
        %8655 = vmatprep.subr.bf16.mxu0 0
        %8656 = vmatpush1.bf16.msra.mxu0 %v6242
        %8657 = vmatprep.subr.bf16.mxu0 0
        %8658 = vmatpush1.bf16.msra.mxu0 %v6243
        %8659 = vmatprep.subr.bf16.mxu0 0
        %8660 = vmatpush1.bf16.msra.mxu0 %v6244
        %8661 = vmatprep.subr.bf16.mxu0 0
        %8662 = vmatpush1.bf16.msra.mxu0 %v6245
        %8663 = vmatprep.subr.bf16.mxu0 0
        %8664 = vmatpush1.bf16.msra.mxu0 %v6246
        %8665 = vmatprep.subr.bf16.mxu0 0
        %8666 = vmatpush1.bf16.msra.mxu0 %v6247
        %8667 = vmatprep.subr.bf16.mxu0 0
        %8668 = vmatpush1.bf16.msra.mxu0 %v6248
        %8669 = vmatprep.subr.bf16.mxu0 0
        %8670 = vmatpush1.bf16.msra.mxu0 %v6249
        %8671 = vmatprep.subr.bf16.mxu0 0
        %8672 = vmatpush1.bf16.msra.mxu0 %v6250
        %8673 = vmatprep.subr.bf16.mxu0 0
        %8674 = vmatpush1.bf16.msra.mxu0 %v6251
        %8675 = vmatprep.subr.bf16.mxu0 0
        %8676 = vmatpush1.bf16.msra.mxu0 %v6252
        %8677 = vmatprep.mubr.bf16.mxu0 %v2273
        %8678 = vmatmul.mubr.bf16.gmra.mrb[0].mxu0 %v2271
        %v8679 = vpop.f32.mrb[0].mxu0
        %v8680 = vadd.f32 %v8640, %v8679
        %v8681 = vpop.f32.mrb[0].mxu0
        %v8682 = vpop.f32.mrb[0].mxu0
        %v8683 = vpop.f32.mrb[0].mxu0
        %8684 = vdwg.mxu0
        %8685 = vmatprep.subr.bf16.mxu0 0
        %8686 = vmatpush1.bf16.msra.mxu0 %v6253
        %8687 = vmatprep.subr.bf16.mxu0 0
        %8688 = vmatpush1.bf16.msra.mxu0 %v6254
        %8689 = vmatprep.subr.bf16.mxu0 0
        %8690 = vmatpush1.bf16.msra.mxu0 %v6255
        %8691 = vmatprep.subr.bf16.mxu0 0
        %8692 = vmatpush1.bf16.msra.mxu0 %v6256
        %8693 = vmatprep.subr.bf16.mxu0 0
        %8694 = vmatpush1.bf16.msra.mxu0 %v6257
        %8695 = vmatprep.subr.bf16.mxu0 0
        %8696 = vmatpush1.bf16.msra.mxu0 %v6258
        %8697 = vmatprep.subr.bf16.mxu0 0
        %8698 = vmatpush1.bf16.msra.mxu0 %v6259
        %8699 = vmatprep.subr.bf16.mxu0 0
        %8700 = vmatpush1.bf16.msra.mxu0 %v6260
        %8701 = vmatprep.subr.bf16.mxu0 0
        %8702 = vmatpush1.bf16.msra.mxu0 %v6261
        %8703 = vmatprep.subr.bf16.mxu0 0
        %8704 = vmatpush1.bf16.msra.mxu0 %v6262
        %8705 = vmatprep.subr.bf16.mxu0 0
        %8706 = vmatpush1.bf16.msra.mxu0 %v6263
        %8707 = vmatprep.subr.bf16.mxu0 0
        %8708 = vmatpush1.bf16.msra.mxu0 %v6264
        %8709 = vmatprep.subr.bf16.mxu0 0
        %8710 = vmatpush1.bf16.msra.mxu0 %v6265
        %8711 = vmatprep.subr.bf16.mxu0 0
        %8712 = vmatpush1.bf16.msra.mxu0 %v6266
        %8713 = vmatprep.subr.bf16.mxu0 0
        %8714 = vmatpush1.bf16.msra.mxu0 %v6267
        %8715 = vmatprep.subr.bf16.mxu0 0
        %8716 = vmatpush1.bf16.msra.mxu0 %v6268
        %8717 = vmatprep.mubr.bf16.mxu0 %v2311
        %8718 = vmatmul.mubr.bf16.gmra.mrb[0].mxu0 %v2297
        %v8719 = vpop.f32.mrb[0].mxu0
        %v8720 = vadd.f32 %v8680, %v8719
        %v8721 = vpop.f32.mrb[0].mxu0
        %v8722 = vpop.f32.mrb[0].mxu0
        %v8723 = vpop.f32.mrb[0].mxu0
        %8724 = vdwg.mxu0
        %8725 = vmatprep.subr.bf16.mxu0 0
        %8726 = vmatpush1.bf16.msra.mxu0 %v6269
        %8727 = vmatprep.subr.bf16.mxu0 0
        %8728 = vmatpush1.bf16.msra.mxu0 %v6270
        %8729 = vmatprep.subr.bf16.mxu0 0
        %8730 = vmatpush1.bf16.msra.mxu0 %v6271
        %8731 = vmatprep.subr.bf16.mxu0 0
        %8732 = vmatpush1.bf16.msra.mxu0 %v6272
        %8733 = vmatprep.subr.bf16.mxu0 0
        %8734 = vmatpush1.bf16.msra.mxu0 %v6273
        %8735 = vmatprep.subr.bf16.mxu0 0
        %8736 = vmatpush1.bf16.msra.mxu0 %v6274
        %8737 = vmatprep.subr.bf16.mxu0 0
        %8738 = vmatpush1.bf16.msra.mxu0 %v6275
        %8739 = vmatprep.subr.bf16.mxu0 0
        %8740 = vmatpush1.bf16.msra.mxu0 %v6276
        %8741 = vmatprep.subr.bf16.mxu0 0
        %8742 = vmatpush1.bf16.msra.mxu0 %v6277
        %8743 = vmatprep.subr.bf16.mxu0 0
        %8744 = vmatpush1.bf16.msra.mxu0 %v6278
        %8745 = vmatprep.subr.bf16.mxu0 0
        %8746 = vmatpush1.bf16.msra.mxu0 %v6279
        %8747 = vmatprep.subr.bf16.mxu0 0
        %8748 = vmatpush1.bf16.msra.mxu0 %v6280
        %8749 = vmatprep.subr.bf16.mxu0 0
        %8750 = vmatpush1.bf16.msra.mxu0 %v6281
        %8751 = vmatprep.subr.bf16.mxu0 0
        %8752 = vmatpush1.bf16.msra.mxu0 %v6282
        %8753 = vmatprep.subr.bf16.mxu0 0
        %8754 = vmatpush1.bf16.msra.mxu0 %v6283
        %8755 = vmatprep.subr.bf16.mxu0 0
        %8756 = vmatpush1.bf16.msra.mxu0 %v6284
        %8757 = vmatprep.mubr.bf16.mxu0 %v2321
        %8758 = vmatmul.mubr.bf16.gmra.mrb[0].mxu0 %v2319
        %v8759 = vpop.f32.mrb[0].mxu0
        %v8760 = vadd.f32 %v8720, %v8759
        %v8761 = vpop.f32.mrb[0].mxu0
        %v8762 = vpop.f32.mrb[0].mxu0
        %v8763 = vpop.f32.mrb[0].mxu0
        %8764 = vdwg.mxu0
        %8765 = vmatprep.subr.bf16.mxu0 0
        %8766 = vmatpush1.bf16.msra.mxu0 %v6285
        %8767 = vmatprep.subr.bf16.mxu0 0
        %8768 = vmatpush1.bf16.msra.mxu0 %v6286
        %8769 = vmatprep.subr.bf16.mxu0 0
        %8770 = vmatpush1.bf16.msra.mxu0 %v6287
        %8771 = vmatprep.subr.bf16.mxu0 0
        %8772 = vmatpush1.bf16.msra.mxu0 %v6288
        %8773 = vmatprep.subr.bf16.mxu0 0
        %8774 = vmatpush1.bf16.msra.mxu0 %v6289
        %8775 = vmatprep.subr.bf16.mxu0 0
        %8776 = vmatpush1.bf16.msra.mxu0 %v6290
        %8777 = vmatprep.subr.bf16.mxu0 0
        %8778 = vmatpush1.bf16.msra.mxu0 %v6291
        %8779 = vmatprep.subr.bf16.mxu0 0
        %8780 = vmatpush1.bf16.msra.mxu0 %v6292
        %8781 = vmatprep.subr.bf16.mxu0 0
        %8782 = vmatpush1.bf16.msra.mxu0 %v6293
        %8783 = vmatprep.subr.bf16.mxu0 0
        %8784 = vmatpush1.bf16.msra.mxu0 %v6294
        %8785 = vmatprep.subr.bf16.mxu0 0
        %8786 = vmatpush1.bf16.msra.mxu0 %v6295
        %8787 = vmatprep.subr.bf16.mxu0 0
        %8788 = vmatpush1.bf16.msra.mxu0 %v6296
        %8789 = vmatprep.subr.bf16.mxu0 0
        %8790 = vmatpush1.bf16.msra.mxu0 %v6297
        %8791 = vmatprep.subr.bf16.mxu0 0
        %8792 = vmatpush1.bf16.msra.mxu0 %v6298
        %8793 = vmatprep.subr.bf16.mxu0 0
        %8794 = vmatpush1.bf16.msra.mxu0 %v6299
        %8795 = vmatprep.subr.bf16.mxu0 0
        %8796 = vmatpush1.bf16.msra.mxu0 %v6300
        %8797 = vmatprep.mubr.bf16.mxu0 %v2318
        %8798 = vmatmul.mubr.bf16.gmra.mrb[0].mxu0 %v2304
        %v8799 = vpop.f32.mrb[0].mxu0
        %v8800 = vadd.f32 %v8760, %v8799
        %v8801 = vpop.f32.mrb[0].mxu0
        %v8802 = vpop.f32.mrb[0].mxu0
        %v8803 = vpop.f32.mrb[0].mxu0
        %8804 = vdwg.mxu0
        %8805 = vmatprep.subr.bf16.mxu0 0
        %8806 = vmatpush1.bf16.msra.mxu0 %v6301
        %8807 = vmatprep.subr.bf16.mxu0 0
        %8808 = vmatpush1.bf16.msra.mxu0 %v6302
        %8809 = vmatprep.subr.bf16.mxu0 0
        %8810 = vmatpush1.bf16.msra.mxu0 %v6303
        %8811 = vmatprep.subr.bf16.mxu0 0
        %8812 = vmatpush1.bf16.msra.mxu0 %v6304
        %8813 = vmatprep.subr.bf16.mxu0 0
        %8814 = vmatpush1.bf16.msra.mxu0 %v6305
        %8815 = vmatprep.subr.bf16.mxu0 0
        %8816 = vmatpush1.bf16.msra.mxu0 %v6306
        %8817 = vmatprep.subr.bf16.mxu0 0
        %8818 = vmatpush1.bf16.msra.mxu0 %v6307
        %8819 = vmatprep.subr.bf16.mxu0 0
        %8820 = vmatpush1.bf16.msra.mxu0 %v6308
        %8821 = vmatprep.subr.bf16.mxu0 0
        %8822 = vmatpush1.bf16.msra.mxu0 %v6309
        %8823 = vmatprep.subr.bf16.mxu0 0
        %8824 = vmatpush1.bf16.msra.mxu0 %v6310
        %8825 = vmatprep.subr.bf16.mxu0 0
        %8826 = vmatpush1.bf16.msra.mxu0 %v6311
        %8827 = vmatprep.subr.bf16.mxu0 0
        %8828 = vmatpush1.bf16.msra.mxu0 %v6312
        %8829 = vmatprep.subr.bf16.mxu0 0
        %8830 = vmatpush1.bf16.msra.mxu0 %v6313
        %8831 = vmatprep.subr.bf16.mxu0 0
        %8832 = vmatpush1.bf16.msra.mxu0 %v6314
        %8833 = vmatprep.subr.bf16.mxu0 0
        %8834 = vmatpush1.bf16.msra.mxu0 %v6315
        %8835 = vmatprep.subr.bf16.mxu0 0
        %8836 = vmatpush1.bf16.msra.mxu0 %v6316
        %8837 = vmatprep.mubr.bf16.mxu0 %v2322
        %8838 = vmatmul.mubr.bf16.gmra.mrb[0].mxu0 %v2320
        %v8839 = vpop.f32.mrb[0].mxu0
        %v8840 = vadd.f32 %v8800, %v8839
        %v8841 = vpop.f32.mrb[0].mxu0
        %v8842 = vpop.f32.mrb[0].mxu0
        %v8843 = vpop.f32.mrb[0].mxu0
        %8844 = vdwg.mxu0
        %8845 = vmatprep.subr.bf16.mxu0 0
        %8846 = vmatpush1.bf16.msra.mxu0 %v6317
        %8847 = vmatprep.subr.bf16.mxu0 0
        %8848 = vmatpush1.bf16.msra.mxu0 %v6318
        %8849 = vmatprep.subr.bf16.mxu0 0
        %8850 = vmatpush1.bf16.msra.mxu0 %v6319
        %8851 = vmatprep.subr.bf16.mxu0 0
        %8852 = vmatpush1.bf16.msra.mxu0 %v6320
        %8853 = vmatprep.subr.bf16.mxu0 0
        %8854 = vmatpush1.bf16.msra.mxu0 %v6321
        %8855 = vmatprep.subr.bf16.mxu0 0
        %8856 = vmatpush1.bf16.msra.mxu0 %v6322
        %8857 = vmatprep.subr.bf16.mxu0 0
        %8858 = vmatpush1.bf16.msra.mxu0 %v6323
        %8859 = vmatprep.subr.bf16.mxu0 0
        %8860 = vmatpush1.bf16.msra.mxu0 %v6324
        %8861 = vmatprep.subr.bf16.mxu0 0
        %8862 = vmatpush1.bf16.msra.mxu0 %v6325
        %8863 = vmatprep.subr.bf16.mxu0 0
        %8864 = vmatpush1.bf16.msra.mxu0 %v6326
        %8865 = vmatprep.subr.bf16.mxu0 0
        %8866 = vmatpush1.bf16.msra.mxu0 %v6327
        %8867 = vmatprep.subr.bf16.mxu0 0
        %8868 = vmatpush1.bf16.msra.mxu0 %v6328
        %8869 = vmatprep.subr.bf16.mxu0 0
        %8870 = vmatpush1.bf16.msra.mxu0 %v6329
        %8871 = vmatprep.subr.bf16.mxu0 0
        %8872 = vmatpush1.bf16.msra.mxu0 %v6330
        %8873 = vmatprep.subr.bf16.mxu0 0
        %8874 = vmatpush1.bf16.msra.mxu0 %v6331
        %8875 = vmatprep.subr.bf16.mxu0 0
        %8876 = vmatpush1.bf16.msra.mxu0 %v6332
        %8877 = vmatprep.mubr.bf16.mxu0 %v2360
        %8878 = vmatmul.mubr.bf16.gmra.mrb[0].mxu0 %v2346
        %v8879 = vpop.f32.mrb[0].mxu0
        %v8880 = vadd.f32 %v8840, %v8879
        %v8881 = vpop.f32.mrb[0].mxu0
        %v8882 = vpop.f32.mrb[0].mxu0
        %v8883 = vpop.f32.mrb[0].mxu0
        %8884 = vdwg.mxu0
        %8885 = vmatprep.subr.bf16.mxu0 0
        %8886 = vmatpush1.bf16.msra.mxu0 %v6333
        %8887 = vmatprep.subr.bf16.mxu0 0
        %8888 = vmatpush1.bf16.msra.mxu0 %v6334
        %8889 = vmatprep.subr.bf16.mxu0 0
        %8890 = vmatpush1.bf16.msra.mxu0 %v6335
        %8891 = vmatprep.subr.bf16.mxu0 0
        %8892 = vmatpush1.bf16.msra.mxu0 %v6336
        %8893 = vmatprep.subr.bf16.mxu0 0
        %8894 = vmatpush1.bf16.msra.mxu0 %v6337
        %8895 = vmatprep.subr.bf16.mxu0 0
        %8896 = vmatpush1.bf16.msra.mxu0 %v6338
        %8897 = vmatprep.subr.bf16.mxu0 0
        %8898 = vmatpush1.bf16.msra.mxu0 %v6339
        %8899 = vmatprep.subr.bf16.mxu0 0
        %8900 = vmatpush1.bf16.msra.mxu0 %v6340
        %8901 = vmatprep.subr.bf16.mxu0 0
        %8902 = vmatpush1.bf16.msra.mxu0 %v6341
        %8903 = vmatprep.subr.bf16.mxu0 0
        %8904 = vmatpush1.bf16.msra.mxu0 %v6342
        %8905 = vmatprep.subr.bf16.mxu0 0
        %8906 = vmatpush1.bf16.msra.mxu0 %v6343
        %8907 = vmatprep.subr.bf16.mxu0 0
        %8908 = vmatpush1.bf16.msra.mxu0 %v6344
        %8909 = vmatprep.subr.bf16.mxu0 0
        %8910 = vmatpush1.bf16.msra.mxu0 %v6345
        %8911 = vmatprep.subr.bf16.mxu0 0
        %8912 = vmatpush1.bf16.msra.mxu0 %v6346
        %8913 = vmatprep.subr.bf16.mxu0 0
        %8914 = vmatpush1.bf16.msra.mxu0 %v6347
        %8915 = vmatprep.subr.bf16.mxu0 0
        %8916 = vmatpush1.bf16.msra.mxu0 %v6348
        %8917 = vmatprep.mubr.bf16.mxu0 %v2370
        %8918 = vmatmul.mubr.bf16.gmra.mrb[0].mxu0 %v2368
        %v8919 = vpop.f32.mrb[0].mxu0
        %v8920 = vadd.f32 %v8880, %v8919
        %v8921 = vpop.f32.mrb[0].mxu0
        %v8922 = vpop.f32.mrb[0].mxu0
        %v8923 = vpop.f32.mrb[0].mxu0
        %8924 = vdwg.mxu0
        %8925 = vmatprep.subr.bf16.mxu0 0
        %8926 = vmatpush1.bf16.msra.mxu0 %v6349
        %8927 = vmatprep.subr.bf16.mxu0 0
        %8928 = vmatpush1.bf16.msra.mxu0 %v6350
        %8929 = vmatprep.subr.bf16.mxu0 0
        %8930 = vmatpush1.bf16.msra.mxu0 %v6351
        %8931 = vmatprep.subr.bf16.mxu0 0
        %8932 = vmatpush1.bf16.msra.mxu0 %v6352
        %8933 = vmatprep.subr.bf16.mxu0 0
        %8934 = vmatpush1.bf16.msra.mxu0 %v6353
        %8935 = vmatprep.subr.bf16.mxu0 0
        %8936 = vmatpush1.bf16.msra.mxu0 %v6354
        %8937 = vmatprep.subr.bf16.mxu0 0
        %8938 = vmatpush1.bf16.msra.mxu0 %v6355
        %8939 = vmatprep.subr.bf16.mxu0 0
        %8940 = vmatpush1.bf16.msra.mxu0 %v6356
        %8941 = vmatprep.subr.bf16.mxu0 0
        %8942 = vmatpush1.bf16.msra.mxu0 %v6357
        %8943 = vmatprep.subr.bf16.mxu0 0
        %8944 = vmatpush1.bf16.msra.mxu0 %v6358
        %8945 = vmatprep.subr.bf16.mxu0 0
        %8946 = vmatpush1.bf16.msra.mxu0 %v6359
        %8947 = vmatprep.subr.bf16.mxu0 0
        %8948 = vmatpush1.bf16.msra.mxu0 %v6360
        %8949 = vmatprep.subr.bf16.mxu0 0
        %8950 = vmatpush1.bf16.msra.mxu0 %v6361
        %8951 = vmatprep.subr.bf16.mxu0 0
        %8952 = vmatpush1.bf16.msra.mxu0 %v6362
        %8953 = vmatprep.subr.bf16.mxu0 0
        %8954 = vmatpush1.bf16.msra.mxu0 %v6363
        %8955 = vmatprep.subr.bf16.mxu0 0
        %8956 = vmatpush1.bf16.msra.mxu0 %v6364
        %8957 = vmatprep.mubr.bf16.mxu0 %v2367
        %8958 = vmatmul.mubr.bf16.gmra.mrb[0].mxu0 %v2353
        %v8959 = vpop.f32.mrb[0].mxu0
        %v8960 = vadd.f32 %v8920, %v8959
        %v8961 = vpop.f32.mrb[0].mxu0
        %v8962 = vpop.f32.mrb[0].mxu0
        %v8963 = vpop.f32.mrb[0].mxu0
        %8964 = vdwg.mxu0
        %8965 = vmatprep.subr.bf16.mxu0 0
        %8966 = vmatpush1.bf16.msra.mxu0 %v6365
        %8967 = vmatprep.subr.bf16.mxu0 0
        %8968 = vmatpush1.bf16.msra.mxu0 %v6366
        %8969 = vmatprep.subr.bf16.mxu0 0
        %8970 = vmatpush1.bf16.msra.mxu0 %v6367
        %8971 = vmatprep.subr.bf16.mxu0 0
        %8972 = vmatpush1.bf16.msra.mxu0 %v6368
        %8973 = vmatprep.subr.bf16.mxu0 0
        %8974 = vmatpush1.bf16.msra.mxu0 %v6369
        %8975 = vmatprep.subr.bf16.mxu0 0
        %8976 = vmatpush1.bf16.msra.mxu0 %v6370
        %8977 = vmatprep.subr.bf16.mxu0 0
        %8978 = vmatpush1.bf16.msra.mxu0 %v6371
        %8979 = vmatprep.subr.bf16.mxu0 0
        %8980 = vmatpush1.bf16.msra.mxu0 %v6372
        %8981 = vmatprep.subr.bf16.mxu0 0
        %8982 = vmatpush1.bf16.msra.mxu0 %v6373
        %8983 = vmatprep.subr.bf16.mxu0 0
        %8984 = vmatpush1.bf16.msra.mxu0 %v6374
        %8985 = vmatprep.subr.bf16.mxu0 0
        %8986 = vmatpush1.bf16.msra.mxu0 %v6375
        %8987 = vmatprep.subr.bf16.mxu0 0
        %8988 = vmatpush1.bf16.msra.mxu0 %v6376
        %8989 = vmatprep.subr.bf16.mxu0 0
        %8990 = vmatpush1.bf16.msra.mxu0 %v6377
        %8991 = vmatprep.subr.bf16.mxu0 0
        %8992 = vmatpush1.bf16.msra.mxu0 %v6378
        %8993 = vmatprep.subr.bf16.mxu0 0
        %8994 = vmatpush1.bf16.msra.mxu0 %v6379
        %8995 = vmatprep.subr.bf16.mxu0 0
        %8996 = vmatpush1.bf16.msra.mxu0 %v6380
        %8997 = vmatprep.mubr.bf16.mxu0 %v2371
        %8998 = vmatmul.mubr.bf16.gmra.mrb[0].mxu0 %v2369
        %v8999 = vpop.f32.mrb[0].mxu0
        %v9000 = vadd.f32 %v8960, %v8999
        %v9001 = vpop.f32.mrb[0].mxu0
        %v9002 = vpop.f32.mrb[0].mxu0
        %v9003 = vpop.f32.mrb[0].mxu0
        %9004 = vdwg.mxu0
        %9005 = vmatprep.subr.bf16.mxu0 0
        %9006 = vmatpush1.bf16.msra.mxu0 %v6381
        %9007 = vmatprep.subr.bf16.mxu0 0
        %9008 = vmatpush1.bf16.msra.mxu0 %v6382
        %9009 = vmatprep.subr.bf16.mxu0 0
        %9010 = vmatpush1.bf16.msra.mxu0 %v6383
        %9011 = vmatprep.subr.bf16.mxu0 0
        %9012 = vmatpush1.bf16.msra.mxu0 %v6384
        %9013 = vmatprep.subr.bf16.mxu0 0
        %9014 = vmatpush1.bf16.msra.mxu0 %v6385
        %9015 = vmatprep.subr.bf16.mxu0 0
        %9016 = vmatpush1.bf16.msra.mxu0 %v6386
        %9017 = vmatprep.subr.bf16.mxu0 0
        %9018 = vmatpush1.bf16.msra.mxu0 %v6387
        %9019 = vmatprep.subr.bf16.mxu0 0
        %9020 = vmatpush1.bf16.msra.mxu0 %v6388
        %9021 = vmatprep.subr.bf16.mxu0 0
        %9022 = vmatpush1.bf16.msra.mxu0 %v6389
        %9023 = vmatprep.subr.bf16.mxu0 0
        %9024 = vmatpush1.bf16.msra.mxu0 %v6390
        %9025 = vmatprep.subr.bf16.mxu0 0
        %9026 = vmatpush1.bf16.msra.mxu0 %v6391
        %9027 = vmatprep.subr.bf16.mxu0 0
        %9028 = vmatpush1.bf16.msra.mxu0 %v6392
        %9029 = vmatprep.subr.bf16.mxu0 0
        %9030 = vmatpush1.bf16.msra.mxu0 %v6393
        %9031 = vmatprep.subr.bf16.mxu0 0
        %9032 = vmatpush1.bf16.msra.mxu0 %v6394
        %9033 = vmatprep.subr.bf16.mxu0 0
        %9034 = vmatpush1.bf16.msra.mxu0 %v6395
        %9035 = vmatprep.subr.bf16.mxu0 0
        %9036 = vmatpush1.bf16.msra.mxu0 %v6396
        %9037 = vmatprep.mubr.bf16.mxu0 %v2409
        %9038 = vmatmul.mubr.bf16.gmra.mrb[0].mxu0 %v2395
        %v9039 = vpop.f32.mrb[0].mxu0
        %v9040 = vadd.f32 %v9000, %v9039
        %v9041 = vpop.f32.mrb[0].mxu0
        %v9042 = vpop.f32.mrb[0].mxu0
        %v9043 = vpop.f32.mrb[0].mxu0
        %9044 = vdwg.mxu0
        %9045 = vmatprep.subr.bf16.mxu0 0
        %9046 = vmatpush1.bf16.msra.mxu0 %v6397
        %9047 = vmatprep.subr.bf16.mxu0 0
        %9048 = vmatpush1.bf16.msra.mxu0 %v6398
        %9049 = vmatprep.subr.bf16.mxu0 0
        %9050 = vmatpush1.bf16.msra.mxu0 %v6399
        %9051 = vmatprep.subr.bf16.mxu0 0
        %9052 = vmatpush1.bf16.msra.mxu0 %v6400
        %9053 = vmatprep.subr.bf16.mxu0 0
        %9054 = vmatpush1.bf16.msra.mxu0 %v6401
        %9055 = vmatprep.subr.bf16.mxu0 0
        %9056 = vmatpush1.bf16.msra.mxu0 %v6402
        %9057 = vmatprep.subr.bf16.mxu0 0
        %9058 = vmatpush1.bf16.msra.mxu0 %v6403
        %9059 = vmatprep.subr.bf16.mxu0 0
        %9060 = vmatpush1.bf16.msra.mxu0 %v6404
        %9061 = vmatprep.subr.bf16.mxu0 0
        %9062 = vmatpush1.bf16.msra.mxu0 %v6405
        %9063 = vmatprep.subr.bf16.mxu0 0
        %9064 = vmatpush1.bf16.msra.mxu0 %v6406
        %9065 = vmatprep.subr.bf16.mxu0 0
        %9066 = vmatpush1.bf16.msra.mxu0 %v6407
        %9067 = vmatprep.subr.bf16.mxu0 0
        %9068 = vmatpush1.bf16.msra.mxu0 %v6408
        %9069 = vmatprep.subr.bf16.mxu0 0
        %9070 = vmatpush1.bf16.msra.mxu0 %v6409
        %9071 = vmatprep.subr.bf16.mxu0 0
        %9072 = vmatpush1.bf16.msra.mxu0 %v6410
        %9073 = vmatprep.subr.bf16.mxu0 0
        %9074 = vmatpush1.bf16.msra.mxu0 %v6411
        %9075 = vmatprep.subr.bf16.mxu0 0
        %9076 = vmatpush1.bf16.msra.mxu0 %v6412
        %9077 = vmatprep.mubr.bf16.mxu0 %v2419
        %9078 = vmatmul.mubr.bf16.gmra.mrb[0].mxu0 %v2417
        %v9079 = vpop.f32.mrb[0].mxu0
        %v9080 = vadd.f32 %v9040, %v9079
        %v9081 = vpop.f32.mrb[0].mxu0
        %v9082 = vpop.f32.mrb[0].mxu0
        %v9083 = vpop.f32.mrb[0].mxu0
        %9084 = vdwg.mxu0
        %9085 = vmatprep.subr.bf16.mxu0 0
        %9086 = vmatpush1.bf16.msra.mxu0 %v6413
        %9087 = vmatprep.subr.bf16.mxu0 0
        %9088 = vmatpush1.bf16.msra.mxu0 %v6414
        %9089 = vmatprep.subr.bf16.mxu0 0
        %9090 = vmatpush1.bf16.msra.mxu0 %v6415
        %9091 = vmatprep.subr.bf16.mxu0 0
        %9092 = vmatpush1.bf16.msra.mxu0 %v6416
        %9093 = vmatprep.subr.bf16.mxu0 0
        %9094 = vmatpush1.bf16.msra.mxu0 %v6417
        %9095 = vmatprep.subr.bf16.mxu0 0
        %9096 = vmatpush1.bf16.msra.mxu0 %v6418
        %9097 = vmatprep.subr.bf16.mxu0 0
        %9098 = vmatpush1.bf16.msra.mxu0 %v6419
        %9099 = vmatprep.subr.bf16.mxu0 0
        %9100 = vmatpush1.bf16.msra.mxu0 %v6420
        %9101 = vmatprep.subr.bf16.mxu0 0
        %9102 = vmatpush1.bf16.msra.mxu0 %v6421
        %9103 = vmatprep.subr.bf16.mxu0 0
        %9104 = vmatpush1.bf16.msra.mxu0 %v6422
        %9105 = vmatprep.subr.bf16.mxu0 0
        %9106 = vmatpush1.bf16.msra.mxu0 %v6423
        %9107 = vmatprep.subr.bf16.mxu0 0
        %9108 = vmatpush1.bf16.msra.mxu0 %v6424
        %9109 = vmatprep.subr.bf16.mxu0 0
        %9110 = vmatpush1.bf16.msra.mxu0 %v6425
        %9111 = vmatprep.subr.bf16.mxu0 0
        %9112 = vmatpush1.bf16.msra.mxu0 %v6426
        %9113 = vmatprep.subr.bf16.mxu0 0
        %9114 = vmatpush1.bf16.msra.mxu0 %v6427
        %9115 = vmatprep.subr.bf16.mxu0 0
        %9116 = vmatpush1.bf16.msra.mxu0 %v6428
        %9117 = vmatprep.mubr.bf16.mxu0 %v2416
        %9118 = vmatmul.mubr.bf16.gmra.mrb[0].mxu0 %v2402
        %v9119 = vpop.f32.mrb[0].mxu0
        %v9120 = vadd.f32 %v9080, %v9119
        %v9121 = vpop.f32.mrb[0].mxu0
        %v9122 = vpop.f32.mrb[0].mxu0
        %v9123 = vpop.f32.mrb[0].mxu0
        %9124 = vdwg.mxu0
        %9125 = vmatprep.subr.bf16.mxu0 0
        %9126 = vmatpush1.bf16.msra.mxu0 %v6429
        %9127 = vmatprep.subr.bf16.mxu0 0
        %9128 = vmatpush1.bf16.msra.mxu0 %v6430
        %9129 = vmatprep.subr.bf16.mxu0 0
        %9130 = vmatpush1.bf16.msra.mxu0 %v6431
        %9131 = vmatprep.subr.bf16.mxu0 0
        %9132 = vmatpush1.bf16.msra.mxu0 %v6432
        %9133 = vmatprep.subr.bf16.mxu0 0
        %9134 = vmatpush1.bf16.msra.mxu0 %v6433
        %9135 = vmatprep.subr.bf16.mxu0 0
        %9136 = vmatpush1.bf16.msra.mxu0 %v6434
        %9137 = vmatprep.subr.bf16.mxu0 0
        %9138 = vmatpush1.bf16.msra.mxu0 %v6435
        %9139 = vmatprep.subr.bf16.mxu0 0
        %9140 = vmatpush1.bf16.msra.mxu0 %v6436
        %9141 = vmatprep.subr.bf16.mxu0 0
        %9142 = vmatpush1.bf16.msra.mxu0 %v6437
        %9143 = vmatprep.subr.bf16.mxu0 0
        %9144 = vmatpush1.bf16.msra.mxu0 %v6438
        %9145 = vmatprep.subr.bf16.mxu0 0
        %9146 = vmatpush1.bf16.msra.mxu0 %v6439
        %9147 = vmatprep.subr.bf16.mxu0 0
        %9148 = vmatpush1.bf16.msra.mxu0 %v6440
        %9149 = vmatprep.subr.bf16.mxu0 0
        %9150 = vmatpush1.bf16.msra.mxu0 %v6441
        %9151 = vmatprep.subr.bf16.mxu0 0
        %9152 = vmatpush1.bf16.msra.mxu0 %v6442
        %9153 = vmatprep.subr.bf16.mxu0 0
        %9154 = vmatpush1.bf16.msra.mxu0 %v6443
        %9155 = vmatprep.subr.bf16.mxu0 0
        %9156 = vmatpush1.bf16.msra.mxu0 %v6444
        %9157 = vmatprep.mubr.bf16.mxu0 %v2420
        %9158 = vmatmul.mubr.bf16.gmra.mrb[0].mxu0 %v2418
        %v9159 = vpop.f32.mrb[0].mxu0
        %v9160 = vadd.f32 %v9120, %v9159
        %v9161 = vpop.f32.mrb[0].mxu0
        %v9162 = vpop.f32.mrb[0].mxu0
        %v9163 = vpop.f32.mrb[0].mxu0
        %9164 = vdwg.mxu0
        %9165 = vmatprep.subr.bf16.mxu0 0
        %9166 = vmatpush1.bf16.msra.mxu0 %v6445
        %9167 = vmatprep.subr.bf16.mxu0 0
        %9168 = vmatpush1.bf16.msra.mxu0 %v6446
        %9169 = vmatprep.subr.bf16.mxu0 0
        %9170 = vmatpush1.bf16.msra.mxu0 %v6447
        %9171 = vmatprep.subr.bf16.mxu0 0
        %9172 = vmatpush1.bf16.msra.mxu0 %v6448
        %9173 = vmatprep.subr.bf16.mxu0 0
        %9174 = vmatpush1.bf16.msra.mxu0 %v6449
        %9175 = vmatprep.subr.bf16.mxu0 0
        %9176 = vmatpush1.bf16.msra.mxu0 %v6450
        %9177 = vmatprep.subr.bf16.mxu0 0
        %9178 = vmatpush1.bf16.msra.mxu0 %v6451
        %9179 = vmatprep.subr.bf16.mxu0 0
        %9180 = vmatpush1.bf16.msra.mxu0 %v6452
        %9181 = vmatprep.subr.bf16.mxu0 0
        %9182 = vmatpush1.bf16.msra.mxu0 %v6453
        %9183 = vmatprep.subr.bf16.mxu0 0
        %9184 = vmatpush1.bf16.msra.mxu0 %v6454
        %9185 = vmatprep.subr.bf16.mxu0 0
        %9186 = vmatpush1.bf16.msra.mxu0 %v6455
        %9187 = vmatprep.subr.bf16.mxu0 0
        %9188 = vmatpush1.bf16.msra.mxu0 %v6456
        %9189 = vmatprep.subr.bf16.mxu0 0
        %9190 = vmatpush1.bf16.msra.mxu0 %v6457
        %9191 = vmatprep.subr.bf16.mxu0 0
        %9192 = vmatpush1.bf16.msra.mxu0 %v6458
        %9193 = vmatprep.subr.bf16.mxu0 0
        %9194 = vmatpush1.bf16.msra.mxu0 %v6459
        %9195 = vmatprep.subr.bf16.mxu0 0
        %9196 = vmatpush1.bf16.msra.mxu0 %v6460
        %9197 = vmatprep.mubr.bf16.mxu0 %v2442
        %9198 = vmatmul.mubr.bf16.gmra.mrb[0].mxu0 %v2435
        %v9199 = vpop.f32.mrb[0].mxu0
        %v9200 = vadd.f32 %v9160, %v9199
        %v9201 = vpop.f32.mrb[0].mxu0
        %v9202 = vpop.f32.mrb[0].mxu0
        %v9203 = vpop.f32.mrb[0].mxu0
        %9204 = vdwg.mxu0
        %v9205 = vadd.f32 %v238, %v9200
        %9206 = vst [vmem:[#allocation2] sm:$0x3] %v9205
        %p9207 = scmp.eq.s32.totalorder %s17, 1
        // Predicated region
        $region45: #{moe_block.3} parent=39 // pred_check
          %p9208 = pneg %p9207
        $region46: #{moe_block.3} parent=39 // pred_check_branch
          %9210 = sbr.rel (%p9208) target = $region48
        $region47: #{moe_block.3} parent=39 // pred_region
          %v9211 = vld [vmem:[#allocation2] sm:$0x3]
          %v9212 = vld [vmem:[%s2] sm:$0x1]
          %v9214 = vlaneseq
          %v9215 = vshrl.u32 %v9214, 7
          %v9216 = vsub.s32 0, %v9215
          %v9217 = vrot.slane %v9212, %v9216
          %v9219 = vadd.f32 %v9211, %v9217
          %v9220 = vmul.f32 %v9219, 0.5
          %v9221 = vmul.f32 %v9219, 0.70710677
          %v9222 = vand.u32 2147483647, %v9221
          %v9223 = vmul.f32 %v9222, 0.3275911
          %v9224 = vadd.f32 %v9223, 1.0
          %v9225 = vrcp.pop %v9224
          %v9226 = vmul.f32 1.0, %v9225
          %v9227 = vmul.f32 %v9226, 1.0614054
          %v9228 = vadd.f32 %v9227, -1.4531521
          %v9229 = vmul.f32 %v9228, %v9226
          %v9230 = vadd.f32 %v9229, 1.4214138
          %v9231 = vmul.f32 %v9230, %v9226
          %v9232 = vadd.f32 %v9231, -0.28449672
          %v9233 = vmul.f32 %v9232, %v9226
          %v9234 = vadd.f32 %v9233, 0.2548296
          %v9235 = vmul.f32 %v9234, %v9226
          %v9236 = vsub.f32 0.0, %v9222
          %v9237 = vmul.f32 %v9236, %v9222
          %v9238 = vmul.f32 %v9237, 1.442695
          %v9239 = vpow.pop %v9238
          %v9240 = vmul.f32 %v9235, %v9239
          %v9241 = vsub.f32 1.0, %v9240
          %vm9242 = vcmp.lt.f32.partialorder %v9221, 0.0
          %v9243 = vsub.f32 0.0, %v9241
          %v9244 = vsel %vm9242, %v9243, %v9241
          %v9245 = vadd.f32 %v9244, 1.0
          %v9246 = vmul.f32 %v9220, %v9245
          %v9247 = vld [vmem:[%s3] sm:$0xff]
          %v9248 = vld [vmem:[%s3 + $0x8] sm:$0xff]
          %v9249 = vld [vmem:[%s3 + $0x10] sm:$0xff]
          %v9250 = vld [vmem:[%s3 + $0x18] sm:$0xff]
          %v9251 = vld [vmem:[%s3 + $0x20] sm:$0xff]
          %v9252 = vld [vmem:[%s3 + $0x28] sm:$0xff]
          %v9253 = vld [vmem:[%s3 + $0x30] sm:$0xff]
          %v9254 = vld [vmem:[%s3 + $0x38] sm:$0xff]
          %v9255 = vld [vmem:[%s3 + $0x40] sm:$0xff]
          %v9256 = vld [vmem:[%s3 + $0x48] sm:$0xff]
          %v9257 = vld [vmem:[%s3 + $0x50] sm:$0xff]
          %v9258 = vld [vmem:[%s3 + $0x58] sm:$0xff]
          %v9259 = vld [vmem:[%s3 + $0x60] sm:$0xff]
          %v9260 = vld [vmem:[%s3 + $0x68] sm:$0xff]
          %v9261 = vld [vmem:[%s3 + $0x70] sm:$0xff]
          %v9262 = vld [vmem:[%s3 + $0x78] sm:$0xff]
          %v9263 = vld [vmem:[%s4] sm:$0x1]
          %v9265 = vlaneseq
          %v9266 = vshrl.u32 %v9265, 7
          %v9267 = vsub.s32 0, %v9266
          %v9268 = vrot.slane %v9263, %v9267
          %9270 = vmatprep.subr.mxu0 0.0
          %9271 = vmatpush1.msra.mxu0 %v9247
          %9272 = vmatprep.subr.mxu0 0.0
          %9273 = vmatpush1.msra.mxu0 %v9248
          %9274 = vmatprep.subr.mxu0 0.0
          %9275 = vmatpush1.msra.mxu0 %v9249
          %9276 = vmatprep.subr.mxu0 0.0
          %9277 = vmatpush1.msra.mxu0 %v9250
          %9278 = vmatprep.subr.mxu0 0.0
          %9279 = vmatpush1.msra.mxu0 %v9251
          %9280 = vmatprep.subr.mxu0 0.0
          %9281 = vmatpush1.msra.mxu0 %v9252
          %9282 = vmatprep.subr.mxu0 0.0
          %9283 = vmatpush1.msra.mxu0 %v9253
          %9284 = vmatprep.subr.mxu0 0.0
          %9285 = vmatpush1.msra.mxu0 %v9254
          %9286 = vmatprep.subr.mxu0 0.0
          %9287 = vmatpush1.msra.mxu0 %v9255
          %9288 = vmatprep.subr.mxu0 0.0
          %9289 = vmatpush1.msra.mxu0 %v9256
          %9290 = vmatprep.subr.mxu0 0.0
          %9291 = vmatpush1.msra.mxu0 %v9257
          %9292 = vmatprep.subr.mxu0 0.0
          %9293 = vmatpush1.msra.mxu0 %v9258
          %9294 = vmatprep.subr.mxu0 0.0
          %9295 = vmatpush1.msra.mxu0 %v9259
          %9296 = vmatprep.subr.mxu0 0.0
          %9297 = vmatpush1.msra.mxu0 %v9260
          %9298 = vmatprep.subr.mxu0 0.0
          %9299 = vmatpush1.msra.mxu0 %v9261
          %9300 = vmatprep.subr.mxu0 0.0
          %9301 = vmatpush1.msra.mxu0 %v9262
          %9302 = vmatprep.subr.mxu0 0.0
          %9303 = vmatpush1.msra.mxu0 0.0
          %9304 = vmatprep.subr.mxu0 0.0
          %9305 = vmatpush1.msra.mxu0 0.0
          %9306 = vmatprep.subr.mxu0 0.0
          %9307 = vmatpush1.msra.mxu0 0.0
          %9308 = vmatprep.subr.mxu0 0.0
          %9309 = vmatpush1.msra.mxu0 0.0
          %9310 = vmatprep.subr.mxu0 0.0
          %9311 = vmatpush1.msra.mxu0 0.0
          %9312 = vmatprep.subr.mxu0 0.0
          %9313 = vmatpush1.msra.mxu0 0.0
          %9314 = vmatprep.subr.mxu0 0.0
          %9315 = vmatpush1.msra.mxu0 0.0
          %9316 = vmatprep.subr.mxu0 0.0
          %9317 = vmatpush1.msra.mxu0 0.0
          %9318 = vmatprep.subr.mxu0 0.0
          %9319 = vmatpush1.msra.mxu0 0.0
          %9320 = vmatprep.subr.mxu0 0.0
          %9321 = vmatpush1.msra.mxu0 0.0
          %9322 = vmatprep.subr.mxu0 0.0
          %9323 = vmatpush1.msra.mxu0 0.0
          %9324 = vmatprep.subr.mxu0 0.0
          %9325 = vmatpush1.msra.mxu0 0.0
          %9326 = vmatprep.subr.mxu0 0.0
          %9327 = vmatpush1.msra.mxu0 0.0
          %9328 = vmatprep.subr.mxu0 0.0
          %9329 = vmatpush1.msra.mxu0 0.0
          %9330 = vmatprep.subr.mxu0 0.0
          %9331 = vmatpush1.msra.mxu0 0.0
          %9332 = vmatprep.subr.mxu0 0.0
          %9333 = vmatpush1.msra.mxu0 0.0
          %9334 = vmatprep.mubr.f32.mxu0 0.0
          %9335 = vmatmul.mubr.f32.gmra.mrb[0].mxu0 %v9246
          %v9336 = vpop.f32.mrb[0].mxu0
          %v9337 = vadd.f32 %v9268, %v9336
          %v9338 = vpop.f32.mrb[0].mxu0
          %9339 = vdwg.mxu0
          %vm9340 = vcmask 9216
          %v9341 = vsel %vm9340, %v9337, -inf
          %9342 = vmax.xlane.f32.xlu0 %v9341
          %v9343 = vpop.xlane.xlu0 %9342
          %v9344 = vsub.f32 %v9337, %v9343
          %v9345 = vmul.f32 %v9344, 1.442695
          %v9346 = vpow.pop %v9345
          %v9347 = vsel %vm9340, %v9346, 0.0
          %9348 = vadd.xlane.f32.xlu0 %v9347
          %v9349 = vpop.xlane.xlu0 %9348
          %v9350 = vrcp.pop %v9349
          %v9351 = vmul.f32 %v9346, %v9350
          %9352 = vst.msk [vmem:[#allocation3] sm:$0x3] %vm9340, %v9351
        $region48: #{moe_block.3} parent=39 // pred_fallthru
          _
        // Predicated region
        $region49: #{moe_block.3} parent=39 // pred_check
          %p9353 = pneg %p145
        $region50: #{moe_block.3} parent=39 // pred_check_branch
          %9355 = sbr.rel (%p9353) target = $region52
        $region51: #{moe_block.3} parent=39 // pred_region
          %s9357 = ssub.s32 32, 32
          %9358 = vsyncadd [#allocation4], %s9357
          %s9360 = sshll.u32 [#allocation3], 4
          %s9361 = int_to_ptr.vmem [resolvable:$true] %s9360
          %9363 = dma.vmem_to_hbm [thread:$0]  %s9361, 32, %s5, [#allocation4]
        $region52: #{moe_block.3} parent=39 // pred_fallthru
          _
        // Predicated region
        $region53: #{moe_block.3} parent=39 // pred_check
          %p9364 = pneg %p145
        $region54: #{moe_block.3} parent=39 // pred_check_branch
          %9366 = sbr.rel (%p9364) target = $region56
        $region55: #{moe_block.3} parent=39 // pred_region
          %9367 = dma.done [#allocation4], 32
        $region56: #{moe_block.3} parent=39 // pred_fallthru
          _
      $region40: #{moe_block.3} parent=5 // pred_fallthru
        _
      %p9368 = scmp.le.s32.totalorder 2, %s12
      // Predicated region
      $region57: #{moe_block.3} parent=5 // pred_check
        %p9369 = pneg %p9368
      $region58: #{moe_block.3} parent=5 // pred_check_branch
        %9371 = sbr.rel (%p9369) target = $region60
      $region59: #{moe_block.3} parent=5 // pred_region
        %s9372 = ssub.s32 %s12, 2
      $region60: #{moe_block.3} parent=5 // pred_fallthru
        _
    $region6: #{moe_block.3} parent=1 // loop_footer
      %s16 = sadd.s32 1, %s12
    $region7: #{moe_block.3} parent=1 // loop_footer_branch
      %11 = sbr.rel target = $region3
    $region8: #{moe_block.3} parent=1 // loop_exit
      _
    %9373 = vsyncpa [#allocation4], 1
    %s9374 = scalar_lea.sflag [#allocation4], 1
    %9375 = vsyncpa %s9374, 1

</llo_original>
